<compile_context>
chip_gen: v7x
topology: tpu7x:2x2x1
jax: 0.10.0
libtpu: 0.0.40
codegen_flags: <defaults>
</compile_context>

<pallas_src>
import math
import functools

import jax
import jax.numpy as jnp
from jax import lax
from jax.experimental import pallas as pl
from jax.experimental.pallas import tpu as pltpu


# ---------------------------------------------------------------------------
# Fused kernel: style modulation + in-kernel zero pad + im2col + one MXU matmul
# ---------------------------------------------------------------------------
def _wnconv_kernel(style_ref, mw_ref, mb_ref, x_ref, w_ref, out_ref,
                   xp_ref, col_ref, *, B, H, W, K, scale):
    # style_ref: (B, S)            mw_ref:  (S, Cin)          mb_ref: (1, Cin)
    # x_ref:     (B, H, W, Cin)    w_ref:   (K*K*Cin, Cout) bf16
    # out_ref:   (B*H*W, Cout) f32
    # xp_ref:    (B, H+2p, W+2p, Cin) bf16 scratch (padded, modulated input)
    # col_ref:   (B*H*W, K*K*Cin)     bf16 scratch (im2col LHS)
    c_in = x_ref.shape[-1]
    pad = K // 2
    hp, wp = H + 2 * pad, W + 2 * pad

    # 1) Style modulation: mstyle = (style @ W_mod + b_mod) * scale  -> (B, Cin) f32
    mstyle = (jnp.dot(style_ref[...], mw_ref[...],
                      preferred_element_type=jnp.float32)
              + mb_ref[...]) * scale

    # 2) Stage the zero-padded, modulated input in bf16.  Only the halo ring is
    #    zeroed (interior is written exactly once); the f32->bf16 cast happens
    #    once, on the interior store.
    if pad > 0:
        row_zeros = jnp.zeros((B, pad, wp, c_in), xp_ref.dtype)
        xp_ref[:, :pad, :, :] = row_zeros
        xp_ref[:, hp - pad:, :, :] = row_zeros
        col_zeros = jnp.zeros((B, H, pad, c_in), xp_ref.dtype)
        xp_ref[:, pad:pad + H, :pad, :] = col_zeros
        xp_ref[:, pad:pad + H, wp - pad:, :] = col_zeros

    x_mod = x_ref[...] * mstyle[:, None, None, :]            # (B, H, W, Cin) f32
    xp_ref[:, pad:pad + H, pad:pad + W, :] = x_mod.astype(xp_ref.dtype)

    # 3) im2col: K*K bf16 window copies into the (B*H*W, K*K*Cin) LHS.
    for kh in range(K):
        for kw in range(K):
            t = kh * K + kw
            win = xp_ref[:, kh:kh + H, kw:kw + W, :]          # (B, H, W, Cin) bf16
            col_ref[:, t * c_in:(t + 1) * c_in] = win.reshape(B * H * W, c_in)

    # 4) ONE deep MXU matmul (bf16 operands, f32 accumulation inside the MXU).
    out_ref[...] = jnp.dot(col_ref[...], w_ref[...],
                           preferred_element_type=jnp.float32).astype(out_ref.dtype)


# ---------------------------------------------------------------------------
# Parameters & weight-norm reparameterization (outside the kernel)
# ---------------------------------------------------------------------------
def effective_weight(v, g):
    # weight_norm: w[o] = g[o] * v[o] / ||v[o]||  (norm over in-ch, kh, kw)
    norm = jnp.sqrt(jnp.sum(v * v, axis=(1, 2, 3), keepdims=True))
    return v * (g[:, None, None, None] / norm)               # (Cout, Cin, K, K)


def init_params(key, style_dim, c_in, c_out, k):
    k1, k2 = jax.random.split(key, 2)
    # modulation Linear: xavier_uniform weight; bias ends at 0 (initialize_module
    # overrides the earlier fill_(1.0) in the reference).
    limit = math.sqrt(6.0 / (style_dim + c_in))
    mod_w = jax.random.uniform(k1, (style_dim, c_in), jnp.float32, -limit, limit)
    mod_b = jnp.zeros((1, c_in), jnp.float32)
    # weight-normed conv: v ~ kaiming_uniform(leaky_relu), g = ||v|| (PyTorch
    # wrap-time init, so w_eff == v initially).
    fan_in = c_in * k * k
    gain = math.sqrt(2.0 / (1.0 + 0.01 ** 2))
    bound = gain * math.sqrt(3.0 / fan_in)
    v = jax.random.uniform(k2, (c_out, c_in, k, k), jnp.float32, -bound, bound)
    g = jnp.sqrt(jnp.sum(v * v, axis=(1, 2, 3)))
    return dict(mod_w=mod_w, mod_b=mod_b, v=v, g=g)


# ---------------------------------------------------------------------------
# Forward wrapper (NCHW in / NCHW out, like the PyTorch module)
# ---------------------------------------------------------------------------
def wnconv2d_forward(x_nchw, style, params):
    B, C_in, H, W = x_nchw.shape
    C_out, _, K, _ = params["v"].shape
    S = style.shape[1]
    pad = K // 2
    scale = 1.0 / math.sqrt(C_in * K * K)

    # Parameter-only preprocessing: weight norm + im2col layout + bf16 for the MXU.
    w_eff = effective_weight(params["v"], params["g"])                  # (Cout,Cin,K,K)
    w_col = jnp.transpose(w_eff, (2, 3, 1, 0)).reshape(K * K * C_in, C_out)
    w_col = w_col.astype(jnp.bfloat16)                                  # (K*K*Cin, Cout)

    x_nhwc = jnp.transpose(x_nchw, (0, 2, 3, 1))                        # channels -> lanes

    kernel = functools.partial(_wnconv_kernel, B=B, H=H, W=W, K=K, scale=scale)
    out = pl.pallas_call(
        kernel,
        out_shape=jax.ShapeDtypeStruct((B * H * W, C_out), jnp.float32),
        grid=(1,),                                                      # single step: batch folded into M
        in_specs=[
            pl.BlockSpec((B, S), lambda i: (0, 0)),
            pl.BlockSpec((S, C_in), lambda i: (0, 0)),
            pl.BlockSpec((1, C_in), lambda i: (0, 0)),
            pl.BlockSpec((B, H, W, C_in), lambda i: (0, 0, 0, 0)),
            pl.BlockSpec((K * K * C_in, C_out), lambda i: (0, 0)),
        ],
        out_specs=pl.BlockSpec((B * H * W, C_out), lambda i: (0, 0)),
        scratch_shapes=[
            pltpu.VMEM((B, H + 2 * pad, W + 2 * pad, C_in), jnp.bfloat16),
            pltpu.VMEM((B * H * W, K * K * C_in), jnp.bfloat16),
        ],
        compiler_params=pltpu.CompilerParams(
            dimension_semantics=("arbitrary",),
        ),
    )(style, params["mod_w"], params["mod_b"], x_nhwc, w_col)

    out = out.reshape(B, H, W, C_out)
    return jnp.transpose(out, (0, 3, 1, 2))                             # back to NCHW


# ---------------------------------------------------------------------------
# Pure-JAX reference (f32) for a sanity check
# ---------------------------------------------------------------------------
def reference_forward(x_nchw, style, params):
    B, C_in, H, W = x_nchw.shape
    C_out, _, K, _ = params["v"].shape
    pad = K // 2
    scale = 1.0 / math.sqrt(C_in * K * K)
    w_eff = effective_weight(params["v"], params["g"])
    mstyle = (style @ params["mod_w"] + params["mod_b"]) * scale        # (B, Cin)
    xm = x_nchw * mstyle[:, :, None, None]
    return lax.conv_general_dilated(
        xm, w_eff, window_strides=(1, 1), padding=[(pad, pad), (pad, pad)],
        dimension_numbers=("NCHW", "OIHW", "NCHW"))


if __name__ == "__main__":
    B, C_in, C_out, H, W, style_dim, K = 2, 32, 128, 16, 16, 8, 3

    key = jax.random.PRNGKey(0)
    kx, ks, kp = jax.random.split(key, 3)
    x_nchw = jax.random.normal(kx, (B, C_in, H, W), jnp.float32)        # PyTorch NCHW
    style = jax.random.normal(ks, (B, style_dim), jnp.float32)
    params = init_params(kp, style_dim, C_in, C_out, K)

    fwd = jax.jit(wnconv2d_forward)
    out = jax.block_until_ready(fwd(x_nchw, style, params))             # (B, Cout, H, W)

    assert out.shape == (B, C_out, H, W), out.shape
    assert bool(jnp.all(jnp.isfinite(out)))

    ref = reference_forward(x_nchw, style, params)
    rel_err = float(jnp.max(jnp.abs(out - ref)) / (jnp.max(jnp.abs(ref)) + 1e-6))
    assert rel_err < 2e-2, f"relative error too large: {rel_err}"

    print("KERNEL_OK")
</pallas_src>

<mosaic_0001>
module attributes {stable_mosaic.version = 11 : i64} {
  func.func @_wnconv_kernel(%arg0: i32, %arg1: memref<2x8xf32, #tpu.memory_space<vmem>>, %arg2: memref<8x32xf32, #tpu.memory_space<vmem>>, %arg3: memref<1x32xf32, #tpu.memory_space<vmem>>, %arg4: memref<2x16x16x32xf32, #tpu.memory_space<vmem>>, %arg5: memref<288x128xbf16, #tpu.memory_space<vmem>>, %arg6: memref<512x128xf32, #tpu.memory_space<vmem>>, %arg7: memref<2x18x18x32xbf16, #tpu.memory_space<vmem>>, %arg8: memref<512x288xbf16, #tpu.memory_space<vmem>>) attributes {dimension_semantics = [#tpu.dimension_semantics<arbitrary>], iteration_bounds = array<i64: 1>, scalar_prefetch = 0 : i64, scratch_operands = 2 : i64, tpu.core_type = #tpu.core_type<tc>, window_params = [{pipeline_mode = #tpu.pipeline_mode<synchronous>, transform_indices = @transform_0, window_bounds = array<i64: 2, 8>}, {pipeline_mode = #tpu.pipeline_mode<synchronous>, transform_indices = @transform_1, window_bounds = array<i64: 8, 32>}, {pipeline_mode = #tpu.pipeline_mode<synchronous>, transform_indices = @transform_2, window_bounds = array<i64: 1, 32>}, {pipeline_mode = #tpu.pipeline_mode<synchronous>, transform_indices = @transform_3, window_bounds = array<i64: 2, 16, 16, 32>}, {pipeline_mode = #tpu.pipeline_mode<synchronous>, transform_indices = @transform_4, window_bounds = array<i64: 288, 128>}, {pipeline_mode = #tpu.pipeline_mode<synchronous>, transform_indices = @transform_5, window_bounds = array<i64: 512, 128>}]} {
    %c0 = arith.constant 0 : index
    %c0_0 = arith.constant 0 : index
    %0 = vector.load %arg1[%c0, %c0_0] : memref<2x8xf32, #tpu.memory_space<vmem>>, vector<2x8xf32>
    %c0_1 = arith.constant 0 : index
    %c0_2 = arith.constant 0 : index
    %1 = vector.load %arg2[%c0_1, %c0_2] : memref<8x32xf32, #tpu.memory_space<vmem>>, vector<8x32xf32>
    %cst = arith.constant dense<0.000000e+00> : vector<2x32xf32>
    %2 = tpu.matmul %0, %1, %cst {dimension_numbers = #tpu.dot_dimension_numbers<[1], [0], [0], [1], [0, 0, 1, 1], [], []>} : vector<2x8xf32>, vector<8x32xf32>, vector<2x32xf32> -> vector<2x32xf32>
    %c0_3 = arith.constant 0 : index
    %c0_4 = arith.constant 0 : index
    %3 = vector.load %arg3[%c0_3, %c0_4] : memref<1x32xf32, #tpu.memory_space<vmem>>, vector<1x32xf32>
    %4 = vector.broadcast %3 : vector<1x32xf32> to vector<2x32xf32>
    %5 = arith.addf %2, %4 : vector<2x32xf32>
    %cst_5 = arith.constant 0.0589255653 : f32
    %6 = vector.broadcast %cst_5 : f32 to vector<2x32xf32>
    %7 = arith.mulf %5, %6 : vector<2x32xf32>
    %cst_6 = arith.constant 0.000000e+00 : bf16
    %8 = vector.broadcast %cst_6 : bf16 to vector<2x1x18x32xbf16>
    %c0_7 = arith.constant 0 : index
    %c0_8 = arith.constant 0 : index
    %c0_9 = arith.constant 0 : index
    %c0_10 = arith.constant 0 : index
    %9 = vector.load %arg7[%c0_7, %c0_8, %c0_9, %c0_10] : memref<2x18x18x32xbf16, #tpu.memory_space<vmem>>, vector<2x1x18x32xbf16>
    tpu.vector_store %arg7[%c0_7, %c0_8, %c0_9, %c0_10], %8 {strides = array<i32>} : memref<2x18x18x32xbf16, #tpu.memory_space<vmem>>, vector<2x1x18x32xbf16>,
    %c0_11 = arith.constant 0 : index
    %c17 = arith.constant 17 : index
    %c0_12 = arith.constant 0 : index
    %c0_13 = arith.constant 0 : index
    %10 = vector.load %arg7[%c0_11, %c17, %c0_12, %c0_13] : memref<2x18x18x32xbf16, #tpu.memory_space<vmem>>, vector<2x1x18x32xbf16>
    tpu.vector_store %arg7[%c0_11, %c17, %c0_12, %c0_13], %8 {strides = array<i32>} : memref<2x18x18x32xbf16, #tpu.memory_space<vmem>>, vector<2x1x18x32xbf16>,
    %cst_14 = arith.constant 0.000000e+00 : bf16
    %11 = vector.broadcast %cst_14 : bf16 to vector<2x16x1x32xbf16>
    %c0_15 = arith.constant 0 : index
    %c1 = arith.constant 1 : index
    %c0_16 = arith.constant 0 : index
    %c0_17 = arith.constant 0 : index
    %12 = vector.load %arg7[%c0_15, %c1, %c0_16, %c0_17] : memref<2x18x18x32xbf16, #tpu.memory_space<vmem>>, vector<2x16x1x32xbf16>
    tpu.vector_store %arg7[%c0_15, %c1, %c0_16, %c0_17], %11 {strides = array<i32>} : memref<2x18x18x32xbf16, #tpu.memory_space<vmem>>, vector<2x16x1x32xbf16>,
    %c0_18 = arith.constant 0 : index
    %c1_19 = arith.constant 1 : index
    %c17_20 = arith.constant 17 : index
    %c0_21 = arith.constant 0 : index
    %13 = vector.load %arg7[%c0_18, %c1_19, %c17_20, %c0_21] : memref<2x18x18x32xbf16, #tpu.memory_space<vmem>>, vector<2x16x1x32xbf16>
    tpu.vector_store %arg7[%c0_18, %c1_19, %c17_20, %c0_21], %11 {strides = array<i32>} : memref<2x18x18x32xbf16, #tpu.memory_space<vmem>>, vector<2x16x1x32xbf16>,
    %c0_22 = arith.constant 0 : index
    %c0_23 = arith.constant 0 : index
    %c0_24 = arith.constant 0 : index
    %c0_25 = arith.constant 0 : index
    %14 = vector.load %arg4[%c0_22, %c0_23, %c0_24, %c0_25] : memref<2x16x16x32xf32, #tpu.memory_space<vmem>>, vector<2x16x16x32xf32>
    %15 = vector.shape_cast %7 : vector<2x32xf32> to vector<2x1x1x32xf32>
    %16 = vector.broadcast %15 : vector<2x1x1x32xf32> to vector<2x16x16x32xf32>
    %17 = arith.mulf %14, %16 : vector<2x16x16x32xf32>
    %18 = arith.truncf %17 : vector<2x16x16x32xf32> to vector<2x16x16x32xbf16>
    %c0_26 = arith.constant 0 : index
    %c1_27 = arith.constant 1 : index
    %c1_28 = arith.constant 1 : index
    %c0_29 = arith.constant 0 : index
    %19 = vector.load %arg7[%c0_26, %c1_27, %c1_28, %c0_29] : memref<2x18x18x32xbf16, #tpu.memory_space<vmem>>, vector<2x16x16x32xbf16>
    tpu.vector_store %arg7[%c0_26, %c1_27, %c1_28, %c0_29], %18 {strides = array<i32>} : memref<2x18x18x32xbf16, #tpu.memory_space<vmem>>, vector<2x16x16x32xbf16>,
    %c0_30 = arith.constant 0 : index
    %c0_31 = arith.constant 0 : index
    %c0_32 = arith.constant 0 : index
    %c0_33 = arith.constant 0 : index
    %20 = vector.load %arg7[%c0_30, %c0_31, %c0_32, %c0_33] : memref<2x18x18x32xbf16, #tpu.memory_space<vmem>>, vector<2x16x16x32xbf16>
    %21 = vector.shape_cast %20 : vector<2x16x16x32xbf16> to vector<512x32xbf16>
    %c0_34 = arith.constant 0 : index
    %c0_35 = arith.constant 0 : index
    %22 = vector.load %arg8[%c0_34, %c0_35] : memref<512x288xbf16, #tpu.memory_space<vmem>>, vector<512x32xbf16>
    tpu.vector_store %arg8[%c0_34, %c0_35], %21 {strides = array<i32>} : memref<512x288xbf16, #tpu.memory_space<vmem>>, vector<512x32xbf16>,
    %c0_36 = arith.constant 0 : index
    %c0_37 = arith.constant 0 : index
    %c1_38 = arith.constant 1 : index
    %c0_39 = arith.constant 0 : index
    %23 = vector.load %arg7[%c0_36, %c0_37, %c1_38, %c0_39] : memref<2x18x18x32xbf16, #tpu.memory_space<vmem>>, vector<2x16x16x32xbf16>
    %24 = vector.shape_cast %23 : vector<2x16x16x32xbf16> to vector<512x32xbf16>
    %c0_40 = arith.constant 0 : index
    %c32 = arith.constant 32 : index
    %25 = vector.load %arg8[%c0_40, %c32] : memref<512x288xbf16, #tpu.memory_space<vmem>>, vector<512x32xbf16>
    tpu.vector_store %arg8[%c0_40, %c32], %24 {strides = array<i32>} : memref<512x288xbf16, #tpu.memory_space<vmem>>, vector<512x32xbf16>,
    %c0_41 = arith.constant 0 : index
    %c0_42 = arith.constant 0 : index
    %c2 = arith.constant 2 : index
    %c0_43 = arith.constant 0 : index
    %26 = vector.load %arg7[%c0_41, %c0_42, %c2, %c0_43] : memref<2x18x18x32xbf16, #tpu.memory_space<vmem>>, vector<2x16x16x32xbf16>
    %27 = vector.shape_cast %26 : vector<2x16x16x32xbf16> to vector<512x32xbf16>
    %c0_44 = arith.constant 0 : index
    %c64 = arith.constant 64 : index
    %28 = vector.load %arg8[%c0_44, %c64] : memref<512x288xbf16, #tpu.memory_space<vmem>>, vector<512x32xbf16>
    tpu.vector_store %arg8[%c0_44, %c64], %27 {strides = array<i32>} : memref<512x288xbf16, #tpu.memory_space<vmem>>, vector<512x32xbf16>,
    %c0_45 = arith.constant 0 : index
    %c1_46 = arith.constant 1 : index
    %c0_47 = arith.constant 0 : index
    %c0_48 = arith.constant 0 : index
    %29 = vector.load %arg7[%c0_45, %c1_46, %c0_47, %c0_48] : memref<2x18x18x32xbf16, #tpu.memory_space<vmem>>, vector<2x16x16x32xbf16>
    %30 = vector.shape_cast %29 : vector<2x16x16x32xbf16> to vector<512x32xbf16>
    %c0_49 = arith.constant 0 : index
    %c96 = arith.constant 96 : index
    %31 = vector.load %arg8[%c0_49, %c96] : memref<512x288xbf16, #tpu.memory_space<vmem>>, vector<512x32xbf16>
    tpu.vector_store %arg8[%c0_49, %c96], %30 {strides = array<i32>} : memref<512x288xbf16, #tpu.memory_space<vmem>>, vector<512x32xbf16>,
    %c0_50 = arith.constant 0 : index
    %c1_51 = arith.constant 1 : index
    %c1_52 = arith.constant 1 : index
    %c0_53 = arith.constant 0 : index
    %32 = vector.load %arg7[%c0_50, %c1_51, %c1_52, %c0_53] : memref<2x18x18x32xbf16, #tpu.memory_space<vmem>>, vector<2x16x16x32xbf16>
    %33 = vector.shape_cast %32 : vector<2x16x16x32xbf16> to vector<512x32xbf16>
    %c0_54 = arith.constant 0 : index
    %c128 = arith.constant 128 : index
    %34 = vector.load %arg8[%c0_54, %c128] : memref<512x288xbf16, #tpu.memory_space<vmem>>, vector<512x32xbf16>
    tpu.vector_store %arg8[%c0_54, %c128], %33 {strides = array<i32>} : memref<512x288xbf16, #tpu.memory_space<vmem>>, vector<512x32xbf16>,
    %c0_55 = arith.constant 0 : index
    %c1_56 = arith.constant 1 : index
    %c2_57 = arith.constant 2 : index
    %c0_58 = arith.constant 0 : index
    %35 = vector.load %arg7[%c0_55, %c1_56, %c2_57, %c0_58] : memref<2x18x18x32xbf16, #tpu.memory_space<vmem>>, vector<2x16x16x32xbf16>
    %36 = vector.shape_cast %35 : vector<2x16x16x32xbf16> to vector<512x32xbf16>
    %c0_59 = arith.constant 0 : index
    %c160 = arith.constant 160 : index
    %37 = vector.load %arg8[%c0_59, %c160] : memref<512x288xbf16, #tpu.memory_space<vmem>>, vector<512x32xbf16>
    tpu.vector_store %arg8[%c0_59, %c160], %36 {strides = array<i32>} : memref<512x288xbf16, #tpu.memory_space<vmem>>, vector<512x32xbf16>,
    %c0_60 = arith.constant 0 : index
    %c2_61 = arith.constant 2 : index
    %c0_62 = arith.constant 0 : index
    %c0_63 = arith.constant 0 : index
    %38 = vector.load %arg7[%c0_60, %c2_61, %c0_62, %c0_63] : memref<2x18x18x32xbf16, #tpu.memory_space<vmem>>, vector<2x16x16x32xbf16>
    %39 = vector.shape_cast %38 : vector<2x16x16x32xbf16> to vector<512x32xbf16>
    %c0_64 = arith.constant 0 : index
    %c192 = arith.constant 192 : index
    %40 = vector.load %arg8[%c0_64, %c192] : memref<512x288xbf16, #tpu.memory_space<vmem>>, vector<512x32xbf16>
    tpu.vector_store %arg8[%c0_64, %c192], %39 {strides = array<i32>} : memref<512x288xbf16, #tpu.memory_space<vmem>>, vector<512x32xbf16>,
    %c0_65 = arith.constant 0 : index
    %c2_66 = arith.constant 2 : index
    %c1_67 = arith.constant 1 : index
    %c0_68 = arith.constant 0 : index
    %41 = vector.load %arg7[%c0_65, %c2_66, %c1_67, %c0_68] : memref<2x18x18x32xbf16, #tpu.memory_space<vmem>>, vector<2x16x16x32xbf16>
    %42 = vector.shape_cast %41 : vector<2x16x16x32xbf16> to vector<512x32xbf16>
    %c0_69 = arith.constant 0 : index
    %c224 = arith.constant 224 : index
    %43 = vector.load %arg8[%c0_69, %c224] : memref<512x288xbf16, #tpu.memory_space<vmem>>, vector<512x32xbf16>
    tpu.vector_store %arg8[%c0_69, %c224], %42 {strides = array<i32>} : memref<512x288xbf16, #tpu.memory_space<vmem>>, vector<512x32xbf16>,
    %c0_70 = arith.constant 0 : index
    %c2_71 = arith.constant 2 : index
    %c2_72 = arith.constant 2 : index
    %c0_73 = arith.constant 0 : index
    %44 = vector.load %arg7[%c0_70, %c2_71, %c2_72, %c0_73] : memref<2x18x18x32xbf16, #tpu.memory_space<vmem>>, vector<2x16x16x32xbf16>
    %45 = vector.shape_cast %44 : vector<2x16x16x32xbf16> to vector<512x32xbf16>
    %c0_74 = arith.constant 0 : index
    %c256 = arith.constant 256 : index
    %46 = vector.load %arg8[%c0_74, %c256] : memref<512x288xbf16, #tpu.memory_space<vmem>>, vector<512x32xbf16>
    tpu.vector_store %arg8[%c0_74, %c256], %45 {strides = array<i32>} : memref<512x288xbf16, #tpu.memory_space<vmem>>, vector<512x32xbf16>,
    %c0_75 = arith.constant 0 : index
    %c0_76 = arith.constant 0 : index
    %47 = vector.load %arg8[%c0_75, %c0_76] : memref<512x288xbf16, #tpu.memory_space<vmem>>, vector<512x288xbf16>
    %c0_77 = arith.constant 0 : index
    %c0_78 = arith.constant 0 : index
    %48 = vector.load %arg5[%c0_77, %c0_78] : memref<288x128xbf16, #tpu.memory_space<vmem>>, vector<288x128xbf16>
    %cst_79 = arith.constant dense<0.000000e+00> : vector<512x128xf32>
    %49 = tpu.matmul %47, %48, %cst_79 {dimension_numbers = #tpu.dot_dimension_numbers<[1], [0], [0], [1], [0, 0, 1, 1], [], []>} : vector<512x288xbf16>, vector<288x128xbf16>, vector<512x128xf32> -> vector<512x128xf32>
    %c0_80 = arith.constant 0 : index
    %c0_81 = arith.constant 0 : index
    %50 = vector.load %arg6[%c0_80, %c0_81] : memref<512x128xf32, #tpu.memory_space<vmem>>, vector<512x128xf32>
    tpu.vector_store %arg6[%c0_80, %c0_81], %49 {strides = array<i32>} : memref<512x128xf32, #tpu.memory_space<vmem>>, vector<512x128xf32>,
    return
  }
  func.func @transform_0(%arg0: i32) -> (i32, i32) {
    %c0_i32 = arith.constant 0 : i32
    %c0_i32_0 = arith.constant 0 : i32
    %c0_i32_1 = arith.constant 0 : i32
    return %c0_i32, %c0_i32_0 : i32, i32
  }
  func.func @transform_1(%arg0: i32) -> (i32, i32) {
    %c0_i32 = arith.constant 0 : i32
    %c0_i32_0 = arith.constant 0 : i32
    %c0_i32_1 = arith.constant 0 : i32
    return %c0_i32, %c0_i32_0 : i32, i32
  }
  func.func @transform_2(%arg0: i32) -> (i32, i32) {
    %c0_i32 = arith.constant 0 : i32
    %c0_i32_0 = arith.constant 0 : i32
    %c0_i32_1 = arith.constant 0 : i32
    return %c0_i32, %c0_i32_0 : i32, i32
  }
  func.func @transform_3(%arg0: i32) -> (i32, i32, i32, i32) {
    %c0_i32 = arith.constant 0 : i32
    %c0_i32_0 = arith.constant 0 : i32
    %c0_i32_1 = arith.constant 0 : i32
    %c0_i32_2 = arith.constant 0 : i32
    %c0_i32_3 = arith.constant 0 : i32
    return %c0_i32, %c0_i32_0, %c0_i32_1, %c0_i32_2 : i32, i32, i32, i32
  }
  func.func @transform_4(%arg0: i32) -> (i32, i32) {
    %c0_i32 = arith.constant 0 : i32
    %c0_i32_0 = arith.constant 0 : i32
    %c0_i32_1 = arith.constant 0 : i32
    return %c0_i32, %c0_i32_0 : i32, i32
  }
  func.func @transform_5(%arg0: i32) -> (i32, i32) {
    %c0_i32 = arith.constant 0 : i32
    %c0_i32_0 = arith.constant 0 : i32
    %c0_i32_1 = arith.constant 0 : i32
    return %c0_i32, %c0_i32_0 : i32, i32
  }
}

</mosaic_0001>

<llo_original>
// kernel: wnconv2d_forward.1
$region0: #{wnconv2d_forward.1}
  #allocation0 [shape = 'u32[]', space=smem, size = 0x4, offset = 0x4, fixed_abs, tag = 'smem constant byte address 0x4 - core index']
  #allocation1 [shape = 'u32[144,128]{1,0:T(1,128)}', space=vmem, size = 0x12000, scoped, tag = 'internal scratch']
  #allocation2 [shape = 'bf16[2,18,18,32]{3,2,1,0:T(8,128)(2,1)}', space=vmem, size = 0x36000, scoped, tag = 'scratch operand']
  #allocation3 [shape = 'bf16[512,288]{1,0:T(16,128)(2,1)}', space=vmem, size = 0x60000, scoped, tag = 'scratch operand']
  %s0 = inlined_call_operand.vmem [shape: f32[2,8], index: 0, kind: input, shape index: {}]
  %s1 = inlined_call_operand.vmem [shape: f32[8,32], index: 1, kind: input, shape index: {}]
  %s2 = inlined_call_operand.vmem [shape: f32[1,32], index: 2, kind: input, shape index: {}]
  %s3 = inlined_call_operand.hbm [shape: f32[2,16,16,32], index: 3, kind: input, shape index: {}]
  %s4 = inlined_call_operand.vmem [shape: bf16[288,128], index: 4, kind: input, shape index: {}]
  %s5 = inlined_call_operand.hbm [shape: f32[512,128], index: 5, kind: output, shape index: {}]
  %s6 = sld [smem:[#allocation0]]
  $region34: #{wnconv2d_forward.1} parent=0
    _
  %s8 = ssub.s32 1, %s6
  %s9 = scalar_select 0, %s8, %s6
  $region1: #{wnconv2d_forward.1} parent=0
    #allocation4 [shape = 'u8[262144]{0}', space=vmem, size = 0x40000, scoped, tag = 'input window, operand 3, single buffered']
    #allocation5 [shape = 's32[1]{0}', space=sflag, size = 0x4, scoped, tag = 'scoped memory for wnconv2d_forward.1']
    #allocation6 [shape = 's32[1]{0}', space=sflag, size = 0x4, scoped, tag = 'scoped memory for wnconv2d_forward.1']
    #allocation7 [shape = 'u8[262144]{0}', space=vmem, size = 0x40000, scoped, tag = 'output window, operand 0, single buffered']
    %10 = vsyncpa [#allocation5], 0
    %11 = vsyncpa [#allocation6], 0
    // Predicated region
    $region2: #{wnconv2d_forward.1} parent=1 // pred_check
      _
    $region3: #{wnconv2d_forward.1} parent=1 // pred_check_branch
      %13 = sbr.rel (0) target = $region5
    $region4: #{wnconv2d_forward.1} parent=1 // pred_region
      _
    $region5: #{wnconv2d_forward.1} parent=1 // pred_fallthru
      _
    // Predicated region
    $region6: #{wnconv2d_forward.1} parent=1 // pred_check
      _
    $region7: #{wnconv2d_forward.1} parent=1 // pred_check_branch
      %15 = sbr.rel (0) target = $region9
    $region8: #{wnconv2d_forward.1} parent=1 // pred_region
      _
    $region9: #{wnconv2d_forward.1} parent=1 // pred_fallthru
      _
    // Predicated region
    $region10: #{wnconv2d_forward.1} parent=1 // pred_check
      _
    $region11: #{wnconv2d_forward.1} parent=1 // pred_check_branch
      %17 = sbr.rel (0) target = $region13
    $region12: #{wnconv2d_forward.1} parent=1 // pred_region
      _
    $region13: #{wnconv2d_forward.1} parent=1 // pred_fallthru
      _
    // Predicated region
    $region14: #{wnconv2d_forward.1} parent=1 // pred_check
      _
    $region15: #{wnconv2d_forward.1} parent=1 // pred_check_branch
      %19 = sbr.rel (0) target = $region17
    $region16: #{wnconv2d_forward.1} parent=1 // pred_region
      %s21 = ssub.s32 8192, 8192
      %22 = vsyncadd [#allocation5], %s21
      %s23 = sshll.u32 [#allocation4], 4
      %s24 = int_to_ptr.vmem [resolvable:$true] %s23
      %29 = dma.hbm_to_vmem [thread:$0]  %s3, 8192, %s24, [#allocation5], 128, 128, 8
    $region17: #{wnconv2d_forward.1} parent=1 // pred_fallthru
      _
    // Predicated region
    $region18: #{wnconv2d_forward.1} parent=1 // pred_check
      _
    $region19: #{wnconv2d_forward.1} parent=1 // pred_check_branch
      %31 = sbr.rel (0) target = $region21
    $region20: #{wnconv2d_forward.1} parent=1 // pred_region
      _
    $region21: #{wnconv2d_forward.1} parent=1 // pred_fallthru
      _
    // Predicated region
    $region22: #{wnconv2d_forward.1} parent=1 // pred_check
      _
    $region23: #{wnconv2d_forward.1} parent=1 // pred_check_branch
      %33 = sbr.rel (0) target = $region25
    $region24: #{wnconv2d_forward.1} parent=1 // pred_region
      %34 = dma.done [#allocation5], 8192
    $region25: #{wnconv2d_forward.1} parent=1 // pred_fallthru
      _
    %v36 = vld [vmem:[%s0] sm:$0x3]
    %v37 = vld [vmem:[%s1] sm:$0xff]
    %v38 = vld [vmem:[%s2] sm:$0x1]
    %v40 = vlaneseq
    %v41 = vshrl.u32 %v40, 7
    %v42 = vsub.s32 0, %v41
    %v43 = vrot.slane %v38, %v42
    %vm45 = vcmask 64512
    %v47 = vsel %vm45, %v36, 0
    %49 = vmatprep.subr.mxu0 0.0
    %50 = vmatpush1.msra.mxu0 %v37
    %51 = vmatprep.subr.mxu0 0.0
    %52 = vmatpush1.msra.mxu0 0.0
    %53 = vmatprep.subr.mxu0 0.0
    %54 = vmatpush1.msra.mxu0 0.0
    %55 = vmatprep.subr.mxu0 0.0
    %56 = vmatpush1.msra.mxu0 0.0
    %57 = vmatprep.subr.mxu0 0.0
    %58 = vmatpush1.msra.mxu0 0.0
    %59 = vmatprep.subr.mxu0 0.0
    %60 = vmatpush1.msra.mxu0 0.0
    %61 = vmatprep.subr.mxu0 0.0
    %62 = vmatpush1.msra.mxu0 0.0
    %63 = vmatprep.subr.mxu0 0.0
    %64 = vmatpush1.msra.mxu0 0.0
    %65 = vmatprep.subr.mxu0 0.0
    %66 = vmatpush1.msra.mxu0 0.0
    %67 = vmatprep.subr.mxu0 0.0
    %68 = vmatpush1.msra.mxu0 0.0
    %69 = vmatprep.subr.mxu0 0.0
    %70 = vmatpush1.msra.mxu0 0.0
    %71 = vmatprep.subr.mxu0 0.0
    %72 = vmatpush1.msra.mxu0 0.0
    %73 = vmatprep.subr.mxu0 0.0
    %74 = vmatpush1.msra.mxu0 0.0
    %75 = vmatprep.subr.mxu0 0.0
    %76 = vmatpush1.msra.mxu0 0.0
    %77 = vmatprep.subr.mxu0 0.0
    %78 = vmatpush1.msra.mxu0 0.0
    %79 = vmatprep.subr.mxu0 0.0
    %80 = vmatpush1.msra.mxu0 0.0
    %81 = vmatprep.subr.mxu0 0.0
    %82 = vmatpush1.msra.mxu0 0.0
    %83 = vmatprep.subr.mxu0 0.0
    %84 = vmatpush1.msra.mxu0 0.0
    %85 = vmatprep.subr.mxu0 0.0
    %86 = vmatpush1.msra.mxu0 0.0
    %87 = vmatprep.subr.mxu0 0.0
    %88 = vmatpush1.msra.mxu0 0.0
    %89 = vmatprep.subr.mxu0 0.0
    %90 = vmatpush1.msra.mxu0 0.0
    %91 = vmatprep.subr.mxu0 0.0
    %92 = vmatpush1.msra.mxu0 0.0
    %93 = vmatprep.subr.mxu0 0.0
    %94 = vmatpush1.msra.mxu0 0.0
    %95 = vmatprep.subr.mxu0 0.0
    %96 = vmatpush1.msra.mxu0 0.0
    %97 = vmatprep.subr.mxu0 0.0
    %98 = vmatpush1.msra.mxu0 0.0
    %99 = vmatprep.subr.mxu0 0.0
    %100 = vmatpush1.msra.mxu0 0.0
    %101 = vmatprep.subr.mxu0 0.0
    %102 = vmatpush1.msra.mxu0 0.0
    %103 = vmatprep.subr.mxu0 0.0
    %104 = vmatpush1.msra.mxu0 0.0
    %105 = vmatprep.subr.mxu0 0.0
    %106 = vmatpush1.msra.mxu0 0.0
    %107 = vmatprep.subr.mxu0 0.0
    %108 = vmatpush1.msra.mxu0 0.0
    %109 = vmatprep.subr.mxu0 0.0
    %110 = vmatpush1.msra.mxu0 0.0
    %111 = vmatprep.subr.mxu0 0.0
    %112 = vmatpush1.msra.mxu0 0.0
    %113 = vmatprep.mubr.f32.mxu0 0.0
    %114 = vmatmul.mubr.f32.gmra.mrb[0].mxu0 %v47
    %v115 = vpop.f32.mrb[0].mxu0
    %v116 = vadd.f32 %v43, %v115
    %v117 = vpop.f32.mrb[0].mxu0
    %118 = vdwg.mxu0
    %v119 = vmul.f32 %v116, 0.058925565
    %vm120 = vcmask 257024
    %121 = vst.msk [vmem:[#allocation2] sm:$0xf] %vm120, 0
    %122 = vst.msk [vmem:[#allocation2 + $0x4] sm:$0xf] %vm120, 0
    %vm123 = vcmask 253952
    %124 = vst.msk [vmem:[#allocation2 + $0x8] sm:$0x1] %vm123, 0
    %125 = vst.msk [vmem:[#allocation2 + $0xd8] sm:$0xf] %vm120, 0
    %126 = vst.msk [vmem:[#allocation2 + $0xdc] sm:$0xf] %vm120, 0
    %127 = vst.msk [vmem:[#allocation2 + $0xe0] sm:$0x1] %vm123, 0
    %s128 = scalar_lea.vmem [#allocation2], 204
    %129 = vst.msk [vmem:[%s128] sm:$0xf] %vm120, 0
    %130 = vst.msk [vmem:[%s128 + $0x4] sm:$0xf] %vm120, 0
    %131 = vst.msk [vmem:[%s128 + $0x8] sm:$0x1] %vm123, 0
    %132 = vst.msk [vmem:[%s128 + $0xd8] sm:$0xf] %vm120, 0
    %133 = vst.msk [vmem:[%s128 + $0xdc] sm:$0xf] %vm120, 0
    %134 = vst.msk [vmem:[%s128 + $0xe0] sm:$0x1] %vm123, 0
    %s135 = scalar_lea.vmem [#allocation2], 12
    %vm136 = vcmask 253952
    %vm137 = vsmask.f32 256
    %vm138 = vmand %vm136, %vm137
    %v139 = vld [vmem:[%s135] sm:$0x1]
    %v140 = vsel %vm138, 0, %v139
    %141 = vst [vmem:[%s135] sm:$0x1] %v140
    %v142 = vld [vmem:[%s135 + $0xc] sm:$0x1]
    %v143 = vsel %vm138, 0, %v142
    %144 = vst [vmem:[%s135 + $0xc] sm:$0x1] %v143
    %v145 = vld [vmem:[%s135 + $0x18] sm:$0x1]
    %v146 = vsel %vm138, 0, %v145
    %147 = vst [vmem:[%s135 + $0x18] sm:$0x1] %v146
    %v148 = vld [vmem:[%s135 + $0x24] sm:$0x1]
    %v149 = vsel %vm138, 0, %v148
    %150 = vst [vmem:[%s135 + $0x24] sm:$0x1] %v149
    %v151 = vld [vmem:[%s135 + $0x30] sm:$0x1]
    %v152 = vsel %vm138, 0, %v151
    %153 = vst [vmem:[%s135 + $0x30] sm:$0x1] %v152
    %v154 = vld [vmem:[%s135 + $0x3c] sm:$0x1]
    %v155 = vsel %vm138, 0, %v154
    %156 = vst [vmem:[%s135 + $0x3c] sm:$0x1] %v155
    %v157 = vld [vmem:[%s135 + $0x48] sm:$0x1]
    %v158 = vsel %vm138, 0, %v157
    %159 = vst [vmem:[%s135 + $0x48] sm:$0x1] %v158
    %v160 = vld [vmem:[%s135 + $0x54] sm:$0x1]
    %v161 = vsel %vm138, 0, %v160
    %162 = vst [vmem:[%s135 + $0x54] sm:$0x1] %v161
    %v163 = vld [vmem:[%s135 + $0x60] sm:$0x1]
    %v164 = vsel %vm138, 0, %v163
    %165 = vst [vmem:[%s135 + $0x60] sm:$0x1] %v164
    %v166 = vld [vmem:[%s135 + $0x6c] sm:$0x1]
    %v167 = vsel %vm138, 0, %v166
    %168 = vst [vmem:[%s135 + $0x6c] sm:$0x1] %v167
    %v169 = vld [vmem:[%s135 + $0x78] sm:$0x1]
    %v170 = vsel %vm138, 0, %v169
    %171 = vst [vmem:[%s135 + $0x78] sm:$0x1] %v170
    %v172 = vld [vmem:[%s135 + $0x84] sm:$0x1]
    %v173 = vsel %vm138, 0, %v172
    %174 = vst [vmem:[%s135 + $0x84] sm:$0x1] %v173
    %v175 = vld [vmem:[%s135 + $0x90] sm:$0x1]
    %v176 = vsel %vm138, 0, %v175
    %177 = vst [vmem:[%s135 + $0x90] sm:$0x1] %v176
    %v178 = vld [vmem:[%s135 + $0x9c] sm:$0x1]
    %v179 = vsel %vm138, 0, %v178
    %180 = vst [vmem:[%s135 + $0x9c] sm:$0x1] %v179
    %v181 = vld [vmem:[%s135 + $0xa8] sm:$0x1]
    %v182 = vsel %vm138, 0, %v181
    %183 = vst [vmem:[%s135 + $0xa8] sm:$0x1] %v182
    %v184 = vld [vmem:[%s135 + $0xb4] sm:$0x1]
    %v185 = vsel %vm138, 0, %v184
    %186 = vst [vmem:[%s135 + $0xb4] sm:$0x1] %v185
    %v187 = vld [vmem:[%s135 + $0xd8] sm:$0x1]
    %v188 = vsel %vm138, 0, %v187
    %189 = vst [vmem:[%s135 + $0xd8] sm:$0x1] %v188
    %v190 = vld [vmem:[%s135 + $0xe4] sm:$0x1]
    %v191 = vsel %vm138, 0, %v190
    %192 = vst [vmem:[%s135 + $0xe4] sm:$0x1] %v191
    %v193 = vld [vmem:[%s135 + $0xf0] sm:$0x1]
    %v194 = vsel %vm138, 0, %v193
    %195 = vst [vmem:[%s135 + $0xf0] sm:$0x1] %v194
    %v196 = vld [vmem:[%s135 + $0xfc] sm:$0x1]
    %v197 = vsel %vm138, 0, %v196
    %198 = vst [vmem:[%s135 + $0xfc] sm:$0x1] %v197
    %v199 = vld [vmem:[%s135 + $0x108] sm:$0x1]
    %v200 = vsel %vm138, 0, %v199
    %201 = vst [vmem:[%s135 + $0x108] sm:$0x1] %v200
    %v202 = vld [vmem:[%s135 + $0x114] sm:$0x1]
    %v203 = vsel %vm138, 0, %v202
    %204 = vst [vmem:[%s135 + $0x114] sm:$0x1] %v203
    %v205 = vld [vmem:[%s135 + $0x120] sm:$0x1]
    %v206 = vsel %vm138, 0, %v205
    %207 = vst [vmem:[%s135 + $0x120] sm:$0x1] %v206
    %v208 = vld [vmem:[%s135 + $0x12c] sm:$0x1]
    %v209 = vsel %vm138, 0, %v208
    %210 = vst [vmem:[%s135 + $0x12c] sm:$0x1] %v209
    %v211 = vld [vmem:[%s135 + $0x138] sm:$0x1]
    %v212 = vsel %vm138, 0, %v211
    %213 = vst [vmem:[%s135 + $0x138] sm:$0x1] %v212
    %v214 = vld [vmem:[%s135 + $0x144] sm:$0x1]
    %v215 = vsel %vm138, 0, %v214
    %216 = vst [vmem:[%s135 + $0x144] sm:$0x1] %v215
    %v217 = vld [vmem:[%s135 + $0x150] sm:$0x1]
    %v218 = vsel %vm138, 0, %v217
    %219 = vst [vmem:[%s135 + $0x150] sm:$0x1] %v218
    %v220 = vld [vmem:[%s135 + $0x15c] sm:$0x1]
    %v221 = vsel %vm138, 0, %v220
    %222 = vst [vmem:[%s135 + $0x15c] sm:$0x1] %v221
    %v223 = vld [vmem:[%s135 + $0x168] sm:$0x1]
    %v224 = vsel %vm138, 0, %v223
    %225 = vst [vmem:[%s135 + $0x168] sm:$0x1] %v224
    %v226 = vld [vmem:[%s135 + $0x174] sm:$0x1]
    %v227 = vsel %vm138, 0, %v226
    %228 = vst [vmem:[%s135 + $0x174] sm:$0x1] %v227
    %v229 = vld [vmem:[%s135 + $0x180] sm:$0x1]
    %v230 = vsel %vm138, 0, %v229
    %231 = vst [vmem:[%s135 + $0x180] sm:$0x1] %v230
    %v232 = vld [vmem:[%s135 + $0x18c] sm:$0x1]
    %v233 = vsel %vm138, 0, %v232
    %234 = vst [vmem:[%s135 + $0x18c] sm:$0x1] %v233
    %vm235 = vsmask.f32 7938
    %vm236 = vmand %vm136, %vm235
    %v237 = vld [vmem:[%s135 + $0x8] sm:$0x1]
    %v238 = vsel %vm236, 0, %v237
    %239 = vst [vmem:[%s135 + $0x8] sm:$0x1] %v238
    %v240 = vld [vmem:[%s135 + $0x14] sm:$0x1]
    %v241 = vsel %vm236, 0, %v240
    %242 = vst [vmem:[%s135 + $0x14] sm:$0x1] %v241
    %v243 = vld [vmem:[%s135 + $0x20] sm:$0x1]
    %v244 = vsel %vm236, 0, %v243
    %245 = vst [vmem:[%s135 + $0x20] sm:$0x1] %v244
    %v246 = vld [vmem:[%s135 + $0x2c] sm:$0x1]
    %v247 = vsel %vm236, 0, %v246
    %248 = vst [vmem:[%s135 + $0x2c] sm:$0x1] %v247
    %v249 = vld [vmem:[%s135 + $0x38] sm:$0x1]
    %v250 = vsel %vm236, 0, %v249
    %251 = vst [vmem:[%s135 + $0x38] sm:$0x1] %v250
    %v252 = vld [vmem:[%s135 + $0x44] sm:$0x1]
    %v253 = vsel %vm236, 0, %v252
    %254 = vst [vmem:[%s135 + $0x44] sm:$0x1] %v253
    %v255 = vld [vmem:[%s135 + $0x50] sm:$0x1]
    %v256 = vsel %vm236, 0, %v255
    %257 = vst [vmem:[%s135 + $0x50] sm:$0x1] %v256
    %v258 = vld [vmem:[%s135 + $0x5c] sm:$0x1]
    %v259 = vsel %vm236, 0, %v258
    %260 = vst [vmem:[%s135 + $0x5c] sm:$0x1] %v259
    %v261 = vld [vmem:[%s135 + $0x68] sm:$0x1]
    %v262 = vsel %vm236, 0, %v261
    %263 = vst [vmem:[%s135 + $0x68] sm:$0x1] %v262
    %v264 = vld [vmem:[%s135 + $0x74] sm:$0x1]
    %v265 = vsel %vm236, 0, %v264
    %266 = vst [vmem:[%s135 + $0x74] sm:$0x1] %v265
    %v267 = vld [vmem:[%s135 + $0x80] sm:$0x1]
    %v268 = vsel %vm236, 0, %v267
    %269 = vst [vmem:[%s135 + $0x80] sm:$0x1] %v268
    %v270 = vld [vmem:[%s135 + $0x8c] sm:$0x1]
    %v271 = vsel %vm236, 0, %v270
    %272 = vst [vmem:[%s135 + $0x8c] sm:$0x1] %v271
    %v273 = vld [vmem:[%s135 + $0x98] sm:$0x1]
    %v274 = vsel %vm236, 0, %v273
    %275 = vst [vmem:[%s135 + $0x98] sm:$0x1] %v274
    %v276 = vld [vmem:[%s135 + $0xa4] sm:$0x1]
    %v277 = vsel %vm236, 0, %v276
    %278 = vst [vmem:[%s135 + $0xa4] sm:$0x1] %v277
    %v279 = vld [vmem:[%s135 + $0xb0] sm:$0x1]
    %v280 = vsel %vm236, 0, %v279
    %281 = vst [vmem:[%s135 + $0xb0] sm:$0x1] %v280
    %v282 = vld [vmem:[%s135 + $0xbc] sm:$0x1]
    %v283 = vsel %vm236, 0, %v282
    %284 = vst [vmem:[%s135 + $0xbc] sm:$0x1] %v283
    %v285 = vld [vmem:[%s135 + $0xe0] sm:$0x1]
    %v286 = vsel %vm236, 0, %v285
    %287 = vst [vmem:[%s135 + $0xe0] sm:$0x1] %v286
    %v288 = vld [vmem:[%s135 + $0xec] sm:$0x1]
    %v289 = vsel %vm236, 0, %v288
    %290 = vst [vmem:[%s135 + $0xec] sm:$0x1] %v289
    %v291 = vld [vmem:[%s135 + $0xf8] sm:$0x1]
    %v292 = vsel %vm236, 0, %v291
    %293 = vst [vmem:[%s135 + $0xf8] sm:$0x1] %v292
    %v294 = vld [vmem:[%s135 + $0x104] sm:$0x1]
    %v295 = vsel %vm236, 0, %v294
    %296 = vst [vmem:[%s135 + $0x104] sm:$0x1] %v295
    %v297 = vld [vmem:[%s135 + $0x110] sm:$0x1]
    %v298 = vsel %vm236, 0, %v297
    %299 = vst [vmem:[%s135 + $0x110] sm:$0x1] %v298
    %v300 = vld [vmem:[%s135 + $0x11c] sm:$0x1]
    %v301 = vsel %vm236, 0, %v300
    %302 = vst [vmem:[%s135 + $0x11c] sm:$0x1] %v301
    %v303 = vld [vmem:[%s135 + $0x128] sm:$0x1]
    %v304 = vsel %vm236, 0, %v303
    %305 = vst [vmem:[%s135 + $0x128] sm:$0x1] %v304
    %v306 = vld [vmem:[%s135 + $0x134] sm:$0x1]
    %v307 = vsel %vm236, 0, %v306
    %308 = vst [vmem:[%s135 + $0x134] sm:$0x1] %v307
    %v309 = vld [vmem:[%s135 + $0x140] sm:$0x1]
    %v310 = vsel %vm236, 0, %v309
    %311 = vst [vmem:[%s135 + $0x140] sm:$0x1] %v310
    %v312 = vld [vmem:[%s135 + $0x14c] sm:$0x1]
    %v313 = vsel %vm236, 0, %v312
    %314 = vst [vmem:[%s135 + $0x14c] sm:$0x1] %v313
    %v315 = vld [vmem:[%s135 + $0x158] sm:$0x1]
    %v316 = vsel %vm236, 0, %v315
    %317 = vst [vmem:[%s135 + $0x158] sm:$0x1] %v316
    %v318 = vld [vmem:[%s135 + $0x164] sm:$0x1]
    %v319 = vsel %vm236, 0, %v318
    %320 = vst [vmem:[%s135 + $0x164] sm:$0x1] %v319
    %v321 = vld [vmem:[%s135 + $0x170] sm:$0x1]
    %v322 = vsel %vm236, 0, %v321
    %323 = vst [vmem:[%s135 + $0x170] sm:$0x1] %v322
    %v324 = vld [vmem:[%s135 + $0x17c] sm:$0x1]
    %v325 = vsel %vm236, 0, %v324
    %326 = vst [vmem:[%s135 + $0x17c] sm:$0x1] %v325
    %v327 = vld [vmem:[%s135 + $0x188] sm:$0x1]
    %v328 = vsel %vm236, 0, %v327
    %329 = vst [vmem:[%s135 + $0x188] sm:$0x1] %v328
    %v330 = vld [vmem:[%s135 + $0x194] sm:$0x1]
    %v331 = vsel %vm236, 0, %v330
    %332 = vst [vmem:[%s135 + $0x194] sm:$0x1] %v331
    %v333 = vld [vmem:[#allocation4] sm:$0xff]
    %v334 = vld [vmem:[#allocation4 + $0x8] sm:$0xff]
    %v335 = vld [vmem:[#allocation4 + $0x10] sm:$0xff]
    %v336 = vld [vmem:[#allocation4 + $0x18] sm:$0xff]
    %v337 = vld [vmem:[#allocation4 + $0x20] sm:$0xff]
    %v338 = vld [vmem:[#allocation4 + $0x28] sm:$0xff]
    %v339 = vld [vmem:[#allocation4 + $0x30] sm:$0xff]
    %v340 = vld [vmem:[#allocation4 + $0x38] sm:$0xff]
    %v341 = vld [vmem:[#allocation4 + $0x40] sm:$0xff]
    %v342 = vld [vmem:[#allocation4 + $0x48] sm:$0xff]
    %v343 = vld [vmem:[#allocation4 + $0x50] sm:$0xff]
    %v344 = vld [vmem:[#allocation4 + $0x58] sm:$0xff]
    %v345 = vld [vmem:[#allocation4 + $0x60] sm:$0xff]
    %v346 = vld [vmem:[#allocation4 + $0x68] sm:$0xff]
    %v347 = vld [vmem:[#allocation4 + $0x70] sm:$0xff]
    %v348 = vld [vmem:[#allocation4 + $0x78] sm:$0xff]
    %v349 = vld [vmem:[#allocation4 + $0x80] sm:$0xff]
    %v350 = vld [vmem:[#allocation4 + $0x88] sm:$0xff]
    %v351 = vld [vmem:[#allocation4 + $0x90] sm:$0xff]
    %v352 = vld [vmem:[#allocation4 + $0x98] sm:$0xff]
    %v353 = vld [vmem:[#allocation4 + $0xa0] sm:$0xff]
    %v354 = vld [vmem:[#allocation4 + $0xa8] sm:$0xff]
    %v355 = vld [vmem:[#allocation4 + $0xb0] sm:$0xff]
    %v356 = vld [vmem:[#allocation4 + $0xb8] sm:$0xff]
    %v357 = vld [vmem:[#allocation4 + $0xc0] sm:$0xff]
    %v358 = vld [vmem:[#allocation4 + $0xc8] sm:$0xff]
    %v359 = vld [vmem:[#allocation4 + $0xd0] sm:$0xff]
    %v360 = vld [vmem:[#allocation4 + $0xd8] sm:$0xff]
    %v361 = vld [vmem:[#allocation4 + $0xe0] sm:$0xff]
    %v362 = vld [vmem:[#allocation4 + $0xe8] sm:$0xff]
    %v363 = vld [vmem:[#allocation4 + $0xf0] sm:$0xff]
    %v364 = vld [vmem:[#allocation4 + $0xf8] sm:$0xff]
    %v365 = vld [vmem:[#allocation4 + $0x100] sm:$0xff]
    %v366 = vld [vmem:[#allocation4 + $0x108] sm:$0xff]
    %v367 = vld [vmem:[#allocation4 + $0x110] sm:$0xff]
    %v368 = vld [vmem:[#allocation4 + $0x118] sm:$0xff]
    %v369 = vld [vmem:[#allocation4 + $0x120] sm:$0xff]
    %v370 = vld [vmem:[#allocation4 + $0x128] sm:$0xff]
    %v371 = vld [vmem:[#allocation4 + $0x130] sm:$0xff]
    %v372 = vld [vmem:[#allocation4 + $0x138] sm:$0xff]
    %v373 = vld [vmem:[#allocation4 + $0x140] sm:$0xff]
    %v374 = vld [vmem:[#allocation4 + $0x148] sm:$0xff]
    %v375 = vld [vmem:[#allocation4 + $0x150] sm:$0xff]
    %v376 = vld [vmem:[#allocation4 + $0x158] sm:$0xff]
    %v377 = vld [vmem:[#allocation4 + $0x160] sm:$0xff]
    %v378 = vld [vmem:[#allocation4 + $0x168] sm:$0xff]
    %v379 = vld [vmem:[#allocation4 + $0x170] sm:$0xff]
    %v380 = vld [vmem:[#allocation4 + $0x178] sm:$0xff]
    %v381 = vld [vmem:[#allocation4 + $0x180] sm:$0xff]
    %v382 = vld [vmem:[#allocation4 + $0x188] sm:$0xff]
    %v383 = vld [vmem:[#allocation4 + $0x190] sm:$0xff]
    %v384 = vld [vmem:[#allocation4 + $0x198] sm:$0xff]
    %v385 = vld [vmem:[#allocation4 + $0x1a0] sm:$0xff]
    %v386 = vld [vmem:[#allocation4 + $0x1a8] sm:$0xff]
    %v387 = vld [vmem:[#allocation4 + $0x1b0] sm:$0xff]
    %v388 = vld [vmem:[#allocation4 + $0x1b8] sm:$0xff]
    %v389 = vld [vmem:[#allocation4 + $0x1c0] sm:$0xff]
    %v390 = vld [vmem:[#allocation4 + $0x1c8] sm:$0xff]
    %v391 = vld [vmem:[#allocation4 + $0x1d0] sm:$0xff]
    %v392 = vld [vmem:[#allocation4 + $0x1d8] sm:$0xff]
    %v393 = vld [vmem:[#allocation4 + $0x1e0] sm:$0xff]
    %v394 = vld [vmem:[#allocation4 + $0x1e8] sm:$0xff]
    %v395 = vld [vmem:[#allocation4 + $0x1f0] sm:$0xff]
    %v396 = vld [vmem:[#allocation4 + $0x1f8] sm:$0xff]
    %v399 = vunpack.c.l.s4 1966171168
    %v400 = vunpack.c.0.s8 %v399
    %v401 = vlaneseq
    %v402 = vshrl.u32 %v401, 7
    %v403 = vsub.s32 %v400, %v402
    %v404 = vrot.slane %v119, %v403
    %v405 = vcombine.high %v404, %v404
    %v407 = vunpack.c.l.s4 1966171168
    %v408 = vunpack.c.0.s8 %v407
    %v409 = vlaneseq
    %v410 = vshrl.u32 %v409, 7
    %v411 = vsub.s32 %v408, %v410
    %v412 = vrot.slane %v404, %v411
    %v414 = vunpack.c.l.s4 1966171168
    %v415 = vunpack.c.0.s8 %v414
    %v416 = vlaneseq
    %v417 = vshrl.u32 %v416, 7
    %v418 = vsub.s32 %v415, %v417
    %v419 = vrot.slane %v405, %v418
    %v420 = vlaneseq
    %v421 = vshrl.u32 %v420, 7
    %v422 = vsub.s32 0, %v421
    %v423 = vrot.slane %v412, %v422
    %v424 = vlaneseq
    %v425 = vshrl.u32 %v424, 7
    %v426 = vsub.s32 0, %v425
    %v427 = vrot.slane %v419, %v426
    %v430 = vmul.f32 %v333, %v423
    %v431 = vmul.f32 %v334, %v423
    %v432 = vmul.f32 %v335, %v423
    %v433 = vmul.f32 %v336, %v423
    %v434 = vmul.f32 %v337, %v423
    %v435 = vmul.f32 %v338, %v423
    %v436 = vmul.f32 %v339, %v423
    %v437 = vmul.f32 %v340, %v423
    %v438 = vmul.f32 %v341, %v423
    %v439 = vmul.f32 %v342, %v423
    %v440 = vmul.f32 %v343, %v423
    %v441 = vmul.f32 %v344, %v423
    %v442 = vmul.f32 %v345, %v423
    %v443 = vmul.f32 %v346, %v423
    %v444 = vmul.f32 %v347, %v423
    %v445 = vmul.f32 %v348, %v423
    %v446 = vmul.f32 %v349, %v423
    %v447 = vmul.f32 %v350, %v423
    %v448 = vmul.f32 %v351, %v423
    %v449 = vmul.f32 %v352, %v423
    %v450 = vmul.f32 %v353, %v423
    %v451 = vmul.f32 %v354, %v423
    %v452 = vmul.f32 %v355, %v423
    %v453 = vmul.f32 %v356, %v423
    %v454 = vmul.f32 %v357, %v423
    %v455 = vmul.f32 %v358, %v423
    %v456 = vmul.f32 %v359, %v423
    %v457 = vmul.f32 %v360, %v423
    %v458 = vmul.f32 %v361, %v423
    %v459 = vmul.f32 %v362, %v423
    %v460 = vmul.f32 %v363, %v423
    %v461 = vmul.f32 %v364, %v423
    %v462 = vmul.f32 %v365, %v427
    %v463 = vmul.f32 %v366, %v427
    %v464 = vmul.f32 %v367, %v427
    %v465 = vmul.f32 %v368, %v427
    %v466 = vmul.f32 %v369, %v427
    %v467 = vmul.f32 %v370, %v427
    %v468 = vmul.f32 %v371, %v427
    %v469 = vmul.f32 %v372, %v427
    %v470 = vmul.f32 %v373, %v427
    %v471 = vmul.f32 %v374, %v427
    %v472 = vmul.f32 %v375, %v427
    %v473 = vmul.f32 %v376, %v427
    %v474 = vmul.f32 %v377, %v427
    %v475 = vmul.f32 %v378, %v427
    %v476 = vmul.f32 %v379, %v427
    %v477 = vmul.f32 %v380, %v427
    %v478 = vmul.f32 %v381, %v427
    %v479 = vmul.f32 %v382, %v427
    %v480 = vmul.f32 %v383, %v427
    %v481 = vmul.f32 %v384, %v427
    %v482 = vmul.f32 %v385, %v427
    %v483 = vmul.f32 %v386, %v427
    %v484 = vmul.f32 %v387, %v427
    %v485 = vmul.f32 %v388, %v427
    %v486 = vmul.f32 %v389, %v427
    %v487 = vmul.f32 %v390, %v427
    %v488 = vmul.f32 %v391, %v427
    %v489 = vmul.f32 %v392, %v427
    %v490 = vmul.f32 %v393, %v427
    %v491 = vmul.f32 %v394, %v427
    %v492 = vmul.f32 %v395, %v427
    %v493 = vmul.f32 %v396, %v427
    %v494 = vpack.c.bf16 %v431, %v430
    %v495 = vpack.c.bf16 %v433, %v432
    %v496 = vpack.c.bf16 %v435, %v434
    %v497 = vpack.c.bf16 %v437, %v436
    %v498 = vpack.c.bf16 %v439, %v438
    %v499 = vpack.c.bf16 %v441, %v440
    %v500 = vpack.c.bf16 %v443, %v442
    %v501 = vpack.c.bf16 %v445, %v444
    %v502 = vpack.c.bf16 %v447, %v446
    %v503 = vpack.c.bf16 %v449, %v448
    %v504 = vpack.c.bf16 %v451, %v450
    %v505 = vpack.c.bf16 %v453, %v452
    %v506 = vpack.c.bf16 %v455, %v454
    %v507 = vpack.c.bf16 %v457, %v456
    %v508 = vpack.c.bf16 %v459, %v458
    %v509 = vpack.c.bf16 %v461, %v460
    %v510 = vpack.c.bf16 %v463, %v462
    %v511 = vpack.c.bf16 %v465, %v464
    %v512 = vpack.c.bf16 %v467, %v466
    %v513 = vpack.c.bf16 %v469, %v468
    %v514 = vpack.c.bf16 %v471, %v470
    %v515 = vpack.c.bf16 %v473, %v472
    %v516 = vpack.c.bf16 %v475, %v474
    %v517 = vpack.c.bf16 %v477, %v476
    %v518 = vpack.c.bf16 %v479, %v478
    %v519 = vpack.c.bf16 %v481, %v480
    %v520 = vpack.c.bf16 %v483, %v482
    %v521 = vpack.c.bf16 %v485, %v484
    %v522 = vpack.c.bf16 %v487, %v486
    %v523 = vpack.c.bf16 %v489, %v488
    %v524 = vpack.c.bf16 %v491, %v490
    %v525 = vpack.c.bf16 %v493, %v492
    %v558 = vunpack.c.l.b16 %v494
    %v559 = vunpack.c.h.b16 %v494
    %v560 = vunpack.c.l.b16 %v495
    %v561 = vunpack.c.h.b16 %v495
    %v562 = vunpack.c.l.b16 %v496
    %v563 = vunpack.c.h.b16 %v496
    %v564 = vunpack.c.l.b16 %v497
    %v565 = vunpack.c.h.b16 %v497
    %v566 = vunpack.c.l.b16 %v498
    %v567 = vunpack.c.h.b16 %v498
    %v568 = vunpack.c.l.b16 %v499
    %v569 = vunpack.c.h.b16 %v499
    %v570 = vunpack.c.l.b16 %v500
    %v571 = vunpack.c.h.b16 %v500
    %v572 = vunpack.c.l.b16 %v501
    %v573 = vunpack.c.h.b16 %v501
    %v574 = vunpack.c.l.b16 %v502
    %v575 = vunpack.c.h.b16 %v502
    %v576 = vunpack.c.l.b16 %v503
    %v577 = vunpack.c.h.b16 %v503
    %v578 = vunpack.c.l.b16 %v504
    %v579 = vunpack.c.h.b16 %v504
    %v580 = vunpack.c.l.b16 %v505
    %v581 = vunpack.c.h.b16 %v505
    %v582 = vunpack.c.l.b16 %v506
    %v583 = vunpack.c.h.b16 %v506
    %v584 = vunpack.c.l.b16 %v507
    %v585 = vunpack.c.h.b16 %v507
    %v586 = vunpack.c.l.b16 %v508
    %v587 = vunpack.c.h.b16 %v508
    %v588 = vunpack.c.l.b16 %v509
    %v589 = vunpack.c.h.b16 %v509
    %v590 = vunpack.c.l.b16 %v510
    %v591 = vunpack.c.h.b16 %v510
    %v592 = vunpack.c.l.b16 %v511
    %v593 = vunpack.c.h.b16 %v511
    %v594 = vunpack.c.l.b16 %v512
    %v595 = vunpack.c.h.b16 %v512
    %v596 = vunpack.c.l.b16 %v513
    %v597 = vunpack.c.h.b16 %v513
    %v598 = vunpack.c.l.b16 %v514
    %v599 = vunpack.c.h.b16 %v514
    %v600 = vunpack.c.l.b16 %v515
    %v601 = vunpack.c.h.b16 %v515
    %v602 = vunpack.c.l.b16 %v516
    %v603 = vunpack.c.h.b16 %v516
    %v604 = vunpack.c.l.b16 %v517
    %v605 = vunpack.c.h.b16 %v517
    %v606 = vunpack.c.l.b16 %v518
    %v607 = vunpack.c.h.b16 %v518
    %v608 = vunpack.c.l.b16 %v519
    %v609 = vunpack.c.h.b16 %v519
    %v610 = vunpack.c.l.b16 %v520
    %v611 = vunpack.c.h.b16 %v520
    %v612 = vunpack.c.l.b16 %v521
    %v613 = vunpack.c.h.b16 %v521
    %v614 = vunpack.c.l.b16 %v522
    %v615 = vunpack.c.h.b16 %v522
    %v616 = vunpack.c.l.b16 %v523
    %v617 = vunpack.c.h.b16 %v523
    %v618 = vunpack.c.l.b16 %v524
    %v619 = vunpack.c.h.b16 %v524
    %v620 = vunpack.c.l.b16 %v525
    %v621 = vunpack.c.h.b16 %v525
    %v622 = vpack.c.b16 %v558, %v558
    %v623 = vpack.c.b16 %v559, %v559
    %v624 = vpack.c.b16 %v560, %v560
    %v625 = vpack.c.b16 %v561, %v561
    %v626 = vpack.c.b16 %v562, %v562
    %v627 = vpack.c.b16 %v563, %v563
    %v628 = vpack.c.b16 %v564, %v564
    %v629 = vpack.c.b16 %v565, %v565
    %v630 = vpack.c.b16 %v566, %v566
    %v631 = vpack.c.b16 %v567, %v567
    %v632 = vpack.c.b16 %v568, %v568
    %v633 = vpack.c.b16 %v569, %v569
    %v634 = vpack.c.b16 %v570, %v570
    %v635 = vpack.c.b16 %v571, %v571
    %v636 = vpack.c.b16 %v572, %v572
    %v637 = vpack.c.b16 %v573, %v573
    %v638 = vpack.c.b16 %v574, %v574
    %v639 = vpack.c.b16 %v575, %v575
    %v640 = vpack.c.b16 %v576, %v576
    %v641 = vpack.c.b16 %v577, %v577
    %v642 = vpack.c.b16 %v578, %v578
    %v643 = vpack.c.b16 %v579, %v579
    %v644 = vpack.c.b16 %v580, %v580
    %v645 = vpack.c.b16 %v581, %v581
    %v646 = vpack.c.b16 %v582, %v582
    %v647 = vpack.c.b16 %v583, %v583
    %v648 = vpack.c.b16 %v584, %v584
    %v649 = vpack.c.b16 %v585, %v585
    %v650 = vpack.c.b16 %v586, %v586
    %v651 = vpack.c.b16 %v587, %v587
    %v652 = vpack.c.b16 %v588, %v588
    %v653 = vpack.c.b16 %v589, %v589
    %v654 = vpack.c.b16 %v590, %v590
    %v655 = vpack.c.b16 %v591, %v591
    %v656 = vpack.c.b16 %v592, %v592
    %v657 = vpack.c.b16 %v593, %v593
    %v658 = vpack.c.b16 %v594, %v594
    %v659 = vpack.c.b16 %v595, %v595
    %v660 = vpack.c.b16 %v596, %v596
    %v661 = vpack.c.b16 %v597, %v597
    %v662 = vpack.c.b16 %v598, %v598
    %v663 = vpack.c.b16 %v599, %v599
    %v664 = vpack.c.b16 %v600, %v600
    %v665 = vpack.c.b16 %v601, %v601
    %v666 = vpack.c.b16 %v602, %v602
    %v667 = vpack.c.b16 %v603, %v603
    %v668 = vpack.c.b16 %v604, %v604
    %v669 = vpack.c.b16 %v605, %v605
    %v670 = vpack.c.b16 %v606, %v606
    %v671 = vpack.c.b16 %v607, %v607
    %v672 = vpack.c.b16 %v608, %v608
    %v673 = vpack.c.b16 %v609, %v609
    %v674 = vpack.c.b16 %v610, %v610
    %v675 = vpack.c.b16 %v611, %v611
    %v676 = vpack.c.b16 %v612, %v612
    %v677 = vpack.c.b16 %v613, %v613
    %v678 = vpack.c.b16 %v614, %v614
    %v679 = vpack.c.b16 %v615, %v615
    %v680 = vpack.c.b16 %v616, %v616
    %v681 = vpack.c.b16 %v617, %v617
    %v682 = vpack.c.b16 %v618, %v618
    %v683 = vpack.c.b16 %v619, %v619
    %v684 = vpack.c.b16 %v620, %v620
    %v685 = vpack.c.b16 %v621, %v621
    %vm686 = vsmask.f32 4368
    %vm687 = vmor %vm137, %vm686
    %v689 = vshrl.u32 %v622, 16
    %v691 = vrot.slane %v689, 7
    %v692 = vshll.u32 %v622, 16
    %v694 = vor.u32 %v691, %v692
    %v695 = vrot.slane %v691, 4
    %v697 = vshrl.u32 %v623, 16
    %v699 = vrot.slane %v697, 7
    %v700 = vshll.u32 %v623, 16
    %v702 = vor.u32 %v699, %v700
    %v703 = vsel %vm687, %v695, %v702
    %v704 = vrot.slane %v699, 4
    %v706 = vshrl.u32 %v624, 16
    %v708 = vrot.slane %v706, 7
    %v709 = vshll.u32 %v624, 16
    %v711 = vor.u32 %v708, %v709
    %v712 = vrot.slane %v708, 4
    %v714 = vshrl.u32 %v625, 16
    %v716 = vrot.slane %v714, 7
    %v717 = vshll.u32 %v625, 16
    %v719 = vor.u32 %v716, %v717
    %v720 = vsel %vm687, %v712, %v719
    %v721 = vrot.slane %v716, 4
    %v723 = vshrl.u32 %v626, 16
    %v725 = vrot.slane %v723, 7
    %v726 = vshll.u32 %v626, 16
    %v728 = vor.u32 %v725, %v726
    %v729 = vrot.slane %v725, 4
    %v731 = vshrl.u32 %v627, 16
    %v733 = vrot.slane %v731, 7
    %v734 = vshll.u32 %v627, 16
    %v736 = vor.u32 %v733, %v734
    %v737 = vsel %vm687, %v729, %v736
    %v738 = vrot.slane %v733, 4
    %v740 = vshrl.u32 %v628, 16
    %v742 = vrot.slane %v740, 7
    %v743 = vshll.u32 %v628, 16
    %v745 = vor.u32 %v742, %v743
    %v746 = vrot.slane %v742, 4
    %v748 = vshrl.u32 %v629, 16
    %v750 = vrot.slane %v748, 7
    %v751 = vshll.u32 %v629, 16
    %v753 = vor.u32 %v750, %v751
    %v754 = vsel %vm687, %v746, %v753
    %v755 = vrot.slane %v750, 4
    %v757 = vshrl.u32 %v630, 16
    %v759 = vrot.slane %v757, 7
    %v760 = vshll.u32 %v630, 16
    %v762 = vor.u32 %v759, %v760
    %v763 = vrot.slane %v759, 4
    %v765 = vshrl.u32 %v631, 16
    %v767 = vrot.slane %v765, 7
    %v768 = vshll.u32 %v631, 16
    %v770 = vor.u32 %v767, %v768
    %v771 = vsel %vm687, %v763, %v770
    %v772 = vrot.slane %v767, 4
    %v774 = vshrl.u32 %v632, 16
    %v776 = vrot.slane %v774, 7
    %v777 = vshll.u32 %v632, 16
    %v779 = vor.u32 %v776, %v777
    %v780 = vrot.slane %v776, 4
    %v782 = vshrl.u32 %v633, 16
    %v784 = vrot.slane %v782, 7
    %v785 = vshll.u32 %v633, 16
    %v787 = vor.u32 %v784, %v785
    %v788 = vsel %vm687, %v780, %v787
    %v789 = vrot.slane %v784, 4
    %v791 = vshrl.u32 %v634, 16
    %v793 = vrot.slane %v791, 7
    %v794 = vshll.u32 %v634, 16
    %v796 = vor.u32 %v793, %v794
    %v797 = vrot.slane %v793, 4
    %v799 = vshrl.u32 %v635, 16
    %v801 = vrot.slane %v799, 7
    %v802 = vshll.u32 %v635, 16
    %v804 = vor.u32 %v801, %v802
    %v805 = vsel %vm687, %v797, %v804
    %v806 = vrot.slane %v801, 4
    %v808 = vshrl.u32 %v636, 16
    %v810 = vrot.slane %v808, 7
    %v811 = vshll.u32 %v636, 16
    %v813 = vor.u32 %v810, %v811
    %v814 = vrot.slane %v810, 4
    %v816 = vshrl.u32 %v637, 16
    %v818 = vrot.slane %v816, 7
    %v819 = vshll.u32 %v637, 16
    %v821 = vor.u32 %v818, %v819
    %v822 = vsel %vm687, %v814, %v821
    %v823 = vrot.slane %v818, 4
    %v825 = vshrl.u32 %v638, 16
    %v827 = vrot.slane %v825, 7
    %v828 = vshll.u32 %v638, 16
    %v830 = vor.u32 %v827, %v828
    %v831 = vrot.slane %v827, 4
    %v833 = vshrl.u32 %v639, 16
    %v835 = vrot.slane %v833, 7
    %v836 = vshll.u32 %v639, 16
    %v838 = vor.u32 %v835, %v836
    %v839 = vsel %vm687, %v831, %v838
    %v840 = vrot.slane %v835, 4
    %v842 = vshrl.u32 %v640, 16
    %v844 = vrot.slane %v842, 7
    %v845 = vshll.u32 %v640, 16
    %v847 = vor.u32 %v844, %v845
    %v848 = vrot.slane %v844, 4
    %v850 = vshrl.u32 %v641, 16
    %v852 = vrot.slane %v850, 7
    %v853 = vshll.u32 %v641, 16
    %v855 = vor.u32 %v852, %v853
    %v856 = vsel %vm687, %v848, %v855
    %v857 = vrot.slane %v852, 4
    %v859 = vshrl.u32 %v642, 16
    %v861 = vrot.slane %v859, 7
    %v862 = vshll.u32 %v642, 16
    %v864 = vor.u32 %v861, %v862
    %v865 = vrot.slane %v861, 4
    %v867 = vshrl.u32 %v643, 16
    %v869 = vrot.slane %v867, 7
    %v870 = vshll.u32 %v643, 16
    %v872 = vor.u32 %v869, %v870
    %v873 = vsel %vm687, %v865, %v872
    %v874 = vrot.slane %v869, 4
    %v876 = vshrl.u32 %v644, 16
    %v878 = vrot.slane %v876, 7
    %v879 = vshll.u32 %v644, 16
    %v881 = vor.u32 %v878, %v879
    %v882 = vrot.slane %v878, 4
    %v884 = vshrl.u32 %v645, 16
    %v886 = vrot.slane %v884, 7
    %v887 = vshll.u32 %v645, 16
    %v889 = vor.u32 %v886, %v887
    %v890 = vsel %vm687, %v882, %v889
    %v891 = vrot.slane %v886, 4
    %v893 = vshrl.u32 %v646, 16
    %v895 = vrot.slane %v893, 7
    %v896 = vshll.u32 %v646, 16
    %v898 = vor.u32 %v895, %v896
    %v899 = vrot.slane %v895, 4
    %v901 = vshrl.u32 %v647, 16
    %v903 = vrot.slane %v901, 7
    %v904 = vshll.u32 %v647, 16
    %v906 = vor.u32 %v903, %v904
    %v907 = vsel %vm687, %v899, %v906
    %v908 = vrot.slane %v903, 4
    %v910 = vshrl.u32 %v648, 16
    %v912 = vrot.slane %v910, 7
    %v913 = vshll.u32 %v648, 16
    %v915 = vor.u32 %v912, %v913
    %v916 = vrot.slane %v912, 4
    %v918 = vshrl.u32 %v649, 16
    %v920 = vrot.slane %v918, 7
    %v921 = vshll.u32 %v649, 16
    %v923 = vor.u32 %v920, %v921
    %v924 = vsel %vm687, %v916, %v923
    %v925 = vrot.slane %v920, 4
    %v927 = vshrl.u32 %v650, 16
    %v929 = vrot.slane %v927, 7
    %v930 = vshll.u32 %v650, 16
    %v932 = vor.u32 %v929, %v930
    %v933 = vrot.slane %v929, 4
    %v935 = vshrl.u32 %v651, 16
    %v937 = vrot.slane %v935, 7
    %v938 = vshll.u32 %v651, 16
    %v940 = vor.u32 %v937, %v938
    %v941 = vsel %vm687, %v933, %v940
    %v942 = vrot.slane %v937, 4
    %v944 = vshrl.u32 %v652, 16
    %v946 = vrot.slane %v944, 7
    %v947 = vshll.u32 %v652, 16
    %v949 = vor.u32 %v946, %v947
    %v950 = vrot.slane %v946, 4
    %v952 = vshrl.u32 %v653, 16
    %v954 = vrot.slane %v952, 7
    %v955 = vshll.u32 %v653, 16
    %v957 = vor.u32 %v954, %v955
    %v958 = vsel %vm687, %v950, %v957
    %v959 = vrot.slane %v954, 4
    %v961 = vshrl.u32 %v654, 16
    %v963 = vrot.slane %v961, 7
    %v964 = vshll.u32 %v654, 16
    %v966 = vor.u32 %v963, %v964
    %v967 = vrot.slane %v963, 4
    %v969 = vshrl.u32 %v655, 16
    %v971 = vrot.slane %v969, 7
    %v972 = vshll.u32 %v655, 16
    %v974 = vor.u32 %v971, %v972
    %v975 = vsel %vm687, %v967, %v974
    %v976 = vrot.slane %v971, 4
    %v978 = vshrl.u32 %v656, 16
    %v980 = vrot.slane %v978, 7
    %v981 = vshll.u32 %v656, 16
    %v983 = vor.u32 %v980, %v981
    %v984 = vrot.slane %v980, 4
    %v986 = vshrl.u32 %v657, 16
    %v988 = vrot.slane %v986, 7
    %v989 = vshll.u32 %v657, 16
    %v991 = vor.u32 %v988, %v989
    %v992 = vsel %vm687, %v984, %v991
    %v993 = vrot.slane %v988, 4
    %v995 = vshrl.u32 %v658, 16
    %v997 = vrot.slane %v995, 7
    %v998 = vshll.u32 %v658, 16
    %v1000 = vor.u32 %v997, %v998
    %v1001 = vrot.slane %v997, 4
    %v1003 = vshrl.u32 %v659, 16
    %v1005 = vrot.slane %v1003, 7
    %v1006 = vshll.u32 %v659, 16
    %v1008 = vor.u32 %v1005, %v1006
    %v1009 = vsel %vm687, %v1001, %v1008
    %v1010 = vrot.slane %v1005, 4
    %v1012 = vshrl.u32 %v660, 16
    %v1014 = vrot.slane %v1012, 7
    %v1015 = vshll.u32 %v660, 16
    %v1017 = vor.u32 %v1014, %v1015
    %v1018 = vrot.slane %v1014, 4
    %v1020 = vshrl.u32 %v661, 16
    %v1022 = vrot.slane %v1020, 7
    %v1023 = vshll.u32 %v661, 16
    %v1025 = vor.u32 %v1022, %v1023
    %v1026 = vsel %vm687, %v1018, %v1025
    %v1027 = vrot.slane %v1022, 4
    %v1029 = vshrl.u32 %v662, 16
    %v1031 = vrot.slane %v1029, 7
    %v1032 = vshll.u32 %v662, 16
    %v1034 = vor.u32 %v1031, %v1032
    %v1035 = vrot.slane %v1031, 4
    %v1037 = vshrl.u32 %v663, 16
    %v1039 = vrot.slane %v1037, 7
    %v1040 = vshll.u32 %v663, 16
    %v1042 = vor.u32 %v1039, %v1040
    %v1043 = vsel %vm687, %v1035, %v1042
    %v1044 = vrot.slane %v1039, 4
    %v1046 = vshrl.u32 %v664, 16
    %v1048 = vrot.slane %v1046, 7
    %v1049 = vshll.u32 %v664, 16
    %v1051 = vor.u32 %v1048, %v1049
    %v1052 = vrot.slane %v1048, 4
    %v1054 = vshrl.u32 %v665, 16
    %v1056 = vrot.slane %v1054, 7
    %v1057 = vshll.u32 %v665, 16
    %v1059 = vor.u32 %v1056, %v1057
    %v1060 = vsel %vm687, %v1052, %v1059
    %v1061 = vrot.slane %v1056, 4
    %v1063 = vshrl.u32 %v666, 16
    %v1065 = vrot.slane %v1063, 7
    %v1066 = vshll.u32 %v666, 16
    %v1068 = vor.u32 %v1065, %v1066
    %v1069 = vrot.slane %v1065, 4
    %v1071 = vshrl.u32 %v667, 16
    %v1073 = vrot.slane %v1071, 7
    %v1074 = vshll.u32 %v667, 16
    %v1076 = vor.u32 %v1073, %v1074
    %v1077 = vsel %vm687, %v1069, %v1076
    %v1078 = vrot.slane %v1073, 4
    %v1080 = vshrl.u32 %v668, 16
    %v1082 = vrot.slane %v1080, 7
    %v1083 = vshll.u32 %v668, 16
    %v1085 = vor.u32 %v1082, %v1083
    %v1086 = vrot.slane %v1082, 4
    %v1088 = vshrl.u32 %v669, 16
    %v1090 = vrot.slane %v1088, 7
    %v1091 = vshll.u32 %v669, 16
    %v1093 = vor.u32 %v1090, %v1091
    %v1094 = vsel %vm687, %v1086, %v1093
    %v1095 = vrot.slane %v1090, 4
    %v1097 = vshrl.u32 %v670, 16
    %v1099 = vrot.slane %v1097, 7
    %v1100 = vshll.u32 %v670, 16
    %v1102 = vor.u32 %v1099, %v1100
    %v1103 = vrot.slane %v1099, 4
    %v1105 = vshrl.u32 %v671, 16
    %v1107 = vrot.slane %v1105, 7
    %v1108 = vshll.u32 %v671, 16
    %v1110 = vor.u32 %v1107, %v1108
    %v1111 = vsel %vm687, %v1103, %v1110
    %v1112 = vrot.slane %v1107, 4
    %v1114 = vshrl.u32 %v672, 16
    %v1116 = vrot.slane %v1114, 7
    %v1117 = vshll.u32 %v672, 16
    %v1119 = vor.u32 %v1116, %v1117
    %v1120 = vrot.slane %v1116, 4
    %v1122 = vshrl.u32 %v673, 16
    %v1124 = vrot.slane %v1122, 7
    %v1125 = vshll.u32 %v673, 16
    %v1127 = vor.u32 %v1124, %v1125
    %v1128 = vsel %vm687, %v1120, %v1127
    %v1129 = vrot.slane %v1124, 4
    %v1131 = vshrl.u32 %v674, 16
    %v1133 = vrot.slane %v1131, 7
    %v1134 = vshll.u32 %v674, 16
    %v1136 = vor.u32 %v1133, %v1134
    %v1137 = vrot.slane %v1133, 4
    %v1139 = vshrl.u32 %v675, 16
    %v1141 = vrot.slane %v1139, 7
    %v1142 = vshll.u32 %v675, 16
    %v1144 = vor.u32 %v1141, %v1142
    %v1145 = vsel %vm687, %v1137, %v1144
    %v1146 = vrot.slane %v1141, 4
    %v1148 = vshrl.u32 %v676, 16
    %v1150 = vrot.slane %v1148, 7
    %v1151 = vshll.u32 %v676, 16
    %v1153 = vor.u32 %v1150, %v1151
    %v1154 = vrot.slane %v1150, 4
    %v1156 = vshrl.u32 %v677, 16
    %v1158 = vrot.slane %v1156, 7
    %v1159 = vshll.u32 %v677, 16
    %v1161 = vor.u32 %v1158, %v1159
    %v1162 = vsel %vm687, %v1154, %v1161
    %v1163 = vrot.slane %v1158, 4
    %v1165 = vshrl.u32 %v678, 16
    %v1167 = vrot.slane %v1165, 7
    %v1168 = vshll.u32 %v678, 16
    %v1170 = vor.u32 %v1167, %v1168
    %v1171 = vrot.slane %v1167, 4
    %v1173 = vshrl.u32 %v679, 16
    %v1175 = vrot.slane %v1173, 7
    %v1176 = vshll.u32 %v679, 16
    %v1178 = vor.u32 %v1175, %v1176
    %v1179 = vsel %vm687, %v1171, %v1178
    %v1180 = vrot.slane %v1175, 4
    %v1182 = vshrl.u32 %v680, 16
    %v1184 = vrot.slane %v1182, 7
    %v1185 = vshll.u32 %v680, 16
    %v1187 = vor.u32 %v1184, %v1185
    %v1188 = vrot.slane %v1184, 4
    %v1190 = vshrl.u32 %v681, 16
    %v1192 = vrot.slane %v1190, 7
    %v1193 = vshll.u32 %v681, 16
    %v1195 = vor.u32 %v1192, %v1193
    %v1196 = vsel %vm687, %v1188, %v1195
    %v1197 = vrot.slane %v1192, 4
    %v1199 = vshrl.u32 %v682, 16
    %v1201 = vrot.slane %v1199, 7
    %v1202 = vshll.u32 %v682, 16
    %v1204 = vor.u32 %v1201, %v1202
    %v1205 = vrot.slane %v1201, 4
    %v1207 = vshrl.u32 %v683, 16
    %v1209 = vrot.slane %v1207, 7
    %v1210 = vshll.u32 %v683, 16
    %v1212 = vor.u32 %v1209, %v1210
    %v1213 = vsel %vm687, %v1205, %v1212
    %v1214 = vrot.slane %v1209, 4
    %v1216 = vshrl.u32 %v684, 16
    %v1218 = vrot.slane %v1216, 7
    %v1219 = vshll.u32 %v684, 16
    %v1221 = vor.u32 %v1218, %v1219
    %v1222 = vrot.slane %v1218, 4
    %v1224 = vshrl.u32 %v685, 16
    %v1226 = vrot.slane %v1224, 7
    %v1227 = vshll.u32 %v685, 16
    %v1229 = vor.u32 %v1226, %v1227
    %v1230 = vsel %vm687, %v1222, %v1229
    %v1231 = vrot.slane %v1226, 4
    %vm1328 = vcmask 257024
    %vm1329 = vmand %vm1328, %vm235
    %v1330 = vld [vmem:[%s135] sm:$0xf]
    %v1331 = vsel %vm1329, %v694, %v1330
    %1332 = vst [vmem:[%s135] sm:$0xf] %v1331
    %1333 = vst.msk [vmem:[%s135 + $0x4] sm:$0xf] %vm120, %v703
    %v1334 = vld [vmem:[%s135 + $0x8] sm:$0x1]
    %v1335 = vsel %vm138, %v704, %v1334
    %1336 = vst [vmem:[%s135 + $0x8] sm:$0x1] %v1335
    %v1337 = vld [vmem:[%s135 + $0xc] sm:$0xf]
    %v1338 = vsel %vm1329, %v711, %v1337
    %1339 = vst [vmem:[%s135 + $0xc] sm:$0xf] %v1338
    %1340 = vst.msk [vmem:[%s135 + $0x10] sm:$0xf] %vm120, %v720
    %v1341 = vld [vmem:[%s135 + $0x14] sm:$0x1]
    %v1342 = vsel %vm138, %v721, %v1341
    %1343 = vst [vmem:[%s135 + $0x14] sm:$0x1] %v1342
    %v1344 = vld [vmem:[%s135 + $0x18] sm:$0xf]
    %v1345 = vsel %vm1329, %v728, %v1344
    %1346 = vst [vmem:[%s135 + $0x18] sm:$0xf] %v1345
    %1347 = vst.msk [vmem:[%s135 + $0x1c] sm:$0xf] %vm120, %v737
    %v1348 = vld [vmem:[%s135 + $0x20] sm:$0x1]
    %v1349 = vsel %vm138, %v738, %v1348
    %1350 = vst [vmem:[%s135 + $0x20] sm:$0x1] %v1349
    %v1351 = vld [vmem:[%s135 + $0x24] sm:$0xf]
    %v1352 = vsel %vm1329, %v745, %v1351
    %1353 = vst [vmem:[%s135 + $0x24] sm:$0xf] %v1352
    %1354 = vst.msk [vmem:[%s135 + $0x28] sm:$0xf] %vm120, %v754
    %v1355 = vld [vmem:[%s135 + $0x2c] sm:$0x1]
    %v1356 = vsel %vm138, %v755, %v1355
    %1357 = vst [vmem:[%s135 + $0x2c] sm:$0x1] %v1356
    %v1358 = vld [vmem:[%s135 + $0x30] sm:$0xf]
    %v1359 = vsel %vm1329, %v762, %v1358
    %1360 = vst [vmem:[%s135 + $0x30] sm:$0xf] %v1359
    %1361 = vst.msk [vmem:[%s135 + $0x34] sm:$0xf] %vm120, %v771
    %v1362 = vld [vmem:[%s135 + $0x38] sm:$0x1]
    %v1363 = vsel %vm138, %v772, %v1362
    %1364 = vst [vmem:[%s135 + $0x38] sm:$0x1] %v1363
    %v1365 = vld [vmem:[%s135 + $0x3c] sm:$0xf]
    %v1366 = vsel %vm1329, %v779, %v1365
    %1367 = vst [vmem:[%s135 + $0x3c] sm:$0xf] %v1366
    %1368 = vst.msk [vmem:[%s135 + $0x40] sm:$0xf] %vm120, %v788
    %v1369 = vld [vmem:[%s135 + $0x44] sm:$0x1]
    %v1370 = vsel %vm138, %v789, %v1369
    %1371 = vst [vmem:[%s135 + $0x44] sm:$0x1] %v1370
    %v1372 = vld [vmem:[%s135 + $0x48] sm:$0xf]
    %v1373 = vsel %vm1329, %v796, %v1372
    %1374 = vst [vmem:[%s135 + $0x48] sm:$0xf] %v1373
    %1375 = vst.msk [vmem:[%s135 + $0x4c] sm:$0xf] %vm120, %v805
    %v1376 = vld [vmem:[%s135 + $0x50] sm:$0x1]
    %v1377 = vsel %vm138, %v806, %v1376
    %1378 = vst [vmem:[%s135 + $0x50] sm:$0x1] %v1377
    %v1379 = vld [vmem:[%s135 + $0x54] sm:$0xf]
    %v1380 = vsel %vm1329, %v813, %v1379
    %1381 = vst [vmem:[%s135 + $0x54] sm:$0xf] %v1380
    %1382 = vst.msk [vmem:[%s135 + $0x58] sm:$0xf] %vm120, %v822
    %v1383 = vld [vmem:[%s135 + $0x5c] sm:$0x1]
    %v1384 = vsel %vm138, %v823, %v1383
    %1385 = vst [vmem:[%s135 + $0x5c] sm:$0x1] %v1384
    %v1386 = vld [vmem:[%s135 + $0x60] sm:$0xf]
    %v1387 = vsel %vm1329, %v830, %v1386
    %1388 = vst [vmem:[%s135 + $0x60] sm:$0xf] %v1387
    %1389 = vst.msk [vmem:[%s135 + $0x64] sm:$0xf] %vm120, %v839
    %v1390 = vld [vmem:[%s135 + $0x68] sm:$0x1]
    %v1391 = vsel %vm138, %v840, %v1390
    %1392 = vst [vmem:[%s135 + $0x68] sm:$0x1] %v1391
    %v1393 = vld [vmem:[%s135 + $0x6c] sm:$0xf]
    %v1394 = vsel %vm1329, %v847, %v1393
    %1395 = vst [vmem:[%s135 + $0x6c] sm:$0xf] %v1394
    %1396 = vst.msk [vmem:[%s135 + $0x70] sm:$0xf] %vm120, %v856
    %v1397 = vld [vmem:[%s135 + $0x74] sm:$0x1]
    %v1398 = vsel %vm138, %v857, %v1397
    %1399 = vst [vmem:[%s135 + $0x74] sm:$0x1] %v1398
    %v1400 = vld [vmem:[%s135 + $0x78] sm:$0xf]
    %v1401 = vsel %vm1329, %v864, %v1400
    %1402 = vst [vmem:[%s135 + $0x78] sm:$0xf] %v1401
    %1403 = vst.msk [vmem:[%s135 + $0x7c] sm:$0xf] %vm120, %v873
    %v1404 = vld [vmem:[%s135 + $0x80] sm:$0x1]
    %v1405 = vsel %vm138, %v874, %v1404
    %1406 = vst [vmem:[%s135 + $0x80] sm:$0x1] %v1405
    %v1407 = vld [vmem:[%s135 + $0x84] sm:$0xf]
    %v1408 = vsel %vm1329, %v881, %v1407
    %1409 = vst [vmem:[%s135 + $0x84] sm:$0xf] %v1408
    %1410 = vst.msk [vmem:[%s135 + $0x88] sm:$0xf] %vm120, %v890
    %v1411 = vld [vmem:[%s135 + $0x8c] sm:$0x1]
    %v1412 = vsel %vm138, %v891, %v1411
    %1413 = vst [vmem:[%s135 + $0x8c] sm:$0x1] %v1412
    %v1414 = vld [vmem:[%s135 + $0x90] sm:$0xf]
    %v1415 = vsel %vm1329, %v898, %v1414
    %1416 = vst [vmem:[%s135 + $0x90] sm:$0xf] %v1415
    %1417 = vst.msk [vmem:[%s135 + $0x94] sm:$0xf] %vm120, %v907
    %v1418 = vld [vmem:[%s135 + $0x98] sm:$0x1]
    %v1419 = vsel %vm138, %v908, %v1418
    %1420 = vst [vmem:[%s135 + $0x98] sm:$0x1] %v1419
    %v1421 = vld [vmem:[%s135 + $0x9c] sm:$0xf]
    %v1422 = vsel %vm1329, %v915, %v1421
    %1423 = vst [vmem:[%s135 + $0x9c] sm:$0xf] %v1422
    %1424 = vst.msk [vmem:[%s135 + $0xa0] sm:$0xf] %vm120, %v924
    %v1425 = vld [vmem:[%s135 + $0xa4] sm:$0x1]
    %v1426 = vsel %vm138, %v925, %v1425
    %1427 = vst [vmem:[%s135 + $0xa4] sm:$0x1] %v1426
    %v1428 = vld [vmem:[%s135 + $0xa8] sm:$0xf]
    %v1429 = vsel %vm1329, %v932, %v1428
    %1430 = vst [vmem:[%s135 + $0xa8] sm:$0xf] %v1429
    %1431 = vst.msk [vmem:[%s135 + $0xac] sm:$0xf] %vm120, %v941
    %v1432 = vld [vmem:[%s135 + $0xb0] sm:$0x1]
    %v1433 = vsel %vm138, %v942, %v1432
    %1434 = vst [vmem:[%s135 + $0xb0] sm:$0x1] %v1433
    %v1435 = vld [vmem:[%s135 + $0xb4] sm:$0xf]
    %v1436 = vsel %vm1329, %v949, %v1435
    %1437 = vst [vmem:[%s135 + $0xb4] sm:$0xf] %v1436
    %1438 = vst.msk [vmem:[%s135 + $0xb8] sm:$0xf] %vm120, %v958
    %v1439 = vld [vmem:[%s135 + $0xbc] sm:$0x1]
    %v1440 = vsel %vm138, %v959, %v1439
    %1441 = vst [vmem:[%s135 + $0xbc] sm:$0x1] %v1440
    %v1442 = vld [vmem:[%s135 + $0xd8] sm:$0xf]
    %v1443 = vsel %vm1329, %v966, %v1442
    %1444 = vst [vmem:[%s135 + $0xd8] sm:$0xf] %v1443
    %1445 = vst.msk [vmem:[%s135 + $0xdc] sm:$0xf] %vm120, %v975
    %v1446 = vld [vmem:[%s135 + $0xe0] sm:$0x1]
    %v1447 = vsel %vm138, %v976, %v1446
    %1448 = vst [vmem:[%s135 + $0xe0] sm:$0x1] %v1447
    %v1449 = vld [vmem:[%s135 + $0xe4] sm:$0xf]
    %v1450 = vsel %vm1329, %v983, %v1449
    %1451 = vst [vmem:[%s135 + $0xe4] sm:$0xf] %v1450
    %1452 = vst.msk [vmem:[%s135 + $0xe8] sm:$0xf] %vm120, %v992
    %v1453 = vld [vmem:[%s135 + $0xec] sm:$0x1]
    %v1454 = vsel %vm138, %v993, %v1453
    %1455 = vst [vmem:[%s135 + $0xec] sm:$0x1] %v1454
    %v1456 = vld [vmem:[%s135 + $0xf0] sm:$0xf]
    %v1457 = vsel %vm1329, %v1000, %v1456
    %1458 = vst [vmem:[%s135 + $0xf0] sm:$0xf] %v1457
    %1459 = vst.msk [vmem:[%s135 + $0xf4] sm:$0xf] %vm120, %v1009
    %v1460 = vld [vmem:[%s135 + $0xf8] sm:$0x1]
    %v1461 = vsel %vm138, %v1010, %v1460
    %1462 = vst [vmem:[%s135 + $0xf8] sm:$0x1] %v1461
    %v1463 = vld [vmem:[%s135 + $0xfc] sm:$0xf]
    %v1464 = vsel %vm1329, %v1017, %v1463
    %1465 = vst [vmem:[%s135 + $0xfc] sm:$0xf] %v1464
    %1466 = vst.msk [vmem:[%s135 + $0x100] sm:$0xf] %vm120, %v1026
    %v1467 = vld [vmem:[%s135 + $0x104] sm:$0x1]
    %v1468 = vsel %vm138, %v1027, %v1467
    %1469 = vst [vmem:[%s135 + $0x104] sm:$0x1] %v1468
    %v1470 = vld [vmem:[%s135 + $0x108] sm:$0xf]
    %v1471 = vsel %vm1329, %v1034, %v1470
    %1472 = vst [vmem:[%s135 + $0x108] sm:$0xf] %v1471
    %1473 = vst.msk [vmem:[%s135 + $0x10c] sm:$0xf] %vm120, %v1043
    %v1474 = vld [vmem:[%s135 + $0x110] sm:$0x1]
    %v1475 = vsel %vm138, %v1044, %v1474
    %1476 = vst [vmem:[%s135 + $0x110] sm:$0x1] %v1475
    %v1477 = vld [vmem:[%s135 + $0x114] sm:$0xf]
    %v1478 = vsel %vm1329, %v1051, %v1477
    %1479 = vst [vmem:[%s135 + $0x114] sm:$0xf] %v1478
    %1480 = vst.msk [vmem:[%s135 + $0x118] sm:$0xf] %vm120, %v1060
    %v1481 = vld [vmem:[%s135 + $0x11c] sm:$0x1]
    %v1482 = vsel %vm138, %v1061, %v1481
    %1483 = vst [vmem:[%s135 + $0x11c] sm:$0x1] %v1482
    %v1484 = vld [vmem:[%s135 + $0x120] sm:$0xf]
    %v1485 = vsel %vm1329, %v1068, %v1484
    %1486 = vst [vmem:[%s135 + $0x120] sm:$0xf] %v1485
    %1487 = vst.msk [vmem:[%s135 + $0x124] sm:$0xf] %vm120, %v1077
    %v1488 = vld [vmem:[%s135 + $0x128] sm:$0x1]
    %v1489 = vsel %vm138, %v1078, %v1488
    %1490 = vst [vmem:[%s135 + $0x128] sm:$0x1] %v1489
    %v1491 = vld [vmem:[%s135 + $0x12c] sm:$0xf]
    %v1492 = vsel %vm1329, %v1085, %v1491
    %1493 = vst [vmem:[%s135 + $0x12c] sm:$0xf] %v1492
    %1494 = vst.msk [vmem:[%s135 + $0x130] sm:$0xf] %vm120, %v1094
    %v1495 = vld [vmem:[%s135 + $0x134] sm:$0x1]
    %v1496 = vsel %vm138, %v1095, %v1495
    %1497 = vst [vmem:[%s135 + $0x134] sm:$0x1] %v1496
    %v1498 = vld [vmem:[%s135 + $0x138] sm:$0xf]
    %v1499 = vsel %vm1329, %v1102, %v1498
    %1500 = vst [vmem:[%s135 + $0x138] sm:$0xf] %v1499
    %1501 = vst.msk [vmem:[%s135 + $0x13c] sm:$0xf] %vm120, %v1111
    %v1502 = vld [vmem:[%s135 + $0x140] sm:$0x1]
    %v1503 = vsel %vm138, %v1112, %v1502
    %1504 = vst [vmem:[%s135 + $0x140] sm:$0x1] %v1503
    %v1505 = vld [vmem:[%s135 + $0x144] sm:$0xf]
    %v1506 = vsel %vm1329, %v1119, %v1505
    %1507 = vst [vmem:[%s135 + $0x144] sm:$0xf] %v1506
    %1508 = vst.msk [vmem:[%s135 + $0x148] sm:$0xf] %vm120, %v1128
    %v1509 = vld [vmem:[%s135 + $0x14c] sm:$0x1]
    %v1510 = vsel %vm138, %v1129, %v1509
    %1511 = vst [vmem:[%s135 + $0x14c] sm:$0x1] %v1510
    %v1512 = vld [vmem:[%s135 + $0x150] sm:$0xf]
    %v1513 = vsel %vm1329, %v1136, %v1512
    %1514 = vst [vmem:[%s135 + $0x150] sm:$0xf] %v1513
    %1515 = vst.msk [vmem:[%s135 + $0x154] sm:$0xf] %vm120, %v1145
    %v1516 = vld [vmem:[%s135 + $0x158] sm:$0x1]
    %v1517 = vsel %vm138, %v1146, %v1516
    %1518 = vst [vmem:[%s135 + $0x158] sm:$0x1] %v1517
    %v1519 = vld [vmem:[%s135 + $0x15c] sm:$0xf]
    %v1520 = vsel %vm1329, %v1153, %v1519
    %1521 = vst [vmem:[%s135 + $0x15c] sm:$0xf] %v1520
    %1522 = vst.msk [vmem:[%s135 + $0x160] sm:$0xf] %vm120, %v1162
    %v1523 = vld [vmem:[%s135 + $0x164] sm:$0x1]
    %v1524 = vsel %vm138, %v1163, %v1523
    %1525 = vst [vmem:[%s135 + $0x164] sm:$0x1] %v1524
    %v1526 = vld [vmem:[%s135 + $0x168] sm:$0xf]
    %v1527 = vsel %vm1329, %v1170, %v1526
    %1528 = vst [vmem:[%s135 + $0x168] sm:$0xf] %v1527
    %1529 = vst.msk [vmem:[%s135 + $0x16c] sm:$0xf] %vm120, %v1179
    %v1530 = vld [vmem:[%s135 + $0x170] sm:$0x1]
    %v1531 = vsel %vm138, %v1180, %v1530
    %1532 = vst [vmem:[%s135 + $0x170] sm:$0x1] %v1531
    %v1533 = vld [vmem:[%s135 + $0x174] sm:$0xf]
    %v1534 = vsel %vm1329, %v1187, %v1533
    %1535 = vst [vmem:[%s135 + $0x174] sm:$0xf] %v1534
    %1536 = vst.msk [vmem:[%s135 + $0x178] sm:$0xf] %vm120, %v1196
    %v1537 = vld [vmem:[%s135 + $0x17c] sm:$0x1]
    %v1538 = vsel %vm138, %v1197, %v1537
    %1539 = vst [vmem:[%s135 + $0x17c] sm:$0x1] %v1538
    %v1540 = vld [vmem:[%s135 + $0x180] sm:$0xf]
    %v1541 = vsel %vm1329, %v1204, %v1540
    %1542 = vst [vmem:[%s135 + $0x180] sm:$0xf] %v1541
    %1543 = vst.msk [vmem:[%s135 + $0x184] sm:$0xf] %vm120, %v1213
    %v1544 = vld [vmem:[%s135 + $0x188] sm:$0x1]
    %v1545 = vsel %vm138, %v1214, %v1544
    %1546 = vst [vmem:[%s135 + $0x188] sm:$0x1] %v1545
    %v1547 = vld [vmem:[%s135 + $0x18c] sm:$0xf]
    %v1548 = vsel %vm1329, %v1221, %v1547
    %1549 = vst [vmem:[%s135 + $0x18c] sm:$0xf] %v1548
    %1550 = vst.msk [vmem:[%s135 + $0x190] sm:$0xf] %vm120, %v1230
    %v1551 = vld [vmem:[%s135 + $0x194] sm:$0x1]
    %v1552 = vsel %vm138, %v1231, %v1551
    %1553 = vst [vmem:[%s135 + $0x194] sm:$0x1] %v1552
    %v1554 = vld [vmem:[#allocation2] sm:$0xf]
    %v1555 = vld [vmem:[#allocation2 + $0x4] sm:$0xf]
    %v1556 = vld [vmem:[#allocation2 + $0xc] sm:$0xf]
    %v1557 = vld [vmem:[#allocation2 + $0x10] sm:$0xf]
    %v1558 = vld [vmem:[#allocation2 + $0x18] sm:$0xf]
    %v1559 = vld [vmem:[#allocation2 + $0x1c] sm:$0xf]
    %v1560 = vld [vmem:[#allocation2 + $0x24] sm:$0xf]
    %v1561 = vld [vmem:[#allocation2 + $0x28] sm:$0xf]
    %v1562 = vld [vmem:[#allocation2 + $0x30] sm:$0xf]
    %v1563 = vld [vmem:[#allocation2 + $0x34] sm:$0xf]
    %v1564 = vld [vmem:[#allocation2 + $0x3c] sm:$0xf]
    %v1565 = vld [vmem:[#allocation2 + $0x40] sm:$0xf]
    %v1566 = vld [vmem:[#allocation2 + $0x48] sm:$0xf]
    %v1567 = vld [vmem:[#allocation2 + $0x4c] sm:$0xf]
    %v1568 = vld [vmem:[#allocation2 + $0x54] sm:$0xf]
    %v1569 = vld [vmem:[#allocation2 + $0x58] sm:$0xf]
    %v1570 = vld [vmem:[#allocation2 + $0x60] sm:$0xf]
    %v1571 = vld [vmem:[#allocation2 + $0x64] sm:$0xf]
    %v1572 = vld [vmem:[#allocation2 + $0x6c] sm:$0xf]
    %v1573 = vld [vmem:[#allocation2 + $0x70] sm:$0xf]
    %v1574 = vld [vmem:[#allocation2 + $0x78] sm:$0xf]
    %v1575 = vld [vmem:[#allocation2 + $0x7c] sm:$0xf]
    %v1576 = vld [vmem:[#allocation2 + $0x84] sm:$0xf]
    %v1577 = vld [vmem:[#allocation2 + $0x88] sm:$0xf]
    %v1578 = vld [vmem:[#allocation2 + $0x90] sm:$0xf]
    %v1579 = vld [vmem:[#allocation2 + $0x94] sm:$0xf]
    %v1580 = vld [vmem:[#allocation2 + $0x9c] sm:$0xf]
    %v1581 = vld [vmem:[#allocation2 + $0xa0] sm:$0xf]
    %v1582 = vld [vmem:[#allocation2 + $0xa8] sm:$0xf]
    %v1583 = vld [vmem:[#allocation2 + $0xac] sm:$0xf]
    %v1584 = vld [vmem:[#allocation2 + $0xb4] sm:$0xf]
    %v1585 = vld [vmem:[#allocation2 + $0xb8] sm:$0xf]
    %v1586 = vld [vmem:[#allocation2 + $0xd8] sm:$0xf]
    %v1587 = vld [vmem:[#allocation2 + $0xdc] sm:$0xf]
    %v1588 = vld [vmem:[#allocation2 + $0xe4] sm:$0xf]
    %v1589 = vld [vmem:[#allocation2 + $0xe8] sm:$0xf]
    %v1590 = vld [vmem:[#allocation2 + $0xf0] sm:$0xf]
    %v1591 = vld [vmem:[#allocation2 + $0xf4] sm:$0xf]
    %v1592 = vld [vmem:[#allocation2 + $0xfc] sm:$0xf]
    %v1593 = vld [vmem:[#allocation2 + $0x100] sm:$0xf]
    %v1594 = vld [vmem:[#allocation2 + $0x108] sm:$0xf]
    %v1595 = vld [vmem:[#allocation2 + $0x10c] sm:$0xf]
    %v1596 = vld [vmem:[#allocation2 + $0x114] sm:$0xf]
    %v1597 = vld [vmem:[#allocation2 + $0x118] sm:$0xf]
    %v1598 = vld [vmem:[#allocation2 + $0x120] sm:$0xf]
    %v1599 = vld [vmem:[#allocation2 + $0x124] sm:$0xf]
    %v1600 = vld [vmem:[#allocation2 + $0x12c] sm:$0xf]
    %v1601 = vld [vmem:[#allocation2 + $0x130] sm:$0xf]
    %v1602 = vld [vmem:[#allocation2 + $0x138] sm:$0xf]
    %v1603 = vld [vmem:[#allocation2 + $0x13c] sm:$0xf]
    %v1604 = vld [vmem:[#allocation2 + $0x144] sm:$0xf]
    %v1605 = vld [vmem:[#allocation2 + $0x148] sm:$0xf]
    %v1606 = vld [vmem:[#allocation2 + $0x150] sm:$0xf]
    %v1607 = vld [vmem:[#allocation2 + $0x154] sm:$0xf]
    %v1608 = vld [vmem:[#allocation2 + $0x15c] sm:$0xf]
    %v1609 = vld [vmem:[#allocation2 + $0x160] sm:$0xf]
    %v1610 = vld [vmem:[#allocation2 + $0x168] sm:$0xf]
    %v1611 = vld [vmem:[#allocation2 + $0x16c] sm:$0xf]
    %v1612 = vld [vmem:[#allocation2 + $0x174] sm:$0xf]
    %v1613 = vld [vmem:[#allocation2 + $0x178] sm:$0xf]
    %v1614 = vld [vmem:[#allocation2 + $0x180] sm:$0xf]
    %v1615 = vld [vmem:[#allocation2 + $0x184] sm:$0xf]
    %v1616 = vld [vmem:[#allocation2 + $0x18c] sm:$0xf]
    %v1617 = vld [vmem:[#allocation2 + $0x190] sm:$0xf]
    %v1682 = vunpack.c.l.b16 %v1554
    %v1683 = vunpack.c.l.b16 %v1555
    %v1684 = vunpack.c.l.b16 %v1556
    %v1685 = vunpack.c.l.b16 %v1557
    %v1686 = vunpack.c.l.b16 %v1558
    %v1687 = vunpack.c.l.b16 %v1559
    %v1688 = vunpack.c.l.b16 %v1560
    %v1689 = vunpack.c.l.b16 %v1561
    %v1690 = vunpack.c.l.b16 %v1562
    %v1691 = vunpack.c.l.b16 %v1563
    %v1692 = vunpack.c.l.b16 %v1564
    %v1693 = vunpack.c.l.b16 %v1565
    %v1694 = vunpack.c.l.b16 %v1566
    %v1695 = vunpack.c.l.b16 %v1567
    %v1696 = vunpack.c.l.b16 %v1568
    %v1697 = vunpack.c.l.b16 %v1569
    %v1698 = vunpack.c.l.b16 %v1570
    %v1699 = vunpack.c.l.b16 %v1571
    %v1700 = vunpack.c.l.b16 %v1572
    %v1701 = vunpack.c.l.b16 %v1573
    %v1702 = vunpack.c.l.b16 %v1574
    %v1703 = vunpack.c.l.b16 %v1575
    %v1704 = vunpack.c.l.b16 %v1576
    %v1705 = vunpack.c.l.b16 %v1577
    %v1706 = vunpack.c.l.b16 %v1578
    %v1707 = vunpack.c.l.b16 %v1579
    %v1708 = vunpack.c.l.b16 %v1580
    %v1709 = vunpack.c.l.b16 %v1581
    %v1710 = vunpack.c.l.b16 %v1582
    %v1711 = vunpack.c.l.b16 %v1583
    %v1712 = vunpack.c.l.b16 %v1584
    %v1713 = vunpack.c.l.b16 %v1585
    %v1714 = vunpack.c.l.b16 %v1586
    %v1715 = vunpack.c.l.b16 %v1587
    %v1716 = vunpack.c.l.b16 %v1588
    %v1717 = vunpack.c.l.b16 %v1589
    %v1718 = vunpack.c.l.b16 %v1590
    %v1719 = vunpack.c.l.b16 %v1591
    %v1720 = vunpack.c.l.b16 %v1592
    %v1721 = vunpack.c.l.b16 %v1593
    %v1722 = vunpack.c.l.b16 %v1594
    %v1723 = vunpack.c.l.b16 %v1595
    %v1724 = vunpack.c.l.b16 %v1596
    %v1725 = vunpack.c.l.b16 %v1597
    %v1726 = vunpack.c.l.b16 %v1598
    %v1727 = vunpack.c.l.b16 %v1599
    %v1728 = vunpack.c.l.b16 %v1600
    %v1729 = vunpack.c.l.b16 %v1601
    %v1730 = vunpack.c.l.b16 %v1602
    %v1731 = vunpack.c.l.b16 %v1603
    %v1732 = vunpack.c.l.b16 %v1604
    %v1733 = vunpack.c.l.b16 %v1605
    %v1734 = vunpack.c.l.b16 %v1606
    %v1735 = vunpack.c.l.b16 %v1607
    %v1736 = vunpack.c.l.b16 %v1608
    %v1737 = vunpack.c.l.b16 %v1609
    %v1738 = vunpack.c.l.b16 %v1610
    %v1739 = vunpack.c.l.b16 %v1611
    %v1740 = vunpack.c.l.b16 %v1612
    %v1741 = vunpack.c.l.b16 %v1613
    %v1742 = vunpack.c.l.b16 %v1614
    %v1743 = vunpack.c.l.b16 %v1615
    %v1744 = vunpack.c.l.b16 %v1616
    %v1745 = vunpack.c.l.b16 %v1617
    %v1746 = vpack.c.b16 %v1683, %v1682
    %v1747 = vpack.c.b16 %v1685, %v1684
    %v1748 = vpack.c.b16 %v1687, %v1686
    %v1749 = vpack.c.b16 %v1689, %v1688
    %v1750 = vpack.c.b16 %v1691, %v1690
    %v1751 = vpack.c.b16 %v1693, %v1692
    %v1752 = vpack.c.b16 %v1695, %v1694
    %v1753 = vpack.c.b16 %v1697, %v1696
    %v1754 = vpack.c.b16 %v1699, %v1698
    %v1755 = vpack.c.b16 %v1701, %v1700
    %v1756 = vpack.c.b16 %v1703, %v1702
    %v1757 = vpack.c.b16 %v1705, %v1704
    %v1758 = vpack.c.b16 %v1707, %v1706
    %v1759 = vpack.c.b16 %v1709, %v1708
    %v1760 = vpack.c.b16 %v1711, %v1710
    %v1761 = vpack.c.b16 %v1713, %v1712
    %v1762 = vpack.c.b16 %v1715, %v1714
    %v1763 = vpack.c.b16 %v1717, %v1716
    %v1764 = vpack.c.b16 %v1719, %v1718
    %v1765 = vpack.c.b16 %v1721, %v1720
    %v1766 = vpack.c.b16 %v1723, %v1722
    %v1767 = vpack.c.b16 %v1725, %v1724
    %v1768 = vpack.c.b16 %v1727, %v1726
    %v1769 = vpack.c.b16 %v1729, %v1728
    %v1770 = vpack.c.b16 %v1731, %v1730
    %v1771 = vpack.c.b16 %v1733, %v1732
    %v1772 = vpack.c.b16 %v1735, %v1734
    %v1773 = vpack.c.b16 %v1737, %v1736
    %v1774 = vpack.c.b16 %v1739, %v1738
    %v1775 = vpack.c.b16 %v1741, %v1740
    %v1776 = vpack.c.b16 %v1743, %v1742
    %v1777 = vpack.c.b16 %v1745, %v1744
    %vm1810 = vcmask 261120
    %1811 = vst.msk [vmem:[#allocation3] sm:$0xff] %vm1810, %v1746
    %1812 = vst.msk [vmem:[#allocation3 + $0x18] sm:$0xff] %vm1810, %v1747
    %1813 = vst.msk [vmem:[#allocation3 + $0x30] sm:$0xff] %vm1810, %v1748
    %1814 = vst.msk [vmem:[#allocation3 + $0x48] sm:$0xff] %vm1810, %v1749
    %1815 = vst.msk [vmem:[#allocation3 + $0x60] sm:$0xff] %vm1810, %v1750
    %1816 = vst.msk [vmem:[#allocation3 + $0x78] sm:$0xff] %vm1810, %v1751
    %1817 = vst.msk [vmem:[#allocation3 + $0x90] sm:$0xff] %vm1810, %v1752
    %1818 = vst.msk [vmem:[#allocation3 + $0xa8] sm:$0xff] %vm1810, %v1753
    %1819 = vst.msk [vmem:[#allocation3 + $0xc0] sm:$0xff] %vm1810, %v1754
    %1820 = vst.msk [vmem:[#allocation3 + $0xd8] sm:$0xff] %vm1810, %v1755
    %1821 = vst.msk [vmem:[#allocation3 + $0xf0] sm:$0xff] %vm1810, %v1756
    %1822 = vst.msk [vmem:[#allocation3 + $0x108] sm:$0xff] %vm1810, %v1757
    %1823 = vst.msk [vmem:[#allocation3 + $0x120] sm:$0xff] %vm1810, %v1758
    %1824 = vst.msk [vmem:[#allocation3 + $0x138] sm:$0xff] %vm1810, %v1759
    %1825 = vst.msk [vmem:[#allocation3 + $0x150] sm:$0xff] %vm1810, %v1760
    %1826 = vst.msk [vmem:[#allocation3 + $0x168] sm:$0xff] %vm1810, %v1761
    %1827 = vst.msk [vmem:[#allocation3 + $0x180] sm:$0xff] %vm1810, %v1762
    %1828 = vst.msk [vmem:[#allocation3 + $0x198] sm:$0xff] %vm1810, %v1763
    %1829 = vst.msk [vmem:[#allocation3 + $0x1b0] sm:$0xff] %vm1810, %v1764
    %1830 = vst.msk [vmem:[#allocation3 + $0x1c8] sm:$0xff] %vm1810, %v1765
    %1831 = vst.msk [vmem:[#allocation3 + $0x1e0] sm:$0xff] %vm1810, %v1766
    %1832 = vst.msk [vmem:[#allocation3 + $0x1f8] sm:$0xff] %vm1810, %v1767
    %1833 = vst.msk [vmem:[#allocation3 + $0x210] sm:$0xff] %vm1810, %v1768
    %1834 = vst.msk [vmem:[#allocation3 + $0x228] sm:$0xff] %vm1810, %v1769
    %1835 = vst.msk [vmem:[#allocation3 + $0x240] sm:$0xff] %vm1810, %v1770
    %1836 = vst.msk [vmem:[#allocation3 + $0x258] sm:$0xff] %vm1810, %v1771
    %1837 = vst.msk [vmem:[#allocation3 + $0x270] sm:$0xff] %vm1810, %v1772
    %1838 = vst.msk [vmem:[#allocation3 + $0x288] sm:$0xff] %vm1810, %v1773
    %1839 = vst.msk [vmem:[#allocation3 + $0x2a0] sm:$0xff] %vm1810, %v1774
    %1840 = vst.msk [vmem:[#allocation3 + $0x2b8] sm:$0xff] %vm1810, %v1775
    %1841 = vst.msk [vmem:[#allocation3 + $0x2d0] sm:$0xff] %vm1810, %v1776
    %1842 = vst.msk [vmem:[#allocation3 + $0x2e8] sm:$0xff] %vm1810, %v1777
    %v1843 = vld [vmem:[#allocation2] sm:$0xf]
    %v1844 = vld [vmem:[#allocation2 + $0x4] sm:$0xf]
    %v1845 = vld [vmem:[#allocation2 + $0x8] sm:$0x1]
    %v1846 = vld [vmem:[#allocation2 + $0xc] sm:$0xf]
    %v1847 = vld [vmem:[#allocation2 + $0x10] sm:$0xf]
    %v1848 = vld [vmem:[#allocation2 + $0x14] sm:$0x1]
    %v1849 = vld [vmem:[#allocation2 + $0x18] sm:$0xf]
    %v1850 = vld [vmem:[#allocation2 + $0x1c] sm:$0xf]
    %v1851 = vld [vmem:[#allocation2 + $0x20] sm:$0x1]
    %v1852 = vld [vmem:[#allocation2 + $0x24] sm:$0xf]
    %v1853 = vld [vmem:[#allocation2 + $0x28] sm:$0xf]
    %v1854 = vld [vmem:[#allocation2 + $0x2c] sm:$0x1]
    %v1855 = vld [vmem:[#allocation2 + $0x30] sm:$0xf]
    %v1856 = vld [vmem:[#allocation2 + $0x34] sm:$0xf]
    %v1857 = vld [vmem:[#allocation2 + $0x38] sm:$0x1]
    %v1858 = vld [vmem:[#allocation2 + $0x3c] sm:$0xf]
    %v1859 = vld [vmem:[#allocation2 + $0x40] sm:$0xf]
    %v1860 = vld [vmem:[#allocation2 + $0x44] sm:$0x1]
    %v1861 = vld [vmem:[#allocation2 + $0x48] sm:$0xf]
    %v1862 = vld [vmem:[#allocation2 + $0x4c] sm:$0xf]
    %v1863 = vld [vmem:[#allocation2 + $0x50] sm:$0x1]
    %v1864 = vld [vmem:[#allocation2 + $0x54] sm:$0xf]
    %v1865 = vld [vmem:[#allocation2 + $0x58] sm:$0xf]
    %v1866 = vld [vmem:[#allocation2 + $0x5c] sm:$0x1]
    %v1867 = vld [vmem:[#allocation2 + $0x60] sm:$0xf]
    %v1868 = vld [vmem:[#allocation2 + $0x64] sm:$0xf]
    %v1869 = vld [vmem:[#allocation2 + $0x68] sm:$0x1]
    %v1870 = vld [vmem:[#allocation2 + $0x6c] sm:$0xf]
    %v1871 = vld [vmem:[#allocation2 + $0x70] sm:$0xf]
    %v1872 = vld [vmem:[#allocation2 + $0x74] sm:$0x1]
    %v1873 = vld [vmem:[#allocation2 + $0x78] sm:$0xf]
    %v1874 = vld [vmem:[#allocation2 + $0x7c] sm:$0xf]
    %v1875 = vld [vmem:[#allocation2 + $0x80] sm:$0x1]
    %v1876 = vld [vmem:[#allocation2 + $0x84] sm:$0xf]
    %v1877 = vld [vmem:[#allocation2 + $0x88] sm:$0xf]
    %v1878 = vld [vmem:[#allocation2 + $0x8c] sm:$0x1]
    %v1879 = vld [vmem:[#allocation2 + $0x90] sm:$0xf]
    %v1880 = vld [vmem:[#allocation2 + $0x94] sm:$0xf]
    %v1881 = vld [vmem:[#allocation2 + $0x98] sm:$0x1]
    %v1882 = vld [vmem:[#allocation2 + $0x9c] sm:$0xf]
    %v1883 = vld [vmem:[#allocation2 + $0xa0] sm:$0xf]
    %v1884 = vld [vmem:[#allocation2 + $0xa4] sm:$0x1]
    %v1885 = vld [vmem:[#allocation2 + $0xa8] sm:$0xf]
    %v1886 = vld [vmem:[#allocation2 + $0xac] sm:$0xf]
    %v1887 = vld [vmem:[#allocation2 + $0xb0] sm:$0x1]
    %v1888 = vld [vmem:[#allocation2 + $0xb4] sm:$0xf]
    %v1889 = vld [vmem:[#allocation2 + $0xb8] sm:$0xf]
    %v1890 = vld [vmem:[#allocation2 + $0xbc] sm:$0x1]
    %v1891 = vld [vmem:[#allocation2 + $0xd8] sm:$0xf]
    %v1892 = vld [vmem:[#allocation2 + $0xdc] sm:$0xf]
    %v1893 = vld [vmem:[#allocation2 + $0xe0] sm:$0x1]
    %v1894 = vld [vmem:[#allocation2 + $0xe4] sm:$0xf]
    %v1895 = vld [vmem:[#allocation2 + $0xe8] sm:$0xf]
    %v1896 = vld [vmem:[#allocation2 + $0xec] sm:$0x1]
    %v1897 = vld [vmem:[#allocation2 + $0xf0] sm:$0xf]
    %v1898 = vld [vmem:[#allocation2 + $0xf4] sm:$0xf]
    %v1899 = vld [vmem:[#allocation2 + $0xf8] sm:$0x1]
    %v1900 = vld [vmem:[#allocation2 + $0xfc] sm:$0xf]
    %v1901 = vld [vmem:[#allocation2 + $0x100] sm:$0xf]
    %v1902 = vld [vmem:[#allocation2 + $0x104] sm:$0x1]
    %v1903 = vld [vmem:[#allocation2 + $0x108] sm:$0xf]
    %v1904 = vld [vmem:[#allocation2 + $0x10c] sm:$0xf]
    %v1905 = vld [vmem:[#allocation2 + $0x110] sm:$0x1]
    %v1906 = vld [vmem:[#allocation2 + $0x114] sm:$0xf]
    %v1907 = vld [vmem:[#allocation2 + $0x118] sm:$0xf]
    %v1908 = vld [vmem:[#allocation2 + $0x11c] sm:$0x1]
    %v1909 = vld [vmem:[#allocation2 + $0x120] sm:$0xf]
    %v1910 = vld [vmem:[#allocation2 + $0x124] sm:$0xf]
    %v1911 = vld [vmem:[#allocation2 + $0x128] sm:$0x1]
    %v1912 = vld [vmem:[#allocation2 + $0x12c] sm:$0xf]
    %v1913 = vld [vmem:[#allocation2 + $0x130] sm:$0xf]
    %v1914 = vld [vmem:[#allocation2 + $0x134] sm:$0x1]
    %v1915 = vld [vmem:[#allocation2 + $0x138] sm:$0xf]
    %v1916 = vld [vmem:[#allocation2 + $0x13c] sm:$0xf]
    %v1917 = vld [vmem:[#allocation2 + $0x140] sm:$0x1]
    %v1918 = vld [vmem:[#allocation2 + $0x144] sm:$0xf]
    %v1919 = vld [vmem:[#allocation2 + $0x148] sm:$0xf]
    %v1920 = vld [vmem:[#allocation2 + $0x14c] sm:$0x1]
    %v1921 = vld [vmem:[#allocation2 + $0x150] sm:$0xf]
    %v1922 = vld [vmem:[#allocation2 + $0x154] sm:$0xf]
    %v1923 = vld [vmem:[#allocation2 + $0x158] sm:$0x1]
    %v1924 = vld [vmem:[#allocation2 + $0x15c] sm:$0xf]
    %v1925 = vld [vmem:[#allocation2 + $0x160] sm:$0xf]
    %v1926 = vld [vmem:[#allocation2 + $0x164] sm:$0x1]
    %v1927 = vld [vmem:[#allocation2 + $0x168] sm:$0xf]
    %v1928 = vld [vmem:[#allocation2 + $0x16c] sm:$0xf]
    %v1929 = vld [vmem:[#allocation2 + $0x170] sm:$0x1]
    %v1930 = vld [vmem:[#allocation2 + $0x174] sm:$0xf]
    %v1931 = vld [vmem:[#allocation2 + $0x178] sm:$0xf]
    %v1932 = vld [vmem:[#allocation2 + $0x17c] sm:$0x1]
    %v1933 = vld [vmem:[#allocation2 + $0x180] sm:$0xf]
    %v1934 = vld [vmem:[#allocation2 + $0x184] sm:$0xf]
    %v1935 = vld [vmem:[#allocation2 + $0x188] sm:$0x1]
    %v1936 = vld [vmem:[#allocation2 + $0x18c] sm:$0xf]
    %v1937 = vld [vmem:[#allocation2 + $0x190] sm:$0xf]
    %v1938 = vld [vmem:[#allocation2 + $0x194] sm:$0x1]
    %vm1939 = vsmask.f32 3328
    %vm1940 = vsmask.f32 7440
    %vm1941 = vmor %vm1939, %vm1940
    %v1943 = vshrl.u32 %v1843, 16
    %v1945 = vrot.slane %v1943, 4
    %v1946 = vshll.u32 %v1843, 16
    %v1948 = vrot.slane %v1946, 5
    %v1949 = vor.u32 %v1945, %v1948
    %v1950 = vrot.slane %v1949, 4
    %v1952 = vshll.u32 %v1844, 16
    %v1954 = vrot.slane %v1952, 5
    %v1955 = vsel %vm1941, %v1950, %v1954
    %v1956 = vshrl.u32 %v1844, 16
    %v1958 = vrot.slane %v1956, 4
    %v1959 = vor.u32 %v1958, %v1954
    %v1960 = vrot.slane %v1959, 4
    %v1962 = vshll.u32 %v1845, 16
    %v1964 = vrot.slane %v1962, 5
    %v1965 = vsel %vm1941, %v1960, %v1964
    %v1967 = vshrl.u32 %v1846, 16
    %v1969 = vrot.slane %v1967, 4
    %v1970 = vshll.u32 %v1846, 16
    %v1972 = vrot.slane %v1970, 5
    %v1973 = vor.u32 %v1969, %v1972
    %v1974 = vrot.slane %v1973, 4
    %v1976 = vshll.u32 %v1847, 16
    %v1978 = vrot.slane %v1976, 5
    %v1979 = vsel %vm1941, %v1974, %v1978
    %v1980 = vshrl.u32 %v1847, 16
    %v1982 = vrot.slane %v1980, 4
    %v1983 = vor.u32 %v1982, %v1978
    %v1984 = vrot.slane %v1983, 4
    %v1986 = vshll.u32 %v1848, 16
    %v1988 = vrot.slane %v1986, 5
    %v1989 = vsel %vm1941, %v1984, %v1988
    %v1991 = vshrl.u32 %v1849, 16
    %v1993 = vrot.slane %v1991, 4
    %v1994 = vshll.u32 %v1849, 16
    %v1996 = vrot.slane %v1994, 5
    %v1997 = vor.u32 %v1993, %v1996
    %v1998 = vrot.slane %v1997, 4
    %v2000 = vshll.u32 %v1850, 16
    %v2002 = vrot.slane %v2000, 5
    %v2003 = vsel %vm1941, %v1998, %v2002
    %v2004 = vshrl.u32 %v1850, 16
    %v2006 = vrot.slane %v2004, 4
    %v2007 = vor.u32 %v2006, %v2002
    %v2008 = vrot.slane %v2007, 4
    %v2010 = vshll.u32 %v1851, 16
    %v2012 = vrot.slane %v2010, 5
    %v2013 = vsel %vm1941, %v2008, %v2012
    %v2015 = vshrl.u32 %v1852, 16
    %v2017 = vrot.slane %v2015, 4
    %v2018 = vshll.u32 %v1852, 16
    %v2020 = vrot.slane %v2018, 5
    %v2021 = vor.u32 %v2017, %v2020
    %v2022 = vrot.slane %v2021, 4
    %v2024 = vshll.u32 %v1853, 16
    %v2026 = vrot.slane %v2024, 5
    %v2027 = vsel %vm1941, %v2022, %v2026
    %v2028 = vshrl.u32 %v1853, 16
    %v2030 = vrot.slane %v2028, 4
    %v2031 = vor.u32 %v2030, %v2026
    %v2032 = vrot.slane %v2031, 4
    %v2034 = vshll.u32 %v1854, 16
    %v2036 = vrot.slane %v2034, 5
    %v2037 = vsel %vm1941, %v2032, %v2036
    %v2039 = vshrl.u32 %v1855, 16
    %v2041 = vrot.slane %v2039, 4
    %v2042 = vshll.u32 %v1855, 16
    %v2044 = vrot.slane %v2042, 5
    %v2045 = vor.u32 %v2041, %v2044
    %v2046 = vrot.slane %v2045, 4
    %v2048 = vshll.u32 %v1856, 16
    %v2050 = vrot.slane %v2048, 5
    %v2051 = vsel %vm1941, %v2046, %v2050
    %v2052 = vshrl.u32 %v1856, 16
    %v2054 = vrot.slane %v2052, 4
    %v2055 = vor.u32 %v2054, %v2050
    %v2056 = vrot.slane %v2055, 4
    %v2058 = vshll.u32 %v1857, 16
    %v2060 = vrot.slane %v2058, 5
    %v2061 = vsel %vm1941, %v2056, %v2060
    %v2063 = vshrl.u32 %v1858, 16
    %v2065 = vrot.slane %v2063, 4
    %v2066 = vshll.u32 %v1858, 16
    %v2068 = vrot.slane %v2066, 5
    %v2069 = vor.u32 %v2065, %v2068
    %v2070 = vrot.slane %v2069, 4
    %v2072 = vshll.u32 %v1859, 16
    %v2074 = vrot.slane %v2072, 5
    %v2075 = vsel %vm1941, %v2070, %v2074
    %v2076 = vshrl.u32 %v1859, 16
    %v2078 = vrot.slane %v2076, 4
    %v2079 = vor.u32 %v2078, %v2074
    %v2080 = vrot.slane %v2079, 4
    %v2082 = vshll.u32 %v1860, 16
    %v2084 = vrot.slane %v2082, 5
    %v2085 = vsel %vm1941, %v2080, %v2084
    %v2087 = vshrl.u32 %v1861, 16
    %v2089 = vrot.slane %v2087, 4
    %v2090 = vshll.u32 %v1861, 16
    %v2092 = vrot.slane %v2090, 5
    %v2093 = vor.u32 %v2089, %v2092
    %v2094 = vrot.slane %v2093, 4
    %v2096 = vshll.u32 %v1862, 16
    %v2098 = vrot.slane %v2096, 5
    %v2099 = vsel %vm1941, %v2094, %v2098
    %v2100 = vshrl.u32 %v1862, 16
    %v2102 = vrot.slane %v2100, 4
    %v2103 = vor.u32 %v2102, %v2098
    %v2104 = vrot.slane %v2103, 4
    %v2106 = vshll.u32 %v1863, 16
    %v2108 = vrot.slane %v2106, 5
    %v2109 = vsel %vm1941, %v2104, %v2108
    %v2111 = vshrl.u32 %v1864, 16
    %v2113 = vrot.slane %v2111, 4
    %v2114 = vshll.u32 %v1864, 16
    %v2116 = vrot.slane %v2114, 5
    %v2117 = vor.u32 %v2113, %v2116
    %v2118 = vrot.slane %v2117, 4
    %v2120 = vshll.u32 %v1865, 16
    %v2122 = vrot.slane %v2120, 5
    %v2123 = vsel %vm1941, %v2118, %v2122
    %v2124 = vshrl.u32 %v1865, 16
    %v2126 = vrot.slane %v2124, 4
    %v2127 = vor.u32 %v2126, %v2122
    %v2128 = vrot.slane %v2127, 4
    %v2130 = vshll.u32 %v1866, 16
    %v2132 = vrot.slane %v2130, 5
    %v2133 = vsel %vm1941, %v2128, %v2132
    %v2135 = vshrl.u32 %v1867, 16
    %v2137 = vrot.slane %v2135, 4
    %v2138 = vshll.u32 %v1867, 16
    %v2140 = vrot.slane %v2138, 5
    %v2141 = vor.u32 %v2137, %v2140
    %v2142 = vrot.slane %v2141, 4
    %v2144 = vshll.u32 %v1868, 16
    %v2146 = vrot.slane %v2144, 5
    %v2147 = vsel %vm1941, %v2142, %v2146
    %v2148 = vshrl.u32 %v1868, 16
    %v2150 = vrot.slane %v2148, 4
    %v2151 = vor.u32 %v2150, %v2146
    %v2152 = vrot.slane %v2151, 4
    %v2154 = vshll.u32 %v1869, 16
    %v2156 = vrot.slane %v2154, 5
    %v2157 = vsel %vm1941, %v2152, %v2156
    %v2159 = vshrl.u32 %v1870, 16
    %v2161 = vrot.slane %v2159, 4
    %v2162 = vshll.u32 %v1870, 16
    %v2164 = vrot.slane %v2162, 5
    %v2165 = vor.u32 %v2161, %v2164
    %v2166 = vrot.slane %v2165, 4
    %v2168 = vshll.u32 %v1871, 16
    %v2170 = vrot.slane %v2168, 5
    %v2171 = vsel %vm1941, %v2166, %v2170
    %v2172 = vshrl.u32 %v1871, 16
    %v2174 = vrot.slane %v2172, 4
    %v2175 = vor.u32 %v2174, %v2170
    %v2176 = vrot.slane %v2175, 4
    %v2178 = vshll.u32 %v1872, 16
    %v2180 = vrot.slane %v2178, 5
    %v2181 = vsel %vm1941, %v2176, %v2180
    %v2183 = vshrl.u32 %v1873, 16
    %v2185 = vrot.slane %v2183, 4
    %v2186 = vshll.u32 %v1873, 16
    %v2188 = vrot.slane %v2186, 5
    %v2189 = vor.u32 %v2185, %v2188
    %v2190 = vrot.slane %v2189, 4
    %v2192 = vshll.u32 %v1874, 16
    %v2194 = vrot.slane %v2192, 5
    %v2195 = vsel %vm1941, %v2190, %v2194
    %v2196 = vshrl.u32 %v1874, 16
    %v2198 = vrot.slane %v2196, 4
    %v2199 = vor.u32 %v2198, %v2194
    %v2200 = vrot.slane %v2199, 4
    %v2202 = vshll.u32 %v1875, 16
    %v2204 = vrot.slane %v2202, 5
    %v2205 = vsel %vm1941, %v2200, %v2204
    %v2207 = vshrl.u32 %v1876, 16
    %v2209 = vrot.slane %v2207, 4
    %v2210 = vshll.u32 %v1876, 16
    %v2212 = vrot.slane %v2210, 5
    %v2213 = vor.u32 %v2209, %v2212
    %v2214 = vrot.slane %v2213, 4
    %v2216 = vshll.u32 %v1877, 16
    %v2218 = vrot.slane %v2216, 5
    %v2219 = vsel %vm1941, %v2214, %v2218
    %v2220 = vshrl.u32 %v1877, 16
    %v2222 = vrot.slane %v2220, 4
    %v2223 = vor.u32 %v2222, %v2218
    %v2224 = vrot.slane %v2223, 4
    %v2226 = vshll.u32 %v1878, 16
    %v2228 = vrot.slane %v2226, 5
    %v2229 = vsel %vm1941, %v2224, %v2228
    %v2231 = vshrl.u32 %v1879, 16
    %v2233 = vrot.slane %v2231, 4
    %v2234 = vshll.u32 %v1879, 16
    %v2236 = vrot.slane %v2234, 5
    %v2237 = vor.u32 %v2233, %v2236
    %v2238 = vrot.slane %v2237, 4
    %v2240 = vshll.u32 %v1880, 16
    %v2242 = vrot.slane %v2240, 5
    %v2243 = vsel %vm1941, %v2238, %v2242
    %v2244 = vshrl.u32 %v1880, 16
    %v2246 = vrot.slane %v2244, 4
    %v2247 = vor.u32 %v2246, %v2242
    %v2248 = vrot.slane %v2247, 4
    %v2250 = vshll.u32 %v1881, 16
    %v2252 = vrot.slane %v2250, 5
    %v2253 = vsel %vm1941, %v2248, %v2252
    %v2255 = vshrl.u32 %v1882, 16
    %v2257 = vrot.slane %v2255, 4
    %v2258 = vshll.u32 %v1882, 16
    %v2260 = vrot.slane %v2258, 5
    %v2261 = vor.u32 %v2257, %v2260
    %v2262 = vrot.slane %v2261, 4
    %v2264 = vshll.u32 %v1883, 16
    %v2266 = vrot.slane %v2264, 5
    %v2267 = vsel %vm1941, %v2262, %v2266
    %v2268 = vshrl.u32 %v1883, 16
    %v2270 = vrot.slane %v2268, 4
    %v2271 = vor.u32 %v2270, %v2266
    %v2272 = vrot.slane %v2271, 4
    %v2274 = vshll.u32 %v1884, 16
    %v2276 = vrot.slane %v2274, 5
    %v2277 = vsel %vm1941, %v2272, %v2276
    %v2279 = vshrl.u32 %v1885, 16
    %v2281 = vrot.slane %v2279, 4
    %v2282 = vshll.u32 %v1885, 16
    %v2284 = vrot.slane %v2282, 5
    %v2285 = vor.u32 %v2281, %v2284
    %v2286 = vrot.slane %v2285, 4
    %v2288 = vshll.u32 %v1886, 16
    %v2290 = vrot.slane %v2288, 5
    %v2291 = vsel %vm1941, %v2286, %v2290
    %v2292 = vshrl.u32 %v1886, 16
    %v2294 = vrot.slane %v2292, 4
    %v2295 = vor.u32 %v2294, %v2290
    %v2296 = vrot.slane %v2295, 4
    %v2298 = vshll.u32 %v1887, 16
    %v2300 = vrot.slane %v2298, 5
    %v2301 = vsel %vm1941, %v2296, %v2300
    %v2303 = vshrl.u32 %v1888, 16
    %v2305 = vrot.slane %v2303, 4
    %v2306 = vshll.u32 %v1888, 16
    %v2308 = vrot.slane %v2306, 5
    %v2309 = vor.u32 %v2305, %v2308
    %v2310 = vrot.slane %v2309, 4
    %v2312 = vshll.u32 %v1889, 16
    %v2314 = vrot.slane %v2312, 5
    %v2315 = vsel %vm1941, %v2310, %v2314
    %v2316 = vshrl.u32 %v1889, 16
    %v2318 = vrot.slane %v2316, 4
    %v2319 = vor.u32 %v2318, %v2314
    %v2320 = vrot.slane %v2319, 4
    %v2322 = vshll.u32 %v1890, 16
    %v2324 = vrot.slane %v2322, 5
    %v2325 = vsel %vm1941, %v2320, %v2324
    %v2327 = vshrl.u32 %v1891, 16
    %v2329 = vrot.slane %v2327, 4
    %v2330 = vshll.u32 %v1891, 16
    %v2332 = vrot.slane %v2330, 5
    %v2333 = vor.u32 %v2329, %v2332
    %v2334 = vrot.slane %v2333, 4
    %v2336 = vshll.u32 %v1892, 16
    %v2338 = vrot.slane %v2336, 5
    %v2339 = vsel %vm1941, %v2334, %v2338
    %v2340 = vshrl.u32 %v1892, 16
    %v2342 = vrot.slane %v2340, 4
    %v2343 = vor.u32 %v2342, %v2338
    %v2344 = vrot.slane %v2343, 4
    %v2346 = vshll.u32 %v1893, 16
    %v2348 = vrot.slane %v2346, 5
    %v2349 = vsel %vm1941, %v2344, %v2348
    %v2351 = vshrl.u32 %v1894, 16
    %v2353 = vrot.slane %v2351, 4
    %v2354 = vshll.u32 %v1894, 16
    %v2356 = vrot.slane %v2354, 5
    %v2357 = vor.u32 %v2353, %v2356
    %v2358 = vrot.slane %v2357, 4
    %v2360 = vshll.u32 %v1895, 16
    %v2362 = vrot.slane %v2360, 5
    %v2363 = vsel %vm1941, %v2358, %v2362
    %v2364 = vshrl.u32 %v1895, 16
    %v2366 = vrot.slane %v2364, 4
    %v2367 = vor.u32 %v2366, %v2362
    %v2368 = vrot.slane %v2367, 4
    %v2370 = vshll.u32 %v1896, 16
    %v2372 = vrot.slane %v2370, 5
    %v2373 = vsel %vm1941, %v2368, %v2372
    %v2375 = vshrl.u32 %v1897, 16
    %v2377 = vrot.slane %v2375, 4
    %v2378 = vshll.u32 %v1897, 16
    %v2380 = vrot.slane %v2378, 5
    %v2381 = vor.u32 %v2377, %v2380
    %v2382 = vrot.slane %v2381, 4
    %v2384 = vshll.u32 %v1898, 16
    %v2386 = vrot.slane %v2384, 5
    %v2387 = vsel %vm1941, %v2382, %v2386
    %v2388 = vshrl.u32 %v1898, 16
    %v2390 = vrot.slane %v2388, 4
    %v2391 = vor.u32 %v2390, %v2386
    %v2392 = vrot.slane %v2391, 4
    %v2394 = vshll.u32 %v1899, 16
    %v2396 = vrot.slane %v2394, 5
    %v2397 = vsel %vm1941, %v2392, %v2396
    %v2399 = vshrl.u32 %v1900, 16
    %v2401 = vrot.slane %v2399, 4
    %v2402 = vshll.u32 %v1900, 16
    %v2404 = vrot.slane %v2402, 5
    %v2405 = vor.u32 %v2401, %v2404
    %v2406 = vrot.slane %v2405, 4
    %v2408 = vshll.u32 %v1901, 16
    %v2410 = vrot.slane %v2408, 5
    %v2411 = vsel %vm1941, %v2406, %v2410
    %v2412 = vshrl.u32 %v1901, 16
    %v2414 = vrot.slane %v2412, 4
    %v2415 = vor.u32 %v2414, %v2410
    %v2416 = vrot.slane %v2415, 4
    %v2418 = vshll.u32 %v1902, 16
    %v2420 = vrot.slane %v2418, 5
    %v2421 = vsel %vm1941, %v2416, %v2420
    %v2423 = vshrl.u32 %v1903, 16
    %v2425 = vrot.slane %v2423, 4
    %v2426 = vshll.u32 %v1903, 16
    %v2428 = vrot.slane %v2426, 5
    %v2429 = vor.u32 %v2425, %v2428
    %v2430 = vrot.slane %v2429, 4
    %v2432 = vshll.u32 %v1904, 16
    %v2434 = vrot.slane %v2432, 5
    %v2435 = vsel %vm1941, %v2430, %v2434
    %v2436 = vshrl.u32 %v1904, 16
    %v2438 = vrot.slane %v2436, 4
    %v2439 = vor.u32 %v2438, %v2434
    %v2440 = vrot.slane %v2439, 4
    %v2442 = vshll.u32 %v1905, 16
    %v2444 = vrot.slane %v2442, 5
    %v2445 = vsel %vm1941, %v2440, %v2444
    %v2447 = vshrl.u32 %v1906, 16
    %v2449 = vrot.slane %v2447, 4
    %v2450 = vshll.u32 %v1906, 16
    %v2452 = vrot.slane %v2450, 5
    %v2453 = vor.u32 %v2449, %v2452
    %v2454 = vrot.slane %v2453, 4
    %v2456 = vshll.u32 %v1907, 16
    %v2458 = vrot.slane %v2456, 5
    %v2459 = vsel %vm1941, %v2454, %v2458
    %v2460 = vshrl.u32 %v1907, 16
    %v2462 = vrot.slane %v2460, 4
    %v2463 = vor.u32 %v2462, %v2458
    %v2464 = vrot.slane %v2463, 4
    %v2466 = vshll.u32 %v1908, 16
    %v2468 = vrot.slane %v2466, 5
    %v2469 = vsel %vm1941, %v2464, %v2468
    %v2471 = vshrl.u32 %v1909, 16
    %v2473 = vrot.slane %v2471, 4
    %v2474 = vshll.u32 %v1909, 16
    %v2476 = vrot.slane %v2474, 5
    %v2477 = vor.u32 %v2473, %v2476
    %v2478 = vrot.slane %v2477, 4
    %v2480 = vshll.u32 %v1910, 16
    %v2482 = vrot.slane %v2480, 5
    %v2483 = vsel %vm1941, %v2478, %v2482
    %v2484 = vshrl.u32 %v1910, 16
    %v2486 = vrot.slane %v2484, 4
    %v2487 = vor.u32 %v2486, %v2482
    %v2488 = vrot.slane %v2487, 4
    %v2490 = vshll.u32 %v1911, 16
    %v2492 = vrot.slane %v2490, 5
    %v2493 = vsel %vm1941, %v2488, %v2492
    %v2495 = vshrl.u32 %v1912, 16
    %v2497 = vrot.slane %v2495, 4
    %v2498 = vshll.u32 %v1912, 16
    %v2500 = vrot.slane %v2498, 5
    %v2501 = vor.u32 %v2497, %v2500
    %v2502 = vrot.slane %v2501, 4
    %v2504 = vshll.u32 %v1913, 16
    %v2506 = vrot.slane %v2504, 5
    %v2507 = vsel %vm1941, %v2502, %v2506
    %v2508 = vshrl.u32 %v1913, 16
    %v2510 = vrot.slane %v2508, 4
    %v2511 = vor.u32 %v2510, %v2506
    %v2512 = vrot.slane %v2511, 4
    %v2514 = vshll.u32 %v1914, 16
    %v2516 = vrot.slane %v2514, 5
    %v2517 = vsel %vm1941, %v2512, %v2516
    %v2519 = vshrl.u32 %v1915, 16
    %v2521 = vrot.slane %v2519, 4
    %v2522 = vshll.u32 %v1915, 16
    %v2524 = vrot.slane %v2522, 5
    %v2525 = vor.u32 %v2521, %v2524
    %v2526 = vrot.slane %v2525, 4
    %v2528 = vshll.u32 %v1916, 16
    %v2530 = vrot.slane %v2528, 5
    %v2531 = vsel %vm1941, %v2526, %v2530
    %v2532 = vshrl.u32 %v1916, 16
    %v2534 = vrot.slane %v2532, 4
    %v2535 = vor.u32 %v2534, %v2530
    %v2536 = vrot.slane %v2535, 4
    %v2538 = vshll.u32 %v1917, 16
    %v2540 = vrot.slane %v2538, 5
    %v2541 = vsel %vm1941, %v2536, %v2540
    %v2543 = vshrl.u32 %v1918, 16
    %v2545 = vrot.slane %v2543, 4
    %v2546 = vshll.u32 %v1918, 16
    %v2548 = vrot.slane %v2546, 5
    %v2549 = vor.u32 %v2545, %v2548
    %v2550 = vrot.slane %v2549, 4
    %v2552 = vshll.u32 %v1919, 16
    %v2554 = vrot.slane %v2552, 5
    %v2555 = vsel %vm1941, %v2550, %v2554
    %v2556 = vshrl.u32 %v1919, 16
    %v2558 = vrot.slane %v2556, 4
    %v2559 = vor.u32 %v2558, %v2554
    %v2560 = vrot.slane %v2559, 4
    %v2562 = vshll.u32 %v1920, 16
    %v2564 = vrot.slane %v2562, 5
    %v2565 = vsel %vm1941, %v2560, %v2564
    %v2567 = vshrl.u32 %v1921, 16
    %v2569 = vrot.slane %v2567, 4
    %v2570 = vshll.u32 %v1921, 16
    %v2572 = vrot.slane %v2570, 5
    %v2573 = vor.u32 %v2569, %v2572
    %v2574 = vrot.slane %v2573, 4
    %v2576 = vshll.u32 %v1922, 16
    %v2578 = vrot.slane %v2576, 5
    %v2579 = vsel %vm1941, %v2574, %v2578
    %v2580 = vshrl.u32 %v1922, 16
    %v2582 = vrot.slane %v2580, 4
    %v2583 = vor.u32 %v2582, %v2578
    %v2584 = vrot.slane %v2583, 4
    %v2586 = vshll.u32 %v1923, 16
    %v2588 = vrot.slane %v2586, 5
    %v2589 = vsel %vm1941, %v2584, %v2588
    %v2591 = vshrl.u32 %v1924, 16
    %v2593 = vrot.slane %v2591, 4
    %v2594 = vshll.u32 %v1924, 16
    %v2596 = vrot.slane %v2594, 5
    %v2597 = vor.u32 %v2593, %v2596
    %v2598 = vrot.slane %v2597, 4
    %v2600 = vshll.u32 %v1925, 16
    %v2602 = vrot.slane %v2600, 5
    %v2603 = vsel %vm1941, %v2598, %v2602
    %v2604 = vshrl.u32 %v1925, 16
    %v2606 = vrot.slane %v2604, 4
    %v2607 = vor.u32 %v2606, %v2602
    %v2608 = vrot.slane %v2607, 4
    %v2610 = vshll.u32 %v1926, 16
    %v2612 = vrot.slane %v2610, 5
    %v2613 = vsel %vm1941, %v2608, %v2612
    %v2615 = vshrl.u32 %v1927, 16
    %v2617 = vrot.slane %v2615, 4
    %v2618 = vshll.u32 %v1927, 16
    %v2620 = vrot.slane %v2618, 5
    %v2621 = vor.u32 %v2617, %v2620
    %v2622 = vrot.slane %v2621, 4
    %v2624 = vshll.u32 %v1928, 16
    %v2626 = vrot.slane %v2624, 5
    %v2627 = vsel %vm1941, %v2622, %v2626
    %v2628 = vshrl.u32 %v1928, 16
    %v2630 = vrot.slane %v2628, 4
    %v2631 = vor.u32 %v2630, %v2626
    %v2632 = vrot.slane %v2631, 4
    %v2634 = vshll.u32 %v1929, 16
    %v2636 = vrot.slane %v2634, 5
    %v2637 = vsel %vm1941, %v2632, %v2636
    %v2639 = vshrl.u32 %v1930, 16
    %v2641 = vrot.slane %v2639, 4
    %v2642 = vshll.u32 %v1930, 16
    %v2644 = vrot.slane %v2642, 5
    %v2645 = vor.u32 %v2641, %v2644
    %v2646 = vrot.slane %v2645, 4
    %v2648 = vshll.u32 %v1931, 16
    %v2650 = vrot.slane %v2648, 5
    %v2651 = vsel %vm1941, %v2646, %v2650
    %v2652 = vshrl.u32 %v1931, 16
    %v2654 = vrot.slane %v2652, 4
    %v2655 = vor.u32 %v2654, %v2650
    %v2656 = vrot.slane %v2655, 4
    %v2658 = vshll.u32 %v1932, 16
    %v2660 = vrot.slane %v2658, 5
    %v2661 = vsel %vm1941, %v2656, %v2660
    %v2663 = vshrl.u32 %v1933, 16
    %v2665 = vrot.slane %v2663, 4
    %v2666 = vshll.u32 %v1933, 16
    %v2668 = vrot.slane %v2666, 5
    %v2669 = vor.u32 %v2665, %v2668
    %v2670 = vrot.slane %v2669, 4
    %v2672 = vshll.u32 %v1934, 16
    %v2674 = vrot.slane %v2672, 5
    %v2675 = vsel %vm1941, %v2670, %v2674
    %v2676 = vshrl.u32 %v1934, 16
    %v2678 = vrot.slane %v2676, 4
    %v2679 = vor.u32 %v2678, %v2674
    %v2680 = vrot.slane %v2679, 4
    %v2682 = vshll.u32 %v1935, 16
    %v2684 = vrot.slane %v2682, 5
    %v2685 = vsel %vm1941, %v2680, %v2684
    %v2687 = vshrl.u32 %v1936, 16
    %v2689 = vrot.slane %v2687, 4
    %v2690 = vshll.u32 %v1936, 16
    %v2692 = vrot.slane %v2690, 5
    %v2693 = vor.u32 %v2689, %v2692
    %v2694 = vrot.slane %v2693, 4
    %v2696 = vshll.u32 %v1937, 16
    %v2698 = vrot.slane %v2696, 5
    %v2699 = vsel %vm1941, %v2694, %v2698
    %v2700 = vshrl.u32 %v1937, 16
    %v2702 = vrot.slane %v2700, 4
    %v2703 = vor.u32 %v2702, %v2698
    %v2704 = vrot.slane %v2703, 4
    %v2706 = vshll.u32 %v1938, 16
    %v2708 = vrot.slane %v2706, 5
    %v2709 = vsel %vm1941, %v2704, %v2708
    %v2710 = vunpack.c.l.b16 %v1955
    %v2711 = vunpack.c.l.b16 %v1965
    %v2712 = vunpack.c.l.b16 %v1979
    %v2713 = vunpack.c.l.b16 %v1989
    %v2714 = vunpack.c.l.b16 %v2003
    %v2715 = vunpack.c.l.b16 %v2013
    %v2716 = vunpack.c.l.b16 %v2027
    %v2717 = vunpack.c.l.b16 %v2037
    %v2718 = vunpack.c.l.b16 %v2051
    %v2719 = vunpack.c.l.b16 %v2061
    %v2720 = vunpack.c.l.b16 %v2075
    %v2721 = vunpack.c.l.b16 %v2085
    %v2722 = vunpack.c.l.b16 %v2099
    %v2723 = vunpack.c.l.b16 %v2109
    %v2724 = vunpack.c.l.b16 %v2123
    %v2725 = vunpack.c.l.b16 %v2133
    %v2726 = vunpack.c.l.b16 %v2147
    %v2727 = vunpack.c.l.b16 %v2157
    %v2728 = vunpack.c.l.b16 %v2171
    %v2729 = vunpack.c.l.b16 %v2181
    %v2730 = vunpack.c.l.b16 %v2195
    %v2731 = vunpack.c.l.b16 %v2205
    %v2732 = vunpack.c.l.b16 %v2219
    %v2733 = vunpack.c.l.b16 %v2229
    %v2734 = vunpack.c.l.b16 %v2243
    %v2735 = vunpack.c.l.b16 %v2253
    %v2736 = vunpack.c.l.b16 %v2267
    %v2737 = vunpack.c.l.b16 %v2277
    %v2738 = vunpack.c.l.b16 %v2291
    %v2739 = vunpack.c.l.b16 %v2301
    %v2740 = vunpack.c.l.b16 %v2315
    %v2741 = vunpack.c.l.b16 %v2325
    %v2742 = vunpack.c.l.b16 %v2339
    %v2743 = vunpack.c.l.b16 %v2349
    %v2744 = vunpack.c.l.b16 %v2363
    %v2745 = vunpack.c.l.b16 %v2373
    %v2746 = vunpack.c.l.b16 %v2387
    %v2747 = vunpack.c.l.b16 %v2397
    %v2748 = vunpack.c.l.b16 %v2411
    %v2749 = vunpack.c.l.b16 %v2421
    %v2750 = vunpack.c.l.b16 %v2435
    %v2751 = vunpack.c.l.b16 %v2445
    %v2752 = vunpack.c.l.b16 %v2459
    %v2753 = vunpack.c.l.b16 %v2469
    %v2754 = vunpack.c.l.b16 %v2483
    %v2755 = vunpack.c.l.b16 %v2493
    %v2756 = vunpack.c.l.b16 %v2507
    %v2757 = vunpack.c.l.b16 %v2517
    %v2758 = vunpack.c.l.b16 %v2531
    %v2759 = vunpack.c.l.b16 %v2541
    %v2760 = vunpack.c.l.b16 %v2555
    %v2761 = vunpack.c.l.b16 %v2565
    %v2762 = vunpack.c.l.b16 %v2579
    %v2763 = vunpack.c.l.b16 %v2589
    %v2764 = vunpack.c.l.b16 %v2603
    %v2765 = vunpack.c.l.b16 %v2613
    %v2766 = vunpack.c.l.b16 %v2627
    %v2767 = vunpack.c.l.b16 %v2637
    %v2768 = vunpack.c.l.b16 %v2651
    %v2769 = vunpack.c.l.b16 %v2661
    %v2770 = vunpack.c.l.b16 %v2675
    %v2771 = vunpack.c.l.b16 %v2685
    %v2772 = vunpack.c.l.b16 %v2699
    %v2773 = vunpack.c.l.b16 %v2709
    %v2774 = vpack.c.b16 %v2711, %v2710
    %v2775 = vpack.c.b16 %v2713, %v2712
    %v2776 = vpack.c.b16 %v2715, %v2714
    %v2777 = vpack.c.b16 %v2717, %v2716
    %v2778 = vpack.c.b16 %v2719, %v2718
    %v2779 = vpack.c.b16 %v2721, %v2720
    %v2780 = vpack.c.b16 %v2723, %v2722
    %v2781 = vpack.c.b16 %v2725, %v2724
    %v2782 = vpack.c.b16 %v2727, %v2726
    %v2783 = vpack.c.b16 %v2729, %v2728
    %v2784 = vpack.c.b16 %v2731, %v2730
    %v2785 = vpack.c.b16 %v2733, %v2732
    %v2786 = vpack.c.b16 %v2735, %v2734
    %v2787 = vpack.c.b16 %v2737, %v2736
    %v2788 = vpack.c.b16 %v2739, %v2738
    %v2789 = vpack.c.b16 %v2741, %v2740
    %v2790 = vpack.c.b16 %v2743, %v2742
    %v2791 = vpack.c.b16 %v2745, %v2744
    %v2792 = vpack.c.b16 %v2747, %v2746
    %v2793 = vpack.c.b16 %v2749, %v2748
    %v2794 = vpack.c.b16 %v2751, %v2750
    %v2795 = vpack.c.b16 %v2753, %v2752
    %v2796 = vpack.c.b16 %v2755, %v2754
    %v2797 = vpack.c.b16 %v2757, %v2756
    %v2798 = vpack.c.b16 %v2759, %v2758
    %v2799 = vpack.c.b16 %v2761, %v2760
    %v2800 = vpack.c.b16 %v2763, %v2762
    %v2801 = vpack.c.b16 %v2765, %v2764
    %v2802 = vpack.c.b16 %v2767, %v2766
    %v2803 = vpack.c.b16 %v2769, %v2768
    %v2804 = vpack.c.b16 %v2771, %v2770
    %v2805 = vpack.c.b16 %v2773, %v2772
    %2806 = vrot.lane.b32.xlu0 %v2774, 32
    %v2807 = vpop.permute.xlu0 %2806
    %2808 = vrot.lane.b32.xlu0 %v2775, 32
    %v2809 = vpop.permute.xlu0 %2808
    %2810 = vrot.lane.b32.xlu0 %v2776, 32
    %v2811 = vpop.permute.xlu0 %2810
    %2812 = vrot.lane.b32.xlu0 %v2777, 32
    %v2813 = vpop.permute.xlu0 %2812
    %2814 = vrot.lane.b32.xlu0 %v2778, 32
    %v2815 = vpop.permute.xlu0 %2814
    %2816 = vrot.lane.b32.xlu0 %v2779, 32
    %v2817 = vpop.permute.xlu0 %2816
    %2818 = vrot.lane.b32.xlu0 %v2780, 32
    %v2819 = vpop.permute.xlu0 %2818
    %2820 = vrot.lane.b32.xlu0 %v2781, 32
    %v2821 = vpop.permute.xlu0 %2820
    %2822 = vrot.lane.b32.xlu0 %v2782, 32
    %v2823 = vpop.permute.xlu0 %2822
    %2824 = vrot.lane.b32.xlu0 %v2783, 32
    %v2825 = vpop.permute.xlu0 %2824
    %2826 = vrot.lane.b32.xlu0 %v2784, 32
    %v2827 = vpop.permute.xlu0 %2826
    %2828 = vrot.lane.b32.xlu0 %v2785, 32
    %v2829 = vpop.permute.xlu0 %2828
    %2830 = vrot.lane.b32.xlu0 %v2786, 32
    %v2831 = vpop.permute.xlu0 %2830
    %2832 = vrot.lane.b32.xlu0 %v2787, 32
    %v2833 = vpop.permute.xlu0 %2832
    %2834 = vrot.lane.b32.xlu0 %v2788, 32
    %v2835 = vpop.permute.xlu0 %2834
    %2836 = vrot.lane.b32.xlu0 %v2789, 32
    %v2837 = vpop.permute.xlu0 %2836
    %2838 = vrot.lane.b32.xlu0 %v2790, 32
    %v2839 = vpop.permute.xlu0 %2838
    %2840 = vrot.lane.b32.xlu0 %v2791, 32
    %v2841 = vpop.permute.xlu0 %2840
    %2842 = vrot.lane.b32.xlu0 %v2792, 32
    %v2843 = vpop.permute.xlu0 %2842
    %2844 = vrot.lane.b32.xlu0 %v2793, 32
    %v2845 = vpop.permute.xlu0 %2844
    %2846 = vrot.lane.b32.xlu0 %v2794, 32
    %v2847 = vpop.permute.xlu0 %2846
    %2848 = vrot.lane.b32.xlu0 %v2795, 32
    %v2849 = vpop.permute.xlu0 %2848
    %2850 = vrot.lane.b32.xlu0 %v2796, 32
    %v2851 = vpop.permute.xlu0 %2850
    %2852 = vrot.lane.b32.xlu0 %v2797, 32
    %v2853 = vpop.permute.xlu0 %2852
    %2854 = vrot.lane.b32.xlu0 %v2798, 32
    %v2855 = vpop.permute.xlu0 %2854
    %2856 = vrot.lane.b32.xlu0 %v2799, 32
    %v2857 = vpop.permute.xlu0 %2856
    %2858 = vrot.lane.b32.xlu0 %v2800, 32
    %v2859 = vpop.permute.xlu0 %2858
    %2860 = vrot.lane.b32.xlu0 %v2801, 32
    %v2861 = vpop.permute.xlu0 %2860
    %2862 = vrot.lane.b32.xlu0 %v2802, 32
    %v2863 = vpop.permute.xlu0 %2862
    %2864 = vrot.lane.b32.xlu0 %v2803, 32
    %v2865 = vpop.permute.xlu0 %2864
    %2866 = vrot.lane.b32.xlu0 %v2804, 32
    %v2867 = vpop.permute.xlu0 %2866
    %2868 = vrot.lane.b32.xlu0 %v2805, 32
    %v2869 = vpop.permute.xlu0 %2868
    %vm2902 = vcmask 523520
    %2903 = vst.msk [vmem:[#allocation3] sm:$0xff] %vm2902, %v2807
    %2904 = vst.msk [vmem:[#allocation3 + $0x18] sm:$0xff] %vm2902, %v2809
    %2905 = vst.msk [vmem:[#allocation3 + $0x30] sm:$0xff] %vm2902, %v2811
    %2906 = vst.msk [vmem:[#allocation3 + $0x48] sm:$0xff] %vm2902, %v2813
    %2907 = vst.msk [vmem:[#allocation3 + $0x60] sm:$0xff] %vm2902, %v2815
    %2908 = vst.msk [vmem:[#allocation3 + $0x78] sm:$0xff] %vm2902, %v2817
    %2909 = vst.msk [vmem:[#allocation3 + $0x90] sm:$0xff] %vm2902, %v2819
    %2910 = vst.msk [vmem:[#allocation3 + $0xa8] sm:$0xff] %vm2902, %v2821
    %2911 = vst.msk [vmem:[#allocation3 + $0xc0] sm:$0xff] %vm2902, %v2823
    %2912 = vst.msk [vmem:[#allocation3 + $0xd8] sm:$0xff] %vm2902, %v2825
    %2913 = vst.msk [vmem:[#allocation3 + $0xf0] sm:$0xff] %vm2902, %v2827
    %2914 = vst.msk [vmem:[#allocation3 + $0x108] sm:$0xff] %vm2902, %v2829
    %2915 = vst.msk [vmem:[#allocation3 + $0x120] sm:$0xff] %vm2902, %v2831
    %2916 = vst.msk [vmem:[#allocation3 + $0x138] sm:$0xff] %vm2902, %v2833
    %2917 = vst.msk [vmem:[#allocation3 + $0x150] sm:$0xff] %vm2902, %v2835
    %2918 = vst.msk [vmem:[#allocation3 + $0x168] sm:$0xff] %vm2902, %v2837
    %2919 = vst.msk [vmem:[#allocation3 + $0x180] sm:$0xff] %vm2902, %v2839
    %2920 = vst.msk [vmem:[#allocation3 + $0x198] sm:$0xff] %vm2902, %v2841
    %2921 = vst.msk [vmem:[#allocation3 + $0x1b0] sm:$0xff] %vm2902, %v2843
    %2922 = vst.msk [vmem:[#allocation3 + $0x1c8] sm:$0xff] %vm2902, %v2845
    %2923 = vst.msk [vmem:[#allocation3 + $0x1e0] sm:$0xff] %vm2902, %v2847
    %2924 = vst.msk [vmem:[#allocation3 + $0x1f8] sm:$0xff] %vm2902, %v2849
    %2925 = vst.msk [vmem:[#allocation3 + $0x210] sm:$0xff] %vm2902, %v2851
    %2926 = vst.msk [vmem:[#allocation3 + $0x228] sm:$0xff] %vm2902, %v2853
    %2927 = vst.msk [vmem:[#allocation3 + $0x240] sm:$0xff] %vm2902, %v2855
    %2928 = vst.msk [vmem:[#allocation3 + $0x258] sm:$0xff] %vm2902, %v2857
    %2929 = vst.msk [vmem:[#allocation3 + $0x270] sm:$0xff] %vm2902, %v2859
    %2930 = vst.msk [vmem:[#allocation3 + $0x288] sm:$0xff] %vm2902, %v2861
    %2931 = vst.msk [vmem:[#allocation3 + $0x2a0] sm:$0xff] %vm2902, %v2863
    %2932 = vst.msk [vmem:[#allocation3 + $0x2b8] sm:$0xff] %vm2902, %v2865
    %2933 = vst.msk [vmem:[#allocation3 + $0x2d0] sm:$0xff] %vm2902, %v2867
    %2934 = vst.msk [vmem:[#allocation3 + $0x2e8] sm:$0xff] %vm2902, %v2869
    %v2935 = vld [vmem:[#allocation2] sm:$0xe]
    %v2936 = vld [vmem:[#allocation2 + $0x4] sm:$0xf]
    %v2937 = vld [vmem:[#allocation2 + $0x8] sm:$0x1]
    %v2938 = vld [vmem:[#allocation2 + $0xc] sm:$0xe]
    %v2939 = vld [vmem:[#allocation2 + $0x10] sm:$0xf]
    %v2940 = vld [vmem:[#allocation2 + $0x14] sm:$0x1]
    %v2941 = vld [vmem:[#allocation2 + $0x18] sm:$0xe]
    %v2942 = vld [vmem:[#allocation2 + $0x1c] sm:$0xf]
    %v2943 = vld [vmem:[#allocation2 + $0x20] sm:$0x1]
    %v2944 = vld [vmem:[#allocation2 + $0x24] sm:$0xe]
    %v2945 = vld [vmem:[#allocation2 + $0x28] sm:$0xf]
    %v2946 = vld [vmem:[#allocation2 + $0x2c] sm:$0x1]
    %v2947 = vld [vmem:[#allocation2 + $0x30] sm:$0xe]
    %v2948 = vld [vmem:[#allocation2 + $0x34] sm:$0xf]
    %v2949 = vld [vmem:[#allocation2 + $0x38] sm:$0x1]
    %v2950 = vld [vmem:[#allocation2 + $0x3c] sm:$0xe]
    %v2951 = vld [vmem:[#allocation2 + $0x40] sm:$0xf]
    %v2952 = vld [vmem:[#allocation2 + $0x44] sm:$0x1]
    %v2953 = vld [vmem:[#allocation2 + $0x48] sm:$0xe]
    %v2954 = vld [vmem:[#allocation2 + $0x4c] sm:$0xf]
    %v2955 = vld [vmem:[#allocation2 + $0x50] sm:$0x1]
    %v2956 = vld [vmem:[#allocation2 + $0x54] sm:$0xe]
    %v2957 = vld [vmem:[#allocation2 + $0x58] sm:$0xf]
    %v2958 = vld [vmem:[#allocation2 + $0x5c] sm:$0x1]
    %v2959 = vld [vmem:[#allocation2 + $0x60] sm:$0xe]
    %v2960 = vld [vmem:[#allocation2 + $0x64] sm:$0xf]
    %v2961 = vld [vmem:[#allocation2 + $0x68] sm:$0x1]
    %v2962 = vld [vmem:[#allocation2 + $0x6c] sm:$0xe]
    %v2963 = vld [vmem:[#allocation2 + $0x70] sm:$0xf]
    %v2964 = vld [vmem:[#allocation2 + $0x74] sm:$0x1]
    %v2965 = vld [vmem:[#allocation2 + $0x78] sm:$0xe]
    %v2966 = vld [vmem:[#allocation2 + $0x7c] sm:$0xf]
    %v2967 = vld [vmem:[#allocation2 + $0x80] sm:$0x1]
    %v2968 = vld [vmem:[#allocation2 + $0x84] sm:$0xe]
    %v2969 = vld [vmem:[#allocation2 + $0x88] sm:$0xf]
    %v2970 = vld [vmem:[#allocation2 + $0x8c] sm:$0x1]
    %v2971 = vld [vmem:[#allocation2 + $0x90] sm:$0xe]
    %v2972 = vld [vmem:[#allocation2 + $0x94] sm:$0xf]
    %v2973 = vld [vmem:[#allocation2 + $0x98] sm:$0x1]
    %v2974 = vld [vmem:[#allocation2 + $0x9c] sm:$0xe]
    %v2975 = vld [vmem:[#allocation2 + $0xa0] sm:$0xf]
    %v2976 = vld [vmem:[#allocation2 + $0xa4] sm:$0x1]
    %v2977 = vld [vmem:[#allocation2 + $0xa8] sm:$0xe]
    %v2978 = vld [vmem:[#allocation2 + $0xac] sm:$0xf]
    %v2979 = vld [vmem:[#allocation2 + $0xb0] sm:$0x1]
    %v2980 = vld [vmem:[#allocation2 + $0xb4] sm:$0xe]
    %v2981 = vld [vmem:[#allocation2 + $0xb8] sm:$0xf]
    %v2982 = vld [vmem:[#allocation2 + $0xbc] sm:$0x1]
    %v2983 = vld [vmem:[#allocation2 + $0xd8] sm:$0xe]
    %v2984 = vld [vmem:[#allocation2 + $0xdc] sm:$0xf]
    %v2985 = vld [vmem:[#allocation2 + $0xe0] sm:$0x1]
    %v2986 = vld [vmem:[#allocation2 + $0xe4] sm:$0xe]
    %v2987 = vld [vmem:[#allocation2 + $0xe8] sm:$0xf]
    %v2988 = vld [vmem:[#allocation2 + $0xec] sm:$0x1]
    %v2989 = vld [vmem:[#allocation2 + $0xf0] sm:$0xe]
    %v2990 = vld [vmem:[#allocation2 + $0xf4] sm:$0xf]
    %v2991 = vld [vmem:[#allocation2 + $0xf8] sm:$0x1]
    %v2992 = vld [vmem:[#allocation2 + $0xfc] sm:$0xe]
    %v2993 = vld [vmem:[#allocation2 + $0x100] sm:$0xf]
    %v2994 = vld [vmem:[#allocation2 + $0x104] sm:$0x1]
    %v2995 = vld [vmem:[#allocation2 + $0x108] sm:$0xe]
    %v2996 = vld [vmem:[#allocation2 + $0x10c] sm:$0xf]
    %v2997 = vld [vmem:[#allocation2 + $0x110] sm:$0x1]
    %v2998 = vld [vmem:[#allocation2 + $0x114] sm:$0xe]
    %v2999 = vld [vmem:[#allocation2 + $0x118] sm:$0xf]
    %v3000 = vld [vmem:[#allocation2 + $0x11c] sm:$0x1]
    %v3001 = vld [vmem:[#allocation2 + $0x120] sm:$0xe]
    %v3002 = vld [vmem:[#allocation2 + $0x124] sm:$0xf]
    %v3003 = vld [vmem:[#allocation2 + $0x128] sm:$0x1]
    %v3004 = vld [vmem:[#allocation2 + $0x12c] sm:$0xe]
    %v3005 = vld [vmem:[#allocation2 + $0x130] sm:$0xf]
    %v3006 = vld [vmem:[#allocation2 + $0x134] sm:$0x1]
    %v3007 = vld [vmem:[#allocation2 + $0x138] sm:$0xe]
    %v3008 = vld [vmem:[#allocation2 + $0x13c] sm:$0xf]
    %v3009 = vld [vmem:[#allocation2 + $0x140] sm:$0x1]
    %v3010 = vld [vmem:[#allocation2 + $0x144] sm:$0xe]
    %v3011 = vld [vmem:[#allocation2 + $0x148] sm:$0xf]
    %v3012 = vld [vmem:[#allocation2 + $0x14c] sm:$0x1]
    %v3013 = vld [vmem:[#allocation2 + $0x150] sm:$0xe]
    %v3014 = vld [vmem:[#allocation2 + $0x154] sm:$0xf]
    %v3015 = vld [vmem:[#allocation2 + $0x158] sm:$0x1]
    %v3016 = vld [vmem:[#allocation2 + $0x15c] sm:$0xe]
    %v3017 = vld [vmem:[#allocation2 + $0x160] sm:$0xf]
    %v3018 = vld [vmem:[#allocation2 + $0x164] sm:$0x1]
    %v3019 = vld [vmem:[#allocation2 + $0x168] sm:$0xe]
    %v3020 = vld [vmem:[#allocation2 + $0x16c] sm:$0xf]
    %v3021 = vld [vmem:[#allocation2 + $0x170] sm:$0x1]
    %v3022 = vld [vmem:[#allocation2 + $0x174] sm:$0xe]
    %v3023 = vld [vmem:[#allocation2 + $0x178] sm:$0xf]
    %v3024 = vld [vmem:[#allocation2 + $0x17c] sm:$0x1]
    %v3025 = vld [vmem:[#allocation2 + $0x180] sm:$0xe]
    %v3026 = vld [vmem:[#allocation2 + $0x184] sm:$0xf]
    %v3027 = vld [vmem:[#allocation2 + $0x188] sm:$0x1]
    %v3028 = vld [vmem:[#allocation2 + $0x18c] sm:$0xe]
    %v3029 = vld [vmem:[#allocation2 + $0x190] sm:$0xf]
    %v3030 = vld [vmem:[#allocation2 + $0x194] sm:$0x1]
    %vm3127 = vcmask 1042432
    %vm3128 = vcmask 1046532
    %vm3129 = vmor %vm3127, %vm3128
    %v3130 = vrot.slane %v2935, 5
    %v3131 = vrot.slane %v3130, 4
    %v3132 = vrot.slane %v2936, 5
    %v3133 = vsel %vm3129, %v3131, %v3132
    %v3134 = vrot.slane %v3132, 4
    %v3135 = vrot.slane %v2937, 5
    %v3136 = vsel %vm3129, %v3134, %v3135
    %v3137 = vrot.slane %v2938, 5
    %v3138 = vrot.slane %v3137, 4
    %v3139 = vrot.slane %v2939, 5
    %v3140 = vsel %vm3129, %v3138, %v3139
    %v3141 = vrot.slane %v3139, 4
    %v3142 = vrot.slane %v2940, 5
    %v3143 = vsel %vm3129, %v3141, %v3142
    %v3144 = vrot.slane %v2941, 5
    %v3145 = vrot.slane %v3144, 4
    %v3146 = vrot.slane %v2942, 5
    %v3147 = vsel %vm3129, %v3145, %v3146
    %v3148 = vrot.slane %v3146, 4
    %v3149 = vrot.slane %v2943, 5
    %v3150 = vsel %vm3129, %v3148, %v3149
    %v3151 = vrot.slane %v2944, 5
    %v3152 = vrot.slane %v3151, 4
    %v3153 = vrot.slane %v2945, 5
    %v3154 = vsel %vm3129, %v3152, %v3153
    %v3155 = vrot.slane %v3153, 4
    %v3156 = vrot.slane %v2946, 5
    %v3157 = vsel %vm3129, %v3155, %v3156
    %v3158 = vrot.slane %v2947, 5
    %v3159 = vrot.slane %v3158, 4
    %v3160 = vrot.slane %v2948, 5
    %v3161 = vsel %vm3129, %v3159, %v3160
    %v3162 = vrot.slane %v3160, 4
    %v3163 = vrot.slane %v2949, 5
    %v3164 = vsel %vm3129, %v3162, %v3163
    %v3165 = vrot.slane %v2950, 5
    %v3166 = vrot.slane %v3165, 4
    %v3167 = vrot.slane %v2951, 5
    %v3168 = vsel %vm3129, %v3166, %v3167
    %v3169 = vrot.slane %v3167, 4
    %v3170 = vrot.slane %v2952, 5
    %v3171 = vsel %vm3129, %v3169, %v3170
    %v3172 = vrot.slane %v2953, 5
    %v3173 = vrot.slane %v3172, 4
    %v3174 = vrot.slane %v2954, 5
    %v3175 = vsel %vm3129, %v3173, %v3174
    %v3176 = vrot.slane %v3174, 4
    %v3177 = vrot.slane %v2955, 5
    %v3178 = vsel %vm3129, %v3176, %v3177
    %v3179 = vrot.slane %v2956, 5
    %v3180 = vrot.slane %v3179, 4
    %v3181 = vrot.slane %v2957, 5
    %v3182 = vsel %vm3129, %v3180, %v3181
    %v3183 = vrot.slane %v3181, 4
    %v3184 = vrot.slane %v2958, 5
    %v3185 = vsel %vm3129, %v3183, %v3184
    %v3186 = vrot.slane %v2959, 5
    %v3187 = vrot.slane %v3186, 4
    %v3188 = vrot.slane %v2960, 5
    %v3189 = vsel %vm3129, %v3187, %v3188
    %v3190 = vrot.slane %v3188, 4
    %v3191 = vrot.slane %v2961, 5
    %v3192 = vsel %vm3129, %v3190, %v3191
    %v3193 = vrot.slane %v2962, 5
    %v3194 = vrot.slane %v3193, 4
    %v3195 = vrot.slane %v2963, 5
    %v3196 = vsel %vm3129, %v3194, %v3195
    %v3197 = vrot.slane %v3195, 4
    %v3198 = vrot.slane %v2964, 5
    %v3199 = vsel %vm3129, %v3197, %v3198
    %v3200 = vrot.slane %v2965, 5
    %v3201 = vrot.slane %v3200, 4
    %v3202 = vrot.slane %v2966, 5
    %v3203 = vsel %vm3129, %v3201, %v3202
    %v3204 = vrot.slane %v3202, 4
    %v3205 = vrot.slane %v2967, 5
    %v3206 = vsel %vm3129, %v3204, %v3205
    %v3207 = vrot.slane %v2968, 5
    %v3208 = vrot.slane %v3207, 4
    %v3209 = vrot.slane %v2969, 5
    %v3210 = vsel %vm3129, %v3208, %v3209
    %v3211 = vrot.slane %v3209, 4
    %v3212 = vrot.slane %v2970, 5
    %v3213 = vsel %vm3129, %v3211, %v3212
    %v3214 = vrot.slane %v2971, 5
    %v3215 = vrot.slane %v3214, 4
    %v3216 = vrot.slane %v2972, 5
    %v3217 = vsel %vm3129, %v3215, %v3216
    %v3218 = vrot.slane %v3216, 4
    %v3219 = vrot.slane %v2973, 5
    %v3220 = vsel %vm3129, %v3218, %v3219
    %v3221 = vrot.slane %v2974, 5
    %v3222 = vrot.slane %v3221, 4
    %v3223 = vrot.slane %v2975, 5
    %v3224 = vsel %vm3129, %v3222, %v3223
    %v3225 = vrot.slane %v3223, 4
    %v3226 = vrot.slane %v2976, 5
    %v3227 = vsel %vm3129, %v3225, %v3226
    %v3228 = vrot.slane %v2977, 5
    %v3229 = vrot.slane %v3228, 4
    %v3230 = vrot.slane %v2978, 5
    %v3231 = vsel %vm3129, %v3229, %v3230
    %v3232 = vrot.slane %v3230, 4
    %v3233 = vrot.slane %v2979, 5
    %v3234 = vsel %vm3129, %v3232, %v3233
    %v3235 = vrot.slane %v2980, 5
    %v3236 = vrot.slane %v3235, 4
    %v3237 = vrot.slane %v2981, 5
    %v3238 = vsel %vm3129, %v3236, %v3237
    %v3239 = vrot.slane %v3237, 4
    %v3240 = vrot.slane %v2982, 5
    %v3241 = vsel %vm3129, %v3239, %v3240
    %v3242 = vrot.slane %v2983, 5
    %v3243 = vrot.slane %v3242, 4
    %v3244 = vrot.slane %v2984, 5
    %v3245 = vsel %vm3129, %v3243, %v3244
    %v3246 = vrot.slane %v3244, 4
    %v3247 = vrot.slane %v2985, 5
    %v3248 = vsel %vm3129, %v3246, %v3247
    %v3249 = vrot.slane %v2986, 5
    %v3250 = vrot.slane %v3249, 4
    %v3251 = vrot.slane %v2987, 5
    %v3252 = vsel %vm3129, %v3250, %v3251
    %v3253 = vrot.slane %v3251, 4
    %v3254 = vrot.slane %v2988, 5
    %v3255 = vsel %vm3129, %v3253, %v3254
    %v3256 = vrot.slane %v2989, 5
    %v3257 = vrot.slane %v3256, 4
    %v3258 = vrot.slane %v2990, 5
    %v3259 = vsel %vm3129, %v3257, %v3258
    %v3260 = vrot.slane %v3258, 4
    %v3261 = vrot.slane %v2991, 5
    %v3262 = vsel %vm3129, %v3260, %v3261
    %v3263 = vrot.slane %v2992, 5
    %v3264 = vrot.slane %v3263, 4
    %v3265 = vrot.slane %v2993, 5
    %v3266 = vsel %vm3129, %v3264, %v3265
    %v3267 = vrot.slane %v3265, 4
    %v3268 = vrot.slane %v2994, 5
    %v3269 = vsel %vm3129, %v3267, %v3268
    %v3270 = vrot.slane %v2995, 5
    %v3271 = vrot.slane %v3270, 4
    %v3272 = vrot.slane %v2996, 5
    %v3273 = vsel %vm3129, %v3271, %v3272
    %v3274 = vrot.slane %v3272, 4
    %v3275 = vrot.slane %v2997, 5
    %v3276 = vsel %vm3129, %v3274, %v3275
    %v3277 = vrot.slane %v2998, 5
    %v3278 = vrot.slane %v3277, 4
    %v3279 = vrot.slane %v2999, 5
    %v3280 = vsel %vm3129, %v3278, %v3279
    %v3281 = vrot.slane %v3279, 4
    %v3282 = vrot.slane %v3000, 5
    %v3283 = vsel %vm3129, %v3281, %v3282
    %v3284 = vrot.slane %v3001, 5
    %v3285 = vrot.slane %v3284, 4
    %v3286 = vrot.slane %v3002, 5
    %v3287 = vsel %vm3129, %v3285, %v3286
    %v3288 = vrot.slane %v3286, 4
    %v3289 = vrot.slane %v3003, 5
    %v3290 = vsel %vm3129, %v3288, %v3289
    %v3291 = vrot.slane %v3004, 5
    %v3292 = vrot.slane %v3291, 4
    %v3293 = vrot.slane %v3005, 5
    %v3294 = vsel %vm3129, %v3292, %v3293
    %v3295 = vrot.slane %v3293, 4
    %v3296 = vrot.slane %v3006, 5
    %v3297 = vsel %vm3129, %v3295, %v3296
    %v3298 = vrot.slane %v3007, 5
    %v3299 = vrot.slane %v3298, 4
    %v3300 = vrot.slane %v3008, 5
    %v3301 = vsel %vm3129, %v3299, %v3300
    %v3302 = vrot.slane %v3300, 4
    %v3303 = vrot.slane %v3009, 5
    %v3304 = vsel %vm3129, %v3302, %v3303
    %v3305 = vrot.slane %v3010, 5
    %v3306 = vrot.slane %v3305, 4
    %v3307 = vrot.slane %v3011, 5
    %v3308 = vsel %vm3129, %v3306, %v3307
    %v3309 = vrot.slane %v3307, 4
    %v3310 = vrot.slane %v3012, 5
    %v3311 = vsel %vm3129, %v3309, %v3310
    %v3312 = vrot.slane %v3013, 5
    %v3313 = vrot.slane %v3312, 4
    %v3314 = vrot.slane %v3014, 5
    %v3315 = vsel %vm3129, %v3313, %v3314
    %v3316 = vrot.slane %v3314, 4
    %v3317 = vrot.slane %v3015, 5
    %v3318 = vsel %vm3129, %v3316, %v3317
    %v3319 = vrot.slane %v3016, 5
    %v3320 = vrot.slane %v3319, 4
    %v3321 = vrot.slane %v3017, 5
    %v3322 = vsel %vm3129, %v3320, %v3321
    %v3323 = vrot.slane %v3321, 4
    %v3324 = vrot.slane %v3018, 5
    %v3325 = vsel %vm3129, %v3323, %v3324
    %v3326 = vrot.slane %v3019, 5
    %v3327 = vrot.slane %v3326, 4
    %v3328 = vrot.slane %v3020, 5
    %v3329 = vsel %vm3129, %v3327, %v3328
    %v3330 = vrot.slane %v3328, 4
    %v3331 = vrot.slane %v3021, 5
    %v3332 = vsel %vm3129, %v3330, %v3331
    %v3333 = vrot.slane %v3022, 5
    %v3334 = vrot.slane %v3333, 4
    %v3335 = vrot.slane %v3023, 5
    %v3336 = vsel %vm3129, %v3334, %v3335
    %v3337 = vrot.slane %v3335, 4
    %v3338 = vrot.slane %v3024, 5
    %v3339 = vsel %vm3129, %v3337, %v3338
    %v3340 = vrot.slane %v3025, 5
    %v3341 = vrot.slane %v3340, 4
    %v3342 = vrot.slane %v3026, 5
    %v3343 = vsel %vm3129, %v3341, %v3342
    %v3344 = vrot.slane %v3342, 4
    %v3345 = vrot.slane %v3027, 5
    %v3346 = vsel %vm3129, %v3344, %v3345
    %v3347 = vrot.slane %v3028, 5
    %v3348 = vrot.slane %v3347, 4
    %v3349 = vrot.slane %v3029, 5
    %v3350 = vsel %vm3129, %v3348, %v3349
    %v3351 = vrot.slane %v3349, 4
    %v3352 = vrot.slane %v3030, 5
    %v3353 = vsel %vm3129, %v3351, %v3352
    %v3354 = vunpack.c.l.b16 %v3133
    %v3355 = vunpack.c.l.b16 %v3136
    %v3356 = vunpack.c.l.b16 %v3140
    %v3357 = vunpack.c.l.b16 %v3143
    %v3358 = vunpack.c.l.b16 %v3147
    %v3359 = vunpack.c.l.b16 %v3150
    %v3360 = vunpack.c.l.b16 %v3154
    %v3361 = vunpack.c.l.b16 %v3157
    %v3362 = vunpack.c.l.b16 %v3161
    %v3363 = vunpack.c.l.b16 %v3164
    %v3364 = vunpack.c.l.b16 %v3168
    %v3365 = vunpack.c.l.b16 %v3171
    %v3366 = vunpack.c.l.b16 %v3175
    %v3367 = vunpack.c.l.b16 %v3178
    %v3368 = vunpack.c.l.b16 %v3182
    %v3369 = vunpack.c.l.b16 %v3185
    %v3370 = vunpack.c.l.b16 %v3189
    %v3371 = vunpack.c.l.b16 %v3192
    %v3372 = vunpack.c.l.b16 %v3196
    %v3373 = vunpack.c.l.b16 %v3199
    %v3374 = vunpack.c.l.b16 %v3203
    %v3375 = vunpack.c.l.b16 %v3206
    %v3376 = vunpack.c.l.b16 %v3210
    %v3377 = vunpack.c.l.b16 %v3213
    %v3378 = vunpack.c.l.b16 %v3217
    %v3379 = vunpack.c.l.b16 %v3220
    %v3380 = vunpack.c.l.b16 %v3224
    %v3381 = vunpack.c.l.b16 %v3227
    %v3382 = vunpack.c.l.b16 %v3231
    %v3383 = vunpack.c.l.b16 %v3234
    %v3384 = vunpack.c.l.b16 %v3238
    %v3385 = vunpack.c.l.b16 %v3241
    %v3386 = vunpack.c.l.b16 %v3245
    %v3387 = vunpack.c.l.b16 %v3248
    %v3388 = vunpack.c.l.b16 %v3252
    %v3389 = vunpack.c.l.b16 %v3255
    %v3390 = vunpack.c.l.b16 %v3259
    %v3391 = vunpack.c.l.b16 %v3262
    %v3392 = vunpack.c.l.b16 %v3266
    %v3393 = vunpack.c.l.b16 %v3269
    %v3394 = vunpack.c.l.b16 %v3273
    %v3395 = vunpack.c.l.b16 %v3276
    %v3396 = vunpack.c.l.b16 %v3280
    %v3397 = vunpack.c.l.b16 %v3283
    %v3398 = vunpack.c.l.b16 %v3287
    %v3399 = vunpack.c.l.b16 %v3290
    %v3400 = vunpack.c.l.b16 %v3294
    %v3401 = vunpack.c.l.b16 %v3297
    %v3402 = vunpack.c.l.b16 %v3301
    %v3403 = vunpack.c.l.b16 %v3304
    %v3404 = vunpack.c.l.b16 %v3308
    %v3405 = vunpack.c.l.b16 %v3311
    %v3406 = vunpack.c.l.b16 %v3315
    %v3407 = vunpack.c.l.b16 %v3318
    %v3408 = vunpack.c.l.b16 %v3322
    %v3409 = vunpack.c.l.b16 %v3325
    %v3410 = vunpack.c.l.b16 %v3329
    %v3411 = vunpack.c.l.b16 %v3332
    %v3412 = vunpack.c.l.b16 %v3336
    %v3413 = vunpack.c.l.b16 %v3339
    %v3414 = vunpack.c.l.b16 %v3343
    %v3415 = vunpack.c.l.b16 %v3346
    %v3416 = vunpack.c.l.b16 %v3350
    %v3417 = vunpack.c.l.b16 %v3353
    %v3418 = vpack.c.b16 %v3355, %v3354
    %v3419 = vpack.c.b16 %v3357, %v3356
    %v3420 = vpack.c.b16 %v3359, %v3358
    %v3421 = vpack.c.b16 %v3361, %v3360
    %v3422 = vpack.c.b16 %v3363, %v3362
    %v3423 = vpack.c.b16 %v3365, %v3364
    %v3424 = vpack.c.b16 %v3367, %v3366
    %v3425 = vpack.c.b16 %v3369, %v3368
    %v3426 = vpack.c.b16 %v3371, %v3370
    %v3427 = vpack.c.b16 %v3373, %v3372
    %v3428 = vpack.c.b16 %v3375, %v3374
    %v3429 = vpack.c.b16 %v3377, %v3376
    %v3430 = vpack.c.b16 %v3379, %v3378
    %v3431 = vpack.c.b16 %v3381, %v3380
    %v3432 = vpack.c.b16 %v3383, %v3382
    %v3433 = vpack.c.b16 %v3385, %v3384
    %v3434 = vpack.c.b16 %v3387, %v3386
    %v3435 = vpack.c.b16 %v3389, %v3388
    %v3436 = vpack.c.b16 %v3391, %v3390
    %v3437 = vpack.c.b16 %v3393, %v3392
    %v3438 = vpack.c.b16 %v3395, %v3394
    %v3439 = vpack.c.b16 %v3397, %v3396
    %v3440 = vpack.c.b16 %v3399, %v3398
    %v3441 = vpack.c.b16 %v3401, %v3400
    %v3442 = vpack.c.b16 %v3403, %v3402
    %v3443 = vpack.c.b16 %v3405, %v3404
    %v3444 = vpack.c.b16 %v3407, %v3406
    %v3445 = vpack.c.b16 %v3409, %v3408
    %v3446 = vpack.c.b16 %v3411, %v3410
    %v3447 = vpack.c.b16 %v3413, %v3412
    %v3448 = vpack.c.b16 %v3415, %v3414
    %v3449 = vpack.c.b16 %v3417, %v3416
    %3450 = vrot.lane.b32.xlu0 %v3418, 64
    %v3451 = vpop.permute.xlu0 %3450
    %3452 = vrot.lane.b32.xlu0 %v3419, 64
    %v3453 = vpop.permute.xlu0 %3452
    %3454 = vrot.lane.b32.xlu0 %v3420, 64
    %v3455 = vpop.permute.xlu0 %3454
    %3456 = vrot.lane.b32.xlu0 %v3421, 64
    %v3457 = vpop.permute.xlu0 %3456
    %3458 = vrot.lane.b32.xlu0 %v3422, 64
    %v3459 = vpop.permute.xlu0 %3458
    %3460 = vrot.lane.b32.xlu0 %v3423, 64
    %v3461 = vpop.permute.xlu0 %3460
    %3462 = vrot.lane.b32.xlu0 %v3424, 64
    %v3463 = vpop.permute.xlu0 %3462
    %3464 = vrot.lane.b32.xlu0 %v3425, 64
    %v3465 = vpop.permute.xlu0 %3464
    %3466 = vrot.lane.b32.xlu0 %v3426, 64
    %v3467 = vpop.permute.xlu0 %3466
    %3468 = vrot.lane.b32.xlu0 %v3427, 64
    %v3469 = vpop.permute.xlu0 %3468
    %3470 = vrot.lane.b32.xlu0 %v3428, 64
    %v3471 = vpop.permute.xlu0 %3470
    %3472 = vrot.lane.b32.xlu0 %v3429, 64
    %v3473 = vpop.permute.xlu0 %3472
    %3474 = vrot.lane.b32.xlu0 %v3430, 64
    %v3475 = vpop.permute.xlu0 %3474
    %3476 = vrot.lane.b32.xlu0 %v3431, 64
    %v3477 = vpop.permute.xlu0 %3476
    %3478 = vrot.lane.b32.xlu0 %v3432, 64
    %v3479 = vpop.permute.xlu0 %3478
    %3480 = vrot.lane.b32.xlu0 %v3433, 64
    %v3481 = vpop.permute.xlu0 %3480
    %3482 = vrot.lane.b32.xlu0 %v3434, 64
    %v3483 = vpop.permute.xlu0 %3482
    %3484 = vrot.lane.b32.xlu0 %v3435, 64
    %v3485 = vpop.permute.xlu0 %3484
    %3486 = vrot.lane.b32.xlu0 %v3436, 64
    %v3487 = vpop.permute.xlu0 %3486
    %3488 = vrot.lane.b32.xlu0 %v3437, 64
    %v3489 = vpop.permute.xlu0 %3488
    %3490 = vrot.lane.b32.xlu0 %v3438, 64
    %v3491 = vpop.permute.xlu0 %3490
    %3492 = vrot.lane.b32.xlu0 %v3439, 64
    %v3493 = vpop.permute.xlu0 %3492
    %3494 = vrot.lane.b32.xlu0 %v3440, 64
    %v3495 = vpop.permute.xlu0 %3494
    %3496 = vrot.lane.b32.xlu0 %v3441, 64
    %v3497 = vpop.permute.xlu0 %3496
    %3498 = vrot.lane.b32.xlu0 %v3442, 64
    %v3499 = vpop.permute.xlu0 %3498
    %3500 = vrot.lane.b32.xlu0 %v3443, 64
    %v3501 = vpop.permute.xlu0 %3500
    %3502 = vrot.lane.b32.xlu0 %v3444, 64
    %v3503 = vpop.permute.xlu0 %3502
    %3504 = vrot.lane.b32.xlu0 %v3445, 64
    %v3505 = vpop.permute.xlu0 %3504
    %3506 = vrot.lane.b32.xlu0 %v3446, 64
    %v3507 = vpop.permute.xlu0 %3506
    %3508 = vrot.lane.b32.xlu0 %v3447, 64
    %v3509 = vpop.permute.xlu0 %3508
    %3510 = vrot.lane.b32.xlu0 %v3448, 64
    %v3511 = vpop.permute.xlu0 %3510
    %3512 = vrot.lane.b32.xlu0 %v3449, 64
    %v3513 = vpop.permute.xlu0 %3512
    %vm3546 = vcmask 785920
    %3547 = vst.msk [vmem:[#allocation3] sm:$0xff] %vm3546, %v3451
    %3548 = vst.msk [vmem:[#allocation3 + $0x18] sm:$0xff] %vm3546, %v3453
    %3549 = vst.msk [vmem:[#allocation3 + $0x30] sm:$0xff] %vm3546, %v3455
    %3550 = vst.msk [vmem:[#allocation3 + $0x48] sm:$0xff] %vm3546, %v3457
    %3551 = vst.msk [vmem:[#allocation3 + $0x60] sm:$0xff] %vm3546, %v3459
    %3552 = vst.msk [vmem:[#allocation3 + $0x78] sm:$0xff] %vm3546, %v3461
    %3553 = vst.msk [vmem:[#allocation3 + $0x90] sm:$0xff] %vm3546, %v3463
    %3554 = vst.msk [vmem:[#allocation3 + $0xa8] sm:$0xff] %vm3546, %v3465
    %3555 = vst.msk [vmem:[#allocation3 + $0xc0] sm:$0xff] %vm3546, %v3467
    %3556 = vst.msk [vmem:[#allocation3 + $0xd8] sm:$0xff] %vm3546, %v3469
    %3557 = vst.msk [vmem:[#allocation3 + $0xf0] sm:$0xff] %vm3546, %v3471
    %3558 = vst.msk [vmem:[#allocation3 + $0x108] sm:$0xff] %vm3546, %v3473
    %3559 = vst.msk [vmem:[#allocation3 + $0x120] sm:$0xff] %vm3546, %v3475
    %3560 = vst.msk [vmem:[#allocation3 + $0x138] sm:$0xff] %vm3546, %v3477
    %3561 = vst.msk [vmem:[#allocation3 + $0x150] sm:$0xff] %vm3546, %v3479
    %3562 = vst.msk [vmem:[#allocation3 + $0x168] sm:$0xff] %vm3546, %v3481
    %3563 = vst.msk [vmem:[#allocation3 + $0x180] sm:$0xff] %vm3546, %v3483
    %3564 = vst.msk [vmem:[#allocation3 + $0x198] sm:$0xff] %vm3546, %v3485
    %3565 = vst.msk [vmem:[#allocation3 + $0x1b0] sm:$0xff] %vm3546, %v3487
    %3566 = vst.msk [vmem:[#allocation3 + $0x1c8] sm:$0xff] %vm3546, %v3489
    %3567 = vst.msk [vmem:[#allocation3 + $0x1e0] sm:$0xff] %vm3546, %v3491
    %3568 = vst.msk [vmem:[#allocation3 + $0x1f8] sm:$0xff] %vm3546, %v3493
    %3569 = vst.msk [vmem:[#allocation3 + $0x210] sm:$0xff] %vm3546, %v3495
    %3570 = vst.msk [vmem:[#allocation3 + $0x228] sm:$0xff] %vm3546, %v3497
    %3571 = vst.msk [vmem:[#allocation3 + $0x240] sm:$0xff] %vm3546, %v3499
    %3572 = vst.msk [vmem:[#allocation3 + $0x258] sm:$0xff] %vm3546, %v3501
    %3573 = vst.msk [vmem:[#allocation3 + $0x270] sm:$0xff] %vm3546, %v3503
    %3574 = vst.msk [vmem:[#allocation3 + $0x288] sm:$0xff] %vm3546, %v3505
    %3575 = vst.msk [vmem:[#allocation3 + $0x2a0] sm:$0xff] %vm3546, %v3507
    %3576 = vst.msk [vmem:[#allocation3 + $0x2b8] sm:$0xff] %vm3546, %v3509
    %3577 = vst.msk [vmem:[#allocation3 + $0x2d0] sm:$0xff] %vm3546, %v3511
    %3578 = vst.msk [vmem:[#allocation3 + $0x2e8] sm:$0xff] %vm3546, %v3513
    %v3579 = vld [vmem:[%s135] sm:$0xf]
    %v3580 = vld [vmem:[%s135 + $0x4] sm:$0xf]
    %v3581 = vld [vmem:[%s135 + $0xc] sm:$0xf]
    %v3582 = vld [vmem:[%s135 + $0x10] sm:$0xf]
    %v3583 = vld [vmem:[%s135 + $0x18] sm:$0xf]
    %v3584 = vld [vmem:[%s135 + $0x1c] sm:$0xf]
    %v3585 = vld [vmem:[%s135 + $0x24] sm:$0xf]
    %v3586 = vld [vmem:[%s135 + $0x28] sm:$0xf]
    %v3587 = vld [vmem:[%s135 + $0x30] sm:$0xf]
    %v3588 = vld [vmem:[%s135 + $0x34] sm:$0xf]
    %v3589 = vld [vmem:[%s135 + $0x3c] sm:$0xf]
    %v3590 = vld [vmem:[%s135 + $0x40] sm:$0xf]
    %v3591 = vld [vmem:[%s135 + $0x48] sm:$0xf]
    %v3592 = vld [vmem:[%s135 + $0x4c] sm:$0xf]
    %v3593 = vld [vmem:[%s135 + $0x54] sm:$0xf]
    %v3594 = vld [vmem:[%s135 + $0x58] sm:$0xf]
    %v3595 = vld [vmem:[%s135 + $0x60] sm:$0xf]
    %v3596 = vld [vmem:[%s135 + $0x64] sm:$0xf]
    %v3597 = vld [vmem:[%s135 + $0x6c] sm:$0xf]
    %v3598 = vld [vmem:[%s135 + $0x70] sm:$0xf]
    %v3599 = vld [vmem:[%s135 + $0x78] sm:$0xf]
    %v3600 = vld [vmem:[%s135 + $0x7c] sm:$0xf]
    %v3601 = vld [vmem:[%s135 + $0x84] sm:$0xf]
    %v3602 = vld [vmem:[%s135 + $0x88] sm:$0xf]
    %v3603 = vld [vmem:[%s135 + $0x90] sm:$0xf]
    %v3604 = vld [vmem:[%s135 + $0x94] sm:$0xf]
    %v3605 = vld [vmem:[%s135 + $0x9c] sm:$0xf]
    %v3606 = vld [vmem:[%s135 + $0xa0] sm:$0xf]
    %v3607 = vld [vmem:[%s135 + $0xa8] sm:$0xf]
    %v3608 = vld [vmem:[%s135 + $0xac] sm:$0xf]
    %v3609 = vld [vmem:[%s135 + $0xb4] sm:$0xf]
    %v3610 = vld [vmem:[%s135 + $0xb8] sm:$0xf]
    %v3611 = vld [vmem:[%s135 + $0xd8] sm:$0xf]
    %v3612 = vld [vmem:[%s135 + $0xdc] sm:$0xf]
    %v3613 = vld [vmem:[%s135 + $0xe4] sm:$0xf]
    %v3614 = vld [vmem:[%s135 + $0xe8] sm:$0xf]
    %v3615 = vld [vmem:[%s135 + $0xf0] sm:$0xf]
    %v3616 = vld [vmem:[%s135 + $0xf4] sm:$0xf]
    %v3617 = vld [vmem:[%s135 + $0xfc] sm:$0xf]
    %v3618 = vld [vmem:[%s135 + $0x100] sm:$0xf]
    %v3619 = vld [vmem:[%s135 + $0x108] sm:$0xf]
    %v3620 = vld [vmem:[%s135 + $0x10c] sm:$0xf]
    %v3621 = vld [vmem:[%s135 + $0x114] sm:$0xf]
    %v3622 = vld [vmem:[%s135 + $0x118] sm:$0xf]
    %v3623 = vld [vmem:[%s135 + $0x120] sm:$0xf]
    %v3624 = vld [vmem:[%s135 + $0x124] sm:$0xf]
    %v3625 = vld [vmem:[%s135 + $0x12c] sm:$0xf]
    %v3626 = vld [vmem:[%s135 + $0x130] sm:$0xf]
    %v3627 = vld [vmem:[%s135 + $0x138] sm:$0xf]
    %v3628 = vld [vmem:[%s135 + $0x13c] sm:$0xf]
    %v3629 = vld [vmem:[%s135 + $0x144] sm:$0xf]
    %v3630 = vld [vmem:[%s135 + $0x148] sm:$0xf]
    %v3631 = vld [vmem:[%s135 + $0x150] sm:$0xf]
    %v3632 = vld [vmem:[%s135 + $0x154] sm:$0xf]
    %v3633 = vld [vmem:[%s135 + $0x15c] sm:$0xf]
    %v3634 = vld [vmem:[%s135 + $0x160] sm:$0xf]
    %v3635 = vld [vmem:[%s135 + $0x168] sm:$0xf]
    %v3636 = vld [vmem:[%s135 + $0x16c] sm:$0xf]
    %v3637 = vld [vmem:[%s135 + $0x174] sm:$0xf]
    %v3638 = vld [vmem:[%s135 + $0x178] sm:$0xf]
    %v3639 = vld [vmem:[%s135 + $0x180] sm:$0xf]
    %v3640 = vld [vmem:[%s135 + $0x184] sm:$0xf]
    %v3641 = vld [vmem:[%s135 + $0x18c] sm:$0xf]
    %v3642 = vld [vmem:[%s135 + $0x190] sm:$0xf]
    %v3707 = vunpack.c.l.b16 %v3579
    %v3708 = vunpack.c.l.b16 %v3580
    %v3709 = vunpack.c.l.b16 %v3581
    %v3710 = vunpack.c.l.b16 %v3582
    %v3711 = vunpack.c.l.b16 %v3583
    %v3712 = vunpack.c.l.b16 %v3584
    %v3713 = vunpack.c.l.b16 %v3585
    %v3714 = vunpack.c.l.b16 %v3586
    %v3715 = vunpack.c.l.b16 %v3587
    %v3716 = vunpack.c.l.b16 %v3588
    %v3717 = vunpack.c.l.b16 %v3589
    %v3718 = vunpack.c.l.b16 %v3590
    %v3719 = vunpack.c.l.b16 %v3591
    %v3720 = vunpack.c.l.b16 %v3592
    %v3721 = vunpack.c.l.b16 %v3593
    %v3722 = vunpack.c.l.b16 %v3594
    %v3723 = vunpack.c.l.b16 %v3595
    %v3724 = vunpack.c.l.b16 %v3596
    %v3725 = vunpack.c.l.b16 %v3597
    %v3726 = vunpack.c.l.b16 %v3598
    %v3727 = vunpack.c.l.b16 %v3599
    %v3728 = vunpack.c.l.b16 %v3600
    %v3729 = vunpack.c.l.b16 %v3601
    %v3730 = vunpack.c.l.b16 %v3602
    %v3731 = vunpack.c.l.b16 %v3603
    %v3732 = vunpack.c.l.b16 %v3604
    %v3733 = vunpack.c.l.b16 %v3605
    %v3734 = vunpack.c.l.b16 %v3606
    %v3735 = vunpack.c.l.b16 %v3607
    %v3736 = vunpack.c.l.b16 %v3608
    %v3737 = vunpack.c.l.b16 %v3609
    %v3738 = vunpack.c.l.b16 %v3610
    %v3739 = vunpack.c.l.b16 %v3611
    %v3740 = vunpack.c.l.b16 %v3612
    %v3741 = vunpack.c.l.b16 %v3613
    %v3742 = vunpack.c.l.b16 %v3614
    %v3743 = vunpack.c.l.b16 %v3615
    %v3744 = vunpack.c.l.b16 %v3616
    %v3745 = vunpack.c.l.b16 %v3617
    %v3746 = vunpack.c.l.b16 %v3618
    %v3747 = vunpack.c.l.b16 %v3619
    %v3748 = vunpack.c.l.b16 %v3620
    %v3749 = vunpack.c.l.b16 %v3621
    %v3750 = vunpack.c.l.b16 %v3622
    %v3751 = vunpack.c.l.b16 %v3623
    %v3752 = vunpack.c.l.b16 %v3624
    %v3753 = vunpack.c.l.b16 %v3625
    %v3754 = vunpack.c.l.b16 %v3626
    %v3755 = vunpack.c.l.b16 %v3627
    %v3756 = vunpack.c.l.b16 %v3628
    %v3757 = vunpack.c.l.b16 %v3629
    %v3758 = vunpack.c.l.b16 %v3630
    %v3759 = vunpack.c.l.b16 %v3631
    %v3760 = vunpack.c.l.b16 %v3632
    %v3761 = vunpack.c.l.b16 %v3633
    %v3762 = vunpack.c.l.b16 %v3634
    %v3763 = vunpack.c.l.b16 %v3635
    %v3764 = vunpack.c.l.b16 %v3636
    %v3765 = vunpack.c.l.b16 %v3637
    %v3766 = vunpack.c.l.b16 %v3638
    %v3767 = vunpack.c.l.b16 %v3639
    %v3768 = vunpack.c.l.b16 %v3640
    %v3769 = vunpack.c.l.b16 %v3641
    %v3770 = vunpack.c.l.b16 %v3642
    %v3771 = vpack.c.b16 %v3708, %v3707
    %v3772 = vpack.c.b16 %v3710, %v3709
    %v3773 = vpack.c.b16 %v3712, %v3711
    %v3774 = vpack.c.b16 %v3714, %v3713
    %v3775 = vpack.c.b16 %v3716, %v3715
    %v3776 = vpack.c.b16 %v3718, %v3717
    %v3777 = vpack.c.b16 %v3720, %v3719
    %v3778 = vpack.c.b16 %v3722, %v3721
    %v3779 = vpack.c.b16 %v3724, %v3723
    %v3780 = vpack.c.b16 %v3726, %v3725
    %v3781 = vpack.c.b16 %v3728, %v3727
    %v3782 = vpack.c.b16 %v3730, %v3729
    %v3783 = vpack.c.b16 %v3732, %v3731
    %v3784 = vpack.c.b16 %v3734, %v3733
    %v3785 = vpack.c.b16 %v3736, %v3735
    %v3786 = vpack.c.b16 %v3738, %v3737
    %v3787 = vpack.c.b16 %v3740, %v3739
    %v3788 = vpack.c.b16 %v3742, %v3741
    %v3789 = vpack.c.b16 %v3744, %v3743
    %v3790 = vpack.c.b16 %v3746, %v3745
    %v3791 = vpack.c.b16 %v3748, %v3747
    %v3792 = vpack.c.b16 %v3750, %v3749
    %v3793 = vpack.c.b16 %v3752, %v3751
    %v3794 = vpack.c.b16 %v3754, %v3753
    %v3795 = vpack.c.b16 %v3756, %v3755
    %v3796 = vpack.c.b16 %v3758, %v3757
    %v3797 = vpack.c.b16 %v3760, %v3759
    %v3798 = vpack.c.b16 %v3762, %v3761
    %v3799 = vpack.c.b16 %v3764, %v3763
    %v3800 = vpack.c.b16 %v3766, %v3765
    %v3801 = vpack.c.b16 %v3768, %v3767
    %v3802 = vpack.c.b16 %v3770, %v3769
    %3803 = vrot.lane.b32.xlu0 %v3771, 96
    %v3804 = vpop.permute.xlu0 %3803
    %3805 = vrot.lane.b32.xlu0 %v3772, 96
    %v3806 = vpop.permute.xlu0 %3805
    %3807 = vrot.lane.b32.xlu0 %v3773, 96
    %v3808 = vpop.permute.xlu0 %3807
    %3809 = vrot.lane.b32.xlu0 %v3774, 96
    %v3810 = vpop.permute.xlu0 %3809
    %3811 = vrot.lane.b32.xlu0 %v3775, 96
    %v3812 = vpop.permute.xlu0 %3811
    %3813 = vrot.lane.b32.xlu0 %v3776, 96
    %v3814 = vpop.permute.xlu0 %3813
    %3815 = vrot.lane.b32.xlu0 %v3777, 96
    %v3816 = vpop.permute.xlu0 %3815
    %3817 = vrot.lane.b32.xlu0 %v3778, 96
    %v3818 = vpop.permute.xlu0 %3817
    %3819 = vrot.lane.b32.xlu0 %v3779, 96
    %v3820 = vpop.permute.xlu0 %3819
    %3821 = vrot.lane.b32.xlu0 %v3780, 96
    %v3822 = vpop.permute.xlu0 %3821
    %3823 = vrot.lane.b32.xlu0 %v3781, 96
    %v3824 = vpop.permute.xlu0 %3823
    %3825 = vrot.lane.b32.xlu0 %v3782, 96
    %v3826 = vpop.permute.xlu0 %3825
    %3827 = vrot.lane.b32.xlu0 %v3783, 96
    %v3828 = vpop.permute.xlu0 %3827
    %3829 = vrot.lane.b32.xlu0 %v3784, 96
    %v3830 = vpop.permute.xlu0 %3829
    %3831 = vrot.lane.b32.xlu0 %v3785, 96
    %v3832 = vpop.permute.xlu0 %3831
    %3833 = vrot.lane.b32.xlu0 %v3786, 96
    %v3834 = vpop.permute.xlu0 %3833
    %3835 = vrot.lane.b32.xlu0 %v3787, 96
    %v3836 = vpop.permute.xlu0 %3835
    %3837 = vrot.lane.b32.xlu0 %v3788, 96
    %v3838 = vpop.permute.xlu0 %3837
    %3839 = vrot.lane.b32.xlu0 %v3789, 96
    %v3840 = vpop.permute.xlu0 %3839
    %3841 = vrot.lane.b32.xlu0 %v3790, 96
    %v3842 = vpop.permute.xlu0 %3841
    %3843 = vrot.lane.b32.xlu0 %v3791, 96
    %v3844 = vpop.permute.xlu0 %3843
    %3845 = vrot.lane.b32.xlu0 %v3792, 96
    %v3846 = vpop.permute.xlu0 %3845
    %3847 = vrot.lane.b32.xlu0 %v3793, 96
    %v3848 = vpop.permute.xlu0 %3847
    %3849 = vrot.lane.b32.xlu0 %v3794, 96
    %v3850 = vpop.permute.xlu0 %3849
    %3851 = vrot.lane.b32.xlu0 %v3795, 96
    %v3852 = vpop.permute.xlu0 %3851
    %3853 = vrot.lane.b32.xlu0 %v3796, 96
    %v3854 = vpop.permute.xlu0 %3853
    %3855 = vrot.lane.b32.xlu0 %v3797, 96
    %v3856 = vpop.permute.xlu0 %3855
    %3857 = vrot.lane.b32.xlu0 %v3798, 96
    %v3858 = vpop.permute.xlu0 %3857
    %3859 = vrot.lane.b32.xlu0 %v3799, 96
    %v3860 = vpop.permute.xlu0 %3859
    %3861 = vrot.lane.b32.xlu0 %v3800, 96
    %v3862 = vpop.permute.xlu0 %3861
    %3863 = vrot.lane.b32.xlu0 %v3801, 96
    %v3864 = vpop.permute.xlu0 %3863
    %3865 = vrot.lane.b32.xlu0 %v3802, 96
    %v3866 = vpop.permute.xlu0 %3865
    %vm3899 = vcmask 1048320
    %3900 = vst.msk [vmem:[#allocation3] sm:$0xff] %vm3899, %v3804
    %3901 = vst.msk [vmem:[#allocation3 + $0x18] sm:$0xff] %vm3899, %v3806
    %3902 = vst.msk [vmem:[#allocation3 + $0x30] sm:$0xff] %vm3899, %v3808
    %3903 = vst.msk [vmem:[#allocation3 + $0x48] sm:$0xff] %vm3899, %v3810
    %3904 = vst.msk [vmem:[#allocation3 + $0x60] sm:$0xff] %vm3899, %v3812
    %3905 = vst.msk [vmem:[#allocation3 + $0x78] sm:$0xff] %vm3899, %v3814
    %3906 = vst.msk [vmem:[#allocation3 + $0x90] sm:$0xff] %vm3899, %v3816
    %3907 = vst.msk [vmem:[#allocation3 + $0xa8] sm:$0xff] %vm3899, %v3818
    %3908 = vst.msk [vmem:[#allocation3 + $0xc0] sm:$0xff] %vm3899, %v3820
    %3909 = vst.msk [vmem:[#allocation3 + $0xd8] sm:$0xff] %vm3899, %v3822
    %3910 = vst.msk [vmem:[#allocation3 + $0xf0] sm:$0xff] %vm3899, %v3824
    %3911 = vst.msk [vmem:[#allocation3 + $0x108] sm:$0xff] %vm3899, %v3826
    %3912 = vst.msk [vmem:[#allocation3 + $0x120] sm:$0xff] %vm3899, %v3828
    %3913 = vst.msk [vmem:[#allocation3 + $0x138] sm:$0xff] %vm3899, %v3830
    %3914 = vst.msk [vmem:[#allocation3 + $0x150] sm:$0xff] %vm3899, %v3832
    %3915 = vst.msk [vmem:[#allocation3 + $0x168] sm:$0xff] %vm3899, %v3834
    %3916 = vst.msk [vmem:[#allocation3 + $0x180] sm:$0xff] %vm3899, %v3836
    %3917 = vst.msk [vmem:[#allocation3 + $0x198] sm:$0xff] %vm3899, %v3838
    %3918 = vst.msk [vmem:[#allocation3 + $0x1b0] sm:$0xff] %vm3899, %v3840
    %3919 = vst.msk [vmem:[#allocation3 + $0x1c8] sm:$0xff] %vm3899, %v3842
    %3920 = vst.msk [vmem:[#allocation3 + $0x1e0] sm:$0xff] %vm3899, %v3844
    %3921 = vst.msk [vmem:[#allocation3 + $0x1f8] sm:$0xff] %vm3899, %v3846
    %3922 = vst.msk [vmem:[#allocation3 + $0x210] sm:$0xff] %vm3899, %v3848
    %3923 = vst.msk [vmem:[#allocation3 + $0x228] sm:$0xff] %vm3899, %v3850
    %3924 = vst.msk [vmem:[#allocation3 + $0x240] sm:$0xff] %vm3899, %v3852
    %3925 = vst.msk [vmem:[#allocation3 + $0x258] sm:$0xff] %vm3899, %v3854
    %3926 = vst.msk [vmem:[#allocation3 + $0x270] sm:$0xff] %vm3899, %v3856
    %3927 = vst.msk [vmem:[#allocation3 + $0x288] sm:$0xff] %vm3899, %v3858
    %3928 = vst.msk [vmem:[#allocation3 + $0x2a0] sm:$0xff] %vm3899, %v3860
    %3929 = vst.msk [vmem:[#allocation3 + $0x2b8] sm:$0xff] %vm3899, %v3862
    %3930 = vst.msk [vmem:[#allocation3 + $0x2d0] sm:$0xff] %vm3899, %v3864
    %3931 = vst.msk [vmem:[#allocation3 + $0x2e8] sm:$0xff] %vm3899, %v3866
    %v3932 = vld [vmem:[%s135] sm:$0xf]
    %v3933 = vld [vmem:[%s135 + $0x4] sm:$0xf]
    %v3934 = vld [vmem:[%s135 + $0x8] sm:$0x1]
    %v3935 = vld [vmem:[%s135 + $0xc] sm:$0xf]
    %v3936 = vld [vmem:[%s135 + $0x10] sm:$0xf]
    %v3937 = vld [vmem:[%s135 + $0x14] sm:$0x1]
    %v3938 = vld [vmem:[%s135 + $0x18] sm:$0xf]
    %v3939 = vld [vmem:[%s135 + $0x1c] sm:$0xf]
    %v3940 = vld [vmem:[%s135 + $0x20] sm:$0x1]
    %v3941 = vld [vmem:[%s135 + $0x24] sm:$0xf]
    %v3942 = vld [vmem:[%s135 + $0x28] sm:$0xf]
    %v3943 = vld [vmem:[%s135 + $0x2c] sm:$0x1]
    %v3944 = vld [vmem:[%s135 + $0x30] sm:$0xf]
    %v3945 = vld [vmem:[%s135 + $0x34] sm:$0xf]
    %v3946 = vld [vmem:[%s135 + $0x38] sm:$0x1]
    %v3947 = vld [vmem:[%s135 + $0x3c] sm:$0xf]
    %v3948 = vld [vmem:[%s135 + $0x40] sm:$0xf]
    %v3949 = vld [vmem:[%s135 + $0x44] sm:$0x1]
    %v3950 = vld [vmem:[%s135 + $0x48] sm:$0xf]
    %v3951 = vld [vmem:[%s135 + $0x4c] sm:$0xf]
    %v3952 = vld [vmem:[%s135 + $0x50] sm:$0x1]
    %v3953 = vld [vmem:[%s135 + $0x54] sm:$0xf]
    %v3954 = vld [vmem:[%s135 + $0x58] sm:$0xf]
    %v3955 = vld [vmem:[%s135 + $0x5c] sm:$0x1]
    %v3956 = vld [vmem:[%s135 + $0x60] sm:$0xf]
    %v3957 = vld [vmem:[%s135 + $0x64] sm:$0xf]
    %v3958 = vld [vmem:[%s135 + $0x68] sm:$0x1]
    %v3959 = vld [vmem:[%s135 + $0x6c] sm:$0xf]
    %v3960 = vld [vmem:[%s135 + $0x70] sm:$0xf]
    %v3961 = vld [vmem:[%s135 + $0x74] sm:$0x1]
    %v3962 = vld [vmem:[%s135 + $0x78] sm:$0xf]
    %v3963 = vld [vmem:[%s135 + $0x7c] sm:$0xf]
    %v3964 = vld [vmem:[%s135 + $0x80] sm:$0x1]
    %v3965 = vld [vmem:[%s135 + $0x84] sm:$0xf]
    %v3966 = vld [vmem:[%s135 + $0x88] sm:$0xf]
    %v3967 = vld [vmem:[%s135 + $0x8c] sm:$0x1]
    %v3968 = vld [vmem:[%s135 + $0x90] sm:$0xf]
    %v3969 = vld [vmem:[%s135 + $0x94] sm:$0xf]
    %v3970 = vld [vmem:[%s135 + $0x98] sm:$0x1]
    %v3971 = vld [vmem:[%s135 + $0x9c] sm:$0xf]
    %v3972 = vld [vmem:[%s135 + $0xa0] sm:$0xf]
    %v3973 = vld [vmem:[%s135 + $0xa4] sm:$0x1]
    %v3974 = vld [vmem:[%s135 + $0xa8] sm:$0xf]
    %v3975 = vld [vmem:[%s135 + $0xac] sm:$0xf]
    %v3976 = vld [vmem:[%s135 + $0xb0] sm:$0x1]
    %v3977 = vld [vmem:[%s135 + $0xb4] sm:$0xf]
    %v3978 = vld [vmem:[%s135 + $0xb8] sm:$0xf]
    %v3979 = vld [vmem:[%s135 + $0xbc] sm:$0x1]
    %v3980 = vld [vmem:[%s135 + $0xd8] sm:$0xf]
    %v3981 = vld [vmem:[%s135 + $0xdc] sm:$0xf]
    %v3982 = vld [vmem:[%s135 + $0xe0] sm:$0x1]
    %v3983 = vld [vmem:[%s135 + $0xe4] sm:$0xf]
    %v3984 = vld [vmem:[%s135 + $0xe8] sm:$0xf]
    %v3985 = vld [vmem:[%s135 + $0xec] sm:$0x1]
    %v3986 = vld [vmem:[%s135 + $0xf0] sm:$0xf]
    %v3987 = vld [vmem:[%s135 + $0xf4] sm:$0xf]
    %v3988 = vld [vmem:[%s135 + $0xf8] sm:$0x1]
    %v3989 = vld [vmem:[%s135 + $0xfc] sm:$0xf]
    %v3990 = vld [vmem:[%s135 + $0x100] sm:$0xf]
    %v3991 = vld [vmem:[%s135 + $0x104] sm:$0x1]
    %v3992 = vld [vmem:[%s135 + $0x108] sm:$0xf]
    %v3993 = vld [vmem:[%s135 + $0x10c] sm:$0xf]
    %v3994 = vld [vmem:[%s135 + $0x110] sm:$0x1]
    %v3995 = vld [vmem:[%s135 + $0x114] sm:$0xf]
    %v3996 = vld [vmem:[%s135 + $0x118] sm:$0xf]
    %v3997 = vld [vmem:[%s135 + $0x11c] sm:$0x1]
    %v3998 = vld [vmem:[%s135 + $0x120] sm:$0xf]
    %v3999 = vld [vmem:[%s135 + $0x124] sm:$0xf]
    %v4000 = vld [vmem:[%s135 + $0x128] sm:$0x1]
    %v4001 = vld [vmem:[%s135 + $0x12c] sm:$0xf]
    %v4002 = vld [vmem:[%s135 + $0x130] sm:$0xf]
    %v4003 = vld [vmem:[%s135 + $0x134] sm:$0x1]
    %v4004 = vld [vmem:[%s135 + $0x138] sm:$0xf]
    %v4005 = vld [vmem:[%s135 + $0x13c] sm:$0xf]
    %v4006 = vld [vmem:[%s135 + $0x140] sm:$0x1]
    %v4007 = vld [vmem:[%s135 + $0x144] sm:$0xf]
    %v4008 = vld [vmem:[%s135 + $0x148] sm:$0xf]
    %v4009 = vld [vmem:[%s135 + $0x14c] sm:$0x1]
    %v4010 = vld [vmem:[%s135 + $0x150] sm:$0xf]
    %v4011 = vld [vmem:[%s135 + $0x154] sm:$0xf]
    %v4012 = vld [vmem:[%s135 + $0x158] sm:$0x1]
    %v4013 = vld [vmem:[%s135 + $0x15c] sm:$0xf]
    %v4014 = vld [vmem:[%s135 + $0x160] sm:$0xf]
    %v4015 = vld [vmem:[%s135 + $0x164] sm:$0x1]
    %v4016 = vld [vmem:[%s135 + $0x168] sm:$0xf]
    %v4017 = vld [vmem:[%s135 + $0x16c] sm:$0xf]
    %v4018 = vld [vmem:[%s135 + $0x170] sm:$0x1]
    %v4019 = vld [vmem:[%s135 + $0x174] sm:$0xf]
    %v4020 = vld [vmem:[%s135 + $0x178] sm:$0xf]
    %v4021 = vld [vmem:[%s135 + $0x17c] sm:$0x1]
    %v4022 = vld [vmem:[%s135 + $0x180] sm:$0xf]
    %v4023 = vld [vmem:[%s135 + $0x184] sm:$0xf]
    %v4024 = vld [vmem:[%s135 + $0x188] sm:$0x1]
    %v4025 = vld [vmem:[%s135 + $0x18c] sm:$0xf]
    %v4026 = vld [vmem:[%s135 + $0x190] sm:$0xf]
    %v4027 = vld [vmem:[%s135 + $0x194] sm:$0x1]
    %v4029 = vshrl.u32 %v3932, 16
    %v4031 = vrot.slane %v4029, 4
    %v4032 = vshll.u32 %v3932, 16
    %v4034 = vrot.slane %v4032, 5
    %v4035 = vor.u32 %v4031, %v4034
    %v4036 = vrot.slane %v4035, 4
    %v4038 = vshll.u32 %v3933, 16
    %v4040 = vrot.slane %v4038, 5
    %v4041 = vsel %vm1941, %v4036, %v4040
    %v4042 = vshrl.u32 %v3933, 16
    %v4044 = vrot.slane %v4042, 4
    %v4045 = vor.u32 %v4044, %v4040
    %v4046 = vrot.slane %v4045, 4
    %v4048 = vshll.u32 %v3934, 16
    %v4050 = vrot.slane %v4048, 5
    %v4051 = vsel %vm1941, %v4046, %v4050
    %v4053 = vshrl.u32 %v3935, 16
    %v4055 = vrot.slane %v4053, 4
    %v4056 = vshll.u32 %v3935, 16
    %v4058 = vrot.slane %v4056, 5
    %v4059 = vor.u32 %v4055, %v4058
    %v4060 = vrot.slane %v4059, 4
    %v4062 = vshll.u32 %v3936, 16
    %v4064 = vrot.slane %v4062, 5
    %v4065 = vsel %vm1941, %v4060, %v4064
    %v4066 = vshrl.u32 %v3936, 16
    %v4068 = vrot.slane %v4066, 4
    %v4069 = vor.u32 %v4068, %v4064
    %v4070 = vrot.slane %v4069, 4
    %v4072 = vshll.u32 %v3937, 16
    %v4074 = vrot.slane %v4072, 5
    %v4075 = vsel %vm1941, %v4070, %v4074
    %v4077 = vshrl.u32 %v3938, 16
    %v4079 = vrot.slane %v4077, 4
    %v4080 = vshll.u32 %v3938, 16
    %v4082 = vrot.slane %v4080, 5
    %v4083 = vor.u32 %v4079, %v4082
    %v4084 = vrot.slane %v4083, 4
    %v4086 = vshll.u32 %v3939, 16
    %v4088 = vrot.slane %v4086, 5
    %v4089 = vsel %vm1941, %v4084, %v4088
    %v4090 = vshrl.u32 %v3939, 16
    %v4092 = vrot.slane %v4090, 4
    %v4093 = vor.u32 %v4092, %v4088
    %v4094 = vrot.slane %v4093, 4
    %v4096 = vshll.u32 %v3940, 16
    %v4098 = vrot.slane %v4096, 5
    %v4099 = vsel %vm1941, %v4094, %v4098
    %v4101 = vshrl.u32 %v3941, 16
    %v4103 = vrot.slane %v4101, 4
    %v4104 = vshll.u32 %v3941, 16
    %v4106 = vrot.slane %v4104, 5
    %v4107 = vor.u32 %v4103, %v4106
    %v4108 = vrot.slane %v4107, 4
    %v4110 = vshll.u32 %v3942, 16
    %v4112 = vrot.slane %v4110, 5
    %v4113 = vsel %vm1941, %v4108, %v4112
    %v4114 = vshrl.u32 %v3942, 16
    %v4116 = vrot.slane %v4114, 4
    %v4117 = vor.u32 %v4116, %v4112
    %v4118 = vrot.slane %v4117, 4
    %v4120 = vshll.u32 %v3943, 16
    %v4122 = vrot.slane %v4120, 5
    %v4123 = vsel %vm1941, %v4118, %v4122
    %v4125 = vshrl.u32 %v3944, 16
    %v4127 = vrot.slane %v4125, 4
    %v4128 = vshll.u32 %v3944, 16
    %v4130 = vrot.slane %v4128, 5
    %v4131 = vor.u32 %v4127, %v4130
    %v4132 = vrot.slane %v4131, 4
    %v4134 = vshll.u32 %v3945, 16
    %v4136 = vrot.slane %v4134, 5
    %v4137 = vsel %vm1941, %v4132, %v4136
    %v4138 = vshrl.u32 %v3945, 16
    %v4140 = vrot.slane %v4138, 4
    %v4141 = vor.u32 %v4140, %v4136
    %v4142 = vrot.slane %v4141, 4
    %v4144 = vshll.u32 %v3946, 16
    %v4146 = vrot.slane %v4144, 5
    %v4147 = vsel %vm1941, %v4142, %v4146
    %v4149 = vshrl.u32 %v3947, 16
    %v4151 = vrot.slane %v4149, 4
    %v4152 = vshll.u32 %v3947, 16
    %v4154 = vrot.slane %v4152, 5
    %v4155 = vor.u32 %v4151, %v4154
    %v4156 = vrot.slane %v4155, 4
    %v4158 = vshll.u32 %v3948, 16
    %v4160 = vrot.slane %v4158, 5
    %v4161 = vsel %vm1941, %v4156, %v4160
    %v4162 = vshrl.u32 %v3948, 16
    %v4164 = vrot.slane %v4162, 4
    %v4165 = vor.u32 %v4164, %v4160
    %v4166 = vrot.slane %v4165, 4
    %v4168 = vshll.u32 %v3949, 16
    %v4170 = vrot.slane %v4168, 5
    %v4171 = vsel %vm1941, %v4166, %v4170
    %v4173 = vshrl.u32 %v3950, 16
    %v4175 = vrot.slane %v4173, 4
    %v4176 = vshll.u32 %v3950, 16
    %v4178 = vrot.slane %v4176, 5
    %v4179 = vor.u32 %v4175, %v4178
    %v4180 = vrot.slane %v4179, 4
    %v4182 = vshll.u32 %v3951, 16
    %v4184 = vrot.slane %v4182, 5
    %v4185 = vsel %vm1941, %v4180, %v4184
    %v4186 = vshrl.u32 %v3951, 16
    %v4188 = vrot.slane %v4186, 4
    %v4189 = vor.u32 %v4188, %v4184
    %v4190 = vrot.slane %v4189, 4
    %v4192 = vshll.u32 %v3952, 16
    %v4194 = vrot.slane %v4192, 5
    %v4195 = vsel %vm1941, %v4190, %v4194
    %v4197 = vshrl.u32 %v3953, 16
    %v4199 = vrot.slane %v4197, 4
    %v4200 = vshll.u32 %v3953, 16
    %v4202 = vrot.slane %v4200, 5
    %v4203 = vor.u32 %v4199, %v4202
    %v4204 = vrot.slane %v4203, 4
    %v4206 = vshll.u32 %v3954, 16
    %v4208 = vrot.slane %v4206, 5
    %v4209 = vsel %vm1941, %v4204, %v4208
    %v4210 = vshrl.u32 %v3954, 16
    %v4212 = vrot.slane %v4210, 4
    %v4213 = vor.u32 %v4212, %v4208
    %v4214 = vrot.slane %v4213, 4
    %v4216 = vshll.u32 %v3955, 16
    %v4218 = vrot.slane %v4216, 5
    %v4219 = vsel %vm1941, %v4214, %v4218
    %v4221 = vshrl.u32 %v3956, 16
    %v4223 = vrot.slane %v4221, 4
    %v4224 = vshll.u32 %v3956, 16
    %v4226 = vrot.slane %v4224, 5
    %v4227 = vor.u32 %v4223, %v4226
    %v4228 = vrot.slane %v4227, 4
    %v4230 = vshll.u32 %v3957, 16
    %v4232 = vrot.slane %v4230, 5
    %v4233 = vsel %vm1941, %v4228, %v4232
    %v4234 = vshrl.u32 %v3957, 16
    %v4236 = vrot.slane %v4234, 4
    %v4237 = vor.u32 %v4236, %v4232
    %v4238 = vrot.slane %v4237, 4
    %v4240 = vshll.u32 %v3958, 16
    %v4242 = vrot.slane %v4240, 5
    %v4243 = vsel %vm1941, %v4238, %v4242
    %v4245 = vshrl.u32 %v3959, 16
    %v4247 = vrot.slane %v4245, 4
    %v4248 = vshll.u32 %v3959, 16
    %v4250 = vrot.slane %v4248, 5
    %v4251 = vor.u32 %v4247, %v4250
    %v4252 = vrot.slane %v4251, 4
    %v4254 = vshll.u32 %v3960, 16
    %v4256 = vrot.slane %v4254, 5
    %v4257 = vsel %vm1941, %v4252, %v4256
    %v4258 = vshrl.u32 %v3960, 16
    %v4260 = vrot.slane %v4258, 4
    %v4261 = vor.u32 %v4260, %v4256
    %v4262 = vrot.slane %v4261, 4
    %v4264 = vshll.u32 %v3961, 16
    %v4266 = vrot.slane %v4264, 5
    %v4267 = vsel %vm1941, %v4262, %v4266
    %v4269 = vshrl.u32 %v3962, 16
    %v4271 = vrot.slane %v4269, 4
    %v4272 = vshll.u32 %v3962, 16
    %v4274 = vrot.slane %v4272, 5
    %v4275 = vor.u32 %v4271, %v4274
    %v4276 = vrot.slane %v4275, 4
    %v4278 = vshll.u32 %v3963, 16
    %v4280 = vrot.slane %v4278, 5
    %v4281 = vsel %vm1941, %v4276, %v4280
    %v4282 = vshrl.u32 %v3963, 16
    %v4284 = vrot.slane %v4282, 4
    %v4285 = vor.u32 %v4284, %v4280
    %v4286 = vrot.slane %v4285, 4
    %v4288 = vshll.u32 %v3964, 16
    %v4290 = vrot.slane %v4288, 5
    %v4291 = vsel %vm1941, %v4286, %v4290
    %v4293 = vshrl.u32 %v3965, 16
    %v4295 = vrot.slane %v4293, 4
    %v4296 = vshll.u32 %v3965, 16
    %v4298 = vrot.slane %v4296, 5
    %v4299 = vor.u32 %v4295, %v4298
    %v4300 = vrot.slane %v4299, 4
    %v4302 = vshll.u32 %v3966, 16
    %v4304 = vrot.slane %v4302, 5
    %v4305 = vsel %vm1941, %v4300, %v4304
    %v4306 = vshrl.u32 %v3966, 16
    %v4308 = vrot.slane %v4306, 4
    %v4309 = vor.u32 %v4308, %v4304
    %v4310 = vrot.slane %v4309, 4
    %v4312 = vshll.u32 %v3967, 16
    %v4314 = vrot.slane %v4312, 5
    %v4315 = vsel %vm1941, %v4310, %v4314
    %v4317 = vshrl.u32 %v3968, 16
    %v4319 = vrot.slane %v4317, 4
    %v4320 = vshll.u32 %v3968, 16
    %v4322 = vrot.slane %v4320, 5
    %v4323 = vor.u32 %v4319, %v4322
    %v4324 = vrot.slane %v4323, 4
    %v4326 = vshll.u32 %v3969, 16
    %v4328 = vrot.slane %v4326, 5
    %v4329 = vsel %vm1941, %v4324, %v4328
    %v4330 = vshrl.u32 %v3969, 16
    %v4332 = vrot.slane %v4330, 4
    %v4333 = vor.u32 %v4332, %v4328
    %v4334 = vrot.slane %v4333, 4
    %v4336 = vshll.u32 %v3970, 16
    %v4338 = vrot.slane %v4336, 5
    %v4339 = vsel %vm1941, %v4334, %v4338
    %v4341 = vshrl.u32 %v3971, 16
    %v4343 = vrot.slane %v4341, 4
    %v4344 = vshll.u32 %v3971, 16
    %v4346 = vrot.slane %v4344, 5
    %v4347 = vor.u32 %v4343, %v4346
    %v4348 = vrot.slane %v4347, 4
    %v4350 = vshll.u32 %v3972, 16
    %v4352 = vrot.slane %v4350, 5
    %v4353 = vsel %vm1941, %v4348, %v4352
    %v4354 = vshrl.u32 %v3972, 16
    %v4356 = vrot.slane %v4354, 4
    %v4357 = vor.u32 %v4356, %v4352
    %v4358 = vrot.slane %v4357, 4
    %v4360 = vshll.u32 %v3973, 16
    %v4362 = vrot.slane %v4360, 5
    %v4363 = vsel %vm1941, %v4358, %v4362
    %v4365 = vshrl.u32 %v3974, 16
    %v4367 = vrot.slane %v4365, 4
    %v4368 = vshll.u32 %v3974, 16
    %v4370 = vrot.slane %v4368, 5
    %v4371 = vor.u32 %v4367, %v4370
    %v4372 = vrot.slane %v4371, 4
    %v4374 = vshll.u32 %v3975, 16
    %v4376 = vrot.slane %v4374, 5
    %v4377 = vsel %vm1941, %v4372, %v4376
    %v4378 = vshrl.u32 %v3975, 16
    %v4380 = vrot.slane %v4378, 4
    %v4381 = vor.u32 %v4380, %v4376
    %v4382 = vrot.slane %v4381, 4
    %v4384 = vshll.u32 %v3976, 16
    %v4386 = vrot.slane %v4384, 5
    %v4387 = vsel %vm1941, %v4382, %v4386
    %v4389 = vshrl.u32 %v3977, 16
    %v4391 = vrot.slane %v4389, 4
    %v4392 = vshll.u32 %v3977, 16
    %v4394 = vrot.slane %v4392, 5
    %v4395 = vor.u32 %v4391, %v4394
    %v4396 = vrot.slane %v4395, 4
    %v4398 = vshll.u32 %v3978, 16
    %v4400 = vrot.slane %v4398, 5
    %v4401 = vsel %vm1941, %v4396, %v4400
    %v4402 = vshrl.u32 %v3978, 16
    %v4404 = vrot.slane %v4402, 4
    %v4405 = vor.u32 %v4404, %v4400
    %v4406 = vrot.slane %v4405, 4
    %v4408 = vshll.u32 %v3979, 16
    %v4410 = vrot.slane %v4408, 5
    %v4411 = vsel %vm1941, %v4406, %v4410
    %v4413 = vshrl.u32 %v3980, 16
    %v4415 = vrot.slane %v4413, 4
    %v4416 = vshll.u32 %v3980, 16
    %v4418 = vrot.slane %v4416, 5
    %v4419 = vor.u32 %v4415, %v4418
    %v4420 = vrot.slane %v4419, 4
    %v4422 = vshll.u32 %v3981, 16
    %v4424 = vrot.slane %v4422, 5
    %v4425 = vsel %vm1941, %v4420, %v4424
    %v4426 = vshrl.u32 %v3981, 16
    %v4428 = vrot.slane %v4426, 4
    %v4429 = vor.u32 %v4428, %v4424
    %v4430 = vrot.slane %v4429, 4
    %v4432 = vshll.u32 %v3982, 16
    %v4434 = vrot.slane %v4432, 5
    %v4435 = vsel %vm1941, %v4430, %v4434
    %v4437 = vshrl.u32 %v3983, 16
    %v4439 = vrot.slane %v4437, 4
    %v4440 = vshll.u32 %v3983, 16
    %v4442 = vrot.slane %v4440, 5
    %v4443 = vor.u32 %v4439, %v4442
    %v4444 = vrot.slane %v4443, 4
    %v4446 = vshll.u32 %v3984, 16
    %v4448 = vrot.slane %v4446, 5
    %v4449 = vsel %vm1941, %v4444, %v4448
    %v4450 = vshrl.u32 %v3984, 16
    %v4452 = vrot.slane %v4450, 4
    %v4453 = vor.u32 %v4452, %v4448
    %v4454 = vrot.slane %v4453, 4
    %v4456 = vshll.u32 %v3985, 16
    %v4458 = vrot.slane %v4456, 5
    %v4459 = vsel %vm1941, %v4454, %v4458
    %v4461 = vshrl.u32 %v3986, 16
    %v4463 = vrot.slane %v4461, 4
    %v4464 = vshll.u32 %v3986, 16
    %v4466 = vrot.slane %v4464, 5
    %v4467 = vor.u32 %v4463, %v4466
    %v4468 = vrot.slane %v4467, 4
    %v4470 = vshll.u32 %v3987, 16
    %v4472 = vrot.slane %v4470, 5
    %v4473 = vsel %vm1941, %v4468, %v4472
    %v4474 = vshrl.u32 %v3987, 16
    %v4476 = vrot.slane %v4474, 4
    %v4477 = vor.u32 %v4476, %v4472
    %v4478 = vrot.slane %v4477, 4
    %v4480 = vshll.u32 %v3988, 16
    %v4482 = vrot.slane %v4480, 5
    %v4483 = vsel %vm1941, %v4478, %v4482
    %v4485 = vshrl.u32 %v3989, 16
    %v4487 = vrot.slane %v4485, 4
    %v4488 = vshll.u32 %v3989, 16
    %v4490 = vrot.slane %v4488, 5
    %v4491 = vor.u32 %v4487, %v4490
    %v4492 = vrot.slane %v4491, 4
    %v4494 = vshll.u32 %v3990, 16
    %v4496 = vrot.slane %v4494, 5
    %v4497 = vsel %vm1941, %v4492, %v4496
    %v4498 = vshrl.u32 %v3990, 16
    %v4500 = vrot.slane %v4498, 4
    %v4501 = vor.u32 %v4500, %v4496
    %v4502 = vrot.slane %v4501, 4
    %v4504 = vshll.u32 %v3991, 16
    %v4506 = vrot.slane %v4504, 5
    %v4507 = vsel %vm1941, %v4502, %v4506
    %v4509 = vshrl.u32 %v3992, 16
    %v4511 = vrot.slane %v4509, 4
    %v4512 = vshll.u32 %v3992, 16
    %v4514 = vrot.slane %v4512, 5
    %v4515 = vor.u32 %v4511, %v4514
    %v4516 = vrot.slane %v4515, 4
    %v4518 = vshll.u32 %v3993, 16
    %v4520 = vrot.slane %v4518, 5
    %v4521 = vsel %vm1941, %v4516, %v4520
    %v4522 = vshrl.u32 %v3993, 16
    %v4524 = vrot.slane %v4522, 4
    %v4525 = vor.u32 %v4524, %v4520
    %v4526 = vrot.slane %v4525, 4
    %v4528 = vshll.u32 %v3994, 16
    %v4530 = vrot.slane %v4528, 5
    %v4531 = vsel %vm1941, %v4526, %v4530
    %v4533 = vshrl.u32 %v3995, 16
    %v4535 = vrot.slane %v4533, 4
    %v4536 = vshll.u32 %v3995, 16
    %v4538 = vrot.slane %v4536, 5
    %v4539 = vor.u32 %v4535, %v4538
    %v4540 = vrot.slane %v4539, 4
    %v4542 = vshll.u32 %v3996, 16
    %v4544 = vrot.slane %v4542, 5
    %v4545 = vsel %vm1941, %v4540, %v4544
    %v4546 = vshrl.u32 %v3996, 16
    %v4548 = vrot.slane %v4546, 4
    %v4549 = vor.u32 %v4548, %v4544
    %v4550 = vrot.slane %v4549, 4
    %v4552 = vshll.u32 %v3997, 16
    %v4554 = vrot.slane %v4552, 5
    %v4555 = vsel %vm1941, %v4550, %v4554
    %v4557 = vshrl.u32 %v3998, 16
    %v4559 = vrot.slane %v4557, 4
    %v4560 = vshll.u32 %v3998, 16
    %v4562 = vrot.slane %v4560, 5
    %v4563 = vor.u32 %v4559, %v4562
    %v4564 = vrot.slane %v4563, 4
    %v4566 = vshll.u32 %v3999, 16
    %v4568 = vrot.slane %v4566, 5
    %v4569 = vsel %vm1941, %v4564, %v4568
    %v4570 = vshrl.u32 %v3999, 16
    %v4572 = vrot.slane %v4570, 4
    %v4573 = vor.u32 %v4572, %v4568
    %v4574 = vrot.slane %v4573, 4
    %v4576 = vshll.u32 %v4000, 16
    %v4578 = vrot.slane %v4576, 5
    %v4579 = vsel %vm1941, %v4574, %v4578
    %v4581 = vshrl.u32 %v4001, 16
    %v4583 = vrot.slane %v4581, 4
    %v4584 = vshll.u32 %v4001, 16
    %v4586 = vrot.slane %v4584, 5
    %v4587 = vor.u32 %v4583, %v4586
    %v4588 = vrot.slane %v4587, 4
    %v4590 = vshll.u32 %v4002, 16
    %v4592 = vrot.slane %v4590, 5
    %v4593 = vsel %vm1941, %v4588, %v4592
    %v4594 = vshrl.u32 %v4002, 16
    %v4596 = vrot.slane %v4594, 4
    %v4597 = vor.u32 %v4596, %v4592
    %v4598 = vrot.slane %v4597, 4
    %v4600 = vshll.u32 %v4003, 16
    %v4602 = vrot.slane %v4600, 5
    %v4603 = vsel %vm1941, %v4598, %v4602
    %v4605 = vshrl.u32 %v4004, 16
    %v4607 = vrot.slane %v4605, 4
    %v4608 = vshll.u32 %v4004, 16
    %v4610 = vrot.slane %v4608, 5
    %v4611 = vor.u32 %v4607, %v4610
    %v4612 = vrot.slane %v4611, 4
    %v4614 = vshll.u32 %v4005, 16
    %v4616 = vrot.slane %v4614, 5
    %v4617 = vsel %vm1941, %v4612, %v4616
    %v4618 = vshrl.u32 %v4005, 16
    %v4620 = vrot.slane %v4618, 4
    %v4621 = vor.u32 %v4620, %v4616
    %v4622 = vrot.slane %v4621, 4
    %v4624 = vshll.u32 %v4006, 16
    %v4626 = vrot.slane %v4624, 5
    %v4627 = vsel %vm1941, %v4622, %v4626
    %v4629 = vshrl.u32 %v4007, 16
    %v4631 = vrot.slane %v4629, 4
    %v4632 = vshll.u32 %v4007, 16
    %v4634 = vrot.slane %v4632, 5
    %v4635 = vor.u32 %v4631, %v4634
    %v4636 = vrot.slane %v4635, 4
    %v4638 = vshll.u32 %v4008, 16
    %v4640 = vrot.slane %v4638, 5
    %v4641 = vsel %vm1941, %v4636, %v4640
    %v4642 = vshrl.u32 %v4008, 16
    %v4644 = vrot.slane %v4642, 4
    %v4645 = vor.u32 %v4644, %v4640
    %v4646 = vrot.slane %v4645, 4
    %v4648 = vshll.u32 %v4009, 16
    %v4650 = vrot.slane %v4648, 5
    %v4651 = vsel %vm1941, %v4646, %v4650
    %v4653 = vshrl.u32 %v4010, 16
    %v4655 = vrot.slane %v4653, 4
    %v4656 = vshll.u32 %v4010, 16
    %v4658 = vrot.slane %v4656, 5
    %v4659 = vor.u32 %v4655, %v4658
    %v4660 = vrot.slane %v4659, 4
    %v4662 = vshll.u32 %v4011, 16
    %v4664 = vrot.slane %v4662, 5
    %v4665 = vsel %vm1941, %v4660, %v4664
    %v4666 = vshrl.u32 %v4011, 16
    %v4668 = vrot.slane %v4666, 4
    %v4669 = vor.u32 %v4668, %v4664
    %v4670 = vrot.slane %v4669, 4
    %v4672 = vshll.u32 %v4012, 16
    %v4674 = vrot.slane %v4672, 5
    %v4675 = vsel %vm1941, %v4670, %v4674
    %v4677 = vshrl.u32 %v4013, 16
    %v4679 = vrot.slane %v4677, 4
    %v4680 = vshll.u32 %v4013, 16
    %v4682 = vrot.slane %v4680, 5
    %v4683 = vor.u32 %v4679, %v4682
    %v4684 = vrot.slane %v4683, 4
    %v4686 = vshll.u32 %v4014, 16
    %v4688 = vrot.slane %v4686, 5
    %v4689 = vsel %vm1941, %v4684, %v4688
    %v4690 = vshrl.u32 %v4014, 16
    %v4692 = vrot.slane %v4690, 4
    %v4693 = vor.u32 %v4692, %v4688
    %v4694 = vrot.slane %v4693, 4
    %v4696 = vshll.u32 %v4015, 16
    %v4698 = vrot.slane %v4696, 5
    %v4699 = vsel %vm1941, %v4694, %v4698
    %v4701 = vshrl.u32 %v4016, 16
    %v4703 = vrot.slane %v4701, 4
    %v4704 = vshll.u32 %v4016, 16
    %v4706 = vrot.slane %v4704, 5
    %v4707 = vor.u32 %v4703, %v4706
    %v4708 = vrot.slane %v4707, 4
    %v4710 = vshll.u32 %v4017, 16
    %v4712 = vrot.slane %v4710, 5
    %v4713 = vsel %vm1941, %v4708, %v4712
    %v4714 = vshrl.u32 %v4017, 16
    %v4716 = vrot.slane %v4714, 4
    %v4717 = vor.u32 %v4716, %v4712
    %v4718 = vrot.slane %v4717, 4
    %v4720 = vshll.u32 %v4018, 16
    %v4722 = vrot.slane %v4720, 5
    %v4723 = vsel %vm1941, %v4718, %v4722
    %v4725 = vshrl.u32 %v4019, 16
    %v4727 = vrot.slane %v4725, 4
    %v4728 = vshll.u32 %v4019, 16
    %v4730 = vrot.slane %v4728, 5
    %v4731 = vor.u32 %v4727, %v4730
    %v4732 = vrot.slane %v4731, 4
    %v4734 = vshll.u32 %v4020, 16
    %v4736 = vrot.slane %v4734, 5
    %v4737 = vsel %vm1941, %v4732, %v4736
    %v4738 = vshrl.u32 %v4020, 16
    %v4740 = vrot.slane %v4738, 4
    %v4741 = vor.u32 %v4740, %v4736
    %v4742 = vrot.slane %v4741, 4
    %v4744 = vshll.u32 %v4021, 16
    %v4746 = vrot.slane %v4744, 5
    %v4747 = vsel %vm1941, %v4742, %v4746
    %v4749 = vshrl.u32 %v4022, 16
    %v4751 = vrot.slane %v4749, 4
    %v4752 = vshll.u32 %v4022, 16
    %v4754 = vrot.slane %v4752, 5
    %v4755 = vor.u32 %v4751, %v4754
    %v4756 = vrot.slane %v4755, 4
    %v4758 = vshll.u32 %v4023, 16
    %v4760 = vrot.slane %v4758, 5
    %v4761 = vsel %vm1941, %v4756, %v4760
    %v4762 = vshrl.u32 %v4023, 16
    %v4764 = vrot.slane %v4762, 4
    %v4765 = vor.u32 %v4764, %v4760
    %v4766 = vrot.slane %v4765, 4
    %v4768 = vshll.u32 %v4024, 16
    %v4770 = vrot.slane %v4768, 5
    %v4771 = vsel %vm1941, %v4766, %v4770
    %v4773 = vshrl.u32 %v4025, 16
    %v4775 = vrot.slane %v4773, 4
    %v4776 = vshll.u32 %v4025, 16
    %v4778 = vrot.slane %v4776, 5
    %v4779 = vor.u32 %v4775, %v4778
    %v4780 = vrot.slane %v4779, 4
    %v4782 = vshll.u32 %v4026, 16
    %v4784 = vrot.slane %v4782, 5
    %v4785 = vsel %vm1941, %v4780, %v4784
    %v4786 = vshrl.u32 %v4026, 16
    %v4788 = vrot.slane %v4786, 4
    %v4789 = vor.u32 %v4788, %v4784
    %v4790 = vrot.slane %v4789, 4
    %v4792 = vshll.u32 %v4027, 16
    %v4794 = vrot.slane %v4792, 5
    %v4795 = vsel %vm1941, %v4790, %v4794
    %v4796 = vunpack.c.l.b16 %v4041
    %v4797 = vunpack.c.l.b16 %v4051
    %v4798 = vunpack.c.l.b16 %v4065
    %v4799 = vunpack.c.l.b16 %v4075
    %v4800 = vunpack.c.l.b16 %v4089
    %v4801 = vunpack.c.l.b16 %v4099
    %v4802 = vunpack.c.l.b16 %v4113
    %v4803 = vunpack.c.l.b16 %v4123
    %v4804 = vunpack.c.l.b16 %v4137
    %v4805 = vunpack.c.l.b16 %v4147
    %v4806 = vunpack.c.l.b16 %v4161
    %v4807 = vunpack.c.l.b16 %v4171
    %v4808 = vunpack.c.l.b16 %v4185
    %v4809 = vunpack.c.l.b16 %v4195
    %v4810 = vunpack.c.l.b16 %v4209
    %v4811 = vunpack.c.l.b16 %v4219
    %v4812 = vunpack.c.l.b16 %v4233
    %v4813 = vunpack.c.l.b16 %v4243
    %v4814 = vunpack.c.l.b16 %v4257
    %v4815 = vunpack.c.l.b16 %v4267
    %v4816 = vunpack.c.l.b16 %v4281
    %v4817 = vunpack.c.l.b16 %v4291
    %v4818 = vunpack.c.l.b16 %v4305
    %v4819 = vunpack.c.l.b16 %v4315
    %v4820 = vunpack.c.l.b16 %v4329
    %v4821 = vunpack.c.l.b16 %v4339
    %v4822 = vunpack.c.l.b16 %v4353
    %v4823 = vunpack.c.l.b16 %v4363
    %v4824 = vunpack.c.l.b16 %v4377
    %v4825 = vunpack.c.l.b16 %v4387
    %v4826 = vunpack.c.l.b16 %v4401
    %v4827 = vunpack.c.l.b16 %v4411
    %v4828 = vunpack.c.l.b16 %v4425
    %v4829 = vunpack.c.l.b16 %v4435
    %v4830 = vunpack.c.l.b16 %v4449
    %v4831 = vunpack.c.l.b16 %v4459
    %v4832 = vunpack.c.l.b16 %v4473
    %v4833 = vunpack.c.l.b16 %v4483
    %v4834 = vunpack.c.l.b16 %v4497
    %v4835 = vunpack.c.l.b16 %v4507
    %v4836 = vunpack.c.l.b16 %v4521
    %v4837 = vunpack.c.l.b16 %v4531
    %v4838 = vunpack.c.l.b16 %v4545
    %v4839 = vunpack.c.l.b16 %v4555
    %v4840 = vunpack.c.l.b16 %v4569
    %v4841 = vunpack.c.l.b16 %v4579
    %v4842 = vunpack.c.l.b16 %v4593
    %v4843 = vunpack.c.l.b16 %v4603
    %v4844 = vunpack.c.l.b16 %v4617
    %v4845 = vunpack.c.l.b16 %v4627
    %v4846 = vunpack.c.l.b16 %v4641
    %v4847 = vunpack.c.l.b16 %v4651
    %v4848 = vunpack.c.l.b16 %v4665
    %v4849 = vunpack.c.l.b16 %v4675
    %v4850 = vunpack.c.l.b16 %v4689
    %v4851 = vunpack.c.l.b16 %v4699
    %v4852 = vunpack.c.l.b16 %v4713
    %v4853 = vunpack.c.l.b16 %v4723
    %v4854 = vunpack.c.l.b16 %v4737
    %v4855 = vunpack.c.l.b16 %v4747
    %v4856 = vunpack.c.l.b16 %v4761
    %v4857 = vunpack.c.l.b16 %v4771
    %v4858 = vunpack.c.l.b16 %v4785
    %v4859 = vunpack.c.l.b16 %v4795
    %v4860 = vpack.c.b16 %v4797, %v4796
    %v4861 = vpack.c.b16 %v4799, %v4798
    %v4862 = vpack.c.b16 %v4801, %v4800
    %v4863 = vpack.c.b16 %v4803, %v4802
    %v4864 = vpack.c.b16 %v4805, %v4804
    %v4865 = vpack.c.b16 %v4807, %v4806
    %v4866 = vpack.c.b16 %v4809, %v4808
    %v4867 = vpack.c.b16 %v4811, %v4810
    %v4868 = vpack.c.b16 %v4813, %v4812
    %v4869 = vpack.c.b16 %v4815, %v4814
    %v4870 = vpack.c.b16 %v4817, %v4816
    %v4871 = vpack.c.b16 %v4819, %v4818
    %v4872 = vpack.c.b16 %v4821, %v4820
    %v4873 = vpack.c.b16 %v4823, %v4822
    %v4874 = vpack.c.b16 %v4825, %v4824
    %v4875 = vpack.c.b16 %v4827, %v4826
    %v4876 = vpack.c.b16 %v4829, %v4828
    %v4877 = vpack.c.b16 %v4831, %v4830
    %v4878 = vpack.c.b16 %v4833, %v4832
    %v4879 = vpack.c.b16 %v4835, %v4834
    %v4880 = vpack.c.b16 %v4837, %v4836
    %v4881 = vpack.c.b16 %v4839, %v4838
    %v4882 = vpack.c.b16 %v4841, %v4840
    %v4883 = vpack.c.b16 %v4843, %v4842
    %v4884 = vpack.c.b16 %v4845, %v4844
    %v4885 = vpack.c.b16 %v4847, %v4846
    %v4886 = vpack.c.b16 %v4849, %v4848
    %v4887 = vpack.c.b16 %v4851, %v4850
    %v4888 = vpack.c.b16 %v4853, %v4852
    %v4889 = vpack.c.b16 %v4855, %v4854
    %v4890 = vpack.c.b16 %v4857, %v4856
    %v4891 = vpack.c.b16 %v4859, %v4858
    %4924 = vst.msk [vmem:[#allocation3 + $0x8] sm:$0xff] %vm1810, %v4860
    %4925 = vst.msk [vmem:[#allocation3 + $0x20] sm:$0xff] %vm1810, %v4861
    %4926 = vst.msk [vmem:[#allocation3 + $0x38] sm:$0xff] %vm1810, %v4862
    %4927 = vst.msk [vmem:[#allocation3 + $0x50] sm:$0xff] %vm1810, %v4863
    %4928 = vst.msk [vmem:[#allocation3 + $0x68] sm:$0xff] %vm1810, %v4864
    %4929 = vst.msk [vmem:[#allocation3 + $0x80] sm:$0xff] %vm1810, %v4865
    %4930 = vst.msk [vmem:[#allocation3 + $0x98] sm:$0xff] %vm1810, %v4866
    %4931 = vst.msk [vmem:[#allocation3 + $0xb0] sm:$0xff] %vm1810, %v4867
    %4932 = vst.msk [vmem:[#allocation3 + $0xc8] sm:$0xff] %vm1810, %v4868
    %4933 = vst.msk [vmem:[#allocation3 + $0xe0] sm:$0xff] %vm1810, %v4869
    %4934 = vst.msk [vmem:[#allocation3 + $0xf8] sm:$0xff] %vm1810, %v4870
    %4935 = vst.msk [vmem:[#allocation3 + $0x110] sm:$0xff] %vm1810, %v4871
    %4936 = vst.msk [vmem:[#allocation3 + $0x128] sm:$0xff] %vm1810, %v4872
    %4937 = vst.msk [vmem:[#allocation3 + $0x140] sm:$0xff] %vm1810, %v4873
    %4938 = vst.msk [vmem:[#allocation3 + $0x158] sm:$0xff] %vm1810, %v4874
    %4939 = vst.msk [vmem:[#allocation3 + $0x170] sm:$0xff] %vm1810, %v4875
    %4940 = vst.msk [vmem:[#allocation3 + $0x188] sm:$0xff] %vm1810, %v4876
    %4941 = vst.msk [vmem:[#allocation3 + $0x1a0] sm:$0xff] %vm1810, %v4877
    %4942 = vst.msk [vmem:[#allocation3 + $0x1b8] sm:$0xff] %vm1810, %v4878
    %4943 = vst.msk [vmem:[#allocation3 + $0x1d0] sm:$0xff] %vm1810, %v4879
    %4944 = vst.msk [vmem:[#allocation3 + $0x1e8] sm:$0xff] %vm1810, %v4880
    %4945 = vst.msk [vmem:[#allocation3 + $0x200] sm:$0xff] %vm1810, %v4881
    %4946 = vst.msk [vmem:[#allocation3 + $0x218] sm:$0xff] %vm1810, %v4882
    %4947 = vst.msk [vmem:[#allocation3 + $0x230] sm:$0xff] %vm1810, %v4883
    %4948 = vst.msk [vmem:[#allocation3 + $0x248] sm:$0xff] %vm1810, %v4884
    %4949 = vst.msk [vmem:[#allocation3 + $0x260] sm:$0xff] %vm1810, %v4885
    %4950 = vst.msk [vmem:[#allocation3 + $0x278] sm:$0xff] %vm1810, %v4886
    %4951 = vst.msk [vmem:[#allocation3 + $0x290] sm:$0xff] %vm1810, %v4887
    %4952 = vst.msk [vmem:[#allocation3 + $0x2a8] sm:$0xff] %vm1810, %v4888
    %4953 = vst.msk [vmem:[#allocation3 + $0x2c0] sm:$0xff] %vm1810, %v4889
    %4954 = vst.msk [vmem:[#allocation3 + $0x2d8] sm:$0xff] %vm1810, %v4890
    %4955 = vst.msk [vmem:[#allocation3 + $0x2f0] sm:$0xff] %vm1810, %v4891
    %v4956 = vld [vmem:[%s135] sm:$0xe]
    %v4957 = vld [vmem:[%s135 + $0x4] sm:$0xf]
    %v4958 = vld [vmem:[%s135 + $0x8] sm:$0x1]
    %v4959 = vld [vmem:[%s135 + $0xc] sm:$0xe]
    %v4960 = vld [vmem:[%s135 + $0x10] sm:$0xf]
    %v4961 = vld [vmem:[%s135 + $0x14] sm:$0x1]
    %v4962 = vld [vmem:[%s135 + $0x18] sm:$0xe]
    %v4963 = vld [vmem:[%s135 + $0x1c] sm:$0xf]
    %v4964 = vld [vmem:[%s135 + $0x20] sm:$0x1]
    %v4965 = vld [vmem:[%s135 + $0x24] sm:$0xe]
    %v4966 = vld [vmem:[%s135 + $0x28] sm:$0xf]
    %v4967 = vld [vmem:[%s135 + $0x2c] sm:$0x1]
    %v4968 = vld [vmem:[%s135 + $0x30] sm:$0xe]
    %v4969 = vld [vmem:[%s135 + $0x34] sm:$0xf]
    %v4970 = vld [vmem:[%s135 + $0x38] sm:$0x1]
    %v4971 = vld [vmem:[%s135 + $0x3c] sm:$0xe]
    %v4972 = vld [vmem:[%s135 + $0x40] sm:$0xf]
    %v4973 = vld [vmem:[%s135 + $0x44] sm:$0x1]
    %v4974 = vld [vmem:[%s135 + $0x48] sm:$0xe]
    %v4975 = vld [vmem:[%s135 + $0x4c] sm:$0xf]
    %v4976 = vld [vmem:[%s135 + $0x50] sm:$0x1]
    %v4977 = vld [vmem:[%s135 + $0x54] sm:$0xe]
    %v4978 = vld [vmem:[%s135 + $0x58] sm:$0xf]
    %v4979 = vld [vmem:[%s135 + $0x5c] sm:$0x1]
    %v4980 = vld [vmem:[%s135 + $0x60] sm:$0xe]
    %v4981 = vld [vmem:[%s135 + $0x64] sm:$0xf]
    %v4982 = vld [vmem:[%s135 + $0x68] sm:$0x1]
    %v4983 = vld [vmem:[%s135 + $0x6c] sm:$0xe]
    %v4984 = vld [vmem:[%s135 + $0x70] sm:$0xf]
    %v4985 = vld [vmem:[%s135 + $0x74] sm:$0x1]
    %v4986 = vld [vmem:[%s135 + $0x78] sm:$0xe]
    %v4987 = vld [vmem:[%s135 + $0x7c] sm:$0xf]
    %v4988 = vld [vmem:[%s135 + $0x80] sm:$0x1]
    %v4989 = vld [vmem:[%s135 + $0x84] sm:$0xe]
    %v4990 = vld [vmem:[%s135 + $0x88] sm:$0xf]
    %v4991 = vld [vmem:[%s135 + $0x8c] sm:$0x1]
    %v4992 = vld [vmem:[%s135 + $0x90] sm:$0xe]
    %v4993 = vld [vmem:[%s135 + $0x94] sm:$0xf]
    %v4994 = vld [vmem:[%s135 + $0x98] sm:$0x1]
    %v4995 = vld [vmem:[%s135 + $0x9c] sm:$0xe]
    %v4996 = vld [vmem:[%s135 + $0xa0] sm:$0xf]
    %v4997 = vld [vmem:[%s135 + $0xa4] sm:$0x1]
    %v4998 = vld [vmem:[%s135 + $0xa8] sm:$0xe]
    %v4999 = vld [vmem:[%s135 + $0xac] sm:$0xf]
    %v5000 = vld [vmem:[%s135 + $0xb0] sm:$0x1]
    %v5001 = vld [vmem:[%s135 + $0xb4] sm:$0xe]
    %v5002 = vld [vmem:[%s135 + $0xb8] sm:$0xf]
    %v5003 = vld [vmem:[%s135 + $0xbc] sm:$0x1]
    %v5004 = vld [vmem:[%s135 + $0xd8] sm:$0xe]
    %v5005 = vld [vmem:[%s135 + $0xdc] sm:$0xf]
    %v5006 = vld [vmem:[%s135 + $0xe0] sm:$0x1]
    %v5007 = vld [vmem:[%s135 + $0xe4] sm:$0xe]
    %v5008 = vld [vmem:[%s135 + $0xe8] sm:$0xf]
    %v5009 = vld [vmem:[%s135 + $0xec] sm:$0x1]
    %v5010 = vld [vmem:[%s135 + $0xf0] sm:$0xe]
    %v5011 = vld [vmem:[%s135 + $0xf4] sm:$0xf]
    %v5012 = vld [vmem:[%s135 + $0xf8] sm:$0x1]
    %v5013 = vld [vmem:[%s135 + $0xfc] sm:$0xe]
    %v5014 = vld [vmem:[%s135 + $0x100] sm:$0xf]
    %v5015 = vld [vmem:[%s135 + $0x104] sm:$0x1]
    %v5016 = vld [vmem:[%s135 + $0x108] sm:$0xe]
    %v5017 = vld [vmem:[%s135 + $0x10c] sm:$0xf]
    %v5018 = vld [vmem:[%s135 + $0x110] sm:$0x1]
    %v5019 = vld [vmem:[%s135 + $0x114] sm:$0xe]
    %v5020 = vld [vmem:[%s135 + $0x118] sm:$0xf]
    %v5021 = vld [vmem:[%s135 + $0x11c] sm:$0x1]
    %v5022 = vld [vmem:[%s135 + $0x120] sm:$0xe]
    %v5023 = vld [vmem:[%s135 + $0x124] sm:$0xf]
    %v5024 = vld [vmem:[%s135 + $0x128] sm:$0x1]
    %v5025 = vld [vmem:[%s135 + $0x12c] sm:$0xe]
    %v5026 = vld [vmem:[%s135 + $0x130] sm:$0xf]
    %v5027 = vld [vmem:[%s135 + $0x134] sm:$0x1]
    %v5028 = vld [vmem:[%s135 + $0x138] sm:$0xe]
    %v5029 = vld [vmem:[%s135 + $0x13c] sm:$0xf]
    %v5030 = vld [vmem:[%s135 + $0x140] sm:$0x1]
    %v5031 = vld [vmem:[%s135 + $0x144] sm:$0xe]
    %v5032 = vld [vmem:[%s135 + $0x148] sm:$0xf]
    %v5033 = vld [vmem:[%s135 + $0x14c] sm:$0x1]
    %v5034 = vld [vmem:[%s135 + $0x150] sm:$0xe]
    %v5035 = vld [vmem:[%s135 + $0x154] sm:$0xf]
    %v5036 = vld [vmem:[%s135 + $0x158] sm:$0x1]
    %v5037 = vld [vmem:[%s135 + $0x15c] sm:$0xe]
    %v5038 = vld [vmem:[%s135 + $0x160] sm:$0xf]
    %v5039 = vld [vmem:[%s135 + $0x164] sm:$0x1]
    %v5040 = vld [vmem:[%s135 + $0x168] sm:$0xe]
    %v5041 = vld [vmem:[%s135 + $0x16c] sm:$0xf]
    %v5042 = vld [vmem:[%s135 + $0x170] sm:$0x1]
    %v5043 = vld [vmem:[%s135 + $0x174] sm:$0xe]
    %v5044 = vld [vmem:[%s135 + $0x178] sm:$0xf]
    %v5045 = vld [vmem:[%s135 + $0x17c] sm:$0x1]
    %v5046 = vld [vmem:[%s135 + $0x180] sm:$0xe]
    %v5047 = vld [vmem:[%s135 + $0x184] sm:$0xf]
    %v5048 = vld [vmem:[%s135 + $0x188] sm:$0x1]
    %v5049 = vld [vmem:[%s135 + $0x18c] sm:$0xe]
    %v5050 = vld [vmem:[%s135 + $0x190] sm:$0xf]
    %v5051 = vld [vmem:[%s135 + $0x194] sm:$0x1]
    %v5148 = vrot.slane %v4956, 5
    %v5149 = vrot.slane %v5148, 4
    %v5150 = vrot.slane %v4957, 5
    %v5151 = vsel %vm3129, %v5149, %v5150
    %v5152 = vrot.slane %v5150, 4
    %v5153 = vrot.slane %v4958, 5
    %v5154 = vsel %vm3129, %v5152, %v5153
    %v5155 = vrot.slane %v4959, 5
    %v5156 = vrot.slane %v5155, 4
    %v5157 = vrot.slane %v4960, 5
    %v5158 = vsel %vm3129, %v5156, %v5157
    %v5159 = vrot.slane %v5157, 4
    %v5160 = vrot.slane %v4961, 5
    %v5161 = vsel %vm3129, %v5159, %v5160
    %v5162 = vrot.slane %v4962, 5
    %v5163 = vrot.slane %v5162, 4
    %v5164 = vrot.slane %v4963, 5
    %v5165 = vsel %vm3129, %v5163, %v5164
    %v5166 = vrot.slane %v5164, 4
    %v5167 = vrot.slane %v4964, 5
    %v5168 = vsel %vm3129, %v5166, %v5167
    %v5169 = vrot.slane %v4965, 5
    %v5170 = vrot.slane %v5169, 4
    %v5171 = vrot.slane %v4966, 5
    %v5172 = vsel %vm3129, %v5170, %v5171
    %v5173 = vrot.slane %v5171, 4
    %v5174 = vrot.slane %v4967, 5
    %v5175 = vsel %vm3129, %v5173, %v5174
    %v5176 = vrot.slane %v4968, 5
    %v5177 = vrot.slane %v5176, 4
    %v5178 = vrot.slane %v4969, 5
    %v5179 = vsel %vm3129, %v5177, %v5178
    %v5180 = vrot.slane %v5178, 4
    %v5181 = vrot.slane %v4970, 5
    %v5182 = vsel %vm3129, %v5180, %v5181
    %v5183 = vrot.slane %v4971, 5
    %v5184 = vrot.slane %v5183, 4
    %v5185 = vrot.slane %v4972, 5
    %v5186 = vsel %vm3129, %v5184, %v5185
    %v5187 = vrot.slane %v5185, 4
    %v5188 = vrot.slane %v4973, 5
    %v5189 = vsel %vm3129, %v5187, %v5188
    %v5190 = vrot.slane %v4974, 5
    %v5191 = vrot.slane %v5190, 4
    %v5192 = vrot.slane %v4975, 5
    %v5193 = vsel %vm3129, %v5191, %v5192
    %v5194 = vrot.slane %v5192, 4
    %v5195 = vrot.slane %v4976, 5
    %v5196 = vsel %vm3129, %v5194, %v5195
    %v5197 = vrot.slane %v4977, 5
    %v5198 = vrot.slane %v5197, 4
    %v5199 = vrot.slane %v4978, 5
    %v5200 = vsel %vm3129, %v5198, %v5199
    %v5201 = vrot.slane %v5199, 4
    %v5202 = vrot.slane %v4979, 5
    %v5203 = vsel %vm3129, %v5201, %v5202
    %v5204 = vrot.slane %v4980, 5
    %v5205 = vrot.slane %v5204, 4
    %v5206 = vrot.slane %v4981, 5
    %v5207 = vsel %vm3129, %v5205, %v5206
    %v5208 = vrot.slane %v5206, 4
    %v5209 = vrot.slane %v4982, 5
    %v5210 = vsel %vm3129, %v5208, %v5209
    %v5211 = vrot.slane %v4983, 5
    %v5212 = vrot.slane %v5211, 4
    %v5213 = vrot.slane %v4984, 5
    %v5214 = vsel %vm3129, %v5212, %v5213
    %v5215 = vrot.slane %v5213, 4
    %v5216 = vrot.slane %v4985, 5
    %v5217 = vsel %vm3129, %v5215, %v5216
    %v5218 = vrot.slane %v4986, 5
    %v5219 = vrot.slane %v5218, 4
    %v5220 = vrot.slane %v4987, 5
    %v5221 = vsel %vm3129, %v5219, %v5220
    %v5222 = vrot.slane %v5220, 4
    %v5223 = vrot.slane %v4988, 5
    %v5224 = vsel %vm3129, %v5222, %v5223
    %v5225 = vrot.slane %v4989, 5
    %v5226 = vrot.slane %v5225, 4
    %v5227 = vrot.slane %v4990, 5
    %v5228 = vsel %vm3129, %v5226, %v5227
    %v5229 = vrot.slane %v5227, 4
    %v5230 = vrot.slane %v4991, 5
    %v5231 = vsel %vm3129, %v5229, %v5230
    %v5232 = vrot.slane %v4992, 5
    %v5233 = vrot.slane %v5232, 4
    %v5234 = vrot.slane %v4993, 5
    %v5235 = vsel %vm3129, %v5233, %v5234
    %v5236 = vrot.slane %v5234, 4
    %v5237 = vrot.slane %v4994, 5
    %v5238 = vsel %vm3129, %v5236, %v5237
    %v5239 = vrot.slane %v4995, 5
    %v5240 = vrot.slane %v5239, 4
    %v5241 = vrot.slane %v4996, 5
    %v5242 = vsel %vm3129, %v5240, %v5241
    %v5243 = vrot.slane %v5241, 4
    %v5244 = vrot.slane %v4997, 5
    %v5245 = vsel %vm3129, %v5243, %v5244
    %v5246 = vrot.slane %v4998, 5
    %v5247 = vrot.slane %v5246, 4
    %v5248 = vrot.slane %v4999, 5
    %v5249 = vsel %vm3129, %v5247, %v5248
    %v5250 = vrot.slane %v5248, 4
    %v5251 = vrot.slane %v5000, 5
    %v5252 = vsel %vm3129, %v5250, %v5251
    %v5253 = vrot.slane %v5001, 5
    %v5254 = vrot.slane %v5253, 4
    %v5255 = vrot.slane %v5002, 5
    %v5256 = vsel %vm3129, %v5254, %v5255
    %v5257 = vrot.slane %v5255, 4
    %v5258 = vrot.slane %v5003, 5
    %v5259 = vsel %vm3129, %v5257, %v5258
    %v5260 = vrot.slane %v5004, 5
    %v5261 = vrot.slane %v5260, 4
    %v5262 = vrot.slane %v5005, 5
    %v5263 = vsel %vm3129, %v5261, %v5262
    %v5264 = vrot.slane %v5262, 4
    %v5265 = vrot.slane %v5006, 5
    %v5266 = vsel %vm3129, %v5264, %v5265
    %v5267 = vrot.slane %v5007, 5
    %v5268 = vrot.slane %v5267, 4
    %v5269 = vrot.slane %v5008, 5
    %v5270 = vsel %vm3129, %v5268, %v5269
    %v5271 = vrot.slane %v5269, 4
    %v5272 = vrot.slane %v5009, 5
    %v5273 = vsel %vm3129, %v5271, %v5272
    %v5274 = vrot.slane %v5010, 5
    %v5275 = vrot.slane %v5274, 4
    %v5276 = vrot.slane %v5011, 5
    %v5277 = vsel %vm3129, %v5275, %v5276
    %v5278 = vrot.slane %v5276, 4
    %v5279 = vrot.slane %v5012, 5
    %v5280 = vsel %vm3129, %v5278, %v5279
    %v5281 = vrot.slane %v5013, 5
    %v5282 = vrot.slane %v5281, 4
    %v5283 = vrot.slane %v5014, 5
    %v5284 = vsel %vm3129, %v5282, %v5283
    %v5285 = vrot.slane %v5283, 4
    %v5286 = vrot.slane %v5015, 5
    %v5287 = vsel %vm3129, %v5285, %v5286
    %v5288 = vrot.slane %v5016, 5
    %v5289 = vrot.slane %v5288, 4
    %v5290 = vrot.slane %v5017, 5
    %v5291 = vsel %vm3129, %v5289, %v5290
    %v5292 = vrot.slane %v5290, 4
    %v5293 = vrot.slane %v5018, 5
    %v5294 = vsel %vm3129, %v5292, %v5293
    %v5295 = vrot.slane %v5019, 5
    %v5296 = vrot.slane %v5295, 4
    %v5297 = vrot.slane %v5020, 5
    %v5298 = vsel %vm3129, %v5296, %v5297
    %v5299 = vrot.slane %v5297, 4
    %v5300 = vrot.slane %v5021, 5
    %v5301 = vsel %vm3129, %v5299, %v5300
    %v5302 = vrot.slane %v5022, 5
    %v5303 = vrot.slane %v5302, 4
    %v5304 = vrot.slane %v5023, 5
    %v5305 = vsel %vm3129, %v5303, %v5304
    %v5306 = vrot.slane %v5304, 4
    %v5307 = vrot.slane %v5024, 5
    %v5308 = vsel %vm3129, %v5306, %v5307
    %v5309 = vrot.slane %v5025, 5
    %v5310 = vrot.slane %v5309, 4
    %v5311 = vrot.slane %v5026, 5
    %v5312 = vsel %vm3129, %v5310, %v5311
    %v5313 = vrot.slane %v5311, 4
    %v5314 = vrot.slane %v5027, 5
    %v5315 = vsel %vm3129, %v5313, %v5314
    %v5316 = vrot.slane %v5028, 5
    %v5317 = vrot.slane %v5316, 4
    %v5318 = vrot.slane %v5029, 5
    %v5319 = vsel %vm3129, %v5317, %v5318
    %v5320 = vrot.slane %v5318, 4
    %v5321 = vrot.slane %v5030, 5
    %v5322 = vsel %vm3129, %v5320, %v5321
    %v5323 = vrot.slane %v5031, 5
    %v5324 = vrot.slane %v5323, 4
    %v5325 = vrot.slane %v5032, 5
    %v5326 = vsel %vm3129, %v5324, %v5325
    %v5327 = vrot.slane %v5325, 4
    %v5328 = vrot.slane %v5033, 5
    %v5329 = vsel %vm3129, %v5327, %v5328
    %v5330 = vrot.slane %v5034, 5
    %v5331 = vrot.slane %v5330, 4
    %v5332 = vrot.slane %v5035, 5
    %v5333 = vsel %vm3129, %v5331, %v5332
    %v5334 = vrot.slane %v5332, 4
    %v5335 = vrot.slane %v5036, 5
    %v5336 = vsel %vm3129, %v5334, %v5335
    %v5337 = vrot.slane %v5037, 5
    %v5338 = vrot.slane %v5337, 4
    %v5339 = vrot.slane %v5038, 5
    %v5340 = vsel %vm3129, %v5338, %v5339
    %v5341 = vrot.slane %v5339, 4
    %v5342 = vrot.slane %v5039, 5
    %v5343 = vsel %vm3129, %v5341, %v5342
    %v5344 = vrot.slane %v5040, 5
    %v5345 = vrot.slane %v5344, 4
    %v5346 = vrot.slane %v5041, 5
    %v5347 = vsel %vm3129, %v5345, %v5346
    %v5348 = vrot.slane %v5346, 4
    %v5349 = vrot.slane %v5042, 5
    %v5350 = vsel %vm3129, %v5348, %v5349
    %v5351 = vrot.slane %v5043, 5
    %v5352 = vrot.slane %v5351, 4
    %v5353 = vrot.slane %v5044, 5
    %v5354 = vsel %vm3129, %v5352, %v5353
    %v5355 = vrot.slane %v5353, 4
    %v5356 = vrot.slane %v5045, 5
    %v5357 = vsel %vm3129, %v5355, %v5356
    %v5358 = vrot.slane %v5046, 5
    %v5359 = vrot.slane %v5358, 4
    %v5360 = vrot.slane %v5047, 5
    %v5361 = vsel %vm3129, %v5359, %v5360
    %v5362 = vrot.slane %v5360, 4
    %v5363 = vrot.slane %v5048, 5
    %v5364 = vsel %vm3129, %v5362, %v5363
    %v5365 = vrot.slane %v5049, 5
    %v5366 = vrot.slane %v5365, 4
    %v5367 = vrot.slane %v5050, 5
    %v5368 = vsel %vm3129, %v5366, %v5367
    %v5369 = vrot.slane %v5367, 4
    %v5370 = vrot.slane %v5051, 5
    %v5371 = vsel %vm3129, %v5369, %v5370
    %v5372 = vunpack.c.l.b16 %v5151
    %v5373 = vunpack.c.l.b16 %v5154
    %v5374 = vunpack.c.l.b16 %v5158
    %v5375 = vunpack.c.l.b16 %v5161
    %v5376 = vunpack.c.l.b16 %v5165
    %v5377 = vunpack.c.l.b16 %v5168
    %v5378 = vunpack.c.l.b16 %v5172
    %v5379 = vunpack.c.l.b16 %v5175
    %v5380 = vunpack.c.l.b16 %v5179
    %v5381 = vunpack.c.l.b16 %v5182
    %v5382 = vunpack.c.l.b16 %v5186
    %v5383 = vunpack.c.l.b16 %v5189
    %v5384 = vunpack.c.l.b16 %v5193
    %v5385 = vunpack.c.l.b16 %v5196
    %v5386 = vunpack.c.l.b16 %v5200
    %v5387 = vunpack.c.l.b16 %v5203
    %v5388 = vunpack.c.l.b16 %v5207
    %v5389 = vunpack.c.l.b16 %v5210
    %v5390 = vunpack.c.l.b16 %v5214
    %v5391 = vunpack.c.l.b16 %v5217
    %v5392 = vunpack.c.l.b16 %v5221
    %v5393 = vunpack.c.l.b16 %v5224
    %v5394 = vunpack.c.l.b16 %v5228
    %v5395 = vunpack.c.l.b16 %v5231
    %v5396 = vunpack.c.l.b16 %v5235
    %v5397 = vunpack.c.l.b16 %v5238
    %v5398 = vunpack.c.l.b16 %v5242
    %v5399 = vunpack.c.l.b16 %v5245
    %v5400 = vunpack.c.l.b16 %v5249
    %v5401 = vunpack.c.l.b16 %v5252
    %v5402 = vunpack.c.l.b16 %v5256
    %v5403 = vunpack.c.l.b16 %v5259
    %v5404 = vunpack.c.l.b16 %v5263
    %v5405 = vunpack.c.l.b16 %v5266
    %v5406 = vunpack.c.l.b16 %v5270
    %v5407 = vunpack.c.l.b16 %v5273
    %v5408 = vunpack.c.l.b16 %v5277
    %v5409 = vunpack.c.l.b16 %v5280
    %v5410 = vunpack.c.l.b16 %v5284
    %v5411 = vunpack.c.l.b16 %v5287
    %v5412 = vunpack.c.l.b16 %v5291
    %v5413 = vunpack.c.l.b16 %v5294
    %v5414 = vunpack.c.l.b16 %v5298
    %v5415 = vunpack.c.l.b16 %v5301
    %v5416 = vunpack.c.l.b16 %v5305
    %v5417 = vunpack.c.l.b16 %v5308
    %v5418 = vunpack.c.l.b16 %v5312
    %v5419 = vunpack.c.l.b16 %v5315
    %v5420 = vunpack.c.l.b16 %v5319
    %v5421 = vunpack.c.l.b16 %v5322
    %v5422 = vunpack.c.l.b16 %v5326
    %v5423 = vunpack.c.l.b16 %v5329
    %v5424 = vunpack.c.l.b16 %v5333
    %v5425 = vunpack.c.l.b16 %v5336
    %v5426 = vunpack.c.l.b16 %v5340
    %v5427 = vunpack.c.l.b16 %v5343
    %v5428 = vunpack.c.l.b16 %v5347
    %v5429 = vunpack.c.l.b16 %v5350
    %v5430 = vunpack.c.l.b16 %v5354
    %v5431 = vunpack.c.l.b16 %v5357
    %v5432 = vunpack.c.l.b16 %v5361
    %v5433 = vunpack.c.l.b16 %v5364
    %v5434 = vunpack.c.l.b16 %v5368
    %v5435 = vunpack.c.l.b16 %v5371
    %v5436 = vpack.c.b16 %v5373, %v5372
    %v5437 = vpack.c.b16 %v5375, %v5374
    %v5438 = vpack.c.b16 %v5377, %v5376
    %v5439 = vpack.c.b16 %v5379, %v5378
    %v5440 = vpack.c.b16 %v5381, %v5380
    %v5441 = vpack.c.b16 %v5383, %v5382
    %v5442 = vpack.c.b16 %v5385, %v5384
    %v5443 = vpack.c.b16 %v5387, %v5386
    %v5444 = vpack.c.b16 %v5389, %v5388
    %v5445 = vpack.c.b16 %v5391, %v5390
    %v5446 = vpack.c.b16 %v5393, %v5392
    %v5447 = vpack.c.b16 %v5395, %v5394
    %v5448 = vpack.c.b16 %v5397, %v5396
    %v5449 = vpack.c.b16 %v5399, %v5398
    %v5450 = vpack.c.b16 %v5401, %v5400
    %v5451 = vpack.c.b16 %v5403, %v5402
    %v5452 = vpack.c.b16 %v5405, %v5404
    %v5453 = vpack.c.b16 %v5407, %v5406
    %v5454 = vpack.c.b16 %v5409, %v5408
    %v5455 = vpack.c.b16 %v5411, %v5410
    %v5456 = vpack.c.b16 %v5413, %v5412
    %v5457 = vpack.c.b16 %v5415, %v5414
    %v5458 = vpack.c.b16 %v5417, %v5416
    %v5459 = vpack.c.b16 %v5419, %v5418
    %v5460 = vpack.c.b16 %v5421, %v5420
    %v5461 = vpack.c.b16 %v5423, %v5422
    %v5462 = vpack.c.b16 %v5425, %v5424
    %v5463 = vpack.c.b16 %v5427, %v5426
    %v5464 = vpack.c.b16 %v5429, %v5428
    %v5465 = vpack.c.b16 %v5431, %v5430
    %v5466 = vpack.c.b16 %v5433, %v5432
    %v5467 = vpack.c.b16 %v5435, %v5434
    %5468 = vrot.lane.b32.xlu0 %v5436, 32
    %v5469 = vpop.permute.xlu0 %5468
    %5470 = vrot.lane.b32.xlu0 %v5437, 32
    %v5471 = vpop.permute.xlu0 %5470
    %5472 = vrot.lane.b32.xlu0 %v5438, 32
    %v5473 = vpop.permute.xlu0 %5472
    %5474 = vrot.lane.b32.xlu0 %v5439, 32
    %v5475 = vpop.permute.xlu0 %5474
    %5476 = vrot.lane.b32.xlu0 %v5440, 32
    %v5477 = vpop.permute.xlu0 %5476
    %5478 = vrot.lane.b32.xlu0 %v5441, 32
    %v5479 = vpop.permute.xlu0 %5478
    %5480 = vrot.lane.b32.xlu0 %v5442, 32
    %v5481 = vpop.permute.xlu0 %5480
    %5482 = vrot.lane.b32.xlu0 %v5443, 32
    %v5483 = vpop.permute.xlu0 %5482
    %5484 = vrot.lane.b32.xlu0 %v5444, 32
    %v5485 = vpop.permute.xlu0 %5484
    %5486 = vrot.lane.b32.xlu0 %v5445, 32
    %v5487 = vpop.permute.xlu0 %5486
    %5488 = vrot.lane.b32.xlu0 %v5446, 32
    %v5489 = vpop.permute.xlu0 %5488
    %5490 = vrot.lane.b32.xlu0 %v5447, 32
    %v5491 = vpop.permute.xlu0 %5490
    %5492 = vrot.lane.b32.xlu0 %v5448, 32
    %v5493 = vpop.permute.xlu0 %5492
    %5494 = vrot.lane.b32.xlu0 %v5449, 32
    %v5495 = vpop.permute.xlu0 %5494
    %5496 = vrot.lane.b32.xlu0 %v5450, 32
    %v5497 = vpop.permute.xlu0 %5496
    %5498 = vrot.lane.b32.xlu0 %v5451, 32
    %v5499 = vpop.permute.xlu0 %5498
    %5500 = vrot.lane.b32.xlu0 %v5452, 32
    %v5501 = vpop.permute.xlu0 %5500
    %5502 = vrot.lane.b32.xlu0 %v5453, 32
    %v5503 = vpop.permute.xlu0 %5502
    %5504 = vrot.lane.b32.xlu0 %v5454, 32
    %v5505 = vpop.permute.xlu0 %5504
    %5506 = vrot.lane.b32.xlu0 %v5455, 32
    %v5507 = vpop.permute.xlu0 %5506
    %5508 = vrot.lane.b32.xlu0 %v5456, 32
    %v5509 = vpop.permute.xlu0 %5508
    %5510 = vrot.lane.b32.xlu0 %v5457, 32
    %v5511 = vpop.permute.xlu0 %5510
    %5512 = vrot.lane.b32.xlu0 %v5458, 32
    %v5513 = vpop.permute.xlu0 %5512
    %5514 = vrot.lane.b32.xlu0 %v5459, 32
    %v5515 = vpop.permute.xlu0 %5514
    %5516 = vrot.lane.b32.xlu0 %v5460, 32
    %v5517 = vpop.permute.xlu0 %5516
    %5518 = vrot.lane.b32.xlu0 %v5461, 32
    %v5519 = vpop.permute.xlu0 %5518
    %5520 = vrot.lane.b32.xlu0 %v5462, 32
    %v5521 = vpop.permute.xlu0 %5520
    %5522 = vrot.lane.b32.xlu0 %v5463, 32
    %v5523 = vpop.permute.xlu0 %5522
    %5524 = vrot.lane.b32.xlu0 %v5464, 32
    %v5525 = vpop.permute.xlu0 %5524
    %5526 = vrot.lane.b32.xlu0 %v5465, 32
    %v5527 = vpop.permute.xlu0 %5526
    %5528 = vrot.lane.b32.xlu0 %v5466, 32
    %v5529 = vpop.permute.xlu0 %5528
    %5530 = vrot.lane.b32.xlu0 %v5467, 32
    %v5531 = vpop.permute.xlu0 %5530
    %5564 = vst.msk [vmem:[#allocation3 + $0x8] sm:$0xff] %vm2902, %v5469
    %5565 = vst.msk [vmem:[#allocation3 + $0x20] sm:$0xff] %vm2902, %v5471
    %5566 = vst.msk [vmem:[#allocation3 + $0x38] sm:$0xff] %vm2902, %v5473
    %5567 = vst.msk [vmem:[#allocation3 + $0x50] sm:$0xff] %vm2902, %v5475
    %5568 = vst.msk [vmem:[#allocation3 + $0x68] sm:$0xff] %vm2902, %v5477
    %5569 = vst.msk [vmem:[#allocation3 + $0x80] sm:$0xff] %vm2902, %v5479
    %5570 = vst.msk [vmem:[#allocation3 + $0x98] sm:$0xff] %vm2902, %v5481
    %5571 = vst.msk [vmem:[#allocation3 + $0xb0] sm:$0xff] %vm2902, %v5483
    %5572 = vst.msk [vmem:[#allocation3 + $0xc8] sm:$0xff] %vm2902, %v5485
    %5573 = vst.msk [vmem:[#allocation3 + $0xe0] sm:$0xff] %vm2902, %v5487
    %5574 = vst.msk [vmem:[#allocation3 + $0xf8] sm:$0xff] %vm2902, %v5489
    %5575 = vst.msk [vmem:[#allocation3 + $0x110] sm:$0xff] %vm2902, %v5491
    %5576 = vst.msk [vmem:[#allocation3 + $0x128] sm:$0xff] %vm2902, %v5493
    %5577 = vst.msk [vmem:[#allocation3 + $0x140] sm:$0xff] %vm2902, %v5495
    %5578 = vst.msk [vmem:[#allocation3 + $0x158] sm:$0xff] %vm2902, %v5497
    %5579 = vst.msk [vmem:[#allocation3 + $0x170] sm:$0xff] %vm2902, %v5499
    %5580 = vst.msk [vmem:[#allocation3 + $0x188] sm:$0xff] %vm2902, %v5501
    %5581 = vst.msk [vmem:[#allocation3 + $0x1a0] sm:$0xff] %vm2902, %v5503
    %5582 = vst.msk [vmem:[#allocation3 + $0x1b8] sm:$0xff] %vm2902, %v5505
    %5583 = vst.msk [vmem:[#allocation3 + $0x1d0] sm:$0xff] %vm2902, %v5507
    %5584 = vst.msk [vmem:[#allocation3 + $0x1e8] sm:$0xff] %vm2902, %v5509
    %5585 = vst.msk [vmem:[#allocation3 + $0x200] sm:$0xff] %vm2902, %v5511
    %5586 = vst.msk [vmem:[#allocation3 + $0x218] sm:$0xff] %vm2902, %v5513
    %5587 = vst.msk [vmem:[#allocation3 + $0x230] sm:$0xff] %vm2902, %v5515
    %5588 = vst.msk [vmem:[#allocation3 + $0x248] sm:$0xff] %vm2902, %v5517
    %5589 = vst.msk [vmem:[#allocation3 + $0x260] sm:$0xff] %vm2902, %v5519
    %5590 = vst.msk [vmem:[#allocation3 + $0x278] sm:$0xff] %vm2902, %v5521
    %5591 = vst.msk [vmem:[#allocation3 + $0x290] sm:$0xff] %vm2902, %v5523
    %5592 = vst.msk [vmem:[#allocation3 + $0x2a8] sm:$0xff] %vm2902, %v5525
    %5593 = vst.msk [vmem:[#allocation3 + $0x2c0] sm:$0xff] %vm2902, %v5527
    %5594 = vst.msk [vmem:[#allocation3 + $0x2d8] sm:$0xff] %vm2902, %v5529
    %5595 = vst.msk [vmem:[#allocation3 + $0x2f0] sm:$0xff] %vm2902, %v5531
    %s5596 = scalar_lea.vmem [#allocation2], 24
    %v5597 = vld [vmem:[%s5596] sm:$0xf]
    %v5598 = vld [vmem:[%s5596 + $0x4] sm:$0xf]
    %v5599 = vld [vmem:[%s5596 + $0xc] sm:$0xf]
    %v5600 = vld [vmem:[%s5596 + $0x10] sm:$0xf]
    %v5601 = vld [vmem:[%s5596 + $0x18] sm:$0xf]
    %v5602 = vld [vmem:[%s5596 + $0x1c] sm:$0xf]
    %v5603 = vld [vmem:[%s5596 + $0x24] sm:$0xf]
    %v5604 = vld [vmem:[%s5596 + $0x28] sm:$0xf]
    %v5605 = vld [vmem:[%s5596 + $0x30] sm:$0xf]
    %v5606 = vld [vmem:[%s5596 + $0x34] sm:$0xf]
    %v5607 = vld [vmem:[%s5596 + $0x3c] sm:$0xf]
    %v5608 = vld [vmem:[%s5596 + $0x40] sm:$0xf]
    %v5609 = vld [vmem:[%s5596 + $0x48] sm:$0xf]
    %v5610 = vld [vmem:[%s5596 + $0x4c] sm:$0xf]
    %v5611 = vld [vmem:[%s5596 + $0x54] sm:$0xf]
    %v5612 = vld [vmem:[%s5596 + $0x58] sm:$0xf]
    %v5613 = vld [vmem:[%s5596 + $0x60] sm:$0xf]
    %v5614 = vld [vmem:[%s5596 + $0x64] sm:$0xf]
    %v5615 = vld [vmem:[%s5596 + $0x6c] sm:$0xf]
    %v5616 = vld [vmem:[%s5596 + $0x70] sm:$0xf]
    %v5617 = vld [vmem:[%s5596 + $0x78] sm:$0xf]
    %v5618 = vld [vmem:[%s5596 + $0x7c] sm:$0xf]
    %v5619 = vld [vmem:[%s5596 + $0x84] sm:$0xf]
    %v5620 = vld [vmem:[%s5596 + $0x88] sm:$0xf]
    %v5621 = vld [vmem:[%s5596 + $0x90] sm:$0xf]
    %v5622 = vld [vmem:[%s5596 + $0x94] sm:$0xf]
    %v5623 = vld [vmem:[%s5596 + $0x9c] sm:$0xf]
    %v5624 = vld [vmem:[%s5596 + $0xa0] sm:$0xf]
    %v5625 = vld [vmem:[%s5596 + $0xa8] sm:$0xf]
    %v5626 = vld [vmem:[%s5596 + $0xac] sm:$0xf]
    %v5627 = vld [vmem:[%s5596 + $0xb4] sm:$0xf]
    %v5628 = vld [vmem:[%s5596 + $0xb8] sm:$0xf]
    %v5629 = vld [vmem:[%s5596 + $0xd8] sm:$0xf]
    %v5630 = vld [vmem:[%s5596 + $0xdc] sm:$0xf]
    %v5631 = vld [vmem:[%s5596 + $0xe4] sm:$0xf]
    %v5632 = vld [vmem:[%s5596 + $0xe8] sm:$0xf]
    %v5633 = vld [vmem:[%s5596 + $0xf0] sm:$0xf]
    %v5634 = vld [vmem:[%s5596 + $0xf4] sm:$0xf]
    %v5635 = vld [vmem:[%s5596 + $0xfc] sm:$0xf]
    %v5636 = vld [vmem:[%s5596 + $0x100] sm:$0xf]
    %v5637 = vld [vmem:[%s5596 + $0x108] sm:$0xf]
    %v5638 = vld [vmem:[%s5596 + $0x10c] sm:$0xf]
    %v5639 = vld [vmem:[%s5596 + $0x114] sm:$0xf]
    %v5640 = vld [vmem:[%s5596 + $0x118] sm:$0xf]
    %v5641 = vld [vmem:[%s5596 + $0x120] sm:$0xf]
    %v5642 = vld [vmem:[%s5596 + $0x124] sm:$0xf]
    %v5643 = vld [vmem:[%s5596 + $0x12c] sm:$0xf]
    %v5644 = vld [vmem:[%s5596 + $0x130] sm:$0xf]
    %v5645 = vld [vmem:[%s5596 + $0x138] sm:$0xf]
    %v5646 = vld [vmem:[%s5596 + $0x13c] sm:$0xf]
    %v5647 = vld [vmem:[%s5596 + $0x144] sm:$0xf]
    %v5648 = vld [vmem:[%s5596 + $0x148] sm:$0xf]
    %v5649 = vld [vmem:[%s5596 + $0x150] sm:$0xf]
    %v5650 = vld [vmem:[%s5596 + $0x154] sm:$0xf]
    %v5651 = vld [vmem:[%s5596 + $0x15c] sm:$0xf]
    %v5652 = vld [vmem:[%s5596 + $0x160] sm:$0xf]
    %v5653 = vld [vmem:[%s5596 + $0x168] sm:$0xf]
    %v5654 = vld [vmem:[%s5596 + $0x16c] sm:$0xf]
    %v5655 = vld [vmem:[%s5596 + $0x174] sm:$0xf]
    %v5656 = vld [vmem:[%s5596 + $0x178] sm:$0xf]
    %v5657 = vld [vmem:[%s5596 + $0x180] sm:$0xf]
    %v5658 = vld [vmem:[%s5596 + $0x184] sm:$0xf]
    %v5659 = vld [vmem:[%s5596 + $0x18c] sm:$0xf]
    %v5660 = vld [vmem:[%s5596 + $0x190] sm:$0xf]
    %v5725 = vunpack.c.l.b16 %v5597
    %v5726 = vunpack.c.l.b16 %v5598
    %v5727 = vunpack.c.l.b16 %v5599
    %v5728 = vunpack.c.l.b16 %v5600
    %v5729 = vunpack.c.l.b16 %v5601
    %v5730 = vunpack.c.l.b16 %v5602
    %v5731 = vunpack.c.l.b16 %v5603
    %v5732 = vunpack.c.l.b16 %v5604
    %v5733 = vunpack.c.l.b16 %v5605
    %v5734 = vunpack.c.l.b16 %v5606
    %v5735 = vunpack.c.l.b16 %v5607
    %v5736 = vunpack.c.l.b16 %v5608
    %v5737 = vunpack.c.l.b16 %v5609
    %v5738 = vunpack.c.l.b16 %v5610
    %v5739 = vunpack.c.l.b16 %v5611
    %v5740 = vunpack.c.l.b16 %v5612
    %v5741 = vunpack.c.l.b16 %v5613
    %v5742 = vunpack.c.l.b16 %v5614
    %v5743 = vunpack.c.l.b16 %v5615
    %v5744 = vunpack.c.l.b16 %v5616
    %v5745 = vunpack.c.l.b16 %v5617
    %v5746 = vunpack.c.l.b16 %v5618
    %v5747 = vunpack.c.l.b16 %v5619
    %v5748 = vunpack.c.l.b16 %v5620
    %v5749 = vunpack.c.l.b16 %v5621
    %v5750 = vunpack.c.l.b16 %v5622
    %v5751 = vunpack.c.l.b16 %v5623
    %v5752 = vunpack.c.l.b16 %v5624
    %v5753 = vunpack.c.l.b16 %v5625
    %v5754 = vunpack.c.l.b16 %v5626
    %v5755 = vunpack.c.l.b16 %v5627
    %v5756 = vunpack.c.l.b16 %v5628
    %v5757 = vunpack.c.l.b16 %v5629
    %v5758 = vunpack.c.l.b16 %v5630
    %v5759 = vunpack.c.l.b16 %v5631
    %v5760 = vunpack.c.l.b16 %v5632
    %v5761 = vunpack.c.l.b16 %v5633
    %v5762 = vunpack.c.l.b16 %v5634
    %v5763 = vunpack.c.l.b16 %v5635
    %v5764 = vunpack.c.l.b16 %v5636
    %v5765 = vunpack.c.l.b16 %v5637
    %v5766 = vunpack.c.l.b16 %v5638
    %v5767 = vunpack.c.l.b16 %v5639
    %v5768 = vunpack.c.l.b16 %v5640
    %v5769 = vunpack.c.l.b16 %v5641
    %v5770 = vunpack.c.l.b16 %v5642
    %v5771 = vunpack.c.l.b16 %v5643
    %v5772 = vunpack.c.l.b16 %v5644
    %v5773 = vunpack.c.l.b16 %v5645
    %v5774 = vunpack.c.l.b16 %v5646
    %v5775 = vunpack.c.l.b16 %v5647
    %v5776 = vunpack.c.l.b16 %v5648
    %v5777 = vunpack.c.l.b16 %v5649
    %v5778 = vunpack.c.l.b16 %v5650
    %v5779 = vunpack.c.l.b16 %v5651
    %v5780 = vunpack.c.l.b16 %v5652
    %v5781 = vunpack.c.l.b16 %v5653
    %v5782 = vunpack.c.l.b16 %v5654
    %v5783 = vunpack.c.l.b16 %v5655
    %v5784 = vunpack.c.l.b16 %v5656
    %v5785 = vunpack.c.l.b16 %v5657
    %v5786 = vunpack.c.l.b16 %v5658
    %v5787 = vunpack.c.l.b16 %v5659
    %v5788 = vunpack.c.l.b16 %v5660
    %v5789 = vpack.c.b16 %v5726, %v5725
    %v5790 = vpack.c.b16 %v5728, %v5727
    %v5791 = vpack.c.b16 %v5730, %v5729
    %v5792 = vpack.c.b16 %v5732, %v5731
    %v5793 = vpack.c.b16 %v5734, %v5733
    %v5794 = vpack.c.b16 %v5736, %v5735
    %v5795 = vpack.c.b16 %v5738, %v5737
    %v5796 = vpack.c.b16 %v5740, %v5739
    %v5797 = vpack.c.b16 %v5742, %v5741
    %v5798 = vpack.c.b16 %v5744, %v5743
    %v5799 = vpack.c.b16 %v5746, %v5745
    %v5800 = vpack.c.b16 %v5748, %v5747
    %v5801 = vpack.c.b16 %v5750, %v5749
    %v5802 = vpack.c.b16 %v5752, %v5751
    %v5803 = vpack.c.b16 %v5754, %v5753
    %v5804 = vpack.c.b16 %v5756, %v5755
    %v5805 = vpack.c.b16 %v5758, %v5757
    %v5806 = vpack.c.b16 %v5760, %v5759
    %v5807 = vpack.c.b16 %v5762, %v5761
    %v5808 = vpack.c.b16 %v5764, %v5763
    %v5809 = vpack.c.b16 %v5766, %v5765
    %v5810 = vpack.c.b16 %v5768, %v5767
    %v5811 = vpack.c.b16 %v5770, %v5769
    %v5812 = vpack.c.b16 %v5772, %v5771
    %v5813 = vpack.c.b16 %v5774, %v5773
    %v5814 = vpack.c.b16 %v5776, %v5775
    %v5815 = vpack.c.b16 %v5778, %v5777
    %v5816 = vpack.c.b16 %v5780, %v5779
    %v5817 = vpack.c.b16 %v5782, %v5781
    %v5818 = vpack.c.b16 %v5784, %v5783
    %v5819 = vpack.c.b16 %v5786, %v5785
    %v5820 = vpack.c.b16 %v5788, %v5787
    %5821 = vrot.lane.b32.xlu0 %v5789, 64
    %v5822 = vpop.permute.xlu0 %5821
    %5823 = vrot.lane.b32.xlu0 %v5790, 64
    %v5824 = vpop.permute.xlu0 %5823
    %5825 = vrot.lane.b32.xlu0 %v5791, 64
    %v5826 = vpop.permute.xlu0 %5825
    %5827 = vrot.lane.b32.xlu0 %v5792, 64
    %v5828 = vpop.permute.xlu0 %5827
    %5829 = vrot.lane.b32.xlu0 %v5793, 64
    %v5830 = vpop.permute.xlu0 %5829
    %5831 = vrot.lane.b32.xlu0 %v5794, 64
    %v5832 = vpop.permute.xlu0 %5831
    %5833 = vrot.lane.b32.xlu0 %v5795, 64
    %v5834 = vpop.permute.xlu0 %5833
    %5835 = vrot.lane.b32.xlu0 %v5796, 64
    %v5836 = vpop.permute.xlu0 %5835
    %5837 = vrot.lane.b32.xlu0 %v5797, 64
    %v5838 = vpop.permute.xlu0 %5837
    %5839 = vrot.lane.b32.xlu0 %v5798, 64
    %v5840 = vpop.permute.xlu0 %5839
    %5841 = vrot.lane.b32.xlu0 %v5799, 64
    %v5842 = vpop.permute.xlu0 %5841
    %5843 = vrot.lane.b32.xlu0 %v5800, 64
    %v5844 = vpop.permute.xlu0 %5843
    %5845 = vrot.lane.b32.xlu0 %v5801, 64
    %v5846 = vpop.permute.xlu0 %5845
    %5847 = vrot.lane.b32.xlu0 %v5802, 64
    %v5848 = vpop.permute.xlu0 %5847
    %5849 = vrot.lane.b32.xlu0 %v5803, 64
    %v5850 = vpop.permute.xlu0 %5849
    %5851 = vrot.lane.b32.xlu0 %v5804, 64
    %v5852 = vpop.permute.xlu0 %5851
    %5853 = vrot.lane.b32.xlu0 %v5805, 64
    %v5854 = vpop.permute.xlu0 %5853
    %5855 = vrot.lane.b32.xlu0 %v5806, 64
    %v5856 = vpop.permute.xlu0 %5855
    %5857 = vrot.lane.b32.xlu0 %v5807, 64
    %v5858 = vpop.permute.xlu0 %5857
    %5859 = vrot.lane.b32.xlu0 %v5808, 64
    %v5860 = vpop.permute.xlu0 %5859
    %5861 = vrot.lane.b32.xlu0 %v5809, 64
    %v5862 = vpop.permute.xlu0 %5861
    %5863 = vrot.lane.b32.xlu0 %v5810, 64
    %v5864 = vpop.permute.xlu0 %5863
    %5865 = vrot.lane.b32.xlu0 %v5811, 64
    %v5866 = vpop.permute.xlu0 %5865
    %5867 = vrot.lane.b32.xlu0 %v5812, 64
    %v5868 = vpop.permute.xlu0 %5867
    %5869 = vrot.lane.b32.xlu0 %v5813, 64
    %v5870 = vpop.permute.xlu0 %5869
    %5871 = vrot.lane.b32.xlu0 %v5814, 64
    %v5872 = vpop.permute.xlu0 %5871
    %5873 = vrot.lane.b32.xlu0 %v5815, 64
    %v5874 = vpop.permute.xlu0 %5873
    %5875 = vrot.lane.b32.xlu0 %v5816, 64
    %v5876 = vpop.permute.xlu0 %5875
    %5877 = vrot.lane.b32.xlu0 %v5817, 64
    %v5878 = vpop.permute.xlu0 %5877
    %5879 = vrot.lane.b32.xlu0 %v5818, 64
    %v5880 = vpop.permute.xlu0 %5879
    %5881 = vrot.lane.b32.xlu0 %v5819, 64
    %v5882 = vpop.permute.xlu0 %5881
    %5883 = vrot.lane.b32.xlu0 %v5820, 64
    %v5884 = vpop.permute.xlu0 %5883
    %5917 = vst.msk [vmem:[#allocation3 + $0x8] sm:$0xff] %vm3546, %v5822
    %5918 = vst.msk [vmem:[#allocation3 + $0x20] sm:$0xff] %vm3546, %v5824
    %5919 = vst.msk [vmem:[#allocation3 + $0x38] sm:$0xff] %vm3546, %v5826
    %5920 = vst.msk [vmem:[#allocation3 + $0x50] sm:$0xff] %vm3546, %v5828
    %5921 = vst.msk [vmem:[#allocation3 + $0x68] sm:$0xff] %vm3546, %v5830
    %5922 = vst.msk [vmem:[#allocation3 + $0x80] sm:$0xff] %vm3546, %v5832
    %5923 = vst.msk [vmem:[#allocation3 + $0x98] sm:$0xff] %vm3546, %v5834
    %5924 = vst.msk [vmem:[#allocation3 + $0xb0] sm:$0xff] %vm3546, %v5836
    %5925 = vst.msk [vmem:[#allocation3 + $0xc8] sm:$0xff] %vm3546, %v5838
    %5926 = vst.msk [vmem:[#allocation3 + $0xe0] sm:$0xff] %vm3546, %v5840
    %5927 = vst.msk [vmem:[#allocation3 + $0xf8] sm:$0xff] %vm3546, %v5842
    %5928 = vst.msk [vmem:[#allocation3 + $0x110] sm:$0xff] %vm3546, %v5844
    %5929 = vst.msk [vmem:[#allocation3 + $0x128] sm:$0xff] %vm3546, %v5846
    %5930 = vst.msk [vmem:[#allocation3 + $0x140] sm:$0xff] %vm3546, %v5848
    %5931 = vst.msk [vmem:[#allocation3 + $0x158] sm:$0xff] %vm3546, %v5850
    %5932 = vst.msk [vmem:[#allocation3 + $0x170] sm:$0xff] %vm3546, %v5852
    %5933 = vst.msk [vmem:[#allocation3 + $0x188] sm:$0xff] %vm3546, %v5854
    %5934 = vst.msk [vmem:[#allocation3 + $0x1a0] sm:$0xff] %vm3546, %v5856
    %5935 = vst.msk [vmem:[#allocation3 + $0x1b8] sm:$0xff] %vm3546, %v5858
    %5936 = vst.msk [vmem:[#allocation3 + $0x1d0] sm:$0xff] %vm3546, %v5860
    %5937 = vst.msk [vmem:[#allocation3 + $0x1e8] sm:$0xff] %vm3546, %v5862
    %5938 = vst.msk [vmem:[#allocation3 + $0x200] sm:$0xff] %vm3546, %v5864
    %5939 = vst.msk [vmem:[#allocation3 + $0x218] sm:$0xff] %vm3546, %v5866
    %5940 = vst.msk [vmem:[#allocation3 + $0x230] sm:$0xff] %vm3546, %v5868
    %5941 = vst.msk [vmem:[#allocation3 + $0x248] sm:$0xff] %vm3546, %v5870
    %5942 = vst.msk [vmem:[#allocation3 + $0x260] sm:$0xff] %vm3546, %v5872
    %5943 = vst.msk [vmem:[#allocation3 + $0x278] sm:$0xff] %vm3546, %v5874
    %5944 = vst.msk [vmem:[#allocation3 + $0x290] sm:$0xff] %vm3546, %v5876
    %5945 = vst.msk [vmem:[#allocation3 + $0x2a8] sm:$0xff] %vm3546, %v5878
    %5946 = vst.msk [vmem:[#allocation3 + $0x2c0] sm:$0xff] %vm3546, %v5880
    %5947 = vst.msk [vmem:[#allocation3 + $0x2d8] sm:$0xff] %vm3546, %v5882
    %5948 = vst.msk [vmem:[#allocation3 + $0x2f0] sm:$0xff] %vm3546, %v5884
    %v5949 = vld [vmem:[%s5596] sm:$0xf]
    %v5950 = vld [vmem:[%s5596 + $0x4] sm:$0xf]
    %v5951 = vld [vmem:[%s5596 + $0x8] sm:$0x1]
    %v5952 = vld [vmem:[%s5596 + $0xc] sm:$0xf]
    %v5953 = vld [vmem:[%s5596 + $0x10] sm:$0xf]
    %v5954 = vld [vmem:[%s5596 + $0x14] sm:$0x1]
    %v5955 = vld [vmem:[%s5596 + $0x18] sm:$0xf]
    %v5956 = vld [vmem:[%s5596 + $0x1c] sm:$0xf]
    %v5957 = vld [vmem:[%s5596 + $0x20] sm:$0x1]
    %v5958 = vld [vmem:[%s5596 + $0x24] sm:$0xf]
    %v5959 = vld [vmem:[%s5596 + $0x28] sm:$0xf]
    %v5960 = vld [vmem:[%s5596 + $0x2c] sm:$0x1]
    %v5961 = vld [vmem:[%s5596 + $0x30] sm:$0xf]
    %v5962 = vld [vmem:[%s5596 + $0x34] sm:$0xf]
    %v5963 = vld [vmem:[%s5596 + $0x38] sm:$0x1]
    %v5964 = vld [vmem:[%s5596 + $0x3c] sm:$0xf]
    %v5965 = vld [vmem:[%s5596 + $0x40] sm:$0xf]
    %v5966 = vld [vmem:[%s5596 + $0x44] sm:$0x1]
    %v5967 = vld [vmem:[%s5596 + $0x48] sm:$0xf]
    %v5968 = vld [vmem:[%s5596 + $0x4c] sm:$0xf]
    %v5969 = vld [vmem:[%s5596 + $0x50] sm:$0x1]
    %v5970 = vld [vmem:[%s5596 + $0x54] sm:$0xf]
    %v5971 = vld [vmem:[%s5596 + $0x58] sm:$0xf]
    %v5972 = vld [vmem:[%s5596 + $0x5c] sm:$0x1]
    %v5973 = vld [vmem:[%s5596 + $0x60] sm:$0xf]
    %v5974 = vld [vmem:[%s5596 + $0x64] sm:$0xf]
    %v5975 = vld [vmem:[%s5596 + $0x68] sm:$0x1]
    %v5976 = vld [vmem:[%s5596 + $0x6c] sm:$0xf]
    %v5977 = vld [vmem:[%s5596 + $0x70] sm:$0xf]
    %v5978 = vld [vmem:[%s5596 + $0x74] sm:$0x1]
    %v5979 = vld [vmem:[%s5596 + $0x78] sm:$0xf]
    %v5980 = vld [vmem:[%s5596 + $0x7c] sm:$0xf]
    %v5981 = vld [vmem:[%s5596 + $0x80] sm:$0x1]
    %v5982 = vld [vmem:[%s5596 + $0x84] sm:$0xf]
    %v5983 = vld [vmem:[%s5596 + $0x88] sm:$0xf]
    %v5984 = vld [vmem:[%s5596 + $0x8c] sm:$0x1]
    %v5985 = vld [vmem:[%s5596 + $0x90] sm:$0xf]
    %v5986 = vld [vmem:[%s5596 + $0x94] sm:$0xf]
    %v5987 = vld [vmem:[%s5596 + $0x98] sm:$0x1]
    %v5988 = vld [vmem:[%s5596 + $0x9c] sm:$0xf]
    %v5989 = vld [vmem:[%s5596 + $0xa0] sm:$0xf]
    %v5990 = vld [vmem:[%s5596 + $0xa4] sm:$0x1]
    %v5991 = vld [vmem:[%s5596 + $0xa8] sm:$0xf]
    %v5992 = vld [vmem:[%s5596 + $0xac] sm:$0xf]
    %v5993 = vld [vmem:[%s5596 + $0xb0] sm:$0x1]
    %v5994 = vld [vmem:[%s5596 + $0xb4] sm:$0xf]
    %v5995 = vld [vmem:[%s5596 + $0xb8] sm:$0xf]
    %v5996 = vld [vmem:[%s5596 + $0xbc] sm:$0x1]
    %v5997 = vld [vmem:[%s5596 + $0xd8] sm:$0xf]
    %v5998 = vld [vmem:[%s5596 + $0xdc] sm:$0xf]
    %v5999 = vld [vmem:[%s5596 + $0xe0] sm:$0x1]
    %v6000 = vld [vmem:[%s5596 + $0xe4] sm:$0xf]
    %v6001 = vld [vmem:[%s5596 + $0xe8] sm:$0xf]
    %v6002 = vld [vmem:[%s5596 + $0xec] sm:$0x1]
    %v6003 = vld [vmem:[%s5596 + $0xf0] sm:$0xf]
    %v6004 = vld [vmem:[%s5596 + $0xf4] sm:$0xf]
    %v6005 = vld [vmem:[%s5596 + $0xf8] sm:$0x1]
    %v6006 = vld [vmem:[%s5596 + $0xfc] sm:$0xf]
    %v6007 = vld [vmem:[%s5596 + $0x100] sm:$0xf]
    %v6008 = vld [vmem:[%s5596 + $0x104] sm:$0x1]
    %v6009 = vld [vmem:[%s5596 + $0x108] sm:$0xf]
    %v6010 = vld [vmem:[%s5596 + $0x10c] sm:$0xf]
    %v6011 = vld [vmem:[%s5596 + $0x110] sm:$0x1]
    %v6012 = vld [vmem:[%s5596 + $0x114] sm:$0xf]
    %v6013 = vld [vmem:[%s5596 + $0x118] sm:$0xf]
    %v6014 = vld [vmem:[%s5596 + $0x11c] sm:$0x1]
    %v6015 = vld [vmem:[%s5596 + $0x120] sm:$0xf]
    %v6016 = vld [vmem:[%s5596 + $0x124] sm:$0xf]
    %v6017 = vld [vmem:[%s5596 + $0x128] sm:$0x1]
    %v6018 = vld [vmem:[%s5596 + $0x12c] sm:$0xf]
    %v6019 = vld [vmem:[%s5596 + $0x130] sm:$0xf]
    %v6020 = vld [vmem:[%s5596 + $0x134] sm:$0x1]
    %v6021 = vld [vmem:[%s5596 + $0x138] sm:$0xf]
    %v6022 = vld [vmem:[%s5596 + $0x13c] sm:$0xf]
    %v6023 = vld [vmem:[%s5596 + $0x140] sm:$0x1]
    %v6024 = vld [vmem:[%s5596 + $0x144] sm:$0xf]
    %v6025 = vld [vmem:[%s5596 + $0x148] sm:$0xf]
    %v6026 = vld [vmem:[%s5596 + $0x14c] sm:$0x1]
    %v6027 = vld [vmem:[%s5596 + $0x150] sm:$0xf]
    %v6028 = vld [vmem:[%s5596 + $0x154] sm:$0xf]
    %v6029 = vld [vmem:[%s5596 + $0x158] sm:$0x1]
    %v6030 = vld [vmem:[%s5596 + $0x15c] sm:$0xf]
    %v6031 = vld [vmem:[%s5596 + $0x160] sm:$0xf]
    %v6032 = vld [vmem:[%s5596 + $0x164] sm:$0x1]
    %v6033 = vld [vmem:[%s5596 + $0x168] sm:$0xf]
    %v6034 = vld [vmem:[%s5596 + $0x16c] sm:$0xf]
    %v6035 = vld [vmem:[%s5596 + $0x170] sm:$0x1]
    %v6036 = vld [vmem:[%s5596 + $0x174] sm:$0xf]
    %v6037 = vld [vmem:[%s5596 + $0x178] sm:$0xf]
    %v6038 = vld [vmem:[%s5596 + $0x17c] sm:$0x1]
    %v6039 = vld [vmem:[%s5596 + $0x180] sm:$0xf]
    %v6040 = vld [vmem:[%s5596 + $0x184] sm:$0xf]
    %v6041 = vld [vmem:[%s5596 + $0x188] sm:$0x1]
    %v6042 = vld [vmem:[%s5596 + $0x18c] sm:$0xf]
    %v6043 = vld [vmem:[%s5596 + $0x190] sm:$0xf]
    %v6044 = vld [vmem:[%s5596 + $0x194] sm:$0x1]
    %v6046 = vshrl.u32 %v5949, 16
    %v6048 = vrot.slane %v6046, 4
    %v6049 = vshll.u32 %v5949, 16
    %v6051 = vrot.slane %v6049, 5
    %v6052 = vor.u32 %v6048, %v6051
    %v6053 = vrot.slane %v6052, 4
    %v6055 = vshll.u32 %v5950, 16
    %v6057 = vrot.slane %v6055, 5
    %v6058 = vsel %vm1941, %v6053, %v6057
    %v6059 = vshrl.u32 %v5950, 16
    %v6061 = vrot.slane %v6059, 4
    %v6062 = vor.u32 %v6061, %v6057
    %v6063 = vrot.slane %v6062, 4
    %v6065 = vshll.u32 %v5951, 16
    %v6067 = vrot.slane %v6065, 5
    %v6068 = vsel %vm1941, %v6063, %v6067
    %v6070 = vshrl.u32 %v5952, 16
    %v6072 = vrot.slane %v6070, 4
    %v6073 = vshll.u32 %v5952, 16
    %v6075 = vrot.slane %v6073, 5
    %v6076 = vor.u32 %v6072, %v6075
    %v6077 = vrot.slane %v6076, 4
    %v6079 = vshll.u32 %v5953, 16
    %v6081 = vrot.slane %v6079, 5
    %v6082 = vsel %vm1941, %v6077, %v6081
    %v6083 = vshrl.u32 %v5953, 16
    %v6085 = vrot.slane %v6083, 4
    %v6086 = vor.u32 %v6085, %v6081
    %v6087 = vrot.slane %v6086, 4
    %v6089 = vshll.u32 %v5954, 16
    %v6091 = vrot.slane %v6089, 5
    %v6092 = vsel %vm1941, %v6087, %v6091
    %v6094 = vshrl.u32 %v5955, 16
    %v6096 = vrot.slane %v6094, 4
    %v6097 = vshll.u32 %v5955, 16
    %v6099 = vrot.slane %v6097, 5
    %v6100 = vor.u32 %v6096, %v6099
    %v6101 = vrot.slane %v6100, 4
    %v6103 = vshll.u32 %v5956, 16
    %v6105 = vrot.slane %v6103, 5
    %v6106 = vsel %vm1941, %v6101, %v6105
    %v6107 = vshrl.u32 %v5956, 16
    %v6109 = vrot.slane %v6107, 4
    %v6110 = vor.u32 %v6109, %v6105
    %v6111 = vrot.slane %v6110, 4
    %v6113 = vshll.u32 %v5957, 16
    %v6115 = vrot.slane %v6113, 5
    %v6116 = vsel %vm1941, %v6111, %v6115
    %v6118 = vshrl.u32 %v5958, 16
    %v6120 = vrot.slane %v6118, 4
    %v6121 = vshll.u32 %v5958, 16
    %v6123 = vrot.slane %v6121, 5
    %v6124 = vor.u32 %v6120, %v6123
    %v6125 = vrot.slane %v6124, 4
    %v6127 = vshll.u32 %v5959, 16
    %v6129 = vrot.slane %v6127, 5
    %v6130 = vsel %vm1941, %v6125, %v6129
    %v6131 = vshrl.u32 %v5959, 16
    %v6133 = vrot.slane %v6131, 4
    %v6134 = vor.u32 %v6133, %v6129
    %v6135 = vrot.slane %v6134, 4
    %v6137 = vshll.u32 %v5960, 16
    %v6139 = vrot.slane %v6137, 5
    %v6140 = vsel %vm1941, %v6135, %v6139
    %v6142 = vshrl.u32 %v5961, 16
    %v6144 = vrot.slane %v6142, 4
    %v6145 = vshll.u32 %v5961, 16
    %v6147 = vrot.slane %v6145, 5
    %v6148 = vor.u32 %v6144, %v6147
    %v6149 = vrot.slane %v6148, 4
    %v6151 = vshll.u32 %v5962, 16
    %v6153 = vrot.slane %v6151, 5
    %v6154 = vsel %vm1941, %v6149, %v6153
    %v6155 = vshrl.u32 %v5962, 16
    %v6157 = vrot.slane %v6155, 4
    %v6158 = vor.u32 %v6157, %v6153
    %v6159 = vrot.slane %v6158, 4
    %v6161 = vshll.u32 %v5963, 16
    %v6163 = vrot.slane %v6161, 5
    %v6164 = vsel %vm1941, %v6159, %v6163
    %v6166 = vshrl.u32 %v5964, 16
    %v6168 = vrot.slane %v6166, 4
    %v6169 = vshll.u32 %v5964, 16
    %v6171 = vrot.slane %v6169, 5
    %v6172 = vor.u32 %v6168, %v6171
    %v6173 = vrot.slane %v6172, 4
    %v6175 = vshll.u32 %v5965, 16
    %v6177 = vrot.slane %v6175, 5
    %v6178 = vsel %vm1941, %v6173, %v6177
    %v6179 = vshrl.u32 %v5965, 16
    %v6181 = vrot.slane %v6179, 4
    %v6182 = vor.u32 %v6181, %v6177
    %v6183 = vrot.slane %v6182, 4
    %v6185 = vshll.u32 %v5966, 16
    %v6187 = vrot.slane %v6185, 5
    %v6188 = vsel %vm1941, %v6183, %v6187
    %v6190 = vshrl.u32 %v5967, 16
    %v6192 = vrot.slane %v6190, 4
    %v6193 = vshll.u32 %v5967, 16
    %v6195 = vrot.slane %v6193, 5
    %v6196 = vor.u32 %v6192, %v6195
    %v6197 = vrot.slane %v6196, 4
    %v6199 = vshll.u32 %v5968, 16
    %v6201 = vrot.slane %v6199, 5
    %v6202 = vsel %vm1941, %v6197, %v6201
    %v6203 = vshrl.u32 %v5968, 16
    %v6205 = vrot.slane %v6203, 4
    %v6206 = vor.u32 %v6205, %v6201
    %v6207 = vrot.slane %v6206, 4
    %v6209 = vshll.u32 %v5969, 16
    %v6211 = vrot.slane %v6209, 5
    %v6212 = vsel %vm1941, %v6207, %v6211
    %v6214 = vshrl.u32 %v5970, 16
    %v6216 = vrot.slane %v6214, 4
    %v6217 = vshll.u32 %v5970, 16
    %v6219 = vrot.slane %v6217, 5
    %v6220 = vor.u32 %v6216, %v6219
    %v6221 = vrot.slane %v6220, 4
    %v6223 = vshll.u32 %v5971, 16
    %v6225 = vrot.slane %v6223, 5
    %v6226 = vsel %vm1941, %v6221, %v6225
    %v6227 = vshrl.u32 %v5971, 16
    %v6229 = vrot.slane %v6227, 4
    %v6230 = vor.u32 %v6229, %v6225
    %v6231 = vrot.slane %v6230, 4
    %v6233 = vshll.u32 %v5972, 16
    %v6235 = vrot.slane %v6233, 5
    %v6236 = vsel %vm1941, %v6231, %v6235
    %v6238 = vshrl.u32 %v5973, 16
    %v6240 = vrot.slane %v6238, 4
    %v6241 = vshll.u32 %v5973, 16
    %v6243 = vrot.slane %v6241, 5
    %v6244 = vor.u32 %v6240, %v6243
    %v6245 = vrot.slane %v6244, 4
    %v6247 = vshll.u32 %v5974, 16
    %v6249 = vrot.slane %v6247, 5
    %v6250 = vsel %vm1941, %v6245, %v6249
    %v6251 = vshrl.u32 %v5974, 16
    %v6253 = vrot.slane %v6251, 4
    %v6254 = vor.u32 %v6253, %v6249
    %v6255 = vrot.slane %v6254, 4
    %v6257 = vshll.u32 %v5975, 16
    %v6259 = vrot.slane %v6257, 5
    %v6260 = vsel %vm1941, %v6255, %v6259
    %v6262 = vshrl.u32 %v5976, 16
    %v6264 = vrot.slane %v6262, 4
    %v6265 = vshll.u32 %v5976, 16
    %v6267 = vrot.slane %v6265, 5
    %v6268 = vor.u32 %v6264, %v6267
    %v6269 = vrot.slane %v6268, 4
    %v6271 = vshll.u32 %v5977, 16
    %v6273 = vrot.slane %v6271, 5
    %v6274 = vsel %vm1941, %v6269, %v6273
    %v6275 = vshrl.u32 %v5977, 16
    %v6277 = vrot.slane %v6275, 4
    %v6278 = vor.u32 %v6277, %v6273
    %v6279 = vrot.slane %v6278, 4
    %v6281 = vshll.u32 %v5978, 16
    %v6283 = vrot.slane %v6281, 5
    %v6284 = vsel %vm1941, %v6279, %v6283
    %v6286 = vshrl.u32 %v5979, 16
    %v6288 = vrot.slane %v6286, 4
    %v6289 = vshll.u32 %v5979, 16
    %v6291 = vrot.slane %v6289, 5
    %v6292 = vor.u32 %v6288, %v6291
    %v6293 = vrot.slane %v6292, 4
    %v6295 = vshll.u32 %v5980, 16
    %v6297 = vrot.slane %v6295, 5
    %v6298 = vsel %vm1941, %v6293, %v6297
    %v6299 = vshrl.u32 %v5980, 16
    %v6301 = vrot.slane %v6299, 4
    %v6302 = vor.u32 %v6301, %v6297
    %v6303 = vrot.slane %v6302, 4
    %v6305 = vshll.u32 %v5981, 16
    %v6307 = vrot.slane %v6305, 5
    %v6308 = vsel %vm1941, %v6303, %v6307
    %v6310 = vshrl.u32 %v5982, 16
    %v6312 = vrot.slane %v6310, 4
    %v6313 = vshll.u32 %v5982, 16
    %v6315 = vrot.slane %v6313, 5
    %v6316 = vor.u32 %v6312, %v6315
    %v6317 = vrot.slane %v6316, 4
    %v6319 = vshll.u32 %v5983, 16
    %v6321 = vrot.slane %v6319, 5
    %v6322 = vsel %vm1941, %v6317, %v6321
    %v6323 = vshrl.u32 %v5983, 16
    %v6325 = vrot.slane %v6323, 4
    %v6326 = vor.u32 %v6325, %v6321
    %v6327 = vrot.slane %v6326, 4
    %v6329 = vshll.u32 %v5984, 16
    %v6331 = vrot.slane %v6329, 5
    %v6332 = vsel %vm1941, %v6327, %v6331
    %v6334 = vshrl.u32 %v5985, 16
    %v6336 = vrot.slane %v6334, 4
    %v6337 = vshll.u32 %v5985, 16
    %v6339 = vrot.slane %v6337, 5
    %v6340 = vor.u32 %v6336, %v6339
    %v6341 = vrot.slane %v6340, 4
    %v6343 = vshll.u32 %v5986, 16
    %v6345 = vrot.slane %v6343, 5
    %v6346 = vsel %vm1941, %v6341, %v6345
    %v6347 = vshrl.u32 %v5986, 16
    %v6349 = vrot.slane %v6347, 4
    %v6350 = vor.u32 %v6349, %v6345
    %v6351 = vrot.slane %v6350, 4
    %v6353 = vshll.u32 %v5987, 16
    %v6355 = vrot.slane %v6353, 5
    %v6356 = vsel %vm1941, %v6351, %v6355
    %v6358 = vshrl.u32 %v5988, 16
    %v6360 = vrot.slane %v6358, 4
    %v6361 = vshll.u32 %v5988, 16
    %v6363 = vrot.slane %v6361, 5
    %v6364 = vor.u32 %v6360, %v6363
    %v6365 = vrot.slane %v6364, 4
    %v6367 = vshll.u32 %v5989, 16
    %v6369 = vrot.slane %v6367, 5
    %v6370 = vsel %vm1941, %v6365, %v6369
    %v6371 = vshrl.u32 %v5989, 16
    %v6373 = vrot.slane %v6371, 4
    %v6374 = vor.u32 %v6373, %v6369
    %v6375 = vrot.slane %v6374, 4
    %v6377 = vshll.u32 %v5990, 16
    %v6379 = vrot.slane %v6377, 5
    %v6380 = vsel %vm1941, %v6375, %v6379
    %v6382 = vshrl.u32 %v5991, 16
    %v6384 = vrot.slane %v6382, 4
    %v6385 = vshll.u32 %v5991, 16
    %v6387 = vrot.slane %v6385, 5
    %v6388 = vor.u32 %v6384, %v6387
    %v6389 = vrot.slane %v6388, 4
    %v6391 = vshll.u32 %v5992, 16
    %v6393 = vrot.slane %v6391, 5
    %v6394 = vsel %vm1941, %v6389, %v6393
    %v6395 = vshrl.u32 %v5992, 16
    %v6397 = vrot.slane %v6395, 4
    %v6398 = vor.u32 %v6397, %v6393
    %v6399 = vrot.slane %v6398, 4
    %v6401 = vshll.u32 %v5993, 16
    %v6403 = vrot.slane %v6401, 5
    %v6404 = vsel %vm1941, %v6399, %v6403
    %v6406 = vshrl.u32 %v5994, 16
    %v6408 = vrot.slane %v6406, 4
    %v6409 = vshll.u32 %v5994, 16
    %v6411 = vrot.slane %v6409, 5
    %v6412 = vor.u32 %v6408, %v6411
    %v6413 = vrot.slane %v6412, 4
    %v6415 = vshll.u32 %v5995, 16
    %v6417 = vrot.slane %v6415, 5
    %v6418 = vsel %vm1941, %v6413, %v6417
    %v6419 = vshrl.u32 %v5995, 16
    %v6421 = vrot.slane %v6419, 4
    %v6422 = vor.u32 %v6421, %v6417
    %v6423 = vrot.slane %v6422, 4
    %v6425 = vshll.u32 %v5996, 16
    %v6427 = vrot.slane %v6425, 5
    %v6428 = vsel %vm1941, %v6423, %v6427
    %v6430 = vshrl.u32 %v5997, 16
    %v6432 = vrot.slane %v6430, 4
    %v6433 = vshll.u32 %v5997, 16
    %v6435 = vrot.slane %v6433, 5
    %v6436 = vor.u32 %v6432, %v6435
    %v6437 = vrot.slane %v6436, 4
    %v6439 = vshll.u32 %v5998, 16
    %v6441 = vrot.slane %v6439, 5
    %v6442 = vsel %vm1941, %v6437, %v6441
    %v6443 = vshrl.u32 %v5998, 16
    %v6445 = vrot.slane %v6443, 4
    %v6446 = vor.u32 %v6445, %v6441
    %v6447 = vrot.slane %v6446, 4
    %v6449 = vshll.u32 %v5999, 16
    %v6451 = vrot.slane %v6449, 5
    %v6452 = vsel %vm1941, %v6447, %v6451
    %v6454 = vshrl.u32 %v6000, 16
    %v6456 = vrot.slane %v6454, 4
    %v6457 = vshll.u32 %v6000, 16
    %v6459 = vrot.slane %v6457, 5
    %v6460 = vor.u32 %v6456, %v6459
    %v6461 = vrot.slane %v6460, 4
    %v6463 = vshll.u32 %v6001, 16
    %v6465 = vrot.slane %v6463, 5
    %v6466 = vsel %vm1941, %v6461, %v6465
    %v6467 = vshrl.u32 %v6001, 16
    %v6469 = vrot.slane %v6467, 4
    %v6470 = vor.u32 %v6469, %v6465
    %v6471 = vrot.slane %v6470, 4
    %v6473 = vshll.u32 %v6002, 16
    %v6475 = vrot.slane %v6473, 5
    %v6476 = vsel %vm1941, %v6471, %v6475
    %v6478 = vshrl.u32 %v6003, 16
    %v6480 = vrot.slane %v6478, 4
    %v6481 = vshll.u32 %v6003, 16
    %v6483 = vrot.slane %v6481, 5
    %v6484 = vor.u32 %v6480, %v6483
    %v6485 = vrot.slane %v6484, 4
    %v6487 = vshll.u32 %v6004, 16
    %v6489 = vrot.slane %v6487, 5
    %v6490 = vsel %vm1941, %v6485, %v6489
    %v6491 = vshrl.u32 %v6004, 16
    %v6493 = vrot.slane %v6491, 4
    %v6494 = vor.u32 %v6493, %v6489
    %v6495 = vrot.slane %v6494, 4
    %v6497 = vshll.u32 %v6005, 16
    %v6499 = vrot.slane %v6497, 5
    %v6500 = vsel %vm1941, %v6495, %v6499
    %v6502 = vshrl.u32 %v6006, 16
    %v6504 = vrot.slane %v6502, 4
    %v6505 = vshll.u32 %v6006, 16
    %v6507 = vrot.slane %v6505, 5
    %v6508 = vor.u32 %v6504, %v6507
    %v6509 = vrot.slane %v6508, 4
    %v6511 = vshll.u32 %v6007, 16
    %v6513 = vrot.slane %v6511, 5
    %v6514 = vsel %vm1941, %v6509, %v6513
    %v6515 = vshrl.u32 %v6007, 16
    %v6517 = vrot.slane %v6515, 4
    %v6518 = vor.u32 %v6517, %v6513
    %v6519 = vrot.slane %v6518, 4
    %v6521 = vshll.u32 %v6008, 16
    %v6523 = vrot.slane %v6521, 5
    %v6524 = vsel %vm1941, %v6519, %v6523
    %v6526 = vshrl.u32 %v6009, 16
    %v6528 = vrot.slane %v6526, 4
    %v6529 = vshll.u32 %v6009, 16
    %v6531 = vrot.slane %v6529, 5
    %v6532 = vor.u32 %v6528, %v6531
    %v6533 = vrot.slane %v6532, 4
    %v6535 = vshll.u32 %v6010, 16
    %v6537 = vrot.slane %v6535, 5
    %v6538 = vsel %vm1941, %v6533, %v6537
    %v6539 = vshrl.u32 %v6010, 16
    %v6541 = vrot.slane %v6539, 4
    %v6542 = vor.u32 %v6541, %v6537
    %v6543 = vrot.slane %v6542, 4
    %v6545 = vshll.u32 %v6011, 16
    %v6547 = vrot.slane %v6545, 5
    %v6548 = vsel %vm1941, %v6543, %v6547
    %v6550 = vshrl.u32 %v6012, 16
    %v6552 = vrot.slane %v6550, 4
    %v6553 = vshll.u32 %v6012, 16
    %v6555 = vrot.slane %v6553, 5
    %v6556 = vor.u32 %v6552, %v6555
    %v6557 = vrot.slane %v6556, 4
    %v6559 = vshll.u32 %v6013, 16
    %v6561 = vrot.slane %v6559, 5
    %v6562 = vsel %vm1941, %v6557, %v6561
    %v6563 = vshrl.u32 %v6013, 16
    %v6565 = vrot.slane %v6563, 4
    %v6566 = vor.u32 %v6565, %v6561
    %v6567 = vrot.slane %v6566, 4
    %v6569 = vshll.u32 %v6014, 16
    %v6571 = vrot.slane %v6569, 5
    %v6572 = vsel %vm1941, %v6567, %v6571
    %v6574 = vshrl.u32 %v6015, 16
    %v6576 = vrot.slane %v6574, 4
    %v6577 = vshll.u32 %v6015, 16
    %v6579 = vrot.slane %v6577, 5
    %v6580 = vor.u32 %v6576, %v6579
    %v6581 = vrot.slane %v6580, 4
    %v6583 = vshll.u32 %v6016, 16
    %v6585 = vrot.slane %v6583, 5
    %v6586 = vsel %vm1941, %v6581, %v6585
    %v6587 = vshrl.u32 %v6016, 16
    %v6589 = vrot.slane %v6587, 4
    %v6590 = vor.u32 %v6589, %v6585
    %v6591 = vrot.slane %v6590, 4
    %v6593 = vshll.u32 %v6017, 16
    %v6595 = vrot.slane %v6593, 5
    %v6596 = vsel %vm1941, %v6591, %v6595
    %v6598 = vshrl.u32 %v6018, 16
    %v6600 = vrot.slane %v6598, 4
    %v6601 = vshll.u32 %v6018, 16
    %v6603 = vrot.slane %v6601, 5
    %v6604 = vor.u32 %v6600, %v6603
    %v6605 = vrot.slane %v6604, 4
    %v6607 = vshll.u32 %v6019, 16
    %v6609 = vrot.slane %v6607, 5
    %v6610 = vsel %vm1941, %v6605, %v6609
    %v6611 = vshrl.u32 %v6019, 16
    %v6613 = vrot.slane %v6611, 4
    %v6614 = vor.u32 %v6613, %v6609
    %v6615 = vrot.slane %v6614, 4
    %v6617 = vshll.u32 %v6020, 16
    %v6619 = vrot.slane %v6617, 5
    %v6620 = vsel %vm1941, %v6615, %v6619
    %v6622 = vshrl.u32 %v6021, 16
    %v6624 = vrot.slane %v6622, 4
    %v6625 = vshll.u32 %v6021, 16
    %v6627 = vrot.slane %v6625, 5
    %v6628 = vor.u32 %v6624, %v6627
    %v6629 = vrot.slane %v6628, 4
    %v6631 = vshll.u32 %v6022, 16
    %v6633 = vrot.slane %v6631, 5
    %v6634 = vsel %vm1941, %v6629, %v6633
    %v6635 = vshrl.u32 %v6022, 16
    %v6637 = vrot.slane %v6635, 4
    %v6638 = vor.u32 %v6637, %v6633
    %v6639 = vrot.slane %v6638, 4
    %v6641 = vshll.u32 %v6023, 16
    %v6643 = vrot.slane %v6641, 5
    %v6644 = vsel %vm1941, %v6639, %v6643
    %v6646 = vshrl.u32 %v6024, 16
    %v6648 = vrot.slane %v6646, 4
    %v6649 = vshll.u32 %v6024, 16
    %v6651 = vrot.slane %v6649, 5
    %v6652 = vor.u32 %v6648, %v6651
    %v6653 = vrot.slane %v6652, 4
    %v6655 = vshll.u32 %v6025, 16
    %v6657 = vrot.slane %v6655, 5
    %v6658 = vsel %vm1941, %v6653, %v6657
    %v6659 = vshrl.u32 %v6025, 16
    %v6661 = vrot.slane %v6659, 4
    %v6662 = vor.u32 %v6661, %v6657
    %v6663 = vrot.slane %v6662, 4
    %v6665 = vshll.u32 %v6026, 16
    %v6667 = vrot.slane %v6665, 5
    %v6668 = vsel %vm1941, %v6663, %v6667
    %v6670 = vshrl.u32 %v6027, 16
    %v6672 = vrot.slane %v6670, 4
    %v6673 = vshll.u32 %v6027, 16
    %v6675 = vrot.slane %v6673, 5
    %v6676 = vor.u32 %v6672, %v6675
    %v6677 = vrot.slane %v6676, 4
    %v6679 = vshll.u32 %v6028, 16
    %v6681 = vrot.slane %v6679, 5
    %v6682 = vsel %vm1941, %v6677, %v6681
    %v6683 = vshrl.u32 %v6028, 16
    %v6685 = vrot.slane %v6683, 4
    %v6686 = vor.u32 %v6685, %v6681
    %v6687 = vrot.slane %v6686, 4
    %v6689 = vshll.u32 %v6029, 16
    %v6691 = vrot.slane %v6689, 5
    %v6692 = vsel %vm1941, %v6687, %v6691
    %v6694 = vshrl.u32 %v6030, 16
    %v6696 = vrot.slane %v6694, 4
    %v6697 = vshll.u32 %v6030, 16
    %v6699 = vrot.slane %v6697, 5
    %v6700 = vor.u32 %v6696, %v6699
    %v6701 = vrot.slane %v6700, 4
    %v6703 = vshll.u32 %v6031, 16
    %v6705 = vrot.slane %v6703, 5
    %v6706 = vsel %vm1941, %v6701, %v6705
    %v6707 = vshrl.u32 %v6031, 16
    %v6709 = vrot.slane %v6707, 4
    %v6710 = vor.u32 %v6709, %v6705
    %v6711 = vrot.slane %v6710, 4
    %v6713 = vshll.u32 %v6032, 16
    %v6715 = vrot.slane %v6713, 5
    %v6716 = vsel %vm1941, %v6711, %v6715
    %v6718 = vshrl.u32 %v6033, 16
    %v6720 = vrot.slane %v6718, 4
    %v6721 = vshll.u32 %v6033, 16
    %v6723 = vrot.slane %v6721, 5
    %v6724 = vor.u32 %v6720, %v6723
    %v6725 = vrot.slane %v6724, 4
    %v6727 = vshll.u32 %v6034, 16
    %v6729 = vrot.slane %v6727, 5
    %v6730 = vsel %vm1941, %v6725, %v6729
    %v6731 = vshrl.u32 %v6034, 16
    %v6733 = vrot.slane %v6731, 4
    %v6734 = vor.u32 %v6733, %v6729
    %v6735 = vrot.slane %v6734, 4
    %v6737 = vshll.u32 %v6035, 16
    %v6739 = vrot.slane %v6737, 5
    %v6740 = vsel %vm1941, %v6735, %v6739
    %v6742 = vshrl.u32 %v6036, 16
    %v6744 = vrot.slane %v6742, 4
    %v6745 = vshll.u32 %v6036, 16
    %v6747 = vrot.slane %v6745, 5
    %v6748 = vor.u32 %v6744, %v6747
    %v6749 = vrot.slane %v6748, 4
    %v6751 = vshll.u32 %v6037, 16
    %v6753 = vrot.slane %v6751, 5
    %v6754 = vsel %vm1941, %v6749, %v6753
    %v6755 = vshrl.u32 %v6037, 16
    %v6757 = vrot.slane %v6755, 4
    %v6758 = vor.u32 %v6757, %v6753
    %v6759 = vrot.slane %v6758, 4
    %v6761 = vshll.u32 %v6038, 16
    %v6763 = vrot.slane %v6761, 5
    %v6764 = vsel %vm1941, %v6759, %v6763
    %v6766 = vshrl.u32 %v6039, 16
    %v6768 = vrot.slane %v6766, 4
    %v6769 = vshll.u32 %v6039, 16
    %v6771 = vrot.slane %v6769, 5
    %v6772 = vor.u32 %v6768, %v6771
    %v6773 = vrot.slane %v6772, 4
    %v6775 = vshll.u32 %v6040, 16
    %v6777 = vrot.slane %v6775, 5
    %v6778 = vsel %vm1941, %v6773, %v6777
    %v6779 = vshrl.u32 %v6040, 16
    %v6781 = vrot.slane %v6779, 4
    %v6782 = vor.u32 %v6781, %v6777
    %v6783 = vrot.slane %v6782, 4
    %v6785 = vshll.u32 %v6041, 16
    %v6787 = vrot.slane %v6785, 5
    %v6788 = vsel %vm1941, %v6783, %v6787
    %v6790 = vshrl.u32 %v6042, 16
    %v6792 = vrot.slane %v6790, 4
    %v6793 = vshll.u32 %v6042, 16
    %v6795 = vrot.slane %v6793, 5
    %v6796 = vor.u32 %v6792, %v6795
    %v6797 = vrot.slane %v6796, 4
    %v6799 = vshll.u32 %v6043, 16
    %v6801 = vrot.slane %v6799, 5
    %v6802 = vsel %vm1941, %v6797, %v6801
    %v6803 = vshrl.u32 %v6043, 16
    %v6805 = vrot.slane %v6803, 4
    %v6806 = vor.u32 %v6805, %v6801
    %v6807 = vrot.slane %v6806, 4
    %v6809 = vshll.u32 %v6044, 16
    %v6811 = vrot.slane %v6809, 5
    %v6812 = vsel %vm1941, %v6807, %v6811
    %v6813 = vunpack.c.l.b16 %v6058
    %v6814 = vunpack.c.l.b16 %v6068
    %v6815 = vunpack.c.l.b16 %v6082
    %v6816 = vunpack.c.l.b16 %v6092
    %v6817 = vunpack.c.l.b16 %v6106
    %v6818 = vunpack.c.l.b16 %v6116
    %v6819 = vunpack.c.l.b16 %v6130
    %v6820 = vunpack.c.l.b16 %v6140
    %v6821 = vunpack.c.l.b16 %v6154
    %v6822 = vunpack.c.l.b16 %v6164
    %v6823 = vunpack.c.l.b16 %v6178
    %v6824 = vunpack.c.l.b16 %v6188
    %v6825 = vunpack.c.l.b16 %v6202
    %v6826 = vunpack.c.l.b16 %v6212
    %v6827 = vunpack.c.l.b16 %v6226
    %v6828 = vunpack.c.l.b16 %v6236
    %v6829 = vunpack.c.l.b16 %v6250
    %v6830 = vunpack.c.l.b16 %v6260
    %v6831 = vunpack.c.l.b16 %v6274
    %v6832 = vunpack.c.l.b16 %v6284
    %v6833 = vunpack.c.l.b16 %v6298
    %v6834 = vunpack.c.l.b16 %v6308
    %v6835 = vunpack.c.l.b16 %v6322
    %v6836 = vunpack.c.l.b16 %v6332
    %v6837 = vunpack.c.l.b16 %v6346
    %v6838 = vunpack.c.l.b16 %v6356
    %v6839 = vunpack.c.l.b16 %v6370
    %v6840 = vunpack.c.l.b16 %v6380
    %v6841 = vunpack.c.l.b16 %v6394
    %v6842 = vunpack.c.l.b16 %v6404
    %v6843 = vunpack.c.l.b16 %v6418
    %v6844 = vunpack.c.l.b16 %v6428
    %v6845 = vunpack.c.l.b16 %v6442
    %v6846 = vunpack.c.l.b16 %v6452
    %v6847 = vunpack.c.l.b16 %v6466
    %v6848 = vunpack.c.l.b16 %v6476
    %v6849 = vunpack.c.l.b16 %v6490
    %v6850 = vunpack.c.l.b16 %v6500
    %v6851 = vunpack.c.l.b16 %v6514
    %v6852 = vunpack.c.l.b16 %v6524
    %v6853 = vunpack.c.l.b16 %v6538
    %v6854 = vunpack.c.l.b16 %v6548
    %v6855 = vunpack.c.l.b16 %v6562
    %v6856 = vunpack.c.l.b16 %v6572
    %v6857 = vunpack.c.l.b16 %v6586
    %v6858 = vunpack.c.l.b16 %v6596
    %v6859 = vunpack.c.l.b16 %v6610
    %v6860 = vunpack.c.l.b16 %v6620
    %v6861 = vunpack.c.l.b16 %v6634
    %v6862 = vunpack.c.l.b16 %v6644
    %v6863 = vunpack.c.l.b16 %v6658
    %v6864 = vunpack.c.l.b16 %v6668
    %v6865 = vunpack.c.l.b16 %v6682
    %v6866 = vunpack.c.l.b16 %v6692
    %v6867 = vunpack.c.l.b16 %v6706
    %v6868 = vunpack.c.l.b16 %v6716
    %v6869 = vunpack.c.l.b16 %v6730
    %v6870 = vunpack.c.l.b16 %v6740
    %v6871 = vunpack.c.l.b16 %v6754
    %v6872 = vunpack.c.l.b16 %v6764
    %v6873 = vunpack.c.l.b16 %v6778
    %v6874 = vunpack.c.l.b16 %v6788
    %v6875 = vunpack.c.l.b16 %v6802
    %v6876 = vunpack.c.l.b16 %v6812
    %v6877 = vpack.c.b16 %v6814, %v6813
    %v6878 = vpack.c.b16 %v6816, %v6815
    %v6879 = vpack.c.b16 %v6818, %v6817
    %v6880 = vpack.c.b16 %v6820, %v6819
    %v6881 = vpack.c.b16 %v6822, %v6821
    %v6882 = vpack.c.b16 %v6824, %v6823
    %v6883 = vpack.c.b16 %v6826, %v6825
    %v6884 = vpack.c.b16 %v6828, %v6827
    %v6885 = vpack.c.b16 %v6830, %v6829
    %v6886 = vpack.c.b16 %v6832, %v6831
    %v6887 = vpack.c.b16 %v6834, %v6833
    %v6888 = vpack.c.b16 %v6836, %v6835
    %v6889 = vpack.c.b16 %v6838, %v6837
    %v6890 = vpack.c.b16 %v6840, %v6839
    %v6891 = vpack.c.b16 %v6842, %v6841
    %v6892 = vpack.c.b16 %v6844, %v6843
    %v6893 = vpack.c.b16 %v6846, %v6845
    %v6894 = vpack.c.b16 %v6848, %v6847
    %v6895 = vpack.c.b16 %v6850, %v6849
    %v6896 = vpack.c.b16 %v6852, %v6851
    %v6897 = vpack.c.b16 %v6854, %v6853
    %v6898 = vpack.c.b16 %v6856, %v6855
    %v6899 = vpack.c.b16 %v6858, %v6857
    %v6900 = vpack.c.b16 %v6860, %v6859
    %v6901 = vpack.c.b16 %v6862, %v6861
    %v6902 = vpack.c.b16 %v6864, %v6863
    %v6903 = vpack.c.b16 %v6866, %v6865
    %v6904 = vpack.c.b16 %v6868, %v6867
    %v6905 = vpack.c.b16 %v6870, %v6869
    %v6906 = vpack.c.b16 %v6872, %v6871
    %v6907 = vpack.c.b16 %v6874, %v6873
    %v6908 = vpack.c.b16 %v6876, %v6875
    %6909 = vrot.lane.b32.xlu0 %v6877, 96
    %v6910 = vpop.permute.xlu0 %6909
    %6911 = vrot.lane.b32.xlu0 %v6878, 96
    %v6912 = vpop.permute.xlu0 %6911
    %6913 = vrot.lane.b32.xlu0 %v6879, 96
    %v6914 = vpop.permute.xlu0 %6913
    %6915 = vrot.lane.b32.xlu0 %v6880, 96
    %v6916 = vpop.permute.xlu0 %6915
    %6917 = vrot.lane.b32.xlu0 %v6881, 96
    %v6918 = vpop.permute.xlu0 %6917
    %6919 = vrot.lane.b32.xlu0 %v6882, 96
    %v6920 = vpop.permute.xlu0 %6919
    %6921 = vrot.lane.b32.xlu0 %v6883, 96
    %v6922 = vpop.permute.xlu0 %6921
    %6923 = vrot.lane.b32.xlu0 %v6884, 96
    %v6924 = vpop.permute.xlu0 %6923
    %6925 = vrot.lane.b32.xlu0 %v6885, 96
    %v6926 = vpop.permute.xlu0 %6925
    %6927 = vrot.lane.b32.xlu0 %v6886, 96
    %v6928 = vpop.permute.xlu0 %6927
    %6929 = vrot.lane.b32.xlu0 %v6887, 96
    %v6930 = vpop.permute.xlu0 %6929
    %6931 = vrot.lane.b32.xlu0 %v6888, 96
    %v6932 = vpop.permute.xlu0 %6931
    %6933 = vrot.lane.b32.xlu0 %v6889, 96
    %v6934 = vpop.permute.xlu0 %6933
    %6935 = vrot.lane.b32.xlu0 %v6890, 96
    %v6936 = vpop.permute.xlu0 %6935
    %6937 = vrot.lane.b32.xlu0 %v6891, 96
    %v6938 = vpop.permute.xlu0 %6937
    %6939 = vrot.lane.b32.xlu0 %v6892, 96
    %v6940 = vpop.permute.xlu0 %6939
    %6941 = vrot.lane.b32.xlu0 %v6893, 96
    %v6942 = vpop.permute.xlu0 %6941
    %6943 = vrot.lane.b32.xlu0 %v6894, 96
    %v6944 = vpop.permute.xlu0 %6943
    %6945 = vrot.lane.b32.xlu0 %v6895, 96
    %v6946 = vpop.permute.xlu0 %6945
    %6947 = vrot.lane.b32.xlu0 %v6896, 96
    %v6948 = vpop.permute.xlu0 %6947
    %6949 = vrot.lane.b32.xlu0 %v6897, 96
    %v6950 = vpop.permute.xlu0 %6949
    %6951 = vrot.lane.b32.xlu0 %v6898, 96
    %v6952 = vpop.permute.xlu0 %6951
    %6953 = vrot.lane.b32.xlu0 %v6899, 96
    %v6954 = vpop.permute.xlu0 %6953
    %6955 = vrot.lane.b32.xlu0 %v6900, 96
    %v6956 = vpop.permute.xlu0 %6955
    %6957 = vrot.lane.b32.xlu0 %v6901, 96
    %v6958 = vpop.permute.xlu0 %6957
    %6959 = vrot.lane.b32.xlu0 %v6902, 96
    %v6960 = vpop.permute.xlu0 %6959
    %6961 = vrot.lane.b32.xlu0 %v6903, 96
    %v6962 = vpop.permute.xlu0 %6961
    %6963 = vrot.lane.b32.xlu0 %v6904, 96
    %v6964 = vpop.permute.xlu0 %6963
    %6965 = vrot.lane.b32.xlu0 %v6905, 96
    %v6966 = vpop.permute.xlu0 %6965
    %6967 = vrot.lane.b32.xlu0 %v6906, 96
    %v6968 = vpop.permute.xlu0 %6967
    %6969 = vrot.lane.b32.xlu0 %v6907, 96
    %v6970 = vpop.permute.xlu0 %6969
    %6971 = vrot.lane.b32.xlu0 %v6908, 96
    %v6972 = vpop.permute.xlu0 %6971
    %7005 = vst.msk [vmem:[#allocation3 + $0x8] sm:$0xff] %vm3899, %v6910
    %7006 = vst.msk [vmem:[#allocation3 + $0x20] sm:$0xff] %vm3899, %v6912
    %7007 = vst.msk [vmem:[#allocation3 + $0x38] sm:$0xff] %vm3899, %v6914
    %7008 = vst.msk [vmem:[#allocation3 + $0x50] sm:$0xff] %vm3899, %v6916
    %7009 = vst.msk [vmem:[#allocation3 + $0x68] sm:$0xff] %vm3899, %v6918
    %7010 = vst.msk [vmem:[#allocation3 + $0x80] sm:$0xff] %vm3899, %v6920
    %7011 = vst.msk [vmem:[#allocation3 + $0x98] sm:$0xff] %vm3899, %v6922
    %7012 = vst.msk [vmem:[#allocation3 + $0xb0] sm:$0xff] %vm3899, %v6924
    %7013 = vst.msk [vmem:[#allocation3 + $0xc8] sm:$0xff] %vm3899, %v6926
    %7014 = vst.msk [vmem:[#allocation3 + $0xe0] sm:$0xff] %vm3899, %v6928
    %7015 = vst.msk [vmem:[#allocation3 + $0xf8] sm:$0xff] %vm3899, %v6930
    %7016 = vst.msk [vmem:[#allocation3 + $0x110] sm:$0xff] %vm3899, %v6932
    %7017 = vst.msk [vmem:[#allocation3 + $0x128] sm:$0xff] %vm3899, %v6934
    %7018 = vst.msk [vmem:[#allocation3 + $0x140] sm:$0xff] %vm3899, %v6936
    %7019 = vst.msk [vmem:[#allocation3 + $0x158] sm:$0xff] %vm3899, %v6938
    %7020 = vst.msk [vmem:[#allocation3 + $0x170] sm:$0xff] %vm3899, %v6940
    %7021 = vst.msk [vmem:[#allocation3 + $0x188] sm:$0xff] %vm3899, %v6942
    %7022 = vst.msk [vmem:[#allocation3 + $0x1a0] sm:$0xff] %vm3899, %v6944
    %7023 = vst.msk [vmem:[#allocation3 + $0x1b8] sm:$0xff] %vm3899, %v6946
    %7024 = vst.msk [vmem:[#allocation3 + $0x1d0] sm:$0xff] %vm3899, %v6948
    %7025 = vst.msk [vmem:[#allocation3 + $0x1e8] sm:$0xff] %vm3899, %v6950
    %7026 = vst.msk [vmem:[#allocation3 + $0x200] sm:$0xff] %vm3899, %v6952
    %7027 = vst.msk [vmem:[#allocation3 + $0x218] sm:$0xff] %vm3899, %v6954
    %7028 = vst.msk [vmem:[#allocation3 + $0x230] sm:$0xff] %vm3899, %v6956
    %7029 = vst.msk [vmem:[#allocation3 + $0x248] sm:$0xff] %vm3899, %v6958
    %7030 = vst.msk [vmem:[#allocation3 + $0x260] sm:$0xff] %vm3899, %v6960
    %7031 = vst.msk [vmem:[#allocation3 + $0x278] sm:$0xff] %vm3899, %v6962
    %7032 = vst.msk [vmem:[#allocation3 + $0x290] sm:$0xff] %vm3899, %v6964
    %7033 = vst.msk [vmem:[#allocation3 + $0x2a8] sm:$0xff] %vm3899, %v6966
    %7034 = vst.msk [vmem:[#allocation3 + $0x2c0] sm:$0xff] %vm3899, %v6968
    %7035 = vst.msk [vmem:[#allocation3 + $0x2d8] sm:$0xff] %vm3899, %v6970
    %7036 = vst.msk [vmem:[#allocation3 + $0x2f0] sm:$0xff] %vm3899, %v6972
    %v7037 = vld [vmem:[%s5596] sm:$0xe]
    %v7038 = vld [vmem:[%s5596 + $0x4] sm:$0xf]
    %v7039 = vld [vmem:[%s5596 + $0x8] sm:$0x1]
    %v7040 = vld [vmem:[%s5596 + $0xc] sm:$0xe]
    %v7041 = vld [vmem:[%s5596 + $0x10] sm:$0xf]
    %v7042 = vld [vmem:[%s5596 + $0x14] sm:$0x1]
    %v7043 = vld [vmem:[%s5596 + $0x18] sm:$0xe]
    %v7044 = vld [vmem:[%s5596 + $0x1c] sm:$0xf]
    %v7045 = vld [vmem:[%s5596 + $0x20] sm:$0x1]
    %v7046 = vld [vmem:[%s5596 + $0x24] sm:$0xe]
    %v7047 = vld [vmem:[%s5596 + $0x28] sm:$0xf]
    %v7048 = vld [vmem:[%s5596 + $0x2c] sm:$0x1]
    %v7049 = vld [vmem:[%s5596 + $0x30] sm:$0xe]
    %v7050 = vld [vmem:[%s5596 + $0x34] sm:$0xf]
    %v7051 = vld [vmem:[%s5596 + $0x38] sm:$0x1]
    %v7052 = vld [vmem:[%s5596 + $0x3c] sm:$0xe]
    %v7053 = vld [vmem:[%s5596 + $0x40] sm:$0xf]
    %v7054 = vld [vmem:[%s5596 + $0x44] sm:$0x1]
    %v7055 = vld [vmem:[%s5596 + $0x48] sm:$0xe]
    %v7056 = vld [vmem:[%s5596 + $0x4c] sm:$0xf]
    %v7057 = vld [vmem:[%s5596 + $0x50] sm:$0x1]
    %v7058 = vld [vmem:[%s5596 + $0x54] sm:$0xe]
    %v7059 = vld [vmem:[%s5596 + $0x58] sm:$0xf]
    %v7060 = vld [vmem:[%s5596 + $0x5c] sm:$0x1]
    %v7061 = vld [vmem:[%s5596 + $0x60] sm:$0xe]
    %v7062 = vld [vmem:[%s5596 + $0x64] sm:$0xf]
    %v7063 = vld [vmem:[%s5596 + $0x68] sm:$0x1]
    %v7064 = vld [vmem:[%s5596 + $0x6c] sm:$0xe]
    %v7065 = vld [vmem:[%s5596 + $0x70] sm:$0xf]
    %v7066 = vld [vmem:[%s5596 + $0x74] sm:$0x1]
    %v7067 = vld [vmem:[%s5596 + $0x78] sm:$0xe]
    %v7068 = vld [vmem:[%s5596 + $0x7c] sm:$0xf]
    %v7069 = vld [vmem:[%s5596 + $0x80] sm:$0x1]
    %v7070 = vld [vmem:[%s5596 + $0x84] sm:$0xe]
    %v7071 = vld [vmem:[%s5596 + $0x88] sm:$0xf]
    %v7072 = vld [vmem:[%s5596 + $0x8c] sm:$0x1]
    %v7073 = vld [vmem:[%s5596 + $0x90] sm:$0xe]
    %v7074 = vld [vmem:[%s5596 + $0x94] sm:$0xf]
    %v7075 = vld [vmem:[%s5596 + $0x98] sm:$0x1]
    %v7076 = vld [vmem:[%s5596 + $0x9c] sm:$0xe]
    %v7077 = vld [vmem:[%s5596 + $0xa0] sm:$0xf]
    %v7078 = vld [vmem:[%s5596 + $0xa4] sm:$0x1]
    %v7079 = vld [vmem:[%s5596 + $0xa8] sm:$0xe]
    %v7080 = vld [vmem:[%s5596 + $0xac] sm:$0xf]
    %v7081 = vld [vmem:[%s5596 + $0xb0] sm:$0x1]
    %v7082 = vld [vmem:[%s5596 + $0xb4] sm:$0xe]
    %v7083 = vld [vmem:[%s5596 + $0xb8] sm:$0xf]
    %v7084 = vld [vmem:[%s5596 + $0xbc] sm:$0x1]
    %v7085 = vld [vmem:[%s5596 + $0xd8] sm:$0xe]
    %v7086 = vld [vmem:[%s5596 + $0xdc] sm:$0xf]
    %v7087 = vld [vmem:[%s5596 + $0xe0] sm:$0x1]
    %v7088 = vld [vmem:[%s5596 + $0xe4] sm:$0xe]
    %v7089 = vld [vmem:[%s5596 + $0xe8] sm:$0xf]
    %v7090 = vld [vmem:[%s5596 + $0xec] sm:$0x1]
    %v7091 = vld [vmem:[%s5596 + $0xf0] sm:$0xe]
    %v7092 = vld [vmem:[%s5596 + $0xf4] sm:$0xf]
    %v7093 = vld [vmem:[%s5596 + $0xf8] sm:$0x1]
    %v7094 = vld [vmem:[%s5596 + $0xfc] sm:$0xe]
    %v7095 = vld [vmem:[%s5596 + $0x100] sm:$0xf]
    %v7096 = vld [vmem:[%s5596 + $0x104] sm:$0x1]
    %v7097 = vld [vmem:[%s5596 + $0x108] sm:$0xe]
    %v7098 = vld [vmem:[%s5596 + $0x10c] sm:$0xf]
    %v7099 = vld [vmem:[%s5596 + $0x110] sm:$0x1]
    %v7100 = vld [vmem:[%s5596 + $0x114] sm:$0xe]
    %v7101 = vld [vmem:[%s5596 + $0x118] sm:$0xf]
    %v7102 = vld [vmem:[%s5596 + $0x11c] sm:$0x1]
    %v7103 = vld [vmem:[%s5596 + $0x120] sm:$0xe]
    %v7104 = vld [vmem:[%s5596 + $0x124] sm:$0xf]
    %v7105 = vld [vmem:[%s5596 + $0x128] sm:$0x1]
    %v7106 = vld [vmem:[%s5596 + $0x12c] sm:$0xe]
    %v7107 = vld [vmem:[%s5596 + $0x130] sm:$0xf]
    %v7108 = vld [vmem:[%s5596 + $0x134] sm:$0x1]
    %v7109 = vld [vmem:[%s5596 + $0x138] sm:$0xe]
    %v7110 = vld [vmem:[%s5596 + $0x13c] sm:$0xf]
    %v7111 = vld [vmem:[%s5596 + $0x140] sm:$0x1]
    %v7112 = vld [vmem:[%s5596 + $0x144] sm:$0xe]
    %v7113 = vld [vmem:[%s5596 + $0x148] sm:$0xf]
    %v7114 = vld [vmem:[%s5596 + $0x14c] sm:$0x1]
    %v7115 = vld [vmem:[%s5596 + $0x150] sm:$0xe]
    %v7116 = vld [vmem:[%s5596 + $0x154] sm:$0xf]
    %v7117 = vld [vmem:[%s5596 + $0x158] sm:$0x1]
    %v7118 = vld [vmem:[%s5596 + $0x15c] sm:$0xe]
    %v7119 = vld [vmem:[%s5596 + $0x160] sm:$0xf]
    %v7120 = vld [vmem:[%s5596 + $0x164] sm:$0x1]
    %v7121 = vld [vmem:[%s5596 + $0x168] sm:$0xe]
    %v7122 = vld [vmem:[%s5596 + $0x16c] sm:$0xf]
    %v7123 = vld [vmem:[%s5596 + $0x170] sm:$0x1]
    %v7124 = vld [vmem:[%s5596 + $0x174] sm:$0xe]
    %v7125 = vld [vmem:[%s5596 + $0x178] sm:$0xf]
    %v7126 = vld [vmem:[%s5596 + $0x17c] sm:$0x1]
    %v7127 = vld [vmem:[%s5596 + $0x180] sm:$0xe]
    %v7128 = vld [vmem:[%s5596 + $0x184] sm:$0xf]
    %v7129 = vld [vmem:[%s5596 + $0x188] sm:$0x1]
    %v7130 = vld [vmem:[%s5596 + $0x18c] sm:$0xe]
    %v7131 = vld [vmem:[%s5596 + $0x190] sm:$0xf]
    %v7132 = vld [vmem:[%s5596 + $0x194] sm:$0x1]
    %v7229 = vrot.slane %v7037, 5
    %v7230 = vrot.slane %v7229, 4
    %v7231 = vrot.slane %v7038, 5
    %v7232 = vsel %vm3129, %v7230, %v7231
    %v7233 = vrot.slane %v7231, 4
    %v7234 = vrot.slane %v7039, 5
    %v7235 = vsel %vm3129, %v7233, %v7234
    %v7236 = vrot.slane %v7040, 5
    %v7237 = vrot.slane %v7236, 4
    %v7238 = vrot.slane %v7041, 5
    %v7239 = vsel %vm3129, %v7237, %v7238
    %v7240 = vrot.slane %v7238, 4
    %v7241 = vrot.slane %v7042, 5
    %v7242 = vsel %vm3129, %v7240, %v7241
    %v7243 = vrot.slane %v7043, 5
    %v7244 = vrot.slane %v7243, 4
    %v7245 = vrot.slane %v7044, 5
    %v7246 = vsel %vm3129, %v7244, %v7245
    %v7247 = vrot.slane %v7245, 4
    %v7248 = vrot.slane %v7045, 5
    %v7249 = vsel %vm3129, %v7247, %v7248
    %v7250 = vrot.slane %v7046, 5
    %v7251 = vrot.slane %v7250, 4
    %v7252 = vrot.slane %v7047, 5
    %v7253 = vsel %vm3129, %v7251, %v7252
    %v7254 = vrot.slane %v7252, 4
    %v7255 = vrot.slane %v7048, 5
    %v7256 = vsel %vm3129, %v7254, %v7255
    %v7257 = vrot.slane %v7049, 5
    %v7258 = vrot.slane %v7257, 4
    %v7259 = vrot.slane %v7050, 5
    %v7260 = vsel %vm3129, %v7258, %v7259
    %v7261 = vrot.slane %v7259, 4
    %v7262 = vrot.slane %v7051, 5
    %v7263 = vsel %vm3129, %v7261, %v7262
    %v7264 = vrot.slane %v7052, 5
    %v7265 = vrot.slane %v7264, 4
    %v7266 = vrot.slane %v7053, 5
    %v7267 = vsel %vm3129, %v7265, %v7266
    %v7268 = vrot.slane %v7266, 4
    %v7269 = vrot.slane %v7054, 5
    %v7270 = vsel %vm3129, %v7268, %v7269
    %v7271 = vrot.slane %v7055, 5
    %v7272 = vrot.slane %v7271, 4
    %v7273 = vrot.slane %v7056, 5
    %v7274 = vsel %vm3129, %v7272, %v7273
    %v7275 = vrot.slane %v7273, 4
    %v7276 = vrot.slane %v7057, 5
    %v7277 = vsel %vm3129, %v7275, %v7276
    %v7278 = vrot.slane %v7058, 5
    %v7279 = vrot.slane %v7278, 4
    %v7280 = vrot.slane %v7059, 5
    %v7281 = vsel %vm3129, %v7279, %v7280
    %v7282 = vrot.slane %v7280, 4
    %v7283 = vrot.slane %v7060, 5
    %v7284 = vsel %vm3129, %v7282, %v7283
    %v7285 = vrot.slane %v7061, 5
    %v7286 = vrot.slane %v7285, 4
    %v7287 = vrot.slane %v7062, 5
    %v7288 = vsel %vm3129, %v7286, %v7287
    %v7289 = vrot.slane %v7287, 4
    %v7290 = vrot.slane %v7063, 5
    %v7291 = vsel %vm3129, %v7289, %v7290
    %v7292 = vrot.slane %v7064, 5
    %v7293 = vrot.slane %v7292, 4
    %v7294 = vrot.slane %v7065, 5
    %v7295 = vsel %vm3129, %v7293, %v7294
    %v7296 = vrot.slane %v7294, 4
    %v7297 = vrot.slane %v7066, 5
    %v7298 = vsel %vm3129, %v7296, %v7297
    %v7299 = vrot.slane %v7067, 5
    %v7300 = vrot.slane %v7299, 4
    %v7301 = vrot.slane %v7068, 5
    %v7302 = vsel %vm3129, %v7300, %v7301
    %v7303 = vrot.slane %v7301, 4
    %v7304 = vrot.slane %v7069, 5
    %v7305 = vsel %vm3129, %v7303, %v7304
    %v7306 = vrot.slane %v7070, 5
    %v7307 = vrot.slane %v7306, 4
    %v7308 = vrot.slane %v7071, 5
    %v7309 = vsel %vm3129, %v7307, %v7308
    %v7310 = vrot.slane %v7308, 4
    %v7311 = vrot.slane %v7072, 5
    %v7312 = vsel %vm3129, %v7310, %v7311
    %v7313 = vrot.slane %v7073, 5
    %v7314 = vrot.slane %v7313, 4
    %v7315 = vrot.slane %v7074, 5
    %v7316 = vsel %vm3129, %v7314, %v7315
    %v7317 = vrot.slane %v7315, 4
    %v7318 = vrot.slane %v7075, 5
    %v7319 = vsel %vm3129, %v7317, %v7318
    %v7320 = vrot.slane %v7076, 5
    %v7321 = vrot.slane %v7320, 4
    %v7322 = vrot.slane %v7077, 5
    %v7323 = vsel %vm3129, %v7321, %v7322
    %v7324 = vrot.slane %v7322, 4
    %v7325 = vrot.slane %v7078, 5
    %v7326 = vsel %vm3129, %v7324, %v7325
    %v7327 = vrot.slane %v7079, 5
    %v7328 = vrot.slane %v7327, 4
    %v7329 = vrot.slane %v7080, 5
    %v7330 = vsel %vm3129, %v7328, %v7329
    %v7331 = vrot.slane %v7329, 4
    %v7332 = vrot.slane %v7081, 5
    %v7333 = vsel %vm3129, %v7331, %v7332
    %v7334 = vrot.slane %v7082, 5
    %v7335 = vrot.slane %v7334, 4
    %v7336 = vrot.slane %v7083, 5
    %v7337 = vsel %vm3129, %v7335, %v7336
    %v7338 = vrot.slane %v7336, 4
    %v7339 = vrot.slane %v7084, 5
    %v7340 = vsel %vm3129, %v7338, %v7339
    %v7341 = vrot.slane %v7085, 5
    %v7342 = vrot.slane %v7341, 4
    %v7343 = vrot.slane %v7086, 5
    %v7344 = vsel %vm3129, %v7342, %v7343
    %v7345 = vrot.slane %v7343, 4
    %v7346 = vrot.slane %v7087, 5
    %v7347 = vsel %vm3129, %v7345, %v7346
    %v7348 = vrot.slane %v7088, 5
    %v7349 = vrot.slane %v7348, 4
    %v7350 = vrot.slane %v7089, 5
    %v7351 = vsel %vm3129, %v7349, %v7350
    %v7352 = vrot.slane %v7350, 4
    %v7353 = vrot.slane %v7090, 5
    %v7354 = vsel %vm3129, %v7352, %v7353
    %v7355 = vrot.slane %v7091, 5
    %v7356 = vrot.slane %v7355, 4
    %v7357 = vrot.slane %v7092, 5
    %v7358 = vsel %vm3129, %v7356, %v7357
    %v7359 = vrot.slane %v7357, 4
    %v7360 = vrot.slane %v7093, 5
    %v7361 = vsel %vm3129, %v7359, %v7360
    %v7362 = vrot.slane %v7094, 5
    %v7363 = vrot.slane %v7362, 4
    %v7364 = vrot.slane %v7095, 5
    %v7365 = vsel %vm3129, %v7363, %v7364
    %v7366 = vrot.slane %v7364, 4
    %v7367 = vrot.slane %v7096, 5
    %v7368 = vsel %vm3129, %v7366, %v7367
    %v7369 = vrot.slane %v7097, 5
    %v7370 = vrot.slane %v7369, 4
    %v7371 = vrot.slane %v7098, 5
    %v7372 = vsel %vm3129, %v7370, %v7371
    %v7373 = vrot.slane %v7371, 4
    %v7374 = vrot.slane %v7099, 5
    %v7375 = vsel %vm3129, %v7373, %v7374
    %v7376 = vrot.slane %v7100, 5
    %v7377 = vrot.slane %v7376, 4
    %v7378 = vrot.slane %v7101, 5
    %v7379 = vsel %vm3129, %v7377, %v7378
    %v7380 = vrot.slane %v7378, 4
    %v7381 = vrot.slane %v7102, 5
    %v7382 = vsel %vm3129, %v7380, %v7381
    %v7383 = vrot.slane %v7103, 5
    %v7384 = vrot.slane %v7383, 4
    %v7385 = vrot.slane %v7104, 5
    %v7386 = vsel %vm3129, %v7384, %v7385
    %v7387 = vrot.slane %v7385, 4
    %v7388 = vrot.slane %v7105, 5
    %v7389 = vsel %vm3129, %v7387, %v7388
    %v7390 = vrot.slane %v7106, 5
    %v7391 = vrot.slane %v7390, 4
    %v7392 = vrot.slane %v7107, 5
    %v7393 = vsel %vm3129, %v7391, %v7392
    %v7394 = vrot.slane %v7392, 4
    %v7395 = vrot.slane %v7108, 5
    %v7396 = vsel %vm3129, %v7394, %v7395
    %v7397 = vrot.slane %v7109, 5
    %v7398 = vrot.slane %v7397, 4
    %v7399 = vrot.slane %v7110, 5
    %v7400 = vsel %vm3129, %v7398, %v7399
    %v7401 = vrot.slane %v7399, 4
    %v7402 = vrot.slane %v7111, 5
    %v7403 = vsel %vm3129, %v7401, %v7402
    %v7404 = vrot.slane %v7112, 5
    %v7405 = vrot.slane %v7404, 4
    %v7406 = vrot.slane %v7113, 5
    %v7407 = vsel %vm3129, %v7405, %v7406
    %v7408 = vrot.slane %v7406, 4
    %v7409 = vrot.slane %v7114, 5
    %v7410 = vsel %vm3129, %v7408, %v7409
    %v7411 = vrot.slane %v7115, 5
    %v7412 = vrot.slane %v7411, 4
    %v7413 = vrot.slane %v7116, 5
    %v7414 = vsel %vm3129, %v7412, %v7413
    %v7415 = vrot.slane %v7413, 4
    %v7416 = vrot.slane %v7117, 5
    %v7417 = vsel %vm3129, %v7415, %v7416
    %v7418 = vrot.slane %v7118, 5
    %v7419 = vrot.slane %v7418, 4
    %v7420 = vrot.slane %v7119, 5
    %v7421 = vsel %vm3129, %v7419, %v7420
    %v7422 = vrot.slane %v7420, 4
    %v7423 = vrot.slane %v7120, 5
    %v7424 = vsel %vm3129, %v7422, %v7423
    %v7425 = vrot.slane %v7121, 5
    %v7426 = vrot.slane %v7425, 4
    %v7427 = vrot.slane %v7122, 5
    %v7428 = vsel %vm3129, %v7426, %v7427
    %v7429 = vrot.slane %v7427, 4
    %v7430 = vrot.slane %v7123, 5
    %v7431 = vsel %vm3129, %v7429, %v7430
    %v7432 = vrot.slane %v7124, 5
    %v7433 = vrot.slane %v7432, 4
    %v7434 = vrot.slane %v7125, 5
    %v7435 = vsel %vm3129, %v7433, %v7434
    %v7436 = vrot.slane %v7434, 4
    %v7437 = vrot.slane %v7126, 5
    %v7438 = vsel %vm3129, %v7436, %v7437
    %v7439 = vrot.slane %v7127, 5
    %v7440 = vrot.slane %v7439, 4
    %v7441 = vrot.slane %v7128, 5
    %v7442 = vsel %vm3129, %v7440, %v7441
    %v7443 = vrot.slane %v7441, 4
    %v7444 = vrot.slane %v7129, 5
    %v7445 = vsel %vm3129, %v7443, %v7444
    %v7446 = vrot.slane %v7130, 5
    %v7447 = vrot.slane %v7446, 4
    %v7448 = vrot.slane %v7131, 5
    %v7449 = vsel %vm3129, %v7447, %v7448
    %v7450 = vrot.slane %v7448, 4
    %v7451 = vrot.slane %v7132, 5
    %v7452 = vsel %vm3129, %v7450, %v7451
    %v7453 = vunpack.c.l.b16 %v7232
    %v7454 = vunpack.c.l.b16 %v7235
    %v7455 = vunpack.c.l.b16 %v7239
    %v7456 = vunpack.c.l.b16 %v7242
    %v7457 = vunpack.c.l.b16 %v7246
    %v7458 = vunpack.c.l.b16 %v7249
    %v7459 = vunpack.c.l.b16 %v7253
    %v7460 = vunpack.c.l.b16 %v7256
    %v7461 = vunpack.c.l.b16 %v7260
    %v7462 = vunpack.c.l.b16 %v7263
    %v7463 = vunpack.c.l.b16 %v7267
    %v7464 = vunpack.c.l.b16 %v7270
    %v7465 = vunpack.c.l.b16 %v7274
    %v7466 = vunpack.c.l.b16 %v7277
    %v7467 = vunpack.c.l.b16 %v7281
    %v7468 = vunpack.c.l.b16 %v7284
    %v7469 = vunpack.c.l.b16 %v7288
    %v7470 = vunpack.c.l.b16 %v7291
    %v7471 = vunpack.c.l.b16 %v7295
    %v7472 = vunpack.c.l.b16 %v7298
    %v7473 = vunpack.c.l.b16 %v7302
    %v7474 = vunpack.c.l.b16 %v7305
    %v7475 = vunpack.c.l.b16 %v7309
    %v7476 = vunpack.c.l.b16 %v7312
    %v7477 = vunpack.c.l.b16 %v7316
    %v7478 = vunpack.c.l.b16 %v7319
    %v7479 = vunpack.c.l.b16 %v7323
    %v7480 = vunpack.c.l.b16 %v7326
    %v7481 = vunpack.c.l.b16 %v7330
    %v7482 = vunpack.c.l.b16 %v7333
    %v7483 = vunpack.c.l.b16 %v7337
    %v7484 = vunpack.c.l.b16 %v7340
    %v7485 = vunpack.c.l.b16 %v7344
    %v7486 = vunpack.c.l.b16 %v7347
    %v7487 = vunpack.c.l.b16 %v7351
    %v7488 = vunpack.c.l.b16 %v7354
    %v7489 = vunpack.c.l.b16 %v7358
    %v7490 = vunpack.c.l.b16 %v7361
    %v7491 = vunpack.c.l.b16 %v7365
    %v7492 = vunpack.c.l.b16 %v7368
    %v7493 = vunpack.c.l.b16 %v7372
    %v7494 = vunpack.c.l.b16 %v7375
    %v7495 = vunpack.c.l.b16 %v7379
    %v7496 = vunpack.c.l.b16 %v7382
    %v7497 = vunpack.c.l.b16 %v7386
    %v7498 = vunpack.c.l.b16 %v7389
    %v7499 = vunpack.c.l.b16 %v7393
    %v7500 = vunpack.c.l.b16 %v7396
    %v7501 = vunpack.c.l.b16 %v7400
    %v7502 = vunpack.c.l.b16 %v7403
    %v7503 = vunpack.c.l.b16 %v7407
    %v7504 = vunpack.c.l.b16 %v7410
    %v7505 = vunpack.c.l.b16 %v7414
    %v7506 = vunpack.c.l.b16 %v7417
    %v7507 = vunpack.c.l.b16 %v7421
    %v7508 = vunpack.c.l.b16 %v7424
    %v7509 = vunpack.c.l.b16 %v7428
    %v7510 = vunpack.c.l.b16 %v7431
    %v7511 = vunpack.c.l.b16 %v7435
    %v7512 = vunpack.c.l.b16 %v7438
    %v7513 = vunpack.c.l.b16 %v7442
    %v7514 = vunpack.c.l.b16 %v7445
    %v7515 = vunpack.c.l.b16 %v7449
    %v7516 = vunpack.c.l.b16 %v7452
    %v7517 = vpack.c.b16 %v7454, %v7453
    %v7518 = vpack.c.b16 %v7456, %v7455
    %v7519 = vpack.c.b16 %v7458, %v7457
    %v7520 = vpack.c.b16 %v7460, %v7459
    %v7521 = vpack.c.b16 %v7462, %v7461
    %v7522 = vpack.c.b16 %v7464, %v7463
    %v7523 = vpack.c.b16 %v7466, %v7465
    %v7524 = vpack.c.b16 %v7468, %v7467
    %v7525 = vpack.c.b16 %v7470, %v7469
    %v7526 = vpack.c.b16 %v7472, %v7471
    %v7527 = vpack.c.b16 %v7474, %v7473
    %v7528 = vpack.c.b16 %v7476, %v7475
    %v7529 = vpack.c.b16 %v7478, %v7477
    %v7530 = vpack.c.b16 %v7480, %v7479
    %v7531 = vpack.c.b16 %v7482, %v7481
    %v7532 = vpack.c.b16 %v7484, %v7483
    %v7533 = vpack.c.b16 %v7486, %v7485
    %v7534 = vpack.c.b16 %v7488, %v7487
    %v7535 = vpack.c.b16 %v7490, %v7489
    %v7536 = vpack.c.b16 %v7492, %v7491
    %v7537 = vpack.c.b16 %v7494, %v7493
    %v7538 = vpack.c.b16 %v7496, %v7495
    %v7539 = vpack.c.b16 %v7498, %v7497
    %v7540 = vpack.c.b16 %v7500, %v7499
    %v7541 = vpack.c.b16 %v7502, %v7501
    %v7542 = vpack.c.b16 %v7504, %v7503
    %v7543 = vpack.c.b16 %v7506, %v7505
    %v7544 = vpack.c.b16 %v7508, %v7507
    %v7545 = vpack.c.b16 %v7510, %v7509
    %v7546 = vpack.c.b16 %v7512, %v7511
    %v7547 = vpack.c.b16 %v7514, %v7513
    %v7548 = vpack.c.b16 %v7516, %v7515
    %7581 = vst.msk [vmem:[#allocation3 + $0x10] sm:$0xff] %vm1810, %v7517
    %7582 = vst.msk [vmem:[#allocation3 + $0x28] sm:$0xff] %vm1810, %v7518
    %7583 = vst.msk [vmem:[#allocation3 + $0x40] sm:$0xff] %vm1810, %v7519
    %7584 = vst.msk [vmem:[#allocation3 + $0x58] sm:$0xff] %vm1810, %v7520
    %7585 = vst.msk [vmem:[#allocation3 + $0x70] sm:$0xff] %vm1810, %v7521
    %7586 = vst.msk [vmem:[#allocation3 + $0x88] sm:$0xff] %vm1810, %v7522
    %7587 = vst.msk [vmem:[#allocation3 + $0xa0] sm:$0xff] %vm1810, %v7523
    %7588 = vst.msk [vmem:[#allocation3 + $0xb8] sm:$0xff] %vm1810, %v7524
    %7589 = vst.msk [vmem:[#allocation3 + $0xd0] sm:$0xff] %vm1810, %v7525
    %7590 = vst.msk [vmem:[#allocation3 + $0xe8] sm:$0xff] %vm1810, %v7526
    %7591 = vst.msk [vmem:[#allocation3 + $0x100] sm:$0xff] %vm1810, %v7527
    %7592 = vst.msk [vmem:[#allocation3 + $0x118] sm:$0xff] %vm1810, %v7528
    %7593 = vst.msk [vmem:[#allocation3 + $0x130] sm:$0xff] %vm1810, %v7529
    %7594 = vst.msk [vmem:[#allocation3 + $0x148] sm:$0xff] %vm1810, %v7530
    %7595 = vst.msk [vmem:[#allocation3 + $0x160] sm:$0xff] %vm1810, %v7531
    %7596 = vst.msk [vmem:[#allocation3 + $0x178] sm:$0xff] %vm1810, %v7532
    %7597 = vst.msk [vmem:[#allocation3 + $0x190] sm:$0xff] %vm1810, %v7533
    %7598 = vst.msk [vmem:[#allocation3 + $0x1a8] sm:$0xff] %vm1810, %v7534
    %7599 = vst.msk [vmem:[#allocation3 + $0x1c0] sm:$0xff] %vm1810, %v7535
    %7600 = vst.msk [vmem:[#allocation3 + $0x1d8] sm:$0xff] %vm1810, %v7536
    %7601 = vst.msk [vmem:[#allocation3 + $0x1f0] sm:$0xff] %vm1810, %v7537
    %7602 = vst.msk [vmem:[#allocation3 + $0x208] sm:$0xff] %vm1810, %v7538
    %7603 = vst.msk [vmem:[#allocation3 + $0x220] sm:$0xff] %vm1810, %v7539
    %7604 = vst.msk [vmem:[#allocation3 + $0x238] sm:$0xff] %vm1810, %v7540
    %7605 = vst.msk [vmem:[#allocation3 + $0x250] sm:$0xff] %vm1810, %v7541
    %7606 = vst.msk [vmem:[#allocation3 + $0x268] sm:$0xff] %vm1810, %v7542
    %7607 = vst.msk [vmem:[#allocation3 + $0x280] sm:$0xff] %vm1810, %v7543
    %7608 = vst.msk [vmem:[#allocation3 + $0x298] sm:$0xff] %vm1810, %v7544
    %7609 = vst.msk [vmem:[#allocation3 + $0x2b0] sm:$0xff] %vm1810, %v7545
    %7610 = vst.msk [vmem:[#allocation3 + $0x2c8] sm:$0xff] %vm1810, %v7546
    %7611 = vst.msk [vmem:[#allocation3 + $0x2e0] sm:$0xff] %vm1810, %v7547
    %7612 = vst.msk [vmem:[#allocation3 + $0x2f8] sm:$0xff] %vm1810, %v7548
    %v7613 = vld [vmem:[#allocation3] sm:$0xff]
    %v7614 = vld [vmem:[#allocation3 + $0x8] sm:$0xff]
    %v7615 = vld [vmem:[#allocation3 + $0x10] sm:$0xff]
    %v7616 = vld [vmem:[#allocation3 + $0x18] sm:$0xff]
    %v7617 = vld [vmem:[#allocation3 + $0x20] sm:$0xff]
    %v7618 = vld [vmem:[#allocation3 + $0x28] sm:$0xff]
    %v7619 = vld [vmem:[#allocation3 + $0x30] sm:$0xff]
    %v7620 = vld [vmem:[#allocation3 + $0x38] sm:$0xff]
    %v7621 = vld [vmem:[#allocation3 + $0x40] sm:$0xff]
    %v7622 = vld [vmem:[#allocation3 + $0x48] sm:$0xff]
    %v7623 = vld [vmem:[#allocation3 + $0x50] sm:$0xff]
    %v7624 = vld [vmem:[#allocation3 + $0x58] sm:$0xff]
    %v7625 = vld [vmem:[#allocation3 + $0x60] sm:$0xff]
    %v7626 = vld [vmem:[#allocation3 + $0x68] sm:$0xff]
    %v7627 = vld [vmem:[#allocation3 + $0x70] sm:$0xff]
    %v7628 = vld [vmem:[#allocation3 + $0x78] sm:$0xff]
    %v7629 = vld [vmem:[#allocation3 + $0x80] sm:$0xff]
    %v7630 = vld [vmem:[#allocation3 + $0x88] sm:$0xff]
    %v7631 = vld [vmem:[#allocation3 + $0x90] sm:$0xff]
    %v7632 = vld [vmem:[#allocation3 + $0x98] sm:$0xff]
    %v7633 = vld [vmem:[#allocation3 + $0xa0] sm:$0xff]
    %v7634 = vld [vmem:[#allocation3 + $0xa8] sm:$0xff]
    %v7635 = vld [vmem:[#allocation3 + $0xb0] sm:$0xff]
    %v7636 = vld [vmem:[#allocation3 + $0xb8] sm:$0xff]
    %v7637 = vld [vmem:[#allocation3 + $0xc0] sm:$0xff]
    %v7638 = vld [vmem:[#allocation3 + $0xc8] sm:$0xff]
    %v7639 = vld [vmem:[#allocation3 + $0xd0] sm:$0xff]
    %v7640 = vld [vmem:[#allocation3 + $0xd8] sm:$0xff]
    %v7641 = vld [vmem:[#allocation3 + $0xe0] sm:$0xff]
    %v7642 = vld [vmem:[#allocation3 + $0xe8] sm:$0xff]
    %v7643 = vld [vmem:[#allocation3 + $0xf0] sm:$0xff]
    %v7644 = vld [vmem:[#allocation3 + $0xf8] sm:$0xff]
    %v7645 = vld [vmem:[#allocation3 + $0x100] sm:$0xff]
    %v7646 = vld [vmem:[#allocation3 + $0x108] sm:$0xff]
    %v7647 = vld [vmem:[#allocation3 + $0x110] sm:$0xff]
    %v7648 = vld [vmem:[#allocation3 + $0x118] sm:$0xff]
    %v7649 = vld [vmem:[#allocation3 + $0x120] sm:$0xff]
    %v7650 = vld [vmem:[#allocation3 + $0x128] sm:$0xff]
    %v7651 = vld [vmem:[#allocation3 + $0x130] sm:$0xff]
    %v7652 = vld [vmem:[#allocation3 + $0x138] sm:$0xff]
    %v7653 = vld [vmem:[#allocation3 + $0x140] sm:$0xff]
    %v7654 = vld [vmem:[#allocation3 + $0x148] sm:$0xff]
    %v7655 = vld [vmem:[#allocation3 + $0x150] sm:$0xff]
    %v7656 = vld [vmem:[#allocation3 + $0x158] sm:$0xff]
    %v7657 = vld [vmem:[#allocation3 + $0x160] sm:$0xff]
    %v7658 = vld [vmem:[#allocation3 + $0x168] sm:$0xff]
    %v7659 = vld [vmem:[#allocation3 + $0x170] sm:$0xff]
    %v7660 = vld [vmem:[#allocation3 + $0x178] sm:$0xff]
    %v7661 = vld [vmem:[#allocation3 + $0x180] sm:$0xff]
    %v7662 = vld [vmem:[#allocation3 + $0x188] sm:$0xff]
    %v7663 = vld [vmem:[#allocation3 + $0x190] sm:$0xff]
    %v7664 = vld [vmem:[#allocation3 + $0x198] sm:$0xff]
    %v7665 = vld [vmem:[#allocation3 + $0x1a0] sm:$0xff]
    %v7666 = vld [vmem:[#allocation3 + $0x1a8] sm:$0xff]
    %v7667 = vld [vmem:[#allocation3 + $0x1b0] sm:$0xff]
    %v7668 = vld [vmem:[#allocation3 + $0x1b8] sm:$0xff]
    %v7669 = vld [vmem:[#allocation3 + $0x1c0] sm:$0xff]
    %v7670 = vld [vmem:[#allocation3 + $0x1c8] sm:$0xff]
    %v7671 = vld [vmem:[#allocation3 + $0x1d0] sm:$0xff]
    %v7672 = vld [vmem:[#allocation3 + $0x1d8] sm:$0xff]
    %v7673 = vld [vmem:[#allocation3 + $0x1e0] sm:$0xff]
    %v7674 = vld [vmem:[#allocation3 + $0x1e8] sm:$0xff]
    %v7675 = vld [vmem:[#allocation3 + $0x1f0] sm:$0xff]
    %v7676 = vld [vmem:[#allocation3 + $0x1f8] sm:$0xff]
    %v7677 = vld [vmem:[#allocation3 + $0x200] sm:$0xff]
    %v7678 = vld [vmem:[#allocation3 + $0x208] sm:$0xff]
    %v7679 = vld [vmem:[#allocation3 + $0x210] sm:$0xff]
    %v7680 = vld [vmem:[#allocation3 + $0x218] sm:$0xff]
    %v7681 = vld [vmem:[#allocation3 + $0x220] sm:$0xff]
    %v7682 = vld [vmem:[#allocation3 + $0x228] sm:$0xff]
    %v7683 = vld [vmem:[#allocation3 + $0x230] sm:$0xff]
    %v7684 = vld [vmem:[#allocation3 + $0x238] sm:$0xff]
    %v7685 = vld [vmem:[#allocation3 + $0x240] sm:$0xff]
    %v7686 = vld [vmem:[#allocation3 + $0x248] sm:$0xff]
    %v7687 = vld [vmem:[#allocation3 + $0x250] sm:$0xff]
    %v7688 = vld [vmem:[#allocation3 + $0x258] sm:$0xff]
    %v7689 = vld [vmem:[#allocation3 + $0x260] sm:$0xff]
    %v7690 = vld [vmem:[#allocation3 + $0x268] sm:$0xff]
    %v7691 = vld [vmem:[#allocation3 + $0x270] sm:$0xff]
    %v7692 = vld [vmem:[#allocation3 + $0x278] sm:$0xff]
    %v7693 = vld [vmem:[#allocation3 + $0x280] sm:$0xff]
    %v7694 = vld [vmem:[#allocation3 + $0x288] sm:$0xff]
    %v7695 = vld [vmem:[#allocation3 + $0x290] sm:$0xff]
    %v7696 = vld [vmem:[#allocation3 + $0x298] sm:$0xff]
    %v7697 = vld [vmem:[#allocation3 + $0x2a0] sm:$0xff]
    %v7698 = vld [vmem:[#allocation3 + $0x2a8] sm:$0xff]
    %v7699 = vld [vmem:[#allocation3 + $0x2b0] sm:$0xff]
    %v7700 = vld [vmem:[#allocation3 + $0x2b8] sm:$0xff]
    %v7701 = vld [vmem:[#allocation3 + $0x2c0] sm:$0xff]
    %v7702 = vld [vmem:[#allocation3 + $0x2c8] sm:$0xff]
    %v7703 = vld [vmem:[#allocation3 + $0x2d0] sm:$0xff]
    %v7704 = vld [vmem:[#allocation3 + $0x2d8] sm:$0xff]
    %v7705 = vld [vmem:[#allocation3 + $0x2e0] sm:$0xff]
    %v7706 = vld [vmem:[#allocation3 + $0x2e8] sm:$0xff]
    %v7707 = vld [vmem:[#allocation3 + $0x2f0] sm:$0xff]
    %v7708 = vld [vmem:[#allocation3 + $0x2f8] sm:$0xff]
    %v7709 = vld [vmem:[%s4] sm:$0xf]
    %v7710 = vld [vmem:[%s4 + $0x4] sm:$0xf]
    %v7711 = vld [vmem:[%s4 + $0x8] sm:$0xf]
    %v7712 = vld [vmem:[%s4 + $0xc] sm:$0xf]
    %v7713 = vld [vmem:[%s4 + $0x10] sm:$0xf]
    %v7714 = vld [vmem:[%s4 + $0x14] sm:$0xf]
    %v7715 = vld [vmem:[%s4 + $0x18] sm:$0xf]
    %v7716 = vld [vmem:[%s4 + $0x1c] sm:$0xf]
    %v7717 = vld [vmem:[%s4 + $0x20] sm:$0xf]
    %v7718 = vld [vmem:[%s4 + $0x24] sm:$0xf]
    %v7719 = vld [vmem:[%s4 + $0x28] sm:$0xf]
    %v7720 = vld [vmem:[%s4 + $0x2c] sm:$0xf]
    %v7721 = vld [vmem:[%s4 + $0x30] sm:$0xf]
    %v7722 = vld [vmem:[%s4 + $0x34] sm:$0xf]
    %v7723 = vld [vmem:[%s4 + $0x38] sm:$0xf]
    %v7724 = vld [vmem:[%s4 + $0x3c] sm:$0xf]
    %v7725 = vld [vmem:[%s4 + $0x40] sm:$0xf]
    %v7726 = vld [vmem:[%s4 + $0x44] sm:$0xf]
    %v7727 = vld [vmem:[%s4 + $0x48] sm:$0xf]
    %v7728 = vld [vmem:[%s4 + $0x4c] sm:$0xf]
    %v7729 = vld [vmem:[%s4 + $0x50] sm:$0xf]
    %v7730 = vld [vmem:[%s4 + $0x54] sm:$0xf]
    %v7731 = vld [vmem:[%s4 + $0x58] sm:$0xf]
    %v7732 = vld [vmem:[%s4 + $0x5c] sm:$0xf]
    %v7733 = vld [vmem:[%s4 + $0x60] sm:$0xf]
    %v7734 = vld [vmem:[%s4 + $0x64] sm:$0xf]
    %v7735 = vld [vmem:[%s4 + $0x68] sm:$0xf]
    %v7736 = vld [vmem:[%s4 + $0x6c] sm:$0xf]
    %v7737 = vld [vmem:[%s4 + $0x70] sm:$0xf]
    %v7738 = vld [vmem:[%s4 + $0x74] sm:$0xf]
    %v7739 = vld [vmem:[%s4 + $0x78] sm:$0xf]
    %v7740 = vld [vmem:[%s4 + $0x7c] sm:$0xf]
    %v7741 = vld [vmem:[%s4 + $0x80] sm:$0xf]
    %v7742 = vld [vmem:[%s4 + $0x84] sm:$0xf]
    %v7743 = vld [vmem:[%s4 + $0x88] sm:$0xf]
    %v7744 = vld [vmem:[%s4 + $0x8c] sm:$0xf]
    %v7781 = vunpack.c.l.b16 %v7709
    %v7782 = vunpack.c.l.b16 %v7710
    %v7783 = vunpack.c.l.b16 %v7711
    %v7784 = vunpack.c.l.b16 %v7712
    %v7785 = vunpack.c.l.b16 %v7713
    %v7786 = vunpack.c.l.b16 %v7714
    %v7787 = vunpack.c.l.b16 %v7715
    %v7788 = vunpack.c.l.b16 %v7716
    %v7789 = vunpack.c.l.b16 %v7717
    %v7790 = vunpack.c.l.b16 %v7718
    %v7791 = vunpack.c.l.b16 %v7719
    %v7792 = vunpack.c.l.b16 %v7720
    %v7793 = vunpack.c.l.b16 %v7721
    %v7794 = vunpack.c.l.b16 %v7722
    %v7795 = vunpack.c.l.b16 %v7723
    %v7796 = vunpack.c.l.b16 %v7724
    %v7797 = vunpack.c.l.b16 %v7725
    %v7798 = vunpack.c.l.b16 %v7726
    %v7799 = vunpack.c.l.b16 %v7727
    %v7800 = vunpack.c.l.b16 %v7728
    %v7801 = vunpack.c.l.b16 %v7729
    %v7802 = vunpack.c.l.b16 %v7730
    %v7803 = vunpack.c.l.b16 %v7731
    %v7804 = vunpack.c.l.b16 %v7732
    %v7805 = vunpack.c.l.b16 %v7733
    %v7806 = vunpack.c.l.b16 %v7734
    %v7807 = vunpack.c.l.b16 %v7735
    %v7808 = vunpack.c.l.b16 %v7736
    %v7809 = vunpack.c.l.b16 %v7737
    %v7810 = vunpack.c.l.b16 %v7738
    %v7811 = vunpack.c.l.b16 %v7739
    %v7812 = vunpack.c.l.b16 %v7740
    %v7813 = vunpack.c.l.b16 %v7741
    %v7814 = vunpack.c.l.b16 %v7742
    %v7815 = vunpack.c.l.b16 %v7743
    %v7816 = vunpack.c.l.b16 %v7744
    %v7817 = vpack.c.b16 %v7782, %v7781
    %v7818 = vpack.c.b16 %v7784, %v7783
    %v7819 = vpack.c.b16 %v7786, %v7785
    %v7820 = vpack.c.b16 %v7788, %v7787
    %v7821 = vpack.c.b16 %v7790, %v7789
    %v7822 = vpack.c.b16 %v7792, %v7791
    %v7823 = vpack.c.b16 %v7794, %v7793
    %v7824 = vpack.c.b16 %v7796, %v7795
    %v7825 = vpack.c.b16 %v7798, %v7797
    %v7826 = vpack.c.b16 %v7800, %v7799
    %v7827 = vpack.c.b16 %v7802, %v7801
    %v7828 = vpack.c.b16 %v7804, %v7803
    %v7829 = vpack.c.b16 %v7806, %v7805
    %v7830 = vpack.c.b16 %v7808, %v7807
    %v7831 = vpack.c.b16 %v7810, %v7809
    %v7832 = vpack.c.b16 %v7812, %v7811
    %v7833 = vpack.c.b16 %v7814, %v7813
    %v7834 = vpack.c.b16 %v7816, %v7815
    %v7854 = vsel %vm1810, %v7615, 0
    %v7857 = vsel %vm1810, %v7618, 0
    %v7860 = vsel %vm1810, %v7621, 0
    %v7863 = vsel %vm1810, %v7624, 0
    %v7866 = vsel %vm1810, %v7627, 0
    %v7869 = vsel %vm1810, %v7630, 0
    %v7872 = vsel %vm1810, %v7633, 0
    %v7875 = vsel %vm1810, %v7636, 0
    %v7878 = vsel %vm1810, %v7639, 0
    %v7881 = vsel %vm1810, %v7642, 0
    %v7884 = vsel %vm1810, %v7645, 0
    %v7887 = vsel %vm1810, %v7648, 0
    %v7890 = vsel %vm1810, %v7651, 0
    %v7893 = vsel %vm1810, %v7654, 0
    %v7896 = vsel %vm1810, %v7657, 0
    %v7899 = vsel %vm1810, %v7660, 0
    %v7902 = vsel %vm1810, %v7663, 0
    %v7905 = vsel %vm1810, %v7666, 0
    %v7908 = vsel %vm1810, %v7669, 0
    %v7911 = vsel %vm1810, %v7672, 0
    %v7914 = vsel %vm1810, %v7675, 0
    %v7917 = vsel %vm1810, %v7678, 0
    %v7920 = vsel %vm1810, %v7681, 0
    %v7923 = vsel %vm1810, %v7684, 0
    %v7926 = vsel %vm1810, %v7687, 0
    %v7929 = vsel %vm1810, %v7690, 0
    %v7932 = vsel %vm1810, %v7693, 0
    %v7935 = vsel %vm1810, %v7696, 0
    %v7938 = vsel %vm1810, %v7699, 0
    %v7941 = vsel %vm1810, %v7702, 0
    %v7944 = vsel %vm1810, %v7705, 0
    %v7947 = vsel %vm1810, %v7708, 0
    %7949 = vmatprep.subr.bf16.mxu0 0
    %7950 = vmatpush1.bf16.msra.mxu0 %v7817
    %7951 = vmatprep.subr.bf16.mxu0 0
    %7952 = vmatpush1.bf16.msra.mxu0 %v7818
    %7953 = vmatprep.subr.bf16.mxu0 0
    %7954 = vmatpush1.bf16.msra.mxu0 %v7819
    %7955 = vmatprep.subr.bf16.mxu0 0
    %7956 = vmatpush1.bf16.msra.mxu0 %v7820
    %7957 = vmatprep.subr.bf16.mxu0 0
    %7958 = vmatpush1.bf16.msra.mxu0 %v7821
    %7959 = vmatprep.subr.bf16.mxu0 0
    %7960 = vmatpush1.bf16.msra.mxu0 %v7822
    %7961 = vmatprep.subr.bf16.mxu0 0
    %7962 = vmatpush1.bf16.msra.mxu0 %v7823
    %7963 = vmatprep.subr.bf16.mxu0 0
    %7964 = vmatpush1.bf16.msra.mxu0 %v7824
    %7965 = vmatprep.subr.bf16.mxu0 0
    %7966 = vmatpush1.bf16.msra.mxu0 %v7825
    %7967 = vmatprep.subr.bf16.mxu0 0
    %7968 = vmatpush1.bf16.msra.mxu0 %v7826
    %7969 = vmatprep.subr.bf16.mxu0 0
    %7970 = vmatpush1.bf16.msra.mxu0 %v7827
    %7971 = vmatprep.subr.bf16.mxu0 0
    %7972 = vmatpush1.bf16.msra.mxu0 %v7828
    %7973 = vmatprep.subr.bf16.mxu0 0
    %7974 = vmatpush1.bf16.msra.mxu0 %v7829
    %7975 = vmatprep.subr.bf16.mxu0 0
    %7976 = vmatpush1.bf16.msra.mxu0 %v7830
    %7977 = vmatprep.subr.bf16.mxu0 0
    %7978 = vmatpush1.bf16.msra.mxu0 %v7831
    %7979 = vmatprep.subr.bf16.mxu0 0
    %7980 = vmatpush1.bf16.msra.mxu0 %v7832
    %7981 = vmatprep.mubr.bf16.mxu0 %v7614
    %7982 = vmatmul.mubr.bf16.gmra.mrb[0].mxu0 %v7613
    %v7983 = vpop.f32.mrb[0].mxu0
    %v7984 = vadd.f32 0.0, %v7983
    %v7985 = vpop.f32.mrb[0].mxu0
    %v7986 = vpop.f32.mrb[0].mxu0
    %v7987 = vadd.f32 0.0, %v7986
    %v7988 = vpop.f32.mrb[0].mxu0
    %7989 = vmatprep.mubr.bf16.mxu0 %v7617
    %7990 = vmatmul.mubr.bf16.gmra.mrb[0].mxu0 %v7616
    %v7991 = vpop.f32.mrb[0].mxu0
    %v7992 = vadd.f32 0.0, %v7991
    %v7993 = vpop.f32.mrb[0].mxu0
    %v7994 = vpop.f32.mrb[0].mxu0
    %v7995 = vadd.f32 0.0, %v7994
    %v7996 = vpop.f32.mrb[0].mxu0
    %7997 = vmatprep.mubr.bf16.mxu0 %v7620
    %7998 = vmatmul.mubr.bf16.gmra.mrb[0].mxu0 %v7619
    %v7999 = vpop.f32.mrb[0].mxu0
    %v8000 = vadd.f32 0.0, %v7999
    %v8001 = vpop.f32.mrb[0].mxu0
    %v8002 = vpop.f32.mrb[0].mxu0
    %v8003 = vadd.f32 0.0, %v8002
    %v8004 = vpop.f32.mrb[0].mxu0
    %8005 = vmatprep.mubr.bf16.mxu0 %v7623
    %8006 = vmatmul.mubr.bf16.gmra.mrb[0].mxu0 %v7622
    %v8007 = vpop.f32.mrb[0].mxu0
    %v8008 = vadd.f32 0.0, %v8007
    %v8009 = vpop.f32.mrb[0].mxu0
    %v8010 = vpop.f32.mrb[0].mxu0
    %v8011 = vadd.f32 0.0, %v8010
    %v8012 = vpop.f32.mrb[0].mxu0
    %8013 = vmatprep.mubr.bf16.mxu0 %v7626
    %8014 = vmatmul.mubr.bf16.gmra.mrb[0].mxu0 %v7625
    %v8015 = vpop.f32.mrb[0].mxu0
    %v8016 = vadd.f32 0.0, %v8015
    %v8017 = vpop.f32.mrb[0].mxu0
    %v8018 = vpop.f32.mrb[0].mxu0
    %v8019 = vadd.f32 0.0, %v8018
    %v8020 = vpop.f32.mrb[0].mxu0
    %8021 = vmatprep.mubr.bf16.mxu0 %v7629
    %8022 = vmatmul.mubr.bf16.gmra.mrb[0].mxu0 %v7628
    %v8023 = vpop.f32.mrb[0].mxu0
    %v8024 = vadd.f32 0.0, %v8023
    %v8025 = vpop.f32.mrb[0].mxu0
    %v8026 = vpop.f32.mrb[0].mxu0
    %v8027 = vadd.f32 0.0, %v8026
    %v8028 = vpop.f32.mrb[0].mxu0
    %8029 = vmatprep.mubr.bf16.mxu0 %v7632
    %8030 = vmatmul.mubr.bf16.gmra.mrb[0].mxu0 %v7631
    %v8031 = vpop.f32.mrb[0].mxu0
    %v8032 = vadd.f32 0.0, %v8031
    %v8033 = vpop.f32.mrb[0].mxu0
    %v8034 = vpop.f32.mrb[0].mxu0
    %v8035 = vadd.f32 0.0, %v8034
    %v8036 = vpop.f32.mrb[0].mxu0
    %8037 = vmatprep.mubr.bf16.mxu0 %v7635
    %8038 = vmatmul.mubr.bf16.gmra.mrb[0].mxu0 %v7634
    %v8039 = vpop.f32.mrb[0].mxu0
    %v8040 = vadd.f32 0.0, %v8039
    %v8041 = vpop.f32.mrb[0].mxu0
    %v8042 = vpop.f32.mrb[0].mxu0
    %v8043 = vadd.f32 0.0, %v8042
    %v8044 = vpop.f32.mrb[0].mxu0
    %8045 = vmatprep.mubr.bf16.mxu0 %v7638
    %8046 = vmatmul.mubr.bf16.gmra.mrb[0].mxu0 %v7637
    %v8047 = vpop.f32.mrb[0].mxu0
    %v8048 = vadd.f32 0.0, %v8047
    %v8049 = vpop.f32.mrb[0].mxu0
    %v8050 = vpop.f32.mrb[0].mxu0
    %v8051 = vadd.f32 0.0, %v8050
    %v8052 = vpop.f32.mrb[0].mxu0
    %8053 = vmatprep.mubr.bf16.mxu0 %v7641
    %8054 = vmatmul.mubr.bf16.gmra.mrb[0].mxu0 %v7640
    %v8055 = vpop.f32.mrb[0].mxu0
    %v8056 = vadd.f32 0.0, %v8055
    %v8057 = vpop.f32.mrb[0].mxu0
    %v8058 = vpop.f32.mrb[0].mxu0
    %v8059 = vadd.f32 0.0, %v8058
    %v8060 = vpop.f32.mrb[0].mxu0
    %8061 = vmatprep.mubr.bf16.mxu0 %v7644
    %8062 = vmatmul.mubr.bf16.gmra.mrb[0].mxu0 %v7643
    %v8063 = vpop.f32.mrb[0].mxu0
    %v8064 = vadd.f32 0.0, %v8063
    %v8065 = vpop.f32.mrb[0].mxu0
    %v8066 = vpop.f32.mrb[0].mxu0
    %v8067 = vadd.f32 0.0, %v8066
    %v8068 = vpop.f32.mrb[0].mxu0
    %8069 = vmatprep.mubr.bf16.mxu0 %v7647
    %8070 = vmatmul.mubr.bf16.gmra.mrb[0].mxu0 %v7646
    %v8071 = vpop.f32.mrb[0].mxu0
    %v8072 = vadd.f32 0.0, %v8071
    %v8073 = vpop.f32.mrb[0].mxu0
    %v8074 = vpop.f32.mrb[0].mxu0
    %v8075 = vadd.f32 0.0, %v8074
    %v8076 = vpop.f32.mrb[0].mxu0
    %8077 = vmatprep.mubr.bf16.mxu0 %v7650
    %8078 = vmatmul.mubr.bf16.gmra.mrb[0].mxu0 %v7649
    %v8079 = vpop.f32.mrb[0].mxu0
    %v8080 = vadd.f32 0.0, %v8079
    %v8081 = vpop.f32.mrb[0].mxu0
    %v8082 = vpop.f32.mrb[0].mxu0
    %v8083 = vadd.f32 0.0, %v8082
    %v8084 = vpop.f32.mrb[0].mxu0
    %8085 = vmatprep.mubr.bf16.mxu0 %v7653
    %8086 = vmatmul.mubr.bf16.gmra.mrb[0].mxu0 %v7652
    %v8087 = vpop.f32.mrb[0].mxu0
    %v8088 = vadd.f32 0.0, %v8087
    %v8089 = vpop.f32.mrb[0].mxu0
    %v8090 = vpop.f32.mrb[0].mxu0
    %v8091 = vadd.f32 0.0, %v8090
    %v8092 = vpop.f32.mrb[0].mxu0
    %8093 = vmatprep.mubr.bf16.mxu0 %v7656
    %8094 = vmatmul.mubr.bf16.gmra.mrb[0].mxu0 %v7655
    %v8095 = vpop.f32.mrb[0].mxu0
    %v8096 = vadd.f32 0.0, %v8095
    %v8097 = vpop.f32.mrb[0].mxu0
    %v8098 = vpop.f32.mrb[0].mxu0
    %v8099 = vadd.f32 0.0, %v8098
    %v8100 = vpop.f32.mrb[0].mxu0
    %8101 = vmatprep.mubr.bf16.mxu0 %v7659
    %8102 = vmatmul.mubr.bf16.gmra.mrb[0].mxu0 %v7658
    %v8103 = vpop.f32.mrb[0].mxu0
    %v8104 = vadd.f32 0.0, %v8103
    %v8105 = vpop.f32.mrb[0].mxu0
    %v8106 = vpop.f32.mrb[0].mxu0
    %v8107 = vadd.f32 0.0, %v8106
    %v8108 = vpop.f32.mrb[0].mxu0
    %8109 = vmatprep.mubr.bf16.mxu0 %v7662
    %8110 = vmatmul.mubr.bf16.gmra.mrb[0].mxu0 %v7661
    %v8111 = vpop.f32.mrb[0].mxu0
    %v8112 = vadd.f32 0.0, %v8111
    %v8113 = vpop.f32.mrb[0].mxu0
    %v8114 = vpop.f32.mrb[0].mxu0
    %v8115 = vadd.f32 0.0, %v8114
    %v8116 = vpop.f32.mrb[0].mxu0
    %8117 = vmatprep.mubr.bf16.mxu0 %v7665
    %8118 = vmatmul.mubr.bf16.gmra.mrb[0].mxu0 %v7664
    %v8119 = vpop.f32.mrb[0].mxu0
    %v8120 = vadd.f32 0.0, %v8119
    %v8121 = vpop.f32.mrb[0].mxu0
    %v8122 = vpop.f32.mrb[0].mxu0
    %v8123 = vadd.f32 0.0, %v8122
    %v8124 = vpop.f32.mrb[0].mxu0
    %8125 = vmatprep.mubr.bf16.mxu0 %v7668
    %8126 = vmatmul.mubr.bf16.gmra.mrb[0].mxu0 %v7667
    %v8127 = vpop.f32.mrb[0].mxu0
    %v8128 = vadd.f32 0.0, %v8127
    %v8129 = vpop.f32.mrb[0].mxu0
    %v8130 = vpop.f32.mrb[0].mxu0
    %v8131 = vadd.f32 0.0, %v8130
    %v8132 = vpop.f32.mrb[0].mxu0
    %8133 = vmatprep.mubr.bf16.mxu0 %v7671
    %8134 = vmatmul.mubr.bf16.gmra.mrb[0].mxu0 %v7670
    %v8135 = vpop.f32.mrb[0].mxu0
    %v8136 = vadd.f32 0.0, %v8135
    %v8137 = vpop.f32.mrb[0].mxu0
    %v8138 = vpop.f32.mrb[0].mxu0
    %v8139 = vadd.f32 0.0, %v8138
    %v8140 = vpop.f32.mrb[0].mxu0
    %8141 = vmatprep.mubr.bf16.mxu0 %v7674
    %8142 = vmatmul.mubr.bf16.gmra.mrb[0].mxu0 %v7673
    %v8143 = vpop.f32.mrb[0].mxu0
    %v8144 = vadd.f32 0.0, %v8143
    %v8145 = vpop.f32.mrb[0].mxu0
    %v8146 = vpop.f32.mrb[0].mxu0
    %v8147 = vadd.f32 0.0, %v8146
    %v8148 = vpop.f32.mrb[0].mxu0
    %8149 = vmatprep.mubr.bf16.mxu0 %v7677
    %8150 = vmatmul.mubr.bf16.gmra.mrb[0].mxu0 %v7676
    %v8151 = vpop.f32.mrb[0].mxu0
    %v8152 = vadd.f32 0.0, %v8151
    %v8153 = vpop.f32.mrb[0].mxu0
    %v8154 = vpop.f32.mrb[0].mxu0
    %v8155 = vadd.f32 0.0, %v8154
    %v8156 = vpop.f32.mrb[0].mxu0
    %8157 = vmatprep.mubr.bf16.mxu0 %v7680
    %8158 = vmatmul.mubr.bf16.gmra.mrb[0].mxu0 %v7679
    %v8159 = vpop.f32.mrb[0].mxu0
    %v8160 = vadd.f32 0.0, %v8159
    %v8161 = vpop.f32.mrb[0].mxu0
    %v8162 = vpop.f32.mrb[0].mxu0
    %v8163 = vadd.f32 0.0, %v8162
    %v8164 = vpop.f32.mrb[0].mxu0
    %8165 = vmatprep.mubr.bf16.mxu0 %v7683
    %8166 = vmatmul.mubr.bf16.gmra.mrb[0].mxu0 %v7682
    %v8167 = vpop.f32.mrb[0].mxu0
    %v8168 = vadd.f32 0.0, %v8167
    %v8169 = vpop.f32.mrb[0].mxu0
    %v8170 = vpop.f32.mrb[0].mxu0
    %v8171 = vadd.f32 0.0, %v8170
    %v8172 = vpop.f32.mrb[0].mxu0
    %8173 = vmatprep.mubr.bf16.mxu0 %v7686
    %8174 = vmatmul.mubr.bf16.gmra.mrb[0].mxu0 %v7685
    %v8175 = vpop.f32.mrb[0].mxu0
    %v8176 = vadd.f32 0.0, %v8175
    %v8177 = vpop.f32.mrb[0].mxu0
    %v8178 = vpop.f32.mrb[0].mxu0
    %v8179 = vadd.f32 0.0, %v8178
    %v8180 = vpop.f32.mrb[0].mxu0
    %8181 = vmatprep.mubr.bf16.mxu0 %v7689
    %8182 = vmatmul.mubr.bf16.gmra.mrb[0].mxu0 %v7688
    %v8183 = vpop.f32.mrb[0].mxu0
    %v8184 = vadd.f32 0.0, %v8183
    %v8185 = vpop.f32.mrb[0].mxu0
    %v8186 = vpop.f32.mrb[0].mxu0
    %v8187 = vadd.f32 0.0, %v8186
    %v8188 = vpop.f32.mrb[0].mxu0
    %8189 = vmatprep.mubr.bf16.mxu0 %v7692
    %8190 = vmatmul.mubr.bf16.gmra.mrb[0].mxu0 %v7691
    %v8191 = vpop.f32.mrb[0].mxu0
    %v8192 = vadd.f32 0.0, %v8191
    %v8193 = vpop.f32.mrb[0].mxu0
    %v8194 = vpop.f32.mrb[0].mxu0
    %v8195 = vadd.f32 0.0, %v8194
    %v8196 = vpop.f32.mrb[0].mxu0
    %8197 = vmatprep.mubr.bf16.mxu0 %v7695
    %8198 = vmatmul.mubr.bf16.gmra.mrb[0].mxu0 %v7694
    %v8199 = vpop.f32.mrb[0].mxu0
    %v8200 = vadd.f32 0.0, %v8199
    %v8201 = vpop.f32.mrb[0].mxu0
    %v8202 = vpop.f32.mrb[0].mxu0
    %v8203 = vadd.f32 0.0, %v8202
    %v8204 = vpop.f32.mrb[0].mxu0
    %8205 = vmatprep.mubr.bf16.mxu0 %v7698
    %8206 = vmatmul.mubr.bf16.gmra.mrb[0].mxu0 %v7697
    %v8207 = vpop.f32.mrb[0].mxu0
    %v8208 = vadd.f32 0.0, %v8207
    %v8209 = vpop.f32.mrb[0].mxu0
    %v8210 = vpop.f32.mrb[0].mxu0
    %v8211 = vadd.f32 0.0, %v8210
    %v8212 = vpop.f32.mrb[0].mxu0
    %8213 = vmatprep.mubr.bf16.mxu0 %v7701
    %8214 = vmatmul.mubr.bf16.gmra.mrb[0].mxu0 %v7700
    %v8215 = vpop.f32.mrb[0].mxu0
    %v8216 = vadd.f32 0.0, %v8215
    %v8217 = vpop.f32.mrb[0].mxu0
    %v8218 = vpop.f32.mrb[0].mxu0
    %v8219 = vadd.f32 0.0, %v8218
    %v8220 = vpop.f32.mrb[0].mxu0
    %8221 = vmatprep.mubr.bf16.mxu0 %v7704
    %8222 = vmatmul.mubr.bf16.gmra.mrb[0].mxu0 %v7703
    %v8223 = vpop.f32.mrb[0].mxu0
    %v8224 = vadd.f32 0.0, %v8223
    %v8225 = vpop.f32.mrb[0].mxu0
    %v8226 = vpop.f32.mrb[0].mxu0
    %v8227 = vadd.f32 0.0, %v8226
    %v8228 = vpop.f32.mrb[0].mxu0
    %8229 = vmatprep.mubr.bf16.mxu0 %v7707
    %8230 = vmatmul.mubr.bf16.gmra.mrb[0].mxu0 %v7706
    %v8231 = vpop.f32.mrb[0].mxu0
    %v8232 = vadd.f32 0.0, %v8231
    %v8233 = vpop.f32.mrb[0].mxu0
    %v8234 = vpop.f32.mrb[0].mxu0
    %v8235 = vadd.f32 0.0, %v8234
    %v8236 = vpop.f32.mrb[0].mxu0
    %8237 = vdwg.mxu0
    %8238 = vmatprep.subr.bf16.mxu0 0
    %8239 = vmatpush1.bf16.msra.mxu0 %v7833
    %8240 = vmatprep.subr.bf16.mxu0 0
    %8241 = vmatpush1.bf16.msra.mxu0 %v7834
    %8242 = vmatprep.subr.bf16.mxu0 0
    %8243 = vmatpush1.bf16.msra.mxu0 0
    %8244 = vmatprep.subr.bf16.mxu0 0
    %8245 = vmatpush1.bf16.msra.mxu0 0
    %8246 = vmatprep.subr.bf16.mxu0 0
    %8247 = vmatpush1.bf16.msra.mxu0 0
    %8248 = vmatprep.subr.bf16.mxu0 0
    %8249 = vmatpush1.bf16.msra.mxu0 0
    %8250 = vmatprep.subr.bf16.mxu0 0
    %8251 = vmatpush1.bf16.msra.mxu0 0
    %8252 = vmatprep.subr.bf16.mxu0 0
    %8253 = vmatpush1.bf16.msra.mxu0 0
    %8254 = vmatprep.subr.bf16.mxu0 0
    %8255 = vmatpush1.bf16.msra.mxu0 0
    %8256 = vmatprep.subr.bf16.mxu0 0
    %8257 = vmatpush1.bf16.msra.mxu0 0
    %8258 = vmatprep.subr.bf16.mxu0 0
    %8259 = vmatpush1.bf16.msra.mxu0 0
    %8260 = vmatprep.subr.bf16.mxu0 0
    %8261 = vmatpush1.bf16.msra.mxu0 0
    %8262 = vmatprep.subr.bf16.mxu0 0
    %8263 = vmatpush1.bf16.msra.mxu0 0
    %8264 = vmatprep.subr.bf16.mxu0 0
    %8265 = vmatpush1.bf16.msra.mxu0 0
    %8266 = vmatprep.subr.bf16.mxu0 0
    %8267 = vmatpush1.bf16.msra.mxu0 0
    %8268 = vmatprep.subr.bf16.mxu0 0
    %8269 = vmatpush1.bf16.msra.mxu0 0
    %8270 = vmatprep.mubr.bf16.mxu0 0
    %8271 = vmatmul.mubr.bf16.gmra.mrb[0].mxu0 %v7854
    %v8272 = vpop.f32.mrb[0].mxu0
    %v8273 = vadd.f32 %v7984, %v8272
    %v8274 = vpop.f32.mrb[0].mxu0
    %v8275 = vpop.f32.mrb[0].mxu0
    %v8276 = vadd.f32 %v7987, %v8275
    %v8277 = vpop.f32.mrb[0].mxu0
    %8278 = vmatprep.mubr.bf16.mxu0 0
    %8279 = vmatmul.mubr.bf16.gmra.mrb[0].mxu0 %v7857
    %v8280 = vpop.f32.mrb[0].mxu0
    %v8281 = vadd.f32 %v7992, %v8280
    %v8282 = vpop.f32.mrb[0].mxu0
    %v8283 = vpop.f32.mrb[0].mxu0
    %v8284 = vadd.f32 %v7995, %v8283
    %v8285 = vpop.f32.mrb[0].mxu0
    %8286 = vmatprep.mubr.bf16.mxu0 0
    %8287 = vmatmul.mubr.bf16.gmra.mrb[0].mxu0 %v7860
    %v8288 = vpop.f32.mrb[0].mxu0
    %v8289 = vadd.f32 %v8000, %v8288
    %v8290 = vpop.f32.mrb[0].mxu0
    %v8291 = vpop.f32.mrb[0].mxu0
    %v8292 = vadd.f32 %v8003, %v8291
    %v8293 = vpop.f32.mrb[0].mxu0
    %8294 = vmatprep.mubr.bf16.mxu0 0
    %8295 = vmatmul.mubr.bf16.gmra.mrb[0].mxu0 %v7863
    %v8296 = vpop.f32.mrb[0].mxu0
    %v8297 = vadd.f32 %v8008, %v8296
    %v8298 = vpop.f32.mrb[0].mxu0
    %v8299 = vpop.f32.mrb[0].mxu0
    %v8300 = vadd.f32 %v8011, %v8299
    %v8301 = vpop.f32.mrb[0].mxu0
    %8302 = vmatprep.mubr.bf16.mxu0 0
    %8303 = vmatmul.mubr.bf16.gmra.mrb[0].mxu0 %v7866
    %v8304 = vpop.f32.mrb[0].mxu0
    %v8305 = vadd.f32 %v8016, %v8304
    %v8306 = vpop.f32.mrb[0].mxu0
    %v8307 = vpop.f32.mrb[0].mxu0
    %v8308 = vadd.f32 %v8019, %v8307
    %v8309 = vpop.f32.mrb[0].mxu0
    %8310 = vmatprep.mubr.bf16.mxu0 0
    %8311 = vmatmul.mubr.bf16.gmra.mrb[0].mxu0 %v7869
    %v8312 = vpop.f32.mrb[0].mxu0
    %v8313 = vadd.f32 %v8024, %v8312
    %v8314 = vpop.f32.mrb[0].mxu0
    %v8315 = vpop.f32.mrb[0].mxu0
    %v8316 = vadd.f32 %v8027, %v8315
    %v8317 = vpop.f32.mrb[0].mxu0
    %8318 = vmatprep.mubr.bf16.mxu0 0
    %8319 = vmatmul.mubr.bf16.gmra.mrb[0].mxu0 %v7872
    %v8320 = vpop.f32.mrb[0].mxu0
    %v8321 = vadd.f32 %v8032, %v8320
    %v8322 = vpop.f32.mrb[0].mxu0
    %v8323 = vpop.f32.mrb[0].mxu0
    %v8324 = vadd.f32 %v8035, %v8323
    %v8325 = vpop.f32.mrb[0].mxu0
    %8326 = vmatprep.mubr.bf16.mxu0 0
    %8327 = vmatmul.mubr.bf16.gmra.mrb[0].mxu0 %v7875
    %v8328 = vpop.f32.mrb[0].mxu0
    %v8329 = vadd.f32 %v8040, %v8328
    %v8330 = vpop.f32.mrb[0].mxu0
    %v8331 = vpop.f32.mrb[0].mxu0
    %v8332 = vadd.f32 %v8043, %v8331
    %v8333 = vpop.f32.mrb[0].mxu0
    %8334 = vmatprep.mubr.bf16.mxu0 0
    %8335 = vmatmul.mubr.bf16.gmra.mrb[0].mxu0 %v7878
    %v8336 = vpop.f32.mrb[0].mxu0
    %v8337 = vadd.f32 %v8048, %v8336
    %v8338 = vpop.f32.mrb[0].mxu0
    %v8339 = vpop.f32.mrb[0].mxu0
    %v8340 = vadd.f32 %v8051, %v8339
    %v8341 = vpop.f32.mrb[0].mxu0
    %8342 = vmatprep.mubr.bf16.mxu0 0
    %8343 = vmatmul.mubr.bf16.gmra.mrb[0].mxu0 %v7881
    %v8344 = vpop.f32.mrb[0].mxu0
    %v8345 = vadd.f32 %v8056, %v8344
    %v8346 = vpop.f32.mrb[0].mxu0
    %v8347 = vpop.f32.mrb[0].mxu0
    %v8348 = vadd.f32 %v8059, %v8347
    %v8349 = vpop.f32.mrb[0].mxu0
    %8350 = vmatprep.mubr.bf16.mxu0 0
    %8351 = vmatmul.mubr.bf16.gmra.mrb[0].mxu0 %v7884
    %v8352 = vpop.f32.mrb[0].mxu0
    %v8353 = vadd.f32 %v8064, %v8352
    %v8354 = vpop.f32.mrb[0].mxu0
    %v8355 = vpop.f32.mrb[0].mxu0
    %v8356 = vadd.f32 %v8067, %v8355
    %v8357 = vpop.f32.mrb[0].mxu0
    %8358 = vmatprep.mubr.bf16.mxu0 0
    %8359 = vmatmul.mubr.bf16.gmra.mrb[0].mxu0 %v7887
    %v8360 = vpop.f32.mrb[0].mxu0
    %v8361 = vadd.f32 %v8072, %v8360
    %v8362 = vpop.f32.mrb[0].mxu0
    %v8363 = vpop.f32.mrb[0].mxu0
    %v8364 = vadd.f32 %v8075, %v8363
    %v8365 = vpop.f32.mrb[0].mxu0
    %8366 = vmatprep.mubr.bf16.mxu0 0
    %8367 = vmatmul.mubr.bf16.gmra.mrb[0].mxu0 %v7890
    %v8368 = vpop.f32.mrb[0].mxu0
    %v8369 = vadd.f32 %v8080, %v8368
    %v8370 = vpop.f32.mrb[0].mxu0
    %v8371 = vpop.f32.mrb[0].mxu0
    %v8372 = vadd.f32 %v8083, %v8371
    %v8373 = vpop.f32.mrb[0].mxu0
    %8374 = vmatprep.mubr.bf16.mxu0 0
    %8375 = vmatmul.mubr.bf16.gmra.mrb[0].mxu0 %v7893
    %v8376 = vpop.f32.mrb[0].mxu0
    %v8377 = vadd.f32 %v8088, %v8376
    %v8378 = vpop.f32.mrb[0].mxu0
    %v8379 = vpop.f32.mrb[0].mxu0
    %v8380 = vadd.f32 %v8091, %v8379
    %v8381 = vpop.f32.mrb[0].mxu0
    %8382 = vmatprep.mubr.bf16.mxu0 0
    %8383 = vmatmul.mubr.bf16.gmra.mrb[0].mxu0 %v7896
    %v8384 = vpop.f32.mrb[0].mxu0
    %v8385 = vadd.f32 %v8096, %v8384
    %v8386 = vpop.f32.mrb[0].mxu0
    %v8387 = vpop.f32.mrb[0].mxu0
    %v8388 = vadd.f32 %v8099, %v8387
    %v8389 = vpop.f32.mrb[0].mxu0
    %8390 = vmatprep.mubr.bf16.mxu0 0
    %8391 = vmatmul.mubr.bf16.gmra.mrb[0].mxu0 %v7899
    %v8392 = vpop.f32.mrb[0].mxu0
    %v8393 = vadd.f32 %v8104, %v8392
    %v8394 = vpop.f32.mrb[0].mxu0
    %v8395 = vpop.f32.mrb[0].mxu0
    %v8396 = vadd.f32 %v8107, %v8395
    %v8397 = vpop.f32.mrb[0].mxu0
    %8398 = vmatprep.mubr.bf16.mxu0 0
    %8399 = vmatmul.mubr.bf16.gmra.mrb[0].mxu0 %v7902
    %v8400 = vpop.f32.mrb[0].mxu0
    %v8401 = vadd.f32 %v8112, %v8400
    %v8402 = vpop.f32.mrb[0].mxu0
    %v8403 = vpop.f32.mrb[0].mxu0
    %v8404 = vadd.f32 %v8115, %v8403
    %v8405 = vpop.f32.mrb[0].mxu0
    %8406 = vmatprep.mubr.bf16.mxu0 0
    %8407 = vmatmul.mubr.bf16.gmra.mrb[0].mxu0 %v7905
    %v8408 = vpop.f32.mrb[0].mxu0
    %v8409 = vadd.f32 %v8120, %v8408
    %v8410 = vpop.f32.mrb[0].mxu0
    %v8411 = vpop.f32.mrb[0].mxu0
    %v8412 = vadd.f32 %v8123, %v8411
    %v8413 = vpop.f32.mrb[0].mxu0
    %8414 = vmatprep.mubr.bf16.mxu0 0
    %8415 = vmatmul.mubr.bf16.gmra.mrb[0].mxu0 %v7908
    %v8416 = vpop.f32.mrb[0].mxu0
    %v8417 = vadd.f32 %v8128, %v8416
    %v8418 = vpop.f32.mrb[0].mxu0
    %v8419 = vpop.f32.mrb[0].mxu0
    %v8420 = vadd.f32 %v8131, %v8419
    %v8421 = vpop.f32.mrb[0].mxu0
    %8422 = vmatprep.mubr.bf16.mxu0 0
    %8423 = vmatmul.mubr.bf16.gmra.mrb[0].mxu0 %v7911
    %v8424 = vpop.f32.mrb[0].mxu0
    %v8425 = vadd.f32 %v8136, %v8424
    %v8426 = vpop.f32.mrb[0].mxu0
    %v8427 = vpop.f32.mrb[0].mxu0
    %v8428 = vadd.f32 %v8139, %v8427
    %v8429 = vpop.f32.mrb[0].mxu0
    %8430 = vmatprep.mubr.bf16.mxu0 0
    %8431 = vmatmul.mubr.bf16.gmra.mrb[0].mxu0 %v7914
    %v8432 = vpop.f32.mrb[0].mxu0
    %v8433 = vadd.f32 %v8144, %v8432
    %v8434 = vpop.f32.mrb[0].mxu0
    %v8435 = vpop.f32.mrb[0].mxu0
    %v8436 = vadd.f32 %v8147, %v8435
    %v8437 = vpop.f32.mrb[0].mxu0
    %8438 = vmatprep.mubr.bf16.mxu0 0
    %8439 = vmatmul.mubr.bf16.gmra.mrb[0].mxu0 %v7917
    %v8440 = vpop.f32.mrb[0].mxu0
    %v8441 = vadd.f32 %v8152, %v8440
    %v8442 = vpop.f32.mrb[0].mxu0
    %v8443 = vpop.f32.mrb[0].mxu0
    %v8444 = vadd.f32 %v8155, %v8443
    %v8445 = vpop.f32.mrb[0].mxu0
    %8446 = vmatprep.mubr.bf16.mxu0 0
    %8447 = vmatmul.mubr.bf16.gmra.mrb[0].mxu0 %v7920
    %v8448 = vpop.f32.mrb[0].mxu0
    %v8449 = vadd.f32 %v8160, %v8448
    %v8450 = vpop.f32.mrb[0].mxu0
    %v8451 = vpop.f32.mrb[0].mxu0
    %v8452 = vadd.f32 %v8163, %v8451
    %v8453 = vpop.f32.mrb[0].mxu0
    %8454 = vmatprep.mubr.bf16.mxu0 0
    %8455 = vmatmul.mubr.bf16.gmra.mrb[0].mxu0 %v7923
    %v8456 = vpop.f32.mrb[0].mxu0
    %v8457 = vadd.f32 %v8168, %v8456
    %v8458 = vpop.f32.mrb[0].mxu0
    %v8459 = vpop.f32.mrb[0].mxu0
    %v8460 = vadd.f32 %v8171, %v8459
    %v8461 = vpop.f32.mrb[0].mxu0
    %8462 = vmatprep.mubr.bf16.mxu0 0
    %8463 = vmatmul.mubr.bf16.gmra.mrb[0].mxu0 %v7926
    %v8464 = vpop.f32.mrb[0].mxu0
    %v8465 = vadd.f32 %v8176, %v8464
    %v8466 = vpop.f32.mrb[0].mxu0
    %v8467 = vpop.f32.mrb[0].mxu0
    %v8468 = vadd.f32 %v8179, %v8467
    %v8469 = vpop.f32.mrb[0].mxu0
    %8470 = vmatprep.mubr.bf16.mxu0 0
    %8471 = vmatmul.mubr.bf16.gmra.mrb[0].mxu0 %v7929
    %v8472 = vpop.f32.mrb[0].mxu0
    %v8473 = vadd.f32 %v8184, %v8472
    %v8474 = vpop.f32.mrb[0].mxu0
    %v8475 = vpop.f32.mrb[0].mxu0
    %v8476 = vadd.f32 %v8187, %v8475
    %v8477 = vpop.f32.mrb[0].mxu0
    %8478 = vmatprep.mubr.bf16.mxu0 0
    %8479 = vmatmul.mubr.bf16.gmra.mrb[0].mxu0 %v7932
    %v8480 = vpop.f32.mrb[0].mxu0
    %v8481 = vadd.f32 %v8192, %v8480
    %v8482 = vpop.f32.mrb[0].mxu0
    %v8483 = vpop.f32.mrb[0].mxu0
    %v8484 = vadd.f32 %v8195, %v8483
    %v8485 = vpop.f32.mrb[0].mxu0
    %8486 = vmatprep.mubr.bf16.mxu0 0
    %8487 = vmatmul.mubr.bf16.gmra.mrb[0].mxu0 %v7935
    %v8488 = vpop.f32.mrb[0].mxu0
    %v8489 = vadd.f32 %v8200, %v8488
    %v8490 = vpop.f32.mrb[0].mxu0
    %v8491 = vpop.f32.mrb[0].mxu0
    %v8492 = vadd.f32 %v8203, %v8491
    %v8493 = vpop.f32.mrb[0].mxu0
    %8494 = vmatprep.mubr.bf16.mxu0 0
    %8495 = vmatmul.mubr.bf16.gmra.mrb[0].mxu0 %v7938
    %v8496 = vpop.f32.mrb[0].mxu0
    %v8497 = vadd.f32 %v8208, %v8496
    %v8498 = vpop.f32.mrb[0].mxu0
    %v8499 = vpop.f32.mrb[0].mxu0
    %v8500 = vadd.f32 %v8211, %v8499
    %v8501 = vpop.f32.mrb[0].mxu0
    %8502 = vmatprep.mubr.bf16.mxu0 0
    %8503 = vmatmul.mubr.bf16.gmra.mrb[0].mxu0 %v7941
    %v8504 = vpop.f32.mrb[0].mxu0
    %v8505 = vadd.f32 %v8216, %v8504
    %v8506 = vpop.f32.mrb[0].mxu0
    %v8507 = vpop.f32.mrb[0].mxu0
    %v8508 = vadd.f32 %v8219, %v8507
    %v8509 = vpop.f32.mrb[0].mxu0
    %8510 = vmatprep.mubr.bf16.mxu0 0
    %8511 = vmatmul.mubr.bf16.gmra.mrb[0].mxu0 %v7944
    %v8512 = vpop.f32.mrb[0].mxu0
    %v8513 = vadd.f32 %v8224, %v8512
    %v8514 = vpop.f32.mrb[0].mxu0
    %v8515 = vpop.f32.mrb[0].mxu0
    %v8516 = vadd.f32 %v8227, %v8515
    %v8517 = vpop.f32.mrb[0].mxu0
    %8518 = vmatprep.mubr.bf16.mxu0 0
    %8519 = vmatmul.mubr.bf16.gmra.mrb[0].mxu0 %v7947
    %v8520 = vpop.f32.mrb[0].mxu0
    %v8521 = vadd.f32 %v8232, %v8520
    %v8522 = vpop.f32.mrb[0].mxu0
    %v8523 = vpop.f32.mrb[0].mxu0
    %v8524 = vadd.f32 %v8235, %v8523
    %v8525 = vpop.f32.mrb[0].mxu0
    %8526 = vdwg.mxu0
    %8527 = vst [vmem:[#allocation7] sm:$0xff] %v8273
    %8528 = vst [vmem:[#allocation7 + $0x8] sm:$0xff] %v8276
    %8529 = vst [vmem:[#allocation7 + $0x10] sm:$0xff] %v8281
    %8530 = vst [vmem:[#allocation7 + $0x18] sm:$0xff] %v8284
    %8531 = vst [vmem:[#allocation7 + $0x20] sm:$0xff] %v8289
    %8532 = vst [vmem:[#allocation7 + $0x28] sm:$0xff] %v8292
    %8533 = vst [vmem:[#allocation7 + $0x30] sm:$0xff] %v8297
    %8534 = vst [vmem:[#allocation7 + $0x38] sm:$0xff] %v8300
    %8535 = vst [vmem:[#allocation7 + $0x40] sm:$0xff] %v8305
    %8536 = vst [vmem:[#allocation7 + $0x48] sm:$0xff] %v8308
    %8537 = vst [vmem:[#allocation7 + $0x50] sm:$0xff] %v8313
    %8538 = vst [vmem:[#allocation7 + $0x58] sm:$0xff] %v8316
    %8539 = vst [vmem:[#allocation7 + $0x60] sm:$0xff] %v8321
    %8540 = vst [vmem:[#allocation7 + $0x68] sm:$0xff] %v8324
    %8541 = vst [vmem:[#allocation7 + $0x70] sm:$0xff] %v8329
    %8542 = vst [vmem:[#allocation7 + $0x78] sm:$0xff] %v8332
    %8543 = vst [vmem:[#allocation7 + $0x80] sm:$0xff] %v8337
    %8544 = vst [vmem:[#allocation7 + $0x88] sm:$0xff] %v8340
    %8545 = vst [vmem:[#allocation7 + $0x90] sm:$0xff] %v8345
    %8546 = vst [vmem:[#allocation7 + $0x98] sm:$0xff] %v8348
    %8547 = vst [vmem:[#allocation7 + $0xa0] sm:$0xff] %v8353
    %8548 = vst [vmem:[#allocation7 + $0xa8] sm:$0xff] %v8356
    %8549 = vst [vmem:[#allocation7 + $0xb0] sm:$0xff] %v8361
    %8550 = vst [vmem:[#allocation7 + $0xb8] sm:$0xff] %v8364
    %8551 = vst [vmem:[#allocation7 + $0xc0] sm:$0xff] %v8369
    %8552 = vst [vmem:[#allocation7 + $0xc8] sm:$0xff] %v8372
    %8553 = vst [vmem:[#allocation7 + $0xd0] sm:$0xff] %v8377
    %8554 = vst [vmem:[#allocation7 + $0xd8] sm:$0xff] %v8380
    %8555 = vst [vmem:[#allocation7 + $0xe0] sm:$0xff] %v8385
    %8556 = vst [vmem:[#allocation7 + $0xe8] sm:$0xff] %v8388
    %8557 = vst [vmem:[#allocation7 + $0xf0] sm:$0xff] %v8393
    %8558 = vst [vmem:[#allocation7 + $0xf8] sm:$0xff] %v8396
    %8559 = vst [vmem:[#allocation7 + $0x100] sm:$0xff] %v8401
    %8560 = vst [vmem:[#allocation7 + $0x108] sm:$0xff] %v8404
    %8561 = vst [vmem:[#allocation7 + $0x110] sm:$0xff] %v8409
    %8562 = vst [vmem:[#allocation7 + $0x118] sm:$0xff] %v8412
    %8563 = vst [vmem:[#allocation7 + $0x120] sm:$0xff] %v8417
    %8564 = vst [vmem:[#allocation7 + $0x128] sm:$0xff] %v8420
    %8565 = vst [vmem:[#allocation7 + $0x130] sm:$0xff] %v8425
    %8566 = vst [vmem:[#allocation7 + $0x138] sm:$0xff] %v8428
    %8567 = vst [vmem:[#allocation7 + $0x140] sm:$0xff] %v8433
    %8568 = vst [vmem:[#allocation7 + $0x148] sm:$0xff] %v8436
    %8569 = vst [vmem:[#allocation7 + $0x150] sm:$0xff] %v8441
    %8570 = vst [vmem:[#allocation7 + $0x158] sm:$0xff] %v8444
    %8571 = vst [vmem:[#allocation7 + $0x160] sm:$0xff] %v8449
    %8572 = vst [vmem:[#allocation7 + $0x168] sm:$0xff] %v8452
    %8573 = vst [vmem:[#allocation7 + $0x170] sm:$0xff] %v8457
    %8574 = vst [vmem:[#allocation7 + $0x178] sm:$0xff] %v8460
    %8575 = vst [vmem:[#allocation7 + $0x180] sm:$0xff] %v8465
    %8576 = vst [vmem:[#allocation7 + $0x188] sm:$0xff] %v8468
    %8577 = vst [vmem:[#allocation7 + $0x190] sm:$0xff] %v8473
    %8578 = vst [vmem:[#allocation7 + $0x198] sm:$0xff] %v8476
    %8579 = vst [vmem:[#allocation7 + $0x1a0] sm:$0xff] %v8481
    %8580 = vst [vmem:[#allocation7 + $0x1a8] sm:$0xff] %v8484
    %8581 = vst [vmem:[#allocation7 + $0x1b0] sm:$0xff] %v8489
    %8582 = vst [vmem:[#allocation7 + $0x1b8] sm:$0xff] %v8492
    %8583 = vst [vmem:[#allocation7 + $0x1c0] sm:$0xff] %v8497
    %8584 = vst [vmem:[#allocation7 + $0x1c8] sm:$0xff] %v8500
    %8585 = vst [vmem:[#allocation7 + $0x1d0] sm:$0xff] %v8505
    %8586 = vst [vmem:[#allocation7 + $0x1d8] sm:$0xff] %v8508
    %8587 = vst [vmem:[#allocation7 + $0x1e0] sm:$0xff] %v8513
    %8588 = vst [vmem:[#allocation7 + $0x1e8] sm:$0xff] %v8516
    %8589 = vst [vmem:[#allocation7 + $0x1f0] sm:$0xff] %v8521
    %8590 = vst [vmem:[#allocation7 + $0x1f8] sm:$0xff] %v8524
    // Predicated region
    $region26: #{wnconv2d_forward.1} parent=1 // pred_check
      _
    $region27: #{wnconv2d_forward.1} parent=1 // pred_check_branch
      %8592 = sbr.rel (0) target = $region29
    $region28: #{wnconv2d_forward.1} parent=1 // pred_region
      %s8594 = ssub.s32 8192, 8192
      %8595 = vsyncadd [#allocation6], %s8594
      %s8596 = sshll.u32 [#allocation7], 4
      %s8597 = int_to_ptr.vmem [resolvable:$true] %s8596
      %8602 = dma.vmem_to_hbm [thread:$0]  %s8597, 8192, %s5, [#allocation6], 128, 128, 8
    $region29: #{wnconv2d_forward.1} parent=1 // pred_fallthru
      _
    // Predicated region
    $region30: #{wnconv2d_forward.1} parent=1 // pred_check
      _
    $region31: #{wnconv2d_forward.1} parent=1 // pred_check_branch
      %8604 = sbr.rel (0) target = $region33
    $region32: #{wnconv2d_forward.1} parent=1 // pred_region
      %8605 = dma.done [#allocation6], 8192
    $region33: #{wnconv2d_forward.1} parent=1 // pred_fallthru
      _
    %8606 = vsyncpa [#allocation5], 1
    %8607 = vsyncpa [#allocation6], 1

</llo_original>
